<compile_context>
chip_gen: v5e
topology: v5e:2x2
jax: 0.10.0
libtpu: 0.0.40
codegen_flags: <defaults>
</compile_context>

<pallas_src>
import jax
import jax.numpy as jnp
from jax.experimental import pallas as pl
from jax.experimental.pallas import tpu as pltpu

IGNORE_ID = -1
PREDICTOR_WEIGHT = 1.0
_MASK_NEG = 1e30
_KV_CHUNK = 512          # flash-attention key/value chunk (keys streamed in tiles)


# ----------------------------- in-kernel helpers -----------------------------
def _ln(x, g, b, eps=1e-5):
    mu = jnp.mean(x, axis=-1, keepdims=True)
    var = jnp.mean((x - mu) ** 2, axis=-1, keepdims=True)
    return (x - mu) * jax.lax.rsqrt(var + eps) * g + b


def _dot(a, b):
    """MXU matmul with f32 accumulation (callers pass bf16 operands)."""
    return jnp.dot(a, b, preferred_element_type=jnp.float32)


def _dot_t(a, b):
    """a @ b.T via dot_general (contract last dims) — no materialized transpose."""
    return jax.lax.dot_general(
        a, b, dimension_numbers=(((1,), (1,)), ((), ())),
        preferred_element_type=jnp.float32)


def _attend(q_bf, k_bf, v_bf, key_mask, scale):
    """Online-softmax attention over key chunks; peak temp is (Tq, chunk).

    q_bf: (Tq, D) bf16; k_bf/v_bf: (Tk, D) bf16; key_mask: (1, Tk) f32 (1 = valid).
    """
    tq, d = q_bf.shape
    tk = k_bf.shape[0]
    chunk = tk if (tk <= _KV_CHUNK or tk % _KV_CHUNK != 0) else _KV_CHUNK
    m = jnp.full((tq, 1), -_MASK_NEG, jnp.float32)
    l = jnp.zeros((tq, 1), jnp.float32)
    acc = jnp.zeros((tq, d), jnp.float32)
    for c in range(tk // chunk):
        ks = jax.lax.slice_in_dim(k_bf, c * chunk, (c + 1) * chunk, axis=0)
        vs = jax.lax.slice_in_dim(v_bf, c * chunk, (c + 1) * chunk, axis=0)
        ms = jax.lax.slice_in_dim(key_mask, c * chunk, (c + 1) * chunk, axis=1)
        s = _dot_t(q_bf, ks) * scale + (ms - 1.0) * _MASK_NEG   # (Tq, chunk) f32
        m_new = jnp.maximum(m, jnp.max(s, axis=-1, keepdims=True))
        corr = jnp.exp(m - m_new)
        p = jnp.exp(s - m_new)
        l = corr * l + jnp.sum(p, axis=-1, keepdims=True)
        acc = corr * acc + _dot(p.astype(jnp.bfloat16), vs)
        m = m_new
    return acc * pl.reciprocal(l, approx=True)                   # (Tq, D) f32


def _lane_cumsum(a):
    """Inclusive prefix sum along the lane (last) axis; O(T log T), no (T,T) temps."""
    r, t = a.shape
    lane = jax.lax.broadcasted_iota(jnp.int32, (r, t), 1)
    s = a
    shift = 1
    while shift < t:
        rolled = pltpu.roll(s, shift=shift, axis=1)
        s = s + jnp.where(lane >= shift, rolled, 0.0)
        shift *= 2
    return s


# ------------------------------- Pallas kernels ------------------------------
def enc_pred_cif_kernel(slen_ref, tlen_ref, x_ref,
                        w_in, b_in, wq, wk, wv, wo,
                        w1, b1, w2, b2, g1, be1, g2, be2,
                        wc0, wc1, wc2, bc, woa, boa,
                        enc_ref, emb_ref, ptl_ref):
    """Fused: SAN encoder layer -> CIF predictor -> alpha rescale -> CIF."""
    b = pl.program_id(0)
    x = x_ref[0]                                            # (T, F) f32
    t = x.shape[0]
    d = wq.shape[1]
    l = emb_ref.shape[1]
    scale = 1.0 / float(d) ** 0.5

    # frame-validity mask, lane-dense (1, T)
    fidx = jax.lax.broadcasted_iota(jnp.int32, (1, t), 1)
    m = (fidx < slen_ref[b]).astype(jnp.float32)

    # ---- encoder layer: in-proj -> self-attn -> add&LN -> FFN -> add&LN ----
    h = _dot(x.astype(jnp.bfloat16), w_in[...]) + b_in[...]             # (T, D) f32
    h_bf = h.astype(jnp.bfloat16)
    q = _dot(h_bf, wq[...]).astype(jnp.bfloat16)
    k = _dot(h_bf, wk[...]).astype(jnp.bfloat16)
    v = _dot(h_bf, wv[...]).astype(jnp.bfloat16)
    ctx = _attend(q, k, v, m, scale)
    h = _ln(h + _dot(ctx.astype(jnp.bfloat16), wo[...]), g1[...], be1[...])
    h_bf = h.astype(jnp.bfloat16)
    ff = _dot(jax.nn.relu(_dot(h_bf, w1[...]) + b1[...]).astype(jnp.bfloat16),
              w2[...]) + b2[...]
    h = _ln(h + ff, g2[...], be2[...])                                  # (T, D) f32
    h_bf = h.astype(jnp.bfloat16)
    enc_ref[0] = h_bf                                                   # bf16 write

    # ---- CIF predictor: conv(k=3, same) -> relu -> linear(1) -> sigmoid ----
    # c[i] = relu(h[i-1]@Wc0 + h[i]@Wc1 + h[i+1]@Wc2 + bc)   (no (T,3D) concat)
    row = jax.lax.broadcasted_iota(jnp.int32, (t, d), 0)
    y0 = _dot(h_bf, wc0[...])
    y1 = _dot(h_bf, wc1[...])
    y2 = _dot(h_bf, wc2[...])
    c = (jnp.where(row > 0, pltpu.roll(y0, shift=1, axis=0), 0.0)       # h[i-1] part
         + y1
         + jnp.where(row < t - 1, pltpu.roll(y2, shift=t - 1, axis=0), 0.0))  # h[i+1]
    c = jax.nn.relu(c + bc[...])                                        # (T, D) f32
    logits = _dot_t(woa[...], c) + boa[...]                             # (1, T) lane-dense
    alpha = jax.nn.sigmoid(logits) * m                                  # (1, T)

    # ---- rescale to target length + continuous integrate-and-fire ----
    ptl = jnp.sum(alpha, axis=1, keepdims=True)                         # (1, 1)
    ptl_ref[0] = ptl
    tlen = tlen_ref[b].astype(jnp.float32)
    a = alpha * (tlen * pl.reciprocal(jnp.maximum(ptl, 1e-6), approx=True))
    csum = _lane_cumsum(a)                                              # inclusive cumsum
    cprev = csum - a
    jj = jax.lax.broadcasted_iota(jnp.int32, (l, t), 0).astype(jnp.float32)
    w = jnp.maximum(jnp.minimum(csum, jj + 1.0) - jnp.maximum(cprev, jj), 0.0)  # (L, T)
    # CIF integration: bf16 operands, f32 accumulation.
    emb_ref[0] = _dot(w.astype(jnp.bfloat16), h_bf)                     # (L, D) f32


def decoder_kernel(slen_ref, s_ref, e_ref,
                   wq, wk, wv, wo, w1, b1, w2, b2, g1, bl1, g2, bl2,
                   hid_ref):
    """Decoder layer: cross-attn(semantic -> encoder) -> add&LN -> FFN -> add&LN."""
    b = pl.program_id(0)
    s = s_ref[0]                                            # (L, D) f32
    e = e_ref[0]                                            # (T, D) bf16
    t = e.shape[0]
    d = s.shape[-1]
    scale = 1.0 / float(d) ** 0.5
    fidx = jax.lax.broadcasted_iota(jnp.int32, (1, t), 1)
    m = (fidx < slen_ref[b]).astype(jnp.float32)

    q = _dot(s.astype(jnp.bfloat16), wq[...]).astype(jnp.bfloat16)
    k = _dot(e, wk[...]).astype(jnp.bfloat16)
    v = _dot(e, wv[...]).astype(jnp.bfloat16)
    ctx = _attend(q, k, v, m, scale)
    h = _ln(s + _dot(ctx.astype(jnp.bfloat16), wo[...]), g1[...], bl1[...])
    ff = _dot(jax.nn.relu(_dot(h.astype(jnp.bfloat16), w1[...]) + b1[...]).astype(jnp.bfloat16),
              w2[...]) + b2[...]
    hid_ref[0] = _ln(h + ff, g2[...], bl2[...]).astype(jnp.bfloat16)    # (L, D) bf16


def vocab_kernel(h_ref, w_ref, b_ref, o_ref):
    """Tiled vocab projection on flattened (B*L, D) bf16 rows."""
    o_ref[...] = _dot(h_ref[...], w_ref[...]) + b_ref[...]


# ------------------------------ pallas_call glue ------------------------------
_VMEM_LIMIT_CACHE = []


def _vmem_limit_bytes():
    """3/4 of physical VMEM (adapts v5e/v6e 128MiB vs v7x 64MiB); None if unknown."""
    if not _VMEM_LIMIT_CACHE:
        lim = None
        try:
            info = pltpu.get_tpu_info()
            cap = getattr(info, "vmem_capacity_bytes", None)
            if cap:
                lim = int(cap) * 3 // 4
        except Exception:
            lim = None
        _VMEM_LIMIT_CACHE.append(lim)
    return _VMEM_LIMIT_CACHE[0]


def _cparams(num_grid_axes):
    kw = dict(dimension_semantics=("parallel",) * num_grid_axes)
    lim = _vmem_limit_bytes()
    if lim:
        kw["vmem_limit_bytes"] = lim
    return pltpu.CompilerParams(**kw)


def _batch_spec(shape):
    nd = len(shape)

    def imap(i, *_):           # ignore scalar-prefetch refs
        return (i,) + (0,) * (nd - 1)

    return pl.BlockSpec((1,) + tuple(shape[1:]), imap)


def _weight_spec():
    # Whole array resident in VMEM for the life of the kernel — no double-buffer.
    return pl.BlockSpec(memory_space=pltpu.MemorySpace.VMEM)


def _bf16(w):
    return w.astype(jnp.bfloat16)


def _round_up(x, m):
    return (x + m - 1) // m * m


def run_encoder_predictor_cif(speech, speech_lengths, text_lengths, max_tokens, p):
    b, t, _ = speech.shape
    d = p["w_in"].shape[1]
    wc = p["pre_wc"]
    # TODO(synk): loading real torch Conv1d checkpoints needs a (out,in,k)->(k,in,out)
    # permute; params here are already stored kernel-position-major (k, in, out).
    ws = [_bf16(p["w_in"]), p["b_in"],
          _bf16(p["enc_wq"]), _bf16(p["enc_wk"]), _bf16(p["enc_wv"]), _bf16(p["enc_wo"]),
          _bf16(p["enc_w1"]), p["enc_b1"], _bf16(p["enc_w2"]), p["enc_b2"],
          p["enc_g1"], p["enc_be1"], p["enc_g2"], p["enc_be2"],
          _bf16(wc[0]), _bf16(wc[1]), _bf16(wc[2]), p["pre_bc"],
          p["pre_wo"].T, p["pre_bo"]]
    grid_spec = pltpu.PrefetchScalarGridSpec(
        num_scalar_prefetch=2,
        grid=(b,),
        in_specs=[_batch_spec(speech.shape)] + [_weight_spec() for _ in ws],
        out_specs=(_batch_spec((b, t, d)),
                   _batch_spec((b, max_tokens, d)),
                   _batch_spec((b, 1, 1))),
    )
    return pl.pallas_call(
        enc_pred_cif_kernel,
        out_shape=(jax.ShapeDtypeStruct((b, t, d), jnp.bfloat16),
                   jax.ShapeDtypeStruct((b, max_tokens, d), jnp.float32),
                   jax.ShapeDtypeStruct((b, 1, 1), jnp.float32)),
        grid_spec=grid_spec,
        compiler_params=_cparams(1),
    )(speech_lengths.astype(jnp.int32), text_lengths.astype(jnp.int32), speech, *ws)


def run_decoder_layer(semantic, enc, speech_lengths, p):
    b, l, d = semantic.shape
    ws = [_bf16(p["dec_wq"]), _bf16(p["dec_wk"]), _bf16(p["dec_wv"]), _bf16(p["dec_wo"]),
          _bf16(p["dec_w1"]), p["dec_b1"], _bf16(p["dec_w2"]), p["dec_b2"],
          p["dec_g1"], p["dec_bl1"], p["dec_g2"], p["dec_bl2"]]
    grid_spec = pltpu.PrefetchScalarGridSpec(
        num_scalar_prefetch=1,
        grid=(b,),
        in_specs=[_batch_spec(semantic.shape), _batch_spec(enc.shape)]
                 + [_weight_spec() for _ in ws],
        out_specs=_batch_spec((b, l, d)),
    )
    return pl.pallas_call(
        decoder_kernel,
        out_shape=jax.ShapeDtypeStruct((b, l, d), jnp.bfloat16),
        grid_spec=grid_spec,
        compiler_params=_cparams(1),
    )(speech_lengths.astype(jnp.int32), semantic, enc, *ws)


def run_vocab_proj(hidden2d_bf16, wout, bout):
    r, d = hidden2d_bf16.shape
    v = wout.shape[1]
    lim = _vmem_limit_bytes() or (48 << 20)
    big = lim >= (72 << 20)                       # 128 MiB parts (v5e/v6e)
    tr_t, tv_t = (512, 1024) if big else (256, 512)
    tr = tr_t if r >= tr_t else _round_up(r, 16)
    tv = tv_t if v >= tv_t else _round_up(v, 128)
    r_pad, v_pad = _round_up(r, tr), _round_up(v, tv)
    h = hidden2d_bf16 if r_pad == r else jnp.pad(hidden2d_bf16, ((0, r_pad - r), (0, 0)))
    w = _bf16(wout)
    w = w if v_pad == v else jnp.pad(w, ((0, 0), (0, v_pad - v)))
    bb = bout if v_pad == v else jnp.pad(bout, ((0, 0), (0, v_pad - v)))
    out = pl.pallas_call(
        vocab_kernel,
        out_shape=jax.ShapeDtypeStruct((r_pad, v_pad), jnp.float32),
        # vocab tiles OUTER, row tiles INNER: the (D, tv) weight tile stays
        # VMEM-resident across the whole inner row loop (weight streamed once).
        grid=(v_pad // tv, r_pad // tr),
        in_specs=[pl.BlockSpec((tr, d), lambda jv, ir: (ir, 0)),
                  pl.BlockSpec((d, tv), lambda jv, ir: (0, jv)),
                  pl.BlockSpec((1, tv), lambda jv, ir: (0, jv))],
        out_specs=pl.BlockSpec((tr, tv), lambda jv, ir: (ir, jv)),
        compiler_params=_cparams(2),
    )(h, w, bb)
    return out[:r, :v]


# ---------------------------- Paraformer.forward ------------------------------
@jax.jit
def paraformer_forward(params, speech, speech_lengths, text, text_lengths):
    b, t, _ = speech.shape
    l = text.shape[1]
    d = params["w_in"].shape[1]

    # encode() + _calc_att_loss() predictor/CIF (training path) — single fused kernel
    encoder_out, pre_acoustic_embeds, ptl = run_encoder_predictor_cif(
        speech, speech_lengths, text_lengths, l, params)
    pre_token_length = ptl[:, 0, 0]                                   # (B,)

    # sampling_ratio = 0.0  =>  sematic_embeds = pre_acoustic_embeds
    hidden = run_decoder_layer(pre_acoustic_embeds, encoder_out, speech_lengths, params)
    decoder_out = run_vocab_proj(hidden.reshape(b * l, d),
                                 params["dec_wout"], params["dec_bout"]).reshape(b, l, -1)

    # LabelSmoothingLoss (smoothing=0, ignore_id=-1, normalize by batch)
    tgt_len = text_lengths.astype(jnp.float32)
    tgt_valid = text != IGNORE_ID
    labels = jnp.where(tgt_valid, text, 0)
    logp = jax.nn.log_softmax(decoder_out, axis=-1)
    nll = -jnp.take_along_axis(logp, labels[..., None], axis=-1)[..., 0]
    loss_att = jnp.sum(jnp.where(tgt_valid, nll, 0.0)) / b

    # th_accuracy
    pred = jnp.argmax(decoder_out, axis=-1)
    n_valid = jnp.maximum(jnp.sum(tgt_valid), 1)
    acc_att = jnp.sum((pred == text) & tgt_valid).astype(jnp.float32) / n_valid

    # mae_loss (normalize by batch)
    loss_pre = jnp.sum(jnp.abs(tgt_len - pre_token_length)) / b

    # ctc_weight == 0.0
    loss = loss_att + loss_pre * PREDICTOR_WEIGHT

    stats = {
        "loss_att": loss_att,
        "pre_loss_att": None,
        "acc": acc_att,
        "loss_pre": loss_pre,
        "loss": loss,
        "batch_size": b,
    }
    weight = jnp.float32(b)
    return loss, stats, weight


# ------------------------------- parameters -----------------------------------
def init_params(key, f, d, h, v):
    def nrm(k, shape, scale=0.1):
        return scale * jax.random.normal(k, shape, jnp.float32)

    ks = iter(jax.random.split(key, 40))
    p = {
        "w_in": nrm(next(ks), (f, d)), "b_in": nrm(next(ks), (1, d)),
        "enc_wq": nrm(next(ks), (d, d)), "enc_wk": nrm(next(ks), (d, d)),
        "enc_wv": nrm(next(ks), (d, d)), "enc_wo": nrm(next(ks), (d, d)),
        "enc_w1": nrm(next(ks), (d, h)), "enc_b1": nrm(next(ks), (1, h)),
        "enc_w2": nrm(next(ks), (h, d)), "enc_b2": nrm(next(ks), (1, d)),
        "enc_g1": jnp.ones((1, d), jnp.float32), "enc_be1": jnp.zeros((1, d), jnp.float32),
        "enc_g2": jnp.ones((1, d), jnp.float32), "enc_be2": jnp.zeros((1, d), jnp.float32),
        "pre_wc": nrm(next(ks), (3, d, d)), "pre_bc": nrm(next(ks), (1, d)),
        "pre_wo": nrm(next(ks), (d, 1)), "pre_bo": nrm(next(ks), (1, 1)),
        "dec_wq": nrm(next(ks), (d, d)), "dec_wk": nrm(next(ks), (d, d)),
        "dec_wv": nrm(next(ks), (d, d)), "dec_wo": nrm(next(ks), (d, d)),
        "dec_w1": nrm(next(ks), (d, h)), "dec_b1": nrm(next(ks), (1, h)),
        "dec_w2": nrm(next(ks), (h, d)), "dec_b2": nrm(next(ks), (1, d)),
        "dec_g1": jnp.ones((1, d), jnp.float32), "dec_bl1": jnp.zeros((1, d), jnp.float32),
        "dec_g2": jnp.ones((1, d), jnp.float32), "dec_bl2": jnp.zeros((1, d), jnp.float32),
        "dec_wout": nrm(next(ks), (d, v)), "dec_bout": nrm(next(ks), (1, v)),
    }
    return p


# TODO(synk): CTC forward-backward loss (ctc_weight>0), the sampler's
# randperm-based scatter (sampling_ratio>0), and beam-search/tokenizer inference
# have no clean Pallas equivalent and are disabled via legal config.

if __name__ == "__main__":
    # MXU/lane-friendly small shapes (D,H multiples of 128; T multiple of 128).
    B, T, F, D, H, V, L = 2, 128, 80, 128, 256, 500, 16

    key = jax.random.PRNGKey(0)
    k_sp, k_tx = jax.random.split(key)
    speech = jax.random.normal(k_sp, (B, T, F), jnp.float32)
    speech_lengths = jnp.array([T, T - 32], jnp.int32)
    text_lengths = jnp.array([L, L - 5], jnp.int32)
    text_raw = jax.random.randint(k_tx, (B, L), 3, V)
    valid = jnp.arange(L)[None, :] < text_lengths[:, None]
    text = jnp.where(valid, text_raw, IGNORE_ID).astype(jnp.int32)

    params = init_params(jax.random.PRNGKey(42), F, D, H, V)

    loss, stats, weight = paraformer_forward(params, speech, speech_lengths,
                                             text, text_lengths)
    jax.block_until_ready(loss)
    print("KERNEL_OK")
</pallas_src>

<mosaic_0001>
module attributes {stable_mosaic.version = 11 : i64} {
  func.func @enc_pred_cif_kernel(%arg0: i32, %arg1: memref<2xi32, #tpu.memory_space<smem>>, %arg2: memref<2xi32, #tpu.memory_space<smem>>, %arg3: memref<1x128x80xf32, #tpu.memory_space<vmem>>, %arg4: memref<80x128xbf16, #tpu.memory_space<vmem>>, %arg5: memref<1x128xf32, #tpu.memory_space<vmem>>, %arg6: memref<128x128xbf16, #tpu.memory_space<vmem>>, %arg7: memref<128x128xbf16, #tpu.memory_space<vmem>>, %arg8: memref<128x128xbf16, #tpu.memory_space<vmem>>, %arg9: memref<128x128xbf16, #tpu.memory_space<vmem>>, %arg10: memref<128x256xbf16, #tpu.memory_space<vmem>>, %arg11: memref<1x256xf32, #tpu.memory_space<vmem>>, %arg12: memref<256x128xbf16, #tpu.memory_space<vmem>>, %arg13: memref<1x128xf32, #tpu.memory_space<vmem>>, %arg14: memref<1x128xf32, #tpu.memory_space<vmem>>, %arg15: memref<1x128xf32, #tpu.memory_space<vmem>>, %arg16: memref<1x128xf32, #tpu.memory_space<vmem>>, %arg17: memref<1x128xf32, #tpu.memory_space<vmem>>, %arg18: memref<128x128xbf16, #tpu.memory_space<vmem>>, %arg19: memref<128x128xbf16, #tpu.memory_space<vmem>>, %arg20: memref<128x128xbf16, #tpu.memory_space<vmem>>, %arg21: memref<1x128xf32, #tpu.memory_space<vmem>>, %arg22: memref<1x128xf32, #tpu.memory_space<vmem>>, %arg23: memref<1x1xf32, #tpu.memory_space<vmem>>, %arg24: memref<1x128x128xbf16, #tpu.memory_space<vmem>>, %arg25: memref<1x16x128xf32, #tpu.memory_space<vmem>>, %arg26: memref<1x1x1xf32, #tpu.memory_space<vmem>>) attributes {dimension_semantics = [#tpu.dimension_semantics<parallel>], iteration_bounds = array<i64: 2>, scalar_prefetch = 2 : i64, scratch_operands = 0 : i64, tpu.core_type = #tpu.core_type<tc>, window_params = [{transform_indices = @transform_0, window_bounds = array<i64: 1, 128, 80>}, {pipeline_mode = #tpu.pipeline_mode<synchronous>, transform_indices = @transform_1, window_bounds = array<i64: 80, 128>}, {pipeline_mode = #tpu.pipeline_mode<synchronous>, transform_indices = @transform_2, window_bounds = array<i64: 1, 128>}, {pipeline_mode = #tpu.pipeline_mode<synchronous>, transform_indices = @transform_3, window_bounds = array<i64: 128, 128>}, {pipeline_mode = #tpu.pipeline_mode<synchronous>, transform_indices = @transform_4, window_bounds = array<i64: 128, 128>}, {pipeline_mode = #tpu.pipeline_mode<synchronous>, transform_indices = @transform_5, window_bounds = array<i64: 128, 128>}, {pipeline_mode = #tpu.pipeline_mode<synchronous>, transform_indices = @transform_6, window_bounds = array<i64: 128, 128>}, {pipeline_mode = #tpu.pipeline_mode<synchronous>, transform_indices = @transform_7, window_bounds = array<i64: 128, 256>}, {pipeline_mode = #tpu.pipeline_mode<synchronous>, transform_indices = @transform_8, window_bounds = array<i64: 1, 256>}, {pipeline_mode = #tpu.pipeline_mode<synchronous>, transform_indices = @transform_9, window_bounds = array<i64: 256, 128>}, {pipeline_mode = #tpu.pipeline_mode<synchronous>, transform_indices = @transform_10, window_bounds = array<i64: 1, 128>}, {pipeline_mode = #tpu.pipeline_mode<synchronous>, transform_indices = @transform_11, window_bounds = array<i64: 1, 128>}, {pipeline_mode = #tpu.pipeline_mode<synchronous>, transform_indices = @transform_12, window_bounds = array<i64: 1, 128>}, {pipeline_mode = #tpu.pipeline_mode<synchronous>, transform_indices = @transform_13, window_bounds = array<i64: 1, 128>}, {pipeline_mode = #tpu.pipeline_mode<synchronous>, transform_indices = @transform_14, window_bounds = array<i64: 1, 128>}, {pipeline_mode = #tpu.pipeline_mode<synchronous>, transform_indices = @transform_15, window_bounds = array<i64: 128, 128>}, {pipeline_mode = #tpu.pipeline_mode<synchronous>, transform_indices = @transform_16, window_bounds = array<i64: 128, 128>}, {pipeline_mode = #tpu.pipeline_mode<synchronous>, transform_indices = @transform_17, window_bounds = array<i64: 128, 128>}, {pipeline_mode = #tpu.pipeline_mode<synchronous>, transform_indices = @transform_18, window_bounds = array<i64: 1, 128>}, {pipeline_mode = #tpu.pipeline_mode<synchronous>, transform_indices = @transform_19, window_bounds = array<i64: 1, 128>}, {pipeline_mode = #tpu.pipeline_mode<synchronous>, transform_indices = @transform_20, window_bounds = array<i64: 1, 1>}, {transform_indices = @transform_21, window_bounds = array<i64: 1, 128, 128>}, {transform_indices = @transform_22, window_bounds = array<i64: 1, 16, 128>}, {transform_indices = @transform_23, window_bounds = array<i64: 1, 1, 1>}]} {
    %c0 = arith.constant 0 : index
    %c0_0 = arith.constant 0 : index
    %c0_1 = arith.constant 0 : index
    %0 = vector.load %arg3[%c0, %c0_0, %c0_1] : memref<1x128x80xf32, #tpu.memory_space<vmem>>, vector<1x128x80xf32>
    %1 = vector.shape_cast %0 : vector<1x128x80xf32> to vector<128x80xf32>
    %2 = tpu.iota {dimensions = array<i32: 1>} : vector<1x128xi32>
    %3 = arith.index_cast %arg0 : i32 to index
    %4 = memref.load %arg1[%3] : memref<2xi32, #tpu.memory_space<smem>>
    %5 = vector.broadcast %4 : i32 to vector<1x128xi32>
    %6 = arith.cmpi slt, %2, %5 : vector<1x128xi32>
    %7 = arith.extui %6 : vector<1x128xi1> to vector<1x128xi32>
    %8 = arith.sitofp %7 : vector<1x128xi32> to vector<1x128xf32>
    %9 = arith.truncf %1 : vector<128x80xf32> to vector<128x80xbf16>
    %c0_2 = arith.constant 0 : index
    %c0_3 = arith.constant 0 : index
    %10 = vector.load %arg4[%c0_2, %c0_3] : memref<80x128xbf16, #tpu.memory_space<vmem>>, vector<80x128xbf16>
    %cst = arith.constant dense<0.000000e+00> : vector<128x128xf32>
    %11 = tpu.matmul %9, %10, %cst {dimension_numbers = #tpu.dot_dimension_numbers<[1], [0], [0], [1], [0, 0, 1, 1], [], []>} : vector<128x80xbf16>, vector<80x128xbf16>, vector<128x128xf32> -> vector<128x128xf32>
    %c0_4 = arith.constant 0 : index
    %c0_5 = arith.constant 0 : index
    %12 = vector.load %arg5[%c0_4, %c0_5] : memref<1x128xf32, #tpu.memory_space<vmem>>, vector<1x128xf32>
    %13 = vector.broadcast %12 : vector<1x128xf32> to vector<128x128xf32>
    %14 = arith.addf %11, %13 : vector<128x128xf32>
    %15 = arith.truncf %14 : vector<128x128xf32> to vector<128x128xbf16>
    %c0_6 = arith.constant 0 : index
    %c0_7 = arith.constant 0 : index
    %16 = vector.load %arg6[%c0_6, %c0_7] : memref<128x128xbf16, #tpu.memory_space<vmem>>, vector<128x128xbf16>
    %cst_8 = arith.constant dense<0.000000e+00> : vector<128x128xf32>
    %17 = tpu.matmul %15, %16, %cst_8 {dimension_numbers = #tpu.dot_dimension_numbers<[1], [0], [0], [1], [0, 0, 1, 1], [], []>} : vector<128x128xbf16>, vector<128x128xbf16>, vector<128x128xf32> -> vector<128x128xf32>
    %18 = arith.truncf %17 : vector<128x128xf32> to vector<128x128xbf16>
    %c0_9 = arith.constant 0 : index
    %c0_10 = arith.constant 0 : index
    %19 = vector.load %arg7[%c0_9, %c0_10] : memref<128x128xbf16, #tpu.memory_space<vmem>>, vector<128x128xbf16>
    %cst_11 = arith.constant dense<0.000000e+00> : vector<128x128xf32>
    %20 = tpu.matmul %15, %19, %cst_11 {dimension_numbers = #tpu.dot_dimension_numbers<[1], [0], [0], [1], [0, 0, 1, 1], [], []>} : vector<128x128xbf16>, vector<128x128xbf16>, vector<128x128xf32> -> vector<128x128xf32>
    %21 = arith.truncf %20 : vector<128x128xf32> to vector<128x128xbf16>
    %c0_12 = arith.constant 0 : index
    %c0_13 = arith.constant 0 : index
    %22 = vector.load %arg8[%c0_12, %c0_13] : memref<128x128xbf16, #tpu.memory_space<vmem>>, vector<128x128xbf16>
    %cst_14 = arith.constant dense<0.000000e+00> : vector<128x128xf32>
    %23 = tpu.matmul %15, %22, %cst_14 {dimension_numbers = #tpu.dot_dimension_numbers<[1], [0], [0], [1], [0, 0, 1, 1], [], []>} : vector<128x128xbf16>, vector<128x128xbf16>, vector<128x128xf32> -> vector<128x128xf32>
    %24 = arith.truncf %23 : vector<128x128xf32> to vector<128x128xbf16>
    %cst_15 = arith.constant -1.000000e+30 : f32
    %25 = vector.broadcast %cst_15 : f32 to vector<128x1xf32>
    %cst_16 = arith.constant 0.000000e+00 : f32
    %26 = vector.broadcast %cst_16 : f32 to vector<128x1xf32>
    %cst_17 = arith.constant 0.000000e+00 : f32
    %27 = vector.broadcast %cst_17 : f32 to vector<128x128xf32>
    %28 = vector.extract_strided_slice %21 {offsets = [0, 0], sizes = [128, 128], strides = [1, 1]} : vector<128x128xbf16> to vector<128x128xbf16>
    %29 = vector.extract_strided_slice %24 {offsets = [0, 0], sizes = [128, 128], strides = [1, 1]} : vector<128x128xbf16> to vector<128x128xbf16>
    %30 = vector.extract_strided_slice %8 {offsets = [0, 0], sizes = [1, 128], strides = [1, 1]} : vector<1x128xf32> to vector<1x128xf32>
    %cst_18 = arith.constant dense<0.000000e+00> : vector<128x128xf32>
    %31 = tpu.matmul %18, %28, %cst_18 {dimension_numbers = #tpu.dot_dimension_numbers<[1], [1], [0], [0], [0, 0, 1, 0], [], []>} : vector<128x128xbf16>, vector<128x128xbf16>, vector<128x128xf32> -> vector<128x128xf32>
    %cst_19 = arith.constant 0.0883883461 : f32
    %32 = vector.broadcast %cst_19 : f32 to vector<128x128xf32>
    %33 = arith.mulf %31, %32 : vector<128x128xf32>
    %cst_20 = arith.constant 1.000000e+00 : f32
    %34 = vector.broadcast %cst_20 : f32 to vector<1x128xf32>
    %35 = arith.subf %30, %34 : vector<1x128xf32>
    %cst_21 = arith.constant 1.000000e+30 : f32
    %36 = vector.broadcast %cst_21 : f32 to vector<1x128xf32>
    %37 = arith.mulf %35, %36 : vector<1x128xf32>
    %38 = vector.broadcast %37 : vector<1x128xf32> to vector<128x128xf32>
    %39 = arith.addf %33, %38 : vector<128x128xf32>
    %cst_22 = arith.constant dense<0xFF800000> : vector<128xf32>
    %40 = vector.multi_reduction <maximumf>, %39, %cst_22 [1] : vector<128x128xf32> to vector<128xf32>
    %41 = vector.shape_cast %40 : vector<128xf32> to vector<128x1xf32>
    %42 = arith.maximumf %25, %41 : vector<128x1xf32>
    %43 = arith.subf %25, %42 : vector<128x1xf32>
    %44 = math.exp %43 : vector<128x1xf32>
    %45 = vector.broadcast %42 : vector<128x1xf32> to vector<128x128xf32>
    %46 = arith.subf %39, %45 : vector<128x128xf32>
    %47 = math.exp %46 : vector<128x128xf32>
    %48 = arith.mulf %44, %26 : vector<128x1xf32>
    %cst_23 = arith.constant dense<0.000000e+00> : vector<128xf32>
    %49 = vector.multi_reduction <add>, %47, %cst_23 [1] : vector<128x128xf32> to vector<128xf32>
    %50 = vector.shape_cast %49 : vector<128xf32> to vector<128x1xf32>
    %51 = arith.addf %48, %50 : vector<128x1xf32>
    %52 = vector.broadcast %44 : vector<128x1xf32> to vector<128x128xf32>
    %53 = arith.mulf %52, %27 : vector<128x128xf32>
    %54 = arith.truncf %47 : vector<128x128xf32> to vector<128x128xbf16>
    %cst_24 = arith.constant dense<0.000000e+00> : vector<128x128xf32>
    %55 = tpu.matmul %54, %29, %cst_24 {dimension_numbers = #tpu.dot_dimension_numbers<[1], [0], [0], [1], [0, 0, 1, 1], [], []>} : vector<128x128xbf16>, vector<128x128xbf16>, vector<128x128xf32> -> vector<128x128xf32>
    %56 = arith.addf %53, %55 : vector<128x128xf32>
    %57 = tpu.reciprocal %51 {approx = true} : vector<128x1xf32> -> vector<128x1xf32>
    %58 = vector.broadcast %57 : vector<128x1xf32> to vector<128x128xf32>
    %59 = arith.mulf %56, %58 : vector<128x128xf32>
    %60 = arith.truncf %59 : vector<128x128xf32> to vector<128x128xbf16>
    %c0_25 = arith.constant 0 : index
    %c0_26 = arith.constant 0 : index
    %61 = vector.load %arg9[%c0_25, %c0_26] : memref<128x128xbf16, #tpu.memory_space<vmem>>, vector<128x128xbf16>
    %cst_27 = arith.constant dense<0.000000e+00> : vector<128x128xf32>
    %62 = tpu.matmul %60, %61, %cst_27 {dimension_numbers = #tpu.dot_dimension_numbers<[1], [0], [0], [1], [0, 0, 1, 1], [], []>} : vector<128x128xbf16>, vector<128x128xbf16>, vector<128x128xf32> -> vector<128x128xf32>
    %63 = arith.addf %14, %62 : vector<128x128xf32>
    %c0_28 = arith.constant 0 : index
    %c0_29 = arith.constant 0 : index
    %64 = vector.load %arg14[%c0_28, %c0_29] : memref<1x128xf32, #tpu.memory_space<vmem>>, vector<1x128xf32>
    %c0_30 = arith.constant 0 : index
    %c0_31 = arith.constant 0 : index
    %65 = vector.load %arg15[%c0_30, %c0_31] : memref<1x128xf32, #tpu.memory_space<vmem>>, vector<1x128xf32>
    %cst_32 = arith.constant dense<0.000000e+00> : vector<128xf32>
    %66 = vector.multi_reduction <add>, %63, %cst_32 [1] : vector<128x128xf32> to vector<128xf32>
    %67 = vector.shape_cast %66 : vector<128xf32> to vector<128x1xf32>
    %cst_33 = arith.constant 1.280000e+02 : f32
    %68 = vector.broadcast %cst_33 : f32 to vector<128x1xf32>
    %69 = arith.divf %67, %68 : vector<128x1xf32>
    %70 = vector.broadcast %69 : vector<128x1xf32> to vector<128x128xf32>
    %71 = arith.subf %63, %70 : vector<128x128xf32>
    %72 = arith.mulf %71, %71 : vector<128x128xf32>
    %cst_34 = arith.constant dense<0.000000e+00> : vector<128xf32>
    %73 = vector.multi_reduction <add>, %72, %cst_34 [1] : vector<128x128xf32> to vector<128xf32>
    %74 = vector.shape_cast %73 : vector<128xf32> to vector<128x1xf32>
    %cst_35 = arith.constant 1.280000e+02 : f32
    %75 = vector.broadcast %cst_35 : f32 to vector<128x1xf32>
    %76 = arith.divf %74, %75 : vector<128x1xf32>
    %77 = vector.broadcast %69 : vector<128x1xf32> to vector<128x128xf32>
    %78 = arith.subf %63, %77 : vector<128x128xf32>
    %cst_36 = arith.constant 9.99999974E-6 : f32
    %79 = vector.broadcast %cst_36 : f32 to vector<128x1xf32>
    %80 = arith.addf %76, %79 : vector<128x1xf32>
    %81 = math.rsqrt %80 : vector<128x1xf32>
    %82 = vector.broadcast %81 : vector<128x1xf32> to vector<128x128xf32>
    %83 = arith.mulf %78, %82 : vector<128x128xf32>
    %84 = vector.broadcast %64 : vector<1x128xf32> to vector<128x128xf32>
    %85 = arith.mulf %83, %84 : vector<128x128xf32>
    %86 = vector.broadcast %65 : vector<1x128xf32> to vector<128x128xf32>
    %87 = arith.addf %85, %86 : vector<128x128xf32>
    %88 = arith.truncf %87 : vector<128x128xf32> to vector<128x128xbf16>
    %c0_37 = arith.constant 0 : index
    %c0_38 = arith.constant 0 : index
    %89 = vector.load %arg10[%c0_37, %c0_38] : memref<128x256xbf16, #tpu.memory_space<vmem>>, vector<128x256xbf16>
    %cst_39 = arith.constant dense<0.000000e+00> : vector<128x256xf32>
    %90 = tpu.matmul %88, %89, %cst_39 {dimension_numbers = #tpu.dot_dimension_numbers<[1], [0], [0], [1], [0, 0, 1, 1], [], []>} : vector<128x128xbf16>, vector<128x256xbf16>, vector<128x256xf32> -> vector<128x256xf32>
    %c0_40 = arith.constant 0 : index
    %c0_41 = arith.constant 0 : index
    %91 = vector.load %arg11[%c0_40, %c0_41] : memref<1x256xf32, #tpu.memory_space<vmem>>, vector<1x256xf32>
    %92 = vector.broadcast %91 : vector<1x256xf32> to vector<128x256xf32>
    %93 = arith.addf %90, %92 : vector<128x256xf32>
    %cst_42 = arith.constant 0.000000e+00 : f32
    %94 = vector.broadcast %cst_42 : f32 to vector<128x256xf32>
    %95 = arith.maximumf %93, %94 : vector<128x256xf32>
    %96 = arith.truncf %95 : vector<128x256xf32> to vector<128x256xbf16>
    %c0_43 = arith.constant 0 : index
    %c0_44 = arith.constant 0 : index
    %97 = vector.load %arg12[%c0_43, %c0_44] : memref<256x128xbf16, #tpu.memory_space<vmem>>, vector<256x128xbf16>
    %cst_45 = arith.constant dense<0.000000e+00> : vector<128x128xf32>
    %98 = tpu.matmul %96, %97, %cst_45 {dimension_numbers = #tpu.dot_dimension_numbers<[1], [0], [0], [1], [0, 0, 1, 1], [], []>} : vector<128x256xbf16>, vector<256x128xbf16>, vector<128x128xf32> -> vector<128x128xf32>
    %c0_46 = arith.constant 0 : index
    %c0_47 = arith.constant 0 : index
    %99 = vector.load %arg13[%c0_46, %c0_47] : memref<1x128xf32, #tpu.memory_space<vmem>>, vector<1x128xf32>
    %100 = vector.broadcast %99 : vector<1x128xf32> to vector<128x128xf32>
    %101 = arith.addf %98, %100 : vector<128x128xf32>
    %102 = arith.addf %87, %101 : vector<128x128xf32>
    %c0_48 = arith.constant 0 : index
    %c0_49 = arith.constant 0 : index
    %103 = vector.load %arg16[%c0_48, %c0_49] : memref<1x128xf32, #tpu.memory_space<vmem>>, vector<1x128xf32>
    %c0_50 = arith.constant 0 : index
    %c0_51 = arith.constant 0 : index
    %104 = vector.load %arg17[%c0_50, %c0_51] : memref<1x128xf32, #tpu.memory_space<vmem>>, vector<1x128xf32>
    %cst_52 = arith.constant dense<0.000000e+00> : vector<128xf32>
    %105 = vector.multi_reduction <add>, %102, %cst_52 [1] : vector<128x128xf32> to vector<128xf32>
    %106 = vector.shape_cast %105 : vector<128xf32> to vector<128x1xf32>
    %cst_53 = arith.constant 1.280000e+02 : f32
    %107 = vector.broadcast %cst_53 : f32 to vector<128x1xf32>
    %108 = arith.divf %106, %107 : vector<128x1xf32>
    %109 = vector.broadcast %108 : vector<128x1xf32> to vector<128x128xf32>
    %110 = arith.subf %102, %109 : vector<128x128xf32>
    %111 = arith.mulf %110, %110 : vector<128x128xf32>
    %cst_54 = arith.constant dense<0.000000e+00> : vector<128xf32>
    %112 = vector.multi_reduction <add>, %111, %cst_54 [1] : vector<128x128xf32> to vector<128xf32>
    %113 = vector.shape_cast %112 : vector<128xf32> to vector<128x1xf32>
    %cst_55 = arith.constant 1.280000e+02 : f32
    %114 = vector.broadcast %cst_55 : f32 to vector<128x1xf32>
    %115 = arith.divf %113, %114 : vector<128x1xf32>
    %116 = vector.broadcast %108 : vector<128x1xf32> to vector<128x128xf32>
    %117 = arith.subf %102, %116 : vector<128x128xf32>
    %cst_56 = arith.constant 9.99999974E-6 : f32
    %118 = vector.broadcast %cst_56 : f32 to vector<128x1xf32>
    %119 = arith.addf %115, %118 : vector<128x1xf32>
    %120 = math.rsqrt %119 : vector<128x1xf32>
    %121 = vector.broadcast %120 : vector<128x1xf32> to vector<128x128xf32>
    %122 = arith.mulf %117, %121 : vector<128x128xf32>
    %123 = vector.broadcast %103 : vector<1x128xf32> to vector<128x128xf32>
    %124 = arith.mulf %122, %123 : vector<128x128xf32>
    %125 = vector.broadcast %104 : vector<1x128xf32> to vector<128x128xf32>
    %126 = arith.addf %124, %125 : vector<128x128xf32>
    %127 = arith.truncf %126 : vector<128x128xf32> to vector<128x128xbf16>
    %c0_57 = arith.constant 0 : index
    %c0_58 = arith.constant 0 : index
    %c0_59 = arith.constant 0 : index
    %128 = vector.load %arg24[%c0_57, %c0_58, %c0_59] : memref<1x128x128xbf16, #tpu.memory_space<vmem>>, vector<1x128x128xbf16>
    %129 = vector.shape_cast %128 : vector<1x128x128xbf16> to vector<128x128xbf16>
    %130 = vector.shape_cast %127 : vector<128x128xbf16> to vector<1x128x128xbf16>
    tpu.vector_store %arg24[%c0_57, %c0_58, %c0_59], %130 {strides = array<i32>} : memref<1x128x128xbf16, #tpu.memory_space<vmem>>, vector<1x128x128xbf16>,
    %131 = tpu.iota {dimensions = array<i32: 0>} : vector<128x128xi32>
    %c0_60 = arith.constant 0 : index
    %c0_61 = arith.constant 0 : index
    %132 = vector.load %arg18[%c0_60, %c0_61] : memref<128x128xbf16, #tpu.memory_space<vmem>>, vector<128x128xbf16>
    %cst_62 = arith.constant dense<0.000000e+00> : vector<128x128xf32>
    %133 = tpu.matmul %127, %132, %cst_62 {dimension_numbers = #tpu.dot_dimension_numbers<[1], [0], [0], [1], [0, 0, 1, 1], [], []>} : vector<128x128xbf16>, vector<128x128xbf16>, vector<128x128xf32> -> vector<128x128xf32>
    %c0_63 = arith.constant 0 : index
    %c0_64 = arith.constant 0 : index
    %134 = vector.load %arg19[%c0_63, %c0_64] : memref<128x128xbf16, #tpu.memory_space<vmem>>, vector<128x128xbf16>
    %cst_65 = arith.constant dense<0.000000e+00> : vector<128x128xf32>
    %135 = tpu.matmul %127, %134, %cst_65 {dimension_numbers = #tpu.dot_dimension_numbers<[1], [0], [0], [1], [0, 0, 1, 1], [], []>} : vector<128x128xbf16>, vector<128x128xbf16>, vector<128x128xf32> -> vector<128x128xf32>
    %c0_66 = arith.constant 0 : index
    %c0_67 = arith.constant 0 : index
    %136 = vector.load %arg20[%c0_66, %c0_67] : memref<128x128xbf16, #tpu.memory_space<vmem>>, vector<128x128xbf16>
    %cst_68 = arith.constant dense<0.000000e+00> : vector<128x128xf32>
    %137 = tpu.matmul %127, %136, %cst_68 {dimension_numbers = #tpu.dot_dimension_numbers<[1], [0], [0], [1], [0, 0, 1, 1], [], []>} : vector<128x128xbf16>, vector<128x128xbf16>, vector<128x128xf32> -> vector<128x128xf32>
    %c0_i32 = arith.constant 0 : i32
    %138 = vector.broadcast %c0_i32 : i32 to vector<128x128xi32>
    %139 = arith.cmpi sgt, %131, %138 : vector<128x128xi32>
    %c1_i32 = arith.constant 1 : i32
    %140 = tpu.dynamic_rotate %133 by %c1_i32 dim 0 : vector<128x128xf32>, i32 -> vector<128x128xf32>
    %cst_69 = arith.constant 0.000000e+00 : f32
    %141 = vector.broadcast %cst_69 : f32 to vector<128x128xf32>
    %142 = arith.select %139, %140, %141 : vector<128x128xi1>, vector<128x128xf32>
    %143 = arith.addf %142, %135 : vector<128x128xf32>
    %c127_i32 = arith.constant 127 : i32
    %144 = vector.broadcast %c127_i32 : i32 to vector<128x128xi32>
    %145 = arith.cmpi slt, %131, %144 : vector<128x128xi32>
    %c127_i32_70 = arith.constant 127 : i32
    %146 = tpu.dynamic_rotate %137 by %c127_i32_70 dim 0 : vector<128x128xf32>, i32 -> vector<128x128xf32>
    %cst_71 = arith.constant 0.000000e+00 : f32
    %147 = vector.broadcast %cst_71 : f32 to vector<128x128xf32>
    %148 = arith.select %145, %146, %147 : vector<128x128xi1>, vector<128x128xf32>
    %149 = arith.addf %143, %148 : vector<128x128xf32>
    %c0_72 = arith.constant 0 : index
    %c0_73 = arith.constant 0 : index
    %150 = vector.load %arg21[%c0_72, %c0_73] : memref<1x128xf32, #tpu.memory_space<vmem>>, vector<1x128xf32>
    %151 = vector.broadcast %150 : vector<1x128xf32> to vector<128x128xf32>
    %152 = arith.addf %149, %151 : vector<128x128xf32>
    %cst_74 = arith.constant 0.000000e+00 : f32
    %153 = vector.broadcast %cst_74 : f32 to vector<128x128xf32>
    %154 = arith.maximumf %152, %153 : vector<128x128xf32>
    %c0_75 = arith.constant 0 : index
    %c0_76 = arith.constant 0 : index
    %155 = vector.load %arg22[%c0_75, %c0_76] : memref<1x128xf32, #tpu.memory_space<vmem>>, vector<1x128xf32>
    %cst_77 = arith.constant dense<0.000000e+00> : vector<1x128xf32>
    %156 = tpu.matmul %155, %154, %cst_77 {dimension_numbers = #tpu.dot_dimension_numbers<[1], [1], [0], [0], [0, 0, 1, 0], [], []>} : vector<1x128xf32>, vector<128x128xf32>, vector<1x128xf32> -> vector<1x128xf32>
    %c0_78 = arith.constant 0 : index
    %c0_79 = arith.constant 0 : index
    %157 = vector.load %arg23[%c0_78, %c0_79] : memref<1x1xf32, #tpu.memory_space<vmem>>, vector<1x1xf32>
    %158 = vector.broadcast %157 : vector<1x1xf32> to vector<1x128xf32>
    %159 = arith.addf %156, %158 : vector<1x128xf32>
    %160 = arith.negf %159 : vector<1x128xf32>
    %161 = math.exp %160 : vector<1x128xf32>
    %cst_80 = arith.constant 1.000000e+00 : f32
    %162 = vector.broadcast %cst_80 : f32 to vector<1x128xf32>
    %163 = arith.addf %162, %161 : vector<1x128xf32>
    %164 = arith.divf %162, %163 : vector<1x128xf32>
    %165 = arith.mulf %164, %8 : vector<1x128xf32>
    %cst_81 = arith.constant dense<0.000000e+00> : vector<1xf32>
    %166 = vector.multi_reduction <add>, %165, %cst_81 [1] : vector<1x128xf32> to vector<1xf32>
    %167 = vector.shape_cast %166 : vector<1xf32> to vector<1x1xf32>
    %c0_82 = arith.constant 0 : index
    %c0_83 = arith.constant 0 : index
    %c0_84 = arith.constant 0 : index
    %168 = vector.load %arg26[%c0_82, %c0_83, %c0_84] : memref<1x1x1xf32, #tpu.memory_space<vmem>>, vector<1x1x1xf32>
    %169 = vector.shape_cast %168 : vector<1x1x1xf32> to vector<1x1xf32>
    %170 = vector.shape_cast %167 : vector<1x1xf32> to vector<1x1x1xf32>
    tpu.vector_store %arg26[%c0_82, %c0_83, %c0_84], %170 {strides = array<i32>} : memref<1x1x1xf32, #tpu.memory_space<vmem>>, vector<1x1x1xf32>,
    %171 = arith.index_cast %arg0 : i32 to index
    %172 = memref.load %arg2[%171] : memref<2xi32, #tpu.memory_space<smem>>
    %173 = arith.sitofp %172 : i32 to f32
    %cst_85 = arith.constant 9.99999997E-7 : f32
    %174 = vector.broadcast %cst_85 : f32 to vector<1x1xf32>
    %175 = arith.maximumf %167, %174 : vector<1x1xf32>
    %176 = tpu.reciprocal %175 {approx = true} : vector<1x1xf32> -> vector<1x1xf32>
    %177 = vector.broadcast %173 : f32 to vector<1x1xf32>
    %178 = arith.mulf %177, %176 : vector<1x1xf32>
    %179 = vector.broadcast %178 : vector<1x1xf32> to vector<1x128xf32>
    %180 = arith.mulf %165, %179 : vector<1x128xf32>
    %181 = tpu.iota {dimensions = array<i32: 1>} : vector<1x128xi32>
    %c1_i32_86 = arith.constant 1 : i32
    %182 = tpu.dynamic_rotate %180 by %c1_i32_86 dim 1 : vector<1x128xf32>, i32 -> vector<1x128xf32>
    %c1_i32_87 = arith.constant 1 : i32
    %183 = vector.broadcast %c1_i32_87 : i32 to vector<1x128xi32>
    %184 = arith.cmpi sge, %181, %183 : vector<1x128xi32>
    %cst_88 = arith.constant 0.000000e+00 : f32
    %185 = vector.broadcast %cst_88 : f32 to vector<1x128xf32>
    %186 = arith.select %184, %182, %185 : vector<1x128xi1>, vector<1x128xf32>
    %187 = arith.addf %180, %186 : vector<1x128xf32>
    %c2_i32 = arith.constant 2 : i32
    %188 = tpu.dynamic_rotate %187 by %c2_i32 dim 1 : vector<1x128xf32>, i32 -> vector<1x128xf32>
    %c2_i32_89 = arith.constant 2 : i32
    %189 = vector.broadcast %c2_i32_89 : i32 to vector<1x128xi32>
    %190 = arith.cmpi sge, %181, %189 : vector<1x128xi32>
    %cst_90 = arith.constant 0.000000e+00 : f32
    %191 = vector.broadcast %cst_90 : f32 to vector<1x128xf32>
    %192 = arith.select %190, %188, %191 : vector<1x128xi1>, vector<1x128xf32>
    %193 = arith.addf %187, %192 : vector<1x128xf32>
    %c4_i32 = arith.constant 4 : i32
    %194 = tpu.dynamic_rotate %193 by %c4_i32 dim 1 : vector<1x128xf32>, i32 -> vector<1x128xf32>
    %c4_i32_91 = arith.constant 4 : i32
    %195 = vector.broadcast %c4_i32_91 : i32 to vector<1x128xi32>
    %196 = arith.cmpi sge, %181, %195 : vector<1x128xi32>
    %cst_92 = arith.constant 0.000000e+00 : f32
    %197 = vector.broadcast %cst_92 : f32 to vector<1x128xf32>
    %198 = arith.select %196, %194, %197 : vector<1x128xi1>, vector<1x128xf32>
    %199 = arith.addf %193, %198 : vector<1x128xf32>
    %c8_i32 = arith.constant 8 : i32
    %200 = tpu.dynamic_rotate %199 by %c8_i32 dim 1 : vector<1x128xf32>, i32 -> vector<1x128xf32>
    %c8_i32_93 = arith.constant 8 : i32
    %201 = vector.broadcast %c8_i32_93 : i32 to vector<1x128xi32>
    %202 = arith.cmpi sge, %181, %201 : vector<1x128xi32>
    %cst_94 = arith.constant 0.000000e+00 : f32
    %203 = vector.broadcast %cst_94 : f32 to vector<1x128xf32>
    %204 = arith.select %202, %200, %203 : vector<1x128xi1>, vector<1x128xf32>
    %205 = arith.addf %199, %204 : vector<1x128xf32>
    %c16_i32 = arith.constant 16 : i32
    %206 = tpu.dynamic_rotate %205 by %c16_i32 dim 1 : vector<1x128xf32>, i32 -> vector<1x128xf32>
    %c16_i32_95 = arith.constant 16 : i32
    %207 = vector.broadcast %c16_i32_95 : i32 to vector<1x128xi32>
    %208 = arith.cmpi sge, %181, %207 : vector<1x128xi32>
    %cst_96 = arith.constant 0.000000e+00 : f32
    %209 = vector.broadcast %cst_96 : f32 to vector<1x128xf32>
    %210 = arith.select %208, %206, %209 : vector<1x128xi1>, vector<1x128xf32>
    %211 = arith.addf %205, %210 : vector<1x128xf32>
    %c32_i32 = arith.constant 32 : i32
    %212 = tpu.dynamic_rotate %211 by %c32_i32 dim 1 : vector<1x128xf32>, i32 -> vector<1x128xf32>
    %c32_i32_97 = arith.constant 32 : i32
    %213 = vector.broadcast %c32_i32_97 : i32 to vector<1x128xi32>
    %214 = arith.cmpi sge, %181, %213 : vector<1x128xi32>
    %cst_98 = arith.constant 0.000000e+00 : f32
    %215 = vector.broadcast %cst_98 : f32 to vector<1x128xf32>
    %216 = arith.select %214, %212, %215 : vector<1x128xi1>, vector<1x128xf32>
    %217 = arith.addf %211, %216 : vector<1x128xf32>
    %c64_i32 = arith.constant 64 : i32
    %218 = tpu.dynamic_rotate %217 by %c64_i32 dim 1 : vector<1x128xf32>, i32 -> vector<1x128xf32>
    %c64_i32_99 = arith.constant 64 : i32
    %219 = vector.broadcast %c64_i32_99 : i32 to vector<1x128xi32>
    %220 = arith.cmpi sge, %181, %219 : vector<1x128xi32>
    %cst_100 = arith.constant 0.000000e+00 : f32
    %221 = vector.broadcast %cst_100 : f32 to vector<1x128xf32>
    %222 = arith.select %220, %218, %221 : vector<1x128xi1>, vector<1x128xf32>
    %223 = arith.addf %217, %222 : vector<1x128xf32>
    %224 = arith.subf %223, %180 : vector<1x128xf32>
    %225 = tpu.iota {dimensions = array<i32: 0>} : vector<16x128xi32>
    %226 = arith.sitofp %225 : vector<16x128xi32> to vector<16x128xf32>
    %cst_101 = arith.constant 1.000000e+00 : f32
    %227 = vector.broadcast %cst_101 : f32 to vector<16x128xf32>
    %228 = arith.addf %226, %227 : vector<16x128xf32>
    %229 = vector.broadcast %223 : vector<1x128xf32> to vector<16x128xf32>
    %230 = arith.minimumf %229, %228 : vector<16x128xf32>
    %231 = vector.broadcast %224 : vector<1x128xf32> to vector<16x128xf32>
    %232 = arith.maximumf %231, %226 : vector<16x128xf32>
    %233 = arith.subf %230, %232 : vector<16x128xf32>
    %cst_102 = arith.constant 0.000000e+00 : f32
    %234 = vector.broadcast %cst_102 : f32 to vector<16x128xf32>
    %235 = arith.maximumf %233, %234 : vector<16x128xf32>
    %236 = arith.truncf %235 : vector<16x128xf32> to vector<16x128xbf16>
    %cst_103 = arith.constant dense<0.000000e+00> : vector<16x128xf32>
    %237 = tpu.matmul %236, %127, %cst_103 {dimension_numbers = #tpu.dot_dimension_numbers<[1], [0], [0], [1], [0, 0, 1, 1], [], []>} : vector<16x128xbf16>, vector<128x128xbf16>, vector<16x128xf32> -> vector<16x128xf32>
    %c0_104 = arith.constant 0 : index
    %c0_105 = arith.constant 0 : index
    %c0_106 = arith.constant 0 : index
    %238 = vector.load %arg25[%c0_104, %c0_105, %c0_106] : memref<1x16x128xf32, #tpu.memory_space<vmem>>, vector<1x16x128xf32>
    %239 = vector.shape_cast %238 : vector<1x16x128xf32> to vector<16x128xf32>
    %240 = vector.shape_cast %237 : vector<16x128xf32> to vector<1x16x128xf32>
    tpu.vector_store %arg25[%c0_104, %c0_105, %c0_106], %240 {strides = array<i32>} : memref<1x16x128xf32, #tpu.memory_space<vmem>>, vector<1x16x128xf32>,
    return
  }
  func.func @transform_0(%arg0: i32, %arg1: memref<2xi32, #tpu.memory_space<smem>>, %arg2: memref<2xi32, #tpu.memory_space<smem>>) -> (i32, i32, i32) {
    %c0_i32 = arith.constant 0 : i32
    %c0_i32_0 = arith.constant 0 : i32
    %c0_i32_1 = arith.constant 0 : i32
    return %arg0, %c0_i32, %c0_i32_0 : i32, i32, i32
  }
  func.func @transform_1(%arg0: i32, %arg1: memref<2xi32, #tpu.memory_space<smem>>, %arg2: memref<2xi32, #tpu.memory_space<smem>>) -> (i32, i32) {
    %c0_i32 = arith.constant 0 : i32
    %c0_i32_0 = arith.constant 0 : i32
    %c0_i32_1 = arith.constant 0 : i32
    return %c0_i32, %c0_i32_0 : i32, i32
  }
  func.func @transform_2(%arg0: i32, %arg1: memref<2xi32, #tpu.memory_space<smem>>, %arg2: memref<2xi32, #tpu.memory_space<smem>>) -> (i32, i32) {
    %c0_i32 = arith.constant 0 : i32
    %c0_i32_0 = arith.constant 0 : i32
    %c0_i32_1 = arith.constant 0 : i32
    return %c0_i32, %c0_i32_0 : i32, i32
  }
  func.func @transform_3(%arg0: i32, %arg1: memref<2xi32, #tpu.memory_space<smem>>, %arg2: memref<2xi32, #tpu.memory_space<smem>>) -> (i32, i32) {
    %c0_i32 = arith.constant 0 : i32
    %c0_i32_0 = arith.constant 0 : i32
    %c0_i32_1 = arith.constant 0 : i32
    return %c0_i32, %c0_i32_0 : i32, i32
  }
  func.func @transform_4(%arg0: i32, %arg1: memref<2xi32, #tpu.memory_space<smem>>, %arg2: memref<2xi32, #tpu.memory_space<smem>>) -> (i32, i32) {
    %c0_i32 = arith.constant 0 : i32
    %c0_i32_0 = arith.constant 0 : i32
    %c0_i32_1 = arith.constant 0 : i32
    return %c0_i32, %c0_i32_0 : i32, i32
  }
  func.func @transform_5(%arg0: i32, %arg1: memref<2xi32, #tpu.memory_space<smem>>, %arg2: memref<2xi32, #tpu.memory_space<smem>>) -> (i32, i32) {
    %c0_i32 = arith.constant 0 : i32
    %c0_i32_0 = arith.constant 0 : i32
    %c0_i32_1 = arith.constant 0 : i32
    return %c0_i32, %c0_i32_0 : i32, i32
  }
  func.func @transform_6(%arg0: i32, %arg1: memref<2xi32, #tpu.memory_space<smem>>, %arg2: memref<2xi32, #tpu.memory_space<smem>>) -> (i32, i32) {
    %c0_i32 = arith.constant 0 : i32
    %c0_i32_0 = arith.constant 0 : i32
    %c0_i32_1 = arith.constant 0 : i32
    return %c0_i32, %c0_i32_0 : i32, i32
  }
  func.func @transform_7(%arg0: i32, %arg1: memref<2xi32, #tpu.memory_space<smem>>, %arg2: memref<2xi32, #tpu.memory_space<smem>>) -> (i32, i32) {
    %c0_i32 = arith.constant 0 : i32
    %c0_i32_0 = arith.constant 0 : i32
    %c0_i32_1 = arith.constant 0 : i32
    return %c0_i32, %c0_i32_0 : i32, i32
  }
  func.func @transform_8(%arg0: i32, %arg1: memref<2xi32, #tpu.memory_space<smem>>, %arg2: memref<2xi32, #tpu.memory_space<smem>>) -> (i32, i32) {
    %c0_i32 = arith.constant 0 : i32
    %c0_i32_0 = arith.constant 0 : i32
    %c0_i32_1 = arith.constant 0 : i32
    return %c0_i32, %c0_i32_0 : i32, i32
  }
  func.func @transform_9(%arg0: i32, %arg1: memref<2xi32, #tpu.memory_space<smem>>, %arg2: memref<2xi32, #tpu.memory_space<smem>>) -> (i32, i32) {
    %c0_i32 = arith.constant 0 : i32
    %c0_i32_0 = arith.constant 0 : i32
    %c0_i32_1 = arith.constant 0 : i32
    return %c0_i32, %c0_i32_0 : i32, i32
  }
  func.func @transform_10(%arg0: i32, %arg1: memref<2xi32, #tpu.memory_space<smem>>, %arg2: memref<2xi32, #tpu.memory_space<smem>>) -> (i32, i32) {
    %c0_i32 = arith.constant 0 : i32
    %c0_i32_0 = arith.constant 0 : i32
    %c0_i32_1 = arith.constant 0 : i32
    return %c0_i32, %c0_i32_0 : i32, i32
  }
  func.func @transform_11(%arg0: i32, %arg1: memref<2xi32, #tpu.memory_space<smem>>, %arg2: memref<2xi32, #tpu.memory_space<smem>>) -> (i32, i32) {
    %c0_i32 = arith.constant 0 : i32
    %c0_i32_0 = arith.constant 0 : i32
    %c0_i32_1 = arith.constant 0 : i32
    return %c0_i32, %c0_i32_0 : i32, i32
  }
  func.func @transform_12(%arg0: i32, %arg1: memref<2xi32, #tpu.memory_space<smem>>, %arg2: memref<2xi32, #tpu.memory_space<smem>>) -> (i32, i32) {
    %c0_i32 = arith.constant 0 : i32
    %c0_i32_0 = arith.constant 0 : i32
    %c0_i32_1 = arith.constant 0 : i32
    return %c0_i32, %c0_i32_0 : i32, i32
  }
  func.func @transform_13(%arg0: i32, %arg1: memref<2xi32, #tpu.memory_space<smem>>, %arg2: memref<2xi32, #tpu.memory_space<smem>>) -> (i32, i32) {
    %c0_i32 = arith.constant 0 : i32
    %c0_i32_0 = arith.constant 0 : i32
    %c0_i32_1 = arith.constant 0 : i32
    return %c0_i32, %c0_i32_0 : i32, i32
  }
  func.func @transform_14(%arg0: i32, %arg1: memref<2xi32, #tpu.memory_space<smem>>, %arg2: memref<2xi32, #tpu.memory_space<smem>>) -> (i32, i32) {
    %c0_i32 = arith.constant 0 : i32
    %c0_i32_0 = arith.constant 0 : i32
    %c0_i32_1 = arith.constant 0 : i32
    return %c0_i32, %c0_i32_0 : i32, i32
  }
  func.func @transform_15(%arg0: i32, %arg1: memref<2xi32, #tpu.memory_space<smem>>, %arg2: memref<2xi32, #tpu.memory_space<smem>>) -> (i32, i32) {
    %c0_i32 = arith.constant 0 : i32
    %c0_i32_0 = arith.constant 0 : i32
    %c0_i32_1 = arith.constant 0 : i32
    return %c0_i32, %c0_i32_0 : i32, i32
  }
  func.func @transform_16(%arg0: i32, %arg1: memref<2xi32, #tpu.memory_space<smem>>, %arg2: memref<2xi32, #tpu.memory_space<smem>>) -> (i32, i32) {
    %c0_i32 = arith.constant 0 : i32
    %c0_i32_0 = arith.constant 0 : i32
    %c0_i32_1 = arith.constant 0 : i32
    return %c0_i32, %c0_i32_0 : i32, i32
  }
  func.func @transform_17(%arg0: i32, %arg1: memref<2xi32, #tpu.memory_space<smem>>, %arg2: memref<2xi32, #tpu.memory_space<smem>>) -> (i32, i32) {
    %c0_i32 = arith.constant 0 : i32
    %c0_i32_0 = arith.constant 0 : i32
    %c0_i32_1 = arith.constant 0 : i32
    return %c0_i32, %c0_i32_0 : i32, i32
  }
  func.func @transform_18(%arg0: i32, %arg1: memref<2xi32, #tpu.memory_space<smem>>, %arg2: memref<2xi32, #tpu.memory_space<smem>>) -> (i32, i32) {
    %c0_i32 = arith.constant 0 : i32
    %c0_i32_0 = arith.constant 0 : i32
    %c0_i32_1 = arith.constant 0 : i32
    return %c0_i32, %c0_i32_0 : i32, i32
  }
  func.func @transform_19(%arg0: i32, %arg1: memref<2xi32, #tpu.memory_space<smem>>, %arg2: memref<2xi32, #tpu.memory_space<smem>>) -> (i32, i32) {
    %c0_i32 = arith.constant 0 : i32
    %c0_i32_0 = arith.constant 0 : i32
    %c0_i32_1 = arith.constant 0 : i32
    return %c0_i32, %c0_i32_0 : i32, i32
  }
  func.func @transform_20(%arg0: i32, %arg1: memref<2xi32, #tpu.memory_space<smem>>, %arg2: memref<2xi32, #tpu.memory_space<smem>>) -> (i32, i32) {
    %c0_i32 = arith.constant 0 : i32
    %c0_i32_0 = arith.constant 0 : i32
    %c0_i32_1 = arith.constant 0 : i32
    return %c0_i32, %c0_i32_0 : i32, i32
  }
  func.func @transform_21(%arg0: i32, %arg1: memref<2xi32, #tpu.memory_space<smem>>, %arg2: memref<2xi32, #tpu.memory_space<smem>>) -> (i32, i32, i32) {
    %c0_i32 = arith.constant 0 : i32
    %c0_i32_0 = arith.constant 0 : i32
    %c0_i32_1 = arith.constant 0 : i32
    return %arg0, %c0_i32, %c0_i32_0 : i32, i32, i32
  }
  func.func @transform_22(%arg0: i32, %arg1: memref<2xi32, #tpu.memory_space<smem>>, %arg2: memref<2xi32, #tpu.memory_space<smem>>) -> (i32, i32, i32) {
    %c0_i32 = arith.constant 0 : i32
    %c0_i32_0 = arith.constant 0 : i32
    %c0_i32_1 = arith.constant 0 : i32
    return %arg0, %c0_i32, %c0_i32_0 : i32, i32, i32
  }
  func.func @transform_23(%arg0: i32, %arg1: memref<2xi32, #tpu.memory_space<smem>>, %arg2: memref<2xi32, #tpu.memory_space<smem>>) -> (i32, i32, i32) {
    %c0_i32 = arith.constant 0 : i32
    %c0_i32_0 = arith.constant 0 : i32
    %c0_i32_1 = arith.constant 0 : i32
    return %arg0, %c0_i32, %c0_i32_0 : i32, i32, i32
  }
}

module attributes {stable_mosaic.version = 11 : i64} {
  func.func @decoder_kernel(%arg0: i32, %arg1: memref<2xi32, #tpu.memory_space<smem>>, %arg2: memref<1x16x128xf32, #tpu.memory_space<vmem>>, %arg3: memref<1x128x128xbf16, #tpu.memory_space<vmem>>, %arg4: memref<128x128xbf16, #tpu.memory_space<vmem>>, %arg5: memref<128x128xbf16, #tpu.memory_space<vmem>>, %arg6: memref<128x128xbf16, #tpu.memory_space<vmem>>, %arg7: memref<128x128xbf16, #tpu.memory_space<vmem>>, %arg8: memref<128x256xbf16, #tpu.memory_space<vmem>>, %arg9: memref<1x256xf32, #tpu.memory_space<vmem>>, %arg10: memref<256x128xbf16, #tpu.memory_space<vmem>>, %arg11: memref<1x128xf32, #tpu.memory_space<vmem>>, %arg12: memref<1x128xf32, #tpu.memory_space<vmem>>, %arg13: memref<1x128xf32, #tpu.memory_space<vmem>>, %arg14: memref<1x128xf32, #tpu.memory_space<vmem>>, %arg15: memref<1x128xf32, #tpu.memory_space<vmem>>, %arg16: memref<1x16x128xbf16, #tpu.memory_space<vmem>>) attributes {dimension_semantics = [#tpu.dimension_semantics<parallel>], iteration_bounds = array<i64: 2>, scalar_prefetch = 1 : i64, scratch_operands = 0 : i64, tpu.core_type = #tpu.core_type<tc>, window_params = [{transform_indices = @transform_0, window_bounds = array<i64: 1, 16, 128>}, {transform_indices = @transform_1, window_bounds = array<i64: 1, 128, 128>}, {pipeline_mode = #tpu.pipeline_mode<synchronous>, transform_indices = @transform_2, window_bounds = array<i64: 128, 128>}, {pipeline_mode = #tpu.pipeline_mode<synchronous>, transform_indices = @transform_3, window_bounds = array<i64: 128, 128>}, {pipeline_mode = #tpu.pipeline_mode<synchronous>, transform_indices = @transform_4, window_bounds = array<i64: 128, 128>}, {pipeline_mode = #tpu.pipeline_mode<synchronous>, transform_indices = @transform_5, window_bounds = array<i64: 128, 128>}, {pipeline_mode = #tpu.pipeline_mode<synchronous>, transform_indices = @transform_6, window_bounds = array<i64: 128, 256>}, {pipeline_mode = #tpu.pipeline_mode<synchronous>, transform_indices = @transform_7, window_bounds = array<i64: 1, 256>}, {pipeline_mode = #tpu.pipeline_mode<synchronous>, transform_indices = @transform_8, window_bounds = array<i64: 256, 128>}, {pipeline_mode = #tpu.pipeline_mode<synchronous>, transform_indices = @transform_9, window_bounds = array<i64: 1, 128>}, {pipeline_mode = #tpu.pipeline_mode<synchronous>, transform_indices = @transform_10, window_bounds = array<i64: 1, 128>}, {pipeline_mode = #tpu.pipeline_mode<synchronous>, transform_indices = @transform_11, window_bounds = array<i64: 1, 128>}, {pipeline_mode = #tpu.pipeline_mode<synchronous>, transform_indices = @transform_12, window_bounds = array<i64: 1, 128>}, {pipeline_mode = #tpu.pipeline_mode<synchronous>, transform_indices = @transform_13, window_bounds = array<i64: 1, 128>}, {transform_indices = @transform_14, window_bounds = array<i64: 1, 16, 128>}]} {
    %c0 = arith.constant 0 : index
    %c0_0 = arith.constant 0 : index
    %c0_1 = arith.constant 0 : index
    %0 = vector.load %arg2[%c0, %c0_0, %c0_1] : memref<1x16x128xf32, #tpu.memory_space<vmem>>, vector<1x16x128xf32>
    %1 = vector.shape_cast %0 : vector<1x16x128xf32> to vector<16x128xf32>
    %c0_2 = arith.constant 0 : index
    %c0_3 = arith.constant 0 : index
    %c0_4 = arith.constant 0 : index
    %2 = vector.load %arg3[%c0_2, %c0_3, %c0_4] : memref<1x128x128xbf16, #tpu.memory_space<vmem>>, vector<1x128x128xbf16>
    %3 = vector.shape_cast %2 : vector<1x128x128xbf16> to vector<128x128xbf16>
    %4 = tpu.iota {dimensions = array<i32: 1>} : vector<1x128xi32>
    %5 = arith.index_cast %arg0 : i32 to index
    %6 = memref.load %arg1[%5] : memref<2xi32, #tpu.memory_space<smem>>
    %7 = vector.broadcast %6 : i32 to vector<1x128xi32>
    %8 = arith.cmpi slt, %4, %7 : vector<1x128xi32>
    %9 = arith.extui %8 : vector<1x128xi1> to vector<1x128xi32>
    %10 = arith.sitofp %9 : vector<1x128xi32> to vector<1x128xf32>
    %11 = arith.truncf %1 : vector<16x128xf32> to vector<16x128xbf16>
    %c0_5 = arith.constant 0 : index
    %c0_6 = arith.constant 0 : index
    %12 = vector.load %arg4[%c0_5, %c0_6] : memref<128x128xbf16, #tpu.memory_space<vmem>>, vector<128x128xbf16>
    %cst = arith.constant dense<0.000000e+00> : vector<16x128xf32>
    %13 = tpu.matmul %11, %12, %cst {dimension_numbers = #tpu.dot_dimension_numbers<[1], [0], [0], [1], [0, 0, 1, 1], [], []>} : vector<16x128xbf16>, vector<128x128xbf16>, vector<16x128xf32> -> vector<16x128xf32>
    %14 = arith.truncf %13 : vector<16x128xf32> to vector<16x128xbf16>
    %c0_7 = arith.constant 0 : index
    %c0_8 = arith.constant 0 : index
    %15 = vector.load %arg5[%c0_7, %c0_8] : memref<128x128xbf16, #tpu.memory_space<vmem>>, vector<128x128xbf16>
    %cst_9 = arith.constant dense<0.000000e+00> : vector<128x128xf32>
    %16 = tpu.matmul %3, %15, %cst_9 {dimension_numbers = #tpu.dot_dimension_numbers<[1], [0], [0], [1], [0, 0, 1, 1], [], []>} : vector<128x128xbf16>, vector<128x128xbf16>, vector<128x128xf32> -> vector<128x128xf32>
    %17 = arith.truncf %16 : vector<128x128xf32> to vector<128x128xbf16>
    %c0_10 = arith.constant 0 : index
    %c0_11 = arith.constant 0 : index
    %18 = vector.load %arg6[%c0_10, %c0_11] : memref<128x128xbf16, #tpu.memory_space<vmem>>, vector<128x128xbf16>
    %cst_12 = arith.constant dense<0.000000e+00> : vector<128x128xf32>
    %19 = tpu.matmul %3, %18, %cst_12 {dimension_numbers = #tpu.dot_dimension_numbers<[1], [0], [0], [1], [0, 0, 1, 1], [], []>} : vector<128x128xbf16>, vector<128x128xbf16>, vector<128x128xf32> -> vector<128x128xf32>
    %20 = arith.truncf %19 : vector<128x128xf32> to vector<128x128xbf16>
    %cst_13 = arith.constant -1.000000e+30 : f32
    %21 = vector.broadcast %cst_13 : f32 to vector<16x1xf32>
    %cst_14 = arith.constant 0.000000e+00 : f32
    %22 = vector.broadcast %cst_14 : f32 to vector<16x1xf32>
    %cst_15 = arith.constant 0.000000e+00 : f32
    %23 = vector.broadcast %cst_15 : f32 to vector<16x128xf32>
    %24 = vector.extract_strided_slice %17 {offsets = [0, 0], sizes = [128, 128], strides = [1, 1]} : vector<128x128xbf16> to vector<128x128xbf16>
    %25 = vector.extract_strided_slice %20 {offsets = [0, 0], sizes = [128, 128], strides = [1, 1]} : vector<128x128xbf16> to vector<128x128xbf16>
    %26 = vector.extract_strided_slice %10 {offsets = [0, 0], sizes = [1, 128], strides = [1, 1]} : vector<1x128xf32> to vector<1x128xf32>
    %cst_16 = arith.constant dense<0.000000e+00> : vector<16x128xf32>
    %27 = tpu.matmul %14, %24, %cst_16 {dimension_numbers = #tpu.dot_dimension_numbers<[1], [1], [0], [0], [0, 0, 1, 0], [], []>} : vector<16x128xbf16>, vector<128x128xbf16>, vector<16x128xf32> -> vector<16x128xf32>
    %cst_17 = arith.constant 0.0883883461 : f32
    %28 = vector.broadcast %cst_17 : f32 to vector<16x128xf32>
    %29 = arith.mulf %27, %28 : vector<16x128xf32>
    %cst_18 = arith.constant 1.000000e+00 : f32
    %30 = vector.broadcast %cst_18 : f32 to vector<1x128xf32>
    %31 = arith.subf %26, %30 : vector<1x128xf32>
    %cst_19 = arith.constant 1.000000e+30 : f32
    %32 = vector.broadcast %cst_19 : f32 to vector<1x128xf32>
    %33 = arith.mulf %31, %32 : vector<1x128xf32>
    %34 = vector.broadcast %33 : vector<1x128xf32> to vector<16x128xf32>
    %35 = arith.addf %29, %34 : vector<16x128xf32>
    %cst_20 = arith.constant dense<0xFF800000> : vector<16xf32>
    %36 = vector.multi_reduction <maximumf>, %35, %cst_20 [1] : vector<16x128xf32> to vector<16xf32>
    %37 = vector.shape_cast %36 : vector<16xf32> to vector<16x1xf32>
    %38 = arith.maximumf %21, %37 : vector<16x1xf32>
    %39 = arith.subf %21, %38 : vector<16x1xf32>
    %40 = math.exp %39 : vector<16x1xf32>
    %41 = vector.broadcast %38 : vector<16x1xf32> to vector<16x128xf32>
    %42 = arith.subf %35, %41 : vector<16x128xf32>
    %43 = math.exp %42 : vector<16x128xf32>
    %44 = arith.mulf %40, %22 : vector<16x1xf32>
    %cst_21 = arith.constant dense<0.000000e+00> : vector<16xf32>
    %45 = vector.multi_reduction <add>, %43, %cst_21 [1] : vector<16x128xf32> to vector<16xf32>
    %46 = vector.shape_cast %45 : vector<16xf32> to vector<16x1xf32>
    %47 = arith.addf %44, %46 : vector<16x1xf32>
    %48 = vector.broadcast %40 : vector<16x1xf32> to vector<16x128xf32>
    %49 = arith.mulf %48, %23 : vector<16x128xf32>
    %50 = arith.truncf %43 : vector<16x128xf32> to vector<16x128xbf16>
    %cst_22 = arith.constant dense<0.000000e+00> : vector<16x128xf32>
    %51 = tpu.matmul %50, %25, %cst_22 {dimension_numbers = #tpu.dot_dimension_numbers<[1], [0], [0], [1], [0, 0, 1, 1], [], []>} : vector<16x128xbf16>, vector<128x128xbf16>, vector<16x128xf32> -> vector<16x128xf32>
    %52 = arith.addf %49, %51 : vector<16x128xf32>
    %53 = tpu.reciprocal %47 {approx = true} : vector<16x1xf32> -> vector<16x1xf32>
    %54 = vector.broadcast %53 : vector<16x1xf32> to vector<16x128xf32>
    %55 = arith.mulf %52, %54 : vector<16x128xf32>
    %56 = arith.truncf %55 : vector<16x128xf32> to vector<16x128xbf16>
    %c0_23 = arith.constant 0 : index
    %c0_24 = arith.constant 0 : index
    %57 = vector.load %arg7[%c0_23, %c0_24] : memref<128x128xbf16, #tpu.memory_space<vmem>>, vector<128x128xbf16>
    %cst_25 = arith.constant dense<0.000000e+00> : vector<16x128xf32>
    %58 = tpu.matmul %56, %57, %cst_25 {dimension_numbers = #tpu.dot_dimension_numbers<[1], [0], [0], [1], [0, 0, 1, 1], [], []>} : vector<16x128xbf16>, vector<128x128xbf16>, vector<16x128xf32> -> vector<16x128xf32>
    %59 = arith.addf %1, %58 : vector<16x128xf32>
    %c0_26 = arith.constant 0 : index
    %c0_27 = arith.constant 0 : index
    %60 = vector.load %arg12[%c0_26, %c0_27] : memref<1x128xf32, #tpu.memory_space<vmem>>, vector<1x128xf32>
    %c0_28 = arith.constant 0 : index
    %c0_29 = arith.constant 0 : index
    %61 = vector.load %arg13[%c0_28, %c0_29] : memref<1x128xf32, #tpu.memory_space<vmem>>, vector<1x128xf32>
    %cst_30 = arith.constant dense<0.000000e+00> : vector<16xf32>
    %62 = vector.multi_reduction <add>, %59, %cst_30 [1] : vector<16x128xf32> to vector<16xf32>
    %63 = vector.shape_cast %62 : vector<16xf32> to vector<16x1xf32>
    %cst_31 = arith.constant 1.280000e+02 : f32
    %64 = vector.broadcast %cst_31 : f32 to vector<16x1xf32>
    %65 = arith.divf %63, %64 : vector<16x1xf32>
    %66 = vector.broadcast %65 : vector<16x1xf32> to vector<16x128xf32>
    %67 = arith.subf %59, %66 : vector<16x128xf32>
    %68 = arith.mulf %67, %67 : vector<16x128xf32>
    %cst_32 = arith.constant dense<0.000000e+00> : vector<16xf32>
    %69 = vector.multi_reduction <add>, %68, %cst_32 [1] : vector<16x128xf32> to vector<16xf32>
    %70 = vector.shape_cast %69 : vector<16xf32> to vector<16x1xf32>
    %cst_33 = arith.constant 1.280000e+02 : f32
    %71 = vector.broadcast %cst_33 : f32 to vector<16x1xf32>
    %72 = arith.divf %70, %71 : vector<16x1xf32>
    %73 = vector.broadcast %65 : vector<16x1xf32> to vector<16x128xf32>
    %74 = arith.subf %59, %73 : vector<16x128xf32>
    %cst_34 = arith.constant 9.99999974E-6 : f32
    %75 = vector.broadcast %cst_34 : f32 to vector<16x1xf32>
    %76 = arith.addf %72, %75 : vector<16x1xf32>
    %77 = math.rsqrt %76 : vector<16x1xf32>
    %78 = vector.broadcast %77 : vector<16x1xf32> to vector<16x128xf32>
    %79 = arith.mulf %74, %78 : vector<16x128xf32>
    %80 = vector.broadcast %60 : vector<1x128xf32> to vector<16x128xf32>
    %81 = arith.mulf %79, %80 : vector<16x128xf32>
    %82 = vector.broadcast %61 : vector<1x128xf32> to vector<16x128xf32>
    %83 = arith.addf %81, %82 : vector<16x128xf32>
    %84 = arith.truncf %83 : vector<16x128xf32> to vector<16x128xbf16>
    %c0_35 = arith.constant 0 : index
    %c0_36 = arith.constant 0 : index
    %85 = vector.load %arg8[%c0_35, %c0_36] : memref<128x256xbf16, #tpu.memory_space<vmem>>, vector<128x256xbf16>
    %cst_37 = arith.constant dense<0.000000e+00> : vector<16x256xf32>
    %86 = tpu.matmul %84, %85, %cst_37 {dimension_numbers = #tpu.dot_dimension_numbers<[1], [0], [0], [1], [0, 0, 1, 1], [], []>} : vector<16x128xbf16>, vector<128x256xbf16>, vector<16x256xf32> -> vector<16x256xf32>
    %c0_38 = arith.constant 0 : index
    %c0_39 = arith.constant 0 : index
    %87 = vector.load %arg9[%c0_38, %c0_39] : memref<1x256xf32, #tpu.memory_space<vmem>>, vector<1x256xf32>
    %88 = vector.broadcast %87 : vector<1x256xf32> to vector<16x256xf32>
    %89 = arith.addf %86, %88 : vector<16x256xf32>
    %cst_40 = arith.constant 0.000000e+00 : f32
    %90 = vector.broadcast %cst_40 : f32 to vector<16x256xf32>
    %91 = arith.maximumf %89, %90 : vector<16x256xf32>
    %92 = arith.truncf %91 : vector<16x256xf32> to vector<16x256xbf16>
    %c0_41 = arith.constant 0 : index
    %c0_42 = arith.constant 0 : index
    %93 = vector.load %arg10[%c0_41, %c0_42] : memref<256x128xbf16, #tpu.memory_space<vmem>>, vector<256x128xbf16>
    %cst_43 = arith.constant dense<0.000000e+00> : vector<16x128xf32>
    %94 = tpu.matmul %92, %93, %cst_43 {dimension_numbers = #tpu.dot_dimension_numbers<[1], [0], [0], [1], [0, 0, 1, 1], [], []>} : vector<16x256xbf16>, vector<256x128xbf16>, vector<16x128xf32> -> vector<16x128xf32>
    %c0_44 = arith.constant 0 : index
    %c0_45 = arith.constant 0 : index
    %95 = vector.load %arg11[%c0_44, %c0_45] : memref<1x128xf32, #tpu.memory_space<vmem>>, vector<1x128xf32>
    %96 = vector.broadcast %95 : vector<1x128xf32> to vector<16x128xf32>
    %97 = arith.addf %94, %96 : vector<16x128xf32>
    %98 = arith.addf %83, %97 : vector<16x128xf32>
    %c0_46 = arith.constant 0 : index
    %c0_47 = arith.constant 0 : index
    %99 = vector.load %arg14[%c0_46, %c0_47] : memref<1x128xf32, #tpu.memory_space<vmem>>, vector<1x128xf32>
    %c0_48 = arith.constant 0 : index
    %c0_49 = arith.constant 0 : index
    %100 = vector.load %arg15[%c0_48, %c0_49] : memref<1x128xf32, #tpu.memory_space<vmem>>, vector<1x128xf32>
    %cst_50 = arith.constant dense<0.000000e+00> : vector<16xf32>
    %101 = vector.multi_reduction <add>, %98, %cst_50 [1] : vector<16x128xf32> to vector<16xf32>
    %102 = vector.shape_cast %101 : vector<16xf32> to vector<16x1xf32>
    %cst_51 = arith.constant 1.280000e+02 : f32
    %103 = vector.broadcast %cst_51 : f32 to vector<16x1xf32>
    %104 = arith.divf %102, %103 : vector<16x1xf32>
    %105 = vector.broadcast %104 : vector<16x1xf32> to vector<16x128xf32>
    %106 = arith.subf %98, %105 : vector<16x128xf32>
    %107 = arith.mulf %106, %106 : vector<16x128xf32>
    %cst_52 = arith.constant dense<0.000000e+00> : vector<16xf32>
    %108 = vector.multi_reduction <add>, %107, %cst_52 [1] : vector<16x128xf32> to vector<16xf32>
    %109 = vector.shape_cast %108 : vector<16xf32> to vector<16x1xf32>
    %cst_53 = arith.constant 1.280000e+02 : f32
    %110 = vector.broadcast %cst_53 : f32 to vector<16x1xf32>
    %111 = arith.divf %109, %110 : vector<16x1xf32>
    %112 = vector.broadcast %104 : vector<16x1xf32> to vector<16x128xf32>
    %113 = arith.subf %98, %112 : vector<16x128xf32>
    %cst_54 = arith.constant 9.99999974E-6 : f32
    %114 = vector.broadcast %cst_54 : f32 to vector<16x1xf32>
    %115 = arith.addf %111, %114 : vector<16x1xf32>
    %116 = math.rsqrt %115 : vector<16x1xf32>
    %117 = vector.broadcast %116 : vector<16x1xf32> to vector<16x128xf32>
    %118 = arith.mulf %113, %117 : vector<16x128xf32>
    %119 = vector.broadcast %99 : vector<1x128xf32> to vector<16x128xf32>
    %120 = arith.mulf %118, %119 : vector<16x128xf32>
    %121 = vector.broadcast %100 : vector<1x128xf32> to vector<16x128xf32>
    %122 = arith.addf %120, %121 : vector<16x128xf32>
    %123 = arith.truncf %122 : vector<16x128xf32> to vector<16x128xbf16>
    %c0_55 = arith.constant 0 : index
    %c0_56 = arith.constant 0 : index
    %c0_57 = arith.constant 0 : index
    %124 = vector.load %arg16[%c0_55, %c0_56, %c0_57] : memref<1x16x128xbf16, #tpu.memory_space<vmem>>, vector<1x16x128xbf16>
    %125 = vector.shape_cast %124 : vector<1x16x128xbf16> to vector<16x128xbf16>
    %126 = vector.shape_cast %123 : vector<16x128xbf16> to vector<1x16x128xbf16>
    tpu.vector_store %arg16[%c0_55, %c0_56, %c0_57], %126 {strides = array<i32>} : memref<1x16x128xbf16, #tpu.memory_space<vmem>>, vector<1x16x128xbf16>,
    return
  }
  func.func @transform_0(%arg0: i32, %arg1: memref<2xi32, #tpu.memory_space<smem>>) -> (i32, i32, i32) {
    %c0_i32 = arith.constant 0 : i32
    %c0_i32_0 = arith.constant 0 : i32
    %c0_i32_1 = arith.constant 0 : i32
    return %arg0, %c0_i32, %c0_i32_0 : i32, i32, i32
  }
  func.func @transform_1(%arg0: i32, %arg1: memref<2xi32, #tpu.memory_space<smem>>) -> (i32, i32, i32) {
    %c0_i32 = arith.constant 0 : i32
    %c0_i32_0 = arith.constant 0 : i32
    %c0_i32_1 = arith.constant 0 : i32
    return %arg0, %c0_i32, %c0_i32_0 : i32, i32, i32
  }
  func.func @transform_2(%arg0: i32, %arg1: memref<2xi32, #tpu.memory_space<smem>>) -> (i32, i32) {
    %c0_i32 = arith.constant 0 : i32
    %c0_i32_0 = arith.constant 0 : i32
    %c0_i32_1 = arith.constant 0 : i32
    return %c0_i32, %c0_i32_0 : i32, i32
  }
  func.func @transform_3(%arg0: i32, %arg1: memref<2xi32, #tpu.memory_space<smem>>) -> (i32, i32) {
    %c0_i32 = arith.constant 0 : i32
    %c0_i32_0 = arith.constant 0 : i32
    %c0_i32_1 = arith.constant 0 : i32
    return %c0_i32, %c0_i32_0 : i32, i32
  }
  func.func @transform_4(%arg0: i32, %arg1: memref<2xi32, #tpu.memory_space<smem>>) -> (i32, i32) {
    %c0_i32 = arith.constant 0 : i32
    %c0_i32_0 = arith.constant 0 : i32
    %c0_i32_1 = arith.constant 0 : i32
    return %c0_i32, %c0_i32_0 : i32, i32
  }
  func.func @transform_5(%arg0: i32, %arg1: memref<2xi32, #tpu.memory_space<smem>>) -> (i32, i32) {
    %c0_i32 = arith.constant 0 : i32
    %c0_i32_0 = arith.constant 0 : i32
    %c0_i32_1 = arith.constant 0 : i32
    return %c0_i32, %c0_i32_0 : i32, i32
  }
  func.func @transform_6(%arg0: i32, %arg1: memref<2xi32, #tpu.memory_space<smem>>) -> (i32, i32) {
    %c0_i32 = arith.constant 0 : i32
    %c0_i32_0 = arith.constant 0 : i32
    %c0_i32_1 = arith.constant 0 : i32
    return %c0_i32, %c0_i32_0 : i32, i32
  }
  func.func @transform_7(%arg0: i32, %arg1: memref<2xi32, #tpu.memory_space<smem>>) -> (i32, i32) {
    %c0_i32 = arith.constant 0 : i32
    %c0_i32_0 = arith.constant 0 : i32
    %c0_i32_1 = arith.constant 0 : i32
    return %c0_i32, %c0_i32_0 : i32, i32
  }
  func.func @transform_8(%arg0: i32, %arg1: memref<2xi32, #tpu.memory_space<smem>>) -> (i32, i32) {
    %c0_i32 = arith.constant 0 : i32
    %c0_i32_0 = arith.constant 0 : i32
    %c0_i32_1 = arith.constant 0 : i32
    return %c0_i32, %c0_i32_0 : i32, i32
  }
  func.func @transform_9(%arg0: i32, %arg1: memref<2xi32, #tpu.memory_space<smem>>) -> (i32, i32) {
    %c0_i32 = arith.constant 0 : i32
    %c0_i32_0 = arith.constant 0 : i32
    %c0_i32_1 = arith.constant 0 : i32
    return %c0_i32, %c0_i32_0 : i32, i32
  }
  func.func @transform_10(%arg0: i32, %arg1: memref<2xi32, #tpu.memory_space<smem>>) -> (i32, i32) {
    %c0_i32 = arith.constant 0 : i32
    %c0_i32_0 = arith.constant 0 : i32
    %c0_i32_1 = arith.constant 0 : i32
    return %c0_i32, %c0_i32_0 : i32, i32
  }
  func.func @transform_11(%arg0: i32, %arg1: memref<2xi32, #tpu.memory_space<smem>>) -> (i32, i32) {
    %c0_i32 = arith.constant 0 : i32
    %c0_i32_0 = arith.constant 0 : i32
    %c0_i32_1 = arith.constant 0 : i32
    return %c0_i32, %c0_i32_0 : i32, i32
  }
  func.func @transform_12(%arg0: i32, %arg1: memref<2xi32, #tpu.memory_space<smem>>) -> (i32, i32) {
    %c0_i32 = arith.constant 0 : i32
    %c0_i32_0 = arith.constant 0 : i32
    %c0_i32_1 = arith.constant 0 : i32
    return %c0_i32, %c0_i32_0 : i32, i32
  }
  func.func @transform_13(%arg0: i32, %arg1: memref<2xi32, #tpu.memory_space<smem>>) -> (i32, i32) {
    %c0_i32 = arith.constant 0 : i32
    %c0_i32_0 = arith.constant 0 : i32
    %c0_i32_1 = arith.constant 0 : i32
    return %c0_i32, %c0_i32_0 : i32, i32
  }
  func.func @transform_14(%arg0: i32, %arg1: memref<2xi32, #tpu.memory_space<smem>>) -> (i32, i32, i32) {
    %c0_i32 = arith.constant 0 : i32
    %c0_i32_0 = arith.constant 0 : i32
    %c0_i32_1 = arith.constant 0 : i32
    return %arg0, %c0_i32, %c0_i32_0 : i32, i32, i32
  }
}

module attributes {stable_mosaic.version = 11 : i64} {
  func.func @vocab_kernel(%arg0: i32, %arg1: i32, %arg2: memref<32x128xbf16, #tpu.memory_space<vmem>>, %arg3: memref<128x512xbf16, #tpu.memory_space<vmem>>, %arg4: memref<1x512xf32, #tpu.memory_space<vmem>>, %arg5: memref<32x512xf32, #tpu.memory_space<vmem>>) attributes {dimension_semantics = [#tpu.dimension_semantics<parallel>, #tpu.dimension_semantics<parallel>], iteration_bounds = array<i64: 1, 1>, scalar_prefetch = 0 : i64, scratch_operands = 0 : i64, tpu.core_type = #tpu.core_type<tc>, window_params = [{transform_indices = @transform_0, window_bounds = array<i64: 32, 128>}, {transform_indices = @transform_1, window_bounds = array<i64: 128, 512>}, {transform_indices = @transform_2, window_bounds = array<i64: 1, 512>}, {transform_indices = @transform_3, window_bounds = array<i64: 32, 512>}]} {
    %c0 = arith.constant 0 : index
    %c0_0 = arith.constant 0 : index
    %0 = vector.load %arg2[%c0, %c0_0] : memref<32x128xbf16, #tpu.memory_space<vmem>>, vector<32x128xbf16>
    %c0_1 = arith.constant 0 : index
    %c0_2 = arith.constant 0 : index
    %1 = vector.load %arg3[%c0_1, %c0_2] : memref<128x512xbf16, #tpu.memory_space<vmem>>, vector<128x512xbf16>
    %cst = arith.constant dense<0.000000e+00> : vector<32x512xf32>
    %2 = tpu.matmul %0, %1, %cst {dimension_numbers = #tpu.dot_dimension_numbers<[1], [0], [0], [1], [0, 0, 1, 1], [], []>} : vector<32x128xbf16>, vector<128x512xbf16>, vector<32x512xf32> -> vector<32x512xf32>
    %c0_3 = arith.constant 0 : index
    %c0_4 = arith.constant 0 : index
    %3 = vector.load %arg4[%c0_3, %c0_4] : memref<1x512xf32, #tpu.memory_space<vmem>>, vector<1x512xf32>
    %4 = vector.broadcast %3 : vector<1x512xf32> to vector<32x512xf32>
    %5 = arith.addf %2, %4 : vector<32x512xf32>
    %c0_5 = arith.constant 0 : index
    %c0_6 = arith.constant 0 : index
    %6 = vector.load %arg5[%c0_5, %c0_6] : memref<32x512xf32, #tpu.memory_space<vmem>>, vector<32x512xf32>
    tpu.vector_store %arg5[%c0_5, %c0_6], %5 {strides = array<i32>} : memref<32x512xf32, #tpu.memory_space<vmem>>, vector<32x512xf32>,
    return
  }
  func.func @transform_0(%arg0: i32, %arg1: i32) -> (i32, i32) {
    %c0_i32 = arith.constant 0 : i32
    %c0_i32_0 = arith.constant 0 : i32
    return %arg1, %c0_i32 : i32, i32
  }
  func.func @transform_1(%arg0: i32, %arg1: i32) -> (i32, i32) {
    %c0_i32 = arith.constant 0 : i32
    %c0_i32_0 = arith.constant 0 : i32
    return %c0_i32, %arg0 : i32, i32
  }
  func.func @transform_2(%arg0: i32, %arg1: i32) -> (i32, i32) {
    %c0_i32 = arith.constant 0 : i32
    %c0_i32_0 = arith.constant 0 : i32
    return %c0_i32, %arg0 : i32, i32
  }
  func.func @transform_3(%arg0: i32, %arg1: i32) -> (i32, i32) {
    %c0_i32 = arith.constant 0 : i32
    return %arg1, %arg0 : i32, i32
  }
}

</mosaic_0001>

<llo_original>
// kernel: paraformer_forward.5
$region0: #{paraformer_forward.5}
  #allocation0 [shape = 'u32[]', space=smem, size = 0x4, offset = 0x4, fixed_abs, tag = 'smem constant byte address 0x4 - core index']
  #allocation1 [shape = 'u32[72,128]{1,0:T(1,128)}', space=vmem, size = 0x9000, scoped, tag = 'internal scratch']
  %s0 = inlined_call_operand.vmem [shape: bf16[32,128], index: 0, kind: input, shape index: {}]
  %s1 = inlined_call_operand.vmem [shape: bf16[128,512], index: 1, kind: input, shape index: {}]
  %s2 = inlined_call_operand.vmem [shape: f32[1,512], index: 2, kind: input, shape index: {}]
  %s3 = inlined_call_operand.vmem [shape: f32[32,512], index: 3, kind: output, shape index: {}]
  %s4 = sld [smem:[#allocation0]]
  $region22: #{paraformer_forward.5} parent=0
    _
  %s6 = ssub.s32 1, %s4
  %s7 = scalar_select 0, %s6, %s4
  // Predicated region
  $region2: #{paraformer_forward.5} parent=0 // pred_check
    _
  $region3: #{paraformer_forward.5} parent=0 // pred_check_branch
    %9 = sbr.rel (0) target = $region5
  $region4: #{paraformer_forward.5} parent=0 // pred_region
    _
  $region5: #{paraformer_forward.5} parent=0 // pred_fallthru
    _
  // Predicated region
  $region6: #{paraformer_forward.5} parent=0 // pred_check
    _
  $region7: #{paraformer_forward.5} parent=0 // pred_check_branch
    %11 = sbr.rel (0) target = $region9
  $region8: #{paraformer_forward.5} parent=0 // pred_region
    _
  $region9: #{paraformer_forward.5} parent=0 // pred_fallthru
    _
  // Predicated region
  $region10: #{paraformer_forward.5} parent=0 // pred_check
    _
  $region11: #{paraformer_forward.5} parent=0 // pred_check_branch
    %13 = sbr.rel (0) target = $region13
  $region12: #{paraformer_forward.5} parent=0 // pred_region
    _
  $region13: #{paraformer_forward.5} parent=0 // pred_fallthru
    _
  %v14 = vld [vmem:[%s0] sm:$0xf]
  %v15 = vld [vmem:[%s0 + $0x4] sm:$0xf]
  %v16 = vld [vmem:[%s0 + $0x8] sm:$0xf]
  %v17 = vld [vmem:[%s0 + $0xc] sm:$0xf]
  %v18 = vld [vmem:[%s1] sm:$0xff]
  %v19 = vld [vmem:[%s1 + $0x8] sm:$0xff]
  %v20 = vld [vmem:[%s1 + $0x10] sm:$0xff]
  %v21 = vld [vmem:[%s1 + $0x18] sm:$0xff]
  %v22 = vld [vmem:[%s1 + $0x20] sm:$0xff]
  %v23 = vld [vmem:[%s1 + $0x28] sm:$0xff]
  %v24 = vld [vmem:[%s1 + $0x30] sm:$0xff]
  %v25 = vld [vmem:[%s1 + $0x38] sm:$0xff]
  %v26 = vld [vmem:[%s1 + $0x40] sm:$0xff]
  %v27 = vld [vmem:[%s1 + $0x48] sm:$0xff]
  %v28 = vld [vmem:[%s1 + $0x50] sm:$0xff]
  %v29 = vld [vmem:[%s1 + $0x58] sm:$0xff]
  %v30 = vld [vmem:[%s1 + $0x60] sm:$0xff]
  %v31 = vld [vmem:[%s1 + $0x68] sm:$0xff]
  %v32 = vld [vmem:[%s1 + $0x70] sm:$0xff]
  %v33 = vld [vmem:[%s1 + $0x78] sm:$0xff]
  %v34 = vld [vmem:[%s1 + $0x80] sm:$0xff]
  %v35 = vld [vmem:[%s1 + $0x88] sm:$0xff]
  %v36 = vld [vmem:[%s1 + $0x90] sm:$0xff]
  %v37 = vld [vmem:[%s1 + $0x98] sm:$0xff]
  %v38 = vld [vmem:[%s1 + $0xa0] sm:$0xff]
  %v39 = vld [vmem:[%s1 + $0xa8] sm:$0xff]
  %v40 = vld [vmem:[%s1 + $0xb0] sm:$0xff]
  %v41 = vld [vmem:[%s1 + $0xb8] sm:$0xff]
  %v42 = vld [vmem:[%s1 + $0xc0] sm:$0xff]
  %v43 = vld [vmem:[%s1 + $0xc8] sm:$0xff]
  %v44 = vld [vmem:[%s1 + $0xd0] sm:$0xff]
  %v45 = vld [vmem:[%s1 + $0xd8] sm:$0xff]
  %v46 = vld [vmem:[%s1 + $0xe0] sm:$0xff]
  %v47 = vld [vmem:[%s1 + $0xe8] sm:$0xff]
  %v48 = vld [vmem:[%s1 + $0xf0] sm:$0xff]
  %v49 = vld [vmem:[%s1 + $0xf8] sm:$0xff]
  %v50 = vld [vmem:[%s2] sm:$0xf]
  %v52 = vperm.slane %v50, 0
  %v53 = vperm.slane %v50, 1
  %v54 = vperm.slane %v50, 2
  %v55 = vperm.slane %v50, 3
  %v64 = vunpack.c.l.b16 %v14
  %v65 = vunpack.c.l.b16 %v15
  %v66 = vunpack.c.l.b16 %v16
  %v67 = vunpack.c.l.b16 %v17
  %v68 = vpack.c.b16 %v65, %v64
  %v69 = vpack.c.b16 %v67, %v66
  %v104 = vunpack.c.l.b16 %v18
  %v105 = vunpack.c.h.b16 %v18
  %v106 = vunpack.c.l.b16 %v19
  %v107 = vunpack.c.h.b16 %v19
  %v108 = vunpack.c.l.b16 %v20
  %v109 = vunpack.c.h.b16 %v20
  %v110 = vunpack.c.l.b16 %v21
  %v111 = vunpack.c.h.b16 %v21
  %v112 = vunpack.c.l.b16 %v22
  %v113 = vunpack.c.h.b16 %v22
  %v114 = vunpack.c.l.b16 %v23
  %v115 = vunpack.c.h.b16 %v23
  %v116 = vunpack.c.l.b16 %v24
  %v117 = vunpack.c.h.b16 %v24
  %v118 = vunpack.c.l.b16 %v25
  %v119 = vunpack.c.h.b16 %v25
  %v120 = vunpack.c.l.b16 %v26
  %v121 = vunpack.c.h.b16 %v26
  %v122 = vunpack.c.l.b16 %v27
  %v123 = vunpack.c.h.b16 %v27
  %v124 = vunpack.c.l.b16 %v28
  %v125 = vunpack.c.h.b16 %v28
  %v126 = vunpack.c.l.b16 %v29
  %v127 = vunpack.c.h.b16 %v29
  %v128 = vunpack.c.l.b16 %v30
  %v129 = vunpack.c.h.b16 %v30
  %v130 = vunpack.c.l.b16 %v31
  %v131 = vunpack.c.h.b16 %v31
  %v132 = vunpack.c.l.b16 %v32
  %v133 = vunpack.c.h.b16 %v32
  %v134 = vunpack.c.l.b16 %v33
  %v135 = vunpack.c.h.b16 %v33
  %v136 = vunpack.c.l.b16 %v34
  %v137 = vunpack.c.h.b16 %v34
  %v138 = vunpack.c.l.b16 %v35
  %v139 = vunpack.c.h.b16 %v35
  %v140 = vunpack.c.l.b16 %v36
  %v141 = vunpack.c.h.b16 %v36
  %v142 = vunpack.c.l.b16 %v37
  %v143 = vunpack.c.h.b16 %v37
  %v144 = vunpack.c.l.b16 %v38
  %v145 = vunpack.c.h.b16 %v38
  %v146 = vunpack.c.l.b16 %v39
  %v147 = vunpack.c.h.b16 %v39
  %v148 = vunpack.c.l.b16 %v40
  %v149 = vunpack.c.h.b16 %v40
  %v150 = vunpack.c.l.b16 %v41
  %v151 = vunpack.c.h.b16 %v41
  %v152 = vunpack.c.l.b16 %v42
  %v153 = vunpack.c.h.b16 %v42
  %v154 = vunpack.c.l.b16 %v43
  %v155 = vunpack.c.h.b16 %v43
  %v156 = vunpack.c.l.b16 %v44
  %v157 = vunpack.c.h.b16 %v44
  %v158 = vunpack.c.l.b16 %v45
  %v159 = vunpack.c.h.b16 %v45
  %v160 = vunpack.c.l.b16 %v46
  %v161 = vunpack.c.h.b16 %v46
  %v162 = vunpack.c.l.b16 %v47
  %v163 = vunpack.c.h.b16 %v47
  %v164 = vunpack.c.l.b16 %v48
  %v165 = vunpack.c.h.b16 %v48
  %v166 = vunpack.c.l.b16 %v49
  %v167 = vunpack.c.h.b16 %v49
  %v168 = vpack.c.b16 %v108, %v104
  %v169 = vpack.c.b16 %v109, %v105
  %v170 = vpack.c.b16 %v110, %v106
  %v171 = vpack.c.b16 %v111, %v107
  %v172 = vpack.c.b16 %v116, %v112
  %v173 = vpack.c.b16 %v117, %v113
  %v174 = vpack.c.b16 %v118, %v114
  %v175 = vpack.c.b16 %v119, %v115
  %v176 = vpack.c.b16 %v124, %v120
  %v177 = vpack.c.b16 %v125, %v121
  %v178 = vpack.c.b16 %v126, %v122
  %v179 = vpack.c.b16 %v127, %v123
  %v180 = vpack.c.b16 %v132, %v128
  %v181 = vpack.c.b16 %v133, %v129
  %v182 = vpack.c.b16 %v134, %v130
  %v183 = vpack.c.b16 %v135, %v131
  %v184 = vpack.c.b16 %v140, %v136
  %v185 = vpack.c.b16 %v141, %v137
  %v186 = vpack.c.b16 %v142, %v138
  %v187 = vpack.c.b16 %v143, %v139
  %v188 = vpack.c.b16 %v148, %v144
  %v189 = vpack.c.b16 %v149, %v145
  %v190 = vpack.c.b16 %v150, %v146
  %v191 = vpack.c.b16 %v151, %v147
  %v192 = vpack.c.b16 %v156, %v152
  %v193 = vpack.c.b16 %v157, %v153
  %v194 = vpack.c.b16 %v158, %v154
  %v195 = vpack.c.b16 %v159, %v155
  %v196 = vpack.c.b16 %v164, %v160
  %v197 = vpack.c.b16 %v165, %v161
  %v198 = vpack.c.b16 %v166, %v162
  %v199 = vpack.c.b16 %v167, %v163
  %232 = vmatpush.bf16.msra.mxu0 %v196
  %233 = vmatpush.bf16.msra.mxu0 %v192
  %234 = vmatpush.bf16.msra.mxu0 %v188
  %235 = vmatpush.bf16.msra.mxu0 %v184
  %236 = vmatpush.bf16.msra.mxu0 %v180
  %237 = vmatpush.bf16.msra.mxu0 %v176
  %238 = vmatpush.bf16.msra.mxu0 %v172
  %239 = vmatpush.bf16.msra.mxu0 %v168
  %240 = vmatmul.bf16.gmra.mxu0 %v68
  %v241 = vpop.f32.mrf.mxu0
  %v242 = vadd.f32 %v52, %v241
  %v243 = vpop.f32.mrf.mxu0
  %v244 = vadd.f32 %v52, %v243
  %245 = vmatmul.bf16.gmra.mxu0 %v69
  %v246 = vpop.f32.mrf.mxu0
  %v247 = vadd.f32 %v52, %v246
  %v248 = vpop.f32.mrf.mxu0
  %v249 = vadd.f32 %v52, %v248
  %250 = vdwg.mxu0
  %251 = vmatpush.bf16.msra.mxu0 %v197
  %252 = vmatpush.bf16.msra.mxu0 %v193
  %253 = vmatpush.bf16.msra.mxu0 %v189
  %254 = vmatpush.bf16.msra.mxu0 %v185
  %255 = vmatpush.bf16.msra.mxu0 %v181
  %256 = vmatpush.bf16.msra.mxu0 %v177
  %257 = vmatpush.bf16.msra.mxu0 %v173
  %258 = vmatpush.bf16.msra.mxu0 %v169
  %259 = vmatmul.bf16.gmra.mxu0 %v68
  %v260 = vpop.f32.mrf.mxu0
  %v261 = vadd.f32 %v53, %v260
  %v262 = vpop.f32.mrf.mxu0
  %v263 = vadd.f32 %v53, %v262
  %264 = vmatmul.bf16.gmra.mxu0 %v69
  %v265 = vpop.f32.mrf.mxu0
  %v266 = vadd.f32 %v53, %v265
  %v267 = vpop.f32.mrf.mxu0
  %v268 = vadd.f32 %v53, %v267
  %269 = vdwg.mxu0
  %270 = vmatpush.bf16.msra.mxu0 %v198
  %271 = vmatpush.bf16.msra.mxu0 %v194
  %272 = vmatpush.bf16.msra.mxu0 %v190
  %273 = vmatpush.bf16.msra.mxu0 %v186
  %274 = vmatpush.bf16.msra.mxu0 %v182
  %275 = vmatpush.bf16.msra.mxu0 %v178
  %276 = vmatpush.bf16.msra.mxu0 %v174
  %277 = vmatpush.bf16.msra.mxu0 %v170
  %278 = vmatmul.bf16.gmra.mxu0 %v68
  %v279 = vpop.f32.mrf.mxu0
  %v280 = vadd.f32 %v54, %v279
  %v281 = vpop.f32.mrf.mxu0
  %v282 = vadd.f32 %v54, %v281
  %283 = vmatmul.bf16.gmra.mxu0 %v69
  %v284 = vpop.f32.mrf.mxu0
  %v285 = vadd.f32 %v54, %v284
  %v286 = vpop.f32.mrf.mxu0
  %v287 = vadd.f32 %v54, %v286
  %288 = vdwg.mxu0
  %289 = vmatpush.bf16.msra.mxu0 %v199
  %290 = vmatpush.bf16.msra.mxu0 %v195
  %291 = vmatpush.bf16.msra.mxu0 %v191
  %292 = vmatpush.bf16.msra.mxu0 %v187
  %293 = vmatpush.bf16.msra.mxu0 %v183
  %294 = vmatpush.bf16.msra.mxu0 %v179
  %295 = vmatpush.bf16.msra.mxu0 %v175
  %296 = vmatpush.bf16.msra.mxu0 %v171
  %297 = vmatmul.bf16.gmra.mxu0 %v68
  %v298 = vpop.f32.mrf.mxu0
  %v299 = vadd.f32 %v55, %v298
  %v300 = vpop.f32.mrf.mxu0
  %v301 = vadd.f32 %v55, %v300
  %302 = vmatmul.bf16.gmra.mxu0 %v69
  %v303 = vpop.f32.mrf.mxu0
  %v304 = vadd.f32 %v55, %v303
  %v305 = vpop.f32.mrf.mxu0
  %v306 = vadd.f32 %v55, %v305
  %307 = vdwg.mxu0
  %308 = vst [vmem:[%s3] sm:$0xff] %v242
  %309 = vst [vmem:[%s3 + $0x8] sm:$0xff] %v261
  %310 = vst [vmem:[%s3 + $0x10] sm:$0xff] %v280
  %311 = vst [vmem:[%s3 + $0x18] sm:$0xff] %v299
  %312 = vst [vmem:[%s3 + $0x20] sm:$0xff] %v244
  %313 = vst [vmem:[%s3 + $0x28] sm:$0xff] %v263
  %314 = vst [vmem:[%s3 + $0x30] sm:$0xff] %v282
  %315 = vst [vmem:[%s3 + $0x38] sm:$0xff] %v301
  %316 = vst [vmem:[%s3 + $0x40] sm:$0xff] %v247
  %317 = vst [vmem:[%s3 + $0x48] sm:$0xff] %v266
  %318 = vst [vmem:[%s3 + $0x50] sm:$0xff] %v285
  %319 = vst [vmem:[%s3 + $0x58] sm:$0xff] %v304
  %320 = vst [vmem:[%s3 + $0x60] sm:$0xff] %v249
  %321 = vst [vmem:[%s3 + $0x68] sm:$0xff] %v268
  %322 = vst [vmem:[%s3 + $0x70] sm:$0xff] %v287
  %323 = vst [vmem:[%s3 + $0x78] sm:$0xff] %v306
  // Predicated region
  $region14: #{paraformer_forward.5} parent=0 // pred_check
    _
  $region15: #{paraformer_forward.5} parent=0 // pred_check_branch
    %325 = sbr.rel (0) target = $region17
  $region16: #{paraformer_forward.5} parent=0 // pred_region
    _
  $region17: #{paraformer_forward.5} parent=0 // pred_fallthru
    _
  // Predicated region
  $region18: #{paraformer_forward.5} parent=0 // pred_check
    _
  $region19: #{paraformer_forward.5} parent=0 // pred_check_branch
    %327 = sbr.rel (0) target = $region21
  $region20: #{paraformer_forward.5} parent=0 // pred_region
    _
  $region21: #{paraformer_forward.5} parent=0 // pred_fallthru
    _

// kernel: paraformer_forward.4
$region0: #{paraformer_forward.4}
  #allocation0 [shape = 'u32[]', space=smem, size = 0x4, offset = 0x4, fixed_abs, tag = 'smem constant byte address 0x4 - core index']
  #allocation1 [shape = 'u32[72,128]{1,0:T(1,128)}', space=vmem, size = 0x9000, scoped, tag = 'internal scratch']
  #allocation2 [shape = 's32[1]{0}', space=sflag, size = 0x4, scoped, tag = 'scoped memory for paraformer_forward.4']
  #allocation3 [shape = 'u8[512]{0}', space=smem, size = 0x200, scoped, tag = 'prefetched SMEM operand 0']
  %s0 = inlined_call_operand.vmem [shape: s32[2], index: 0, kind: input, shape index: {}]
  %s1 = inlined_call_operand.vmem [shape: f32[2,16,128], index: 1, kind: input, shape index: {}]
  %s2 = inlined_call_operand.vmem [shape: bf16[2,128,128], index: 2, kind: input, shape index: {}]
  %s3 = inlined_call_operand.vmem [shape: bf16[128,128], index: 3, kind: input, shape index: {}]
  %s4 = inlined_call_operand.vmem [shape: bf16[128,128], index: 4, kind: input, shape index: {}]
  %s5 = inlined_call_operand.vmem [shape: bf16[128,128], index: 5, kind: input, shape index: {}]
  %s6 = inlined_call_operand.vmem [shape: bf16[128,128], index: 6, kind: input, shape index: {}]
  %s7 = inlined_call_operand.vmem [shape: bf16[128,256], index: 7, kind: input, shape index: {}]
  %s8 = inlined_call_operand.vmem [shape: f32[1,256], index: 8, kind: input, shape index: {}]
  %s9 = inlined_call_operand.vmem [shape: bf16[256,128], index: 9, kind: input, shape index: {}]
  %s10 = inlined_call_operand.vmem [shape: f32[1,128], index: 10, kind: input, shape index: {}]
  %s11 = inlined_call_operand.vmem [shape: f32[1,128], index: 11, kind: input, shape index: {}]
  %s12 = inlined_call_operand.vmem [shape: f32[1,128], index: 12, kind: input, shape index: {}]
  %s13 = inlined_call_operand.vmem [shape: f32[1,128], index: 13, kind: input, shape index: {}]
  %s14 = inlined_call_operand.vmem [shape: f32[1,128], index: 14, kind: input, shape index: {}]
  %s15 = inlined_call_operand.vmem [shape: bf16[2,16,128], index: 15, kind: output, shape index: {}]
  %s16 = sld [smem:[#allocation0]]
  $region89: #{paraformer_forward.4} parent=0
    _
  %s18 = ssub.s32 1, %s16
  %s19 = scalar_select 0, %s18, %s16
  %s21 = sshll.u32 %s0, 4
  %s22 = int_to_ptr.vmem [resolvable:$true] %s21
  %24 = dma.vmem_to_smem %s22, 16, [#allocation3], [#allocation2]
  %26 = dma.done [#allocation2], 16
  %27 = sfence
  loop: start=0, step=1, limit=4
  $region2: #{paraformer_forward.4} parent=0 // loop_pre_header
    _
  $region3: #{paraformer_forward.4} parent=0 // loop_header
    %s29 = sphi 0, %s33
    %p30 = scmp.ge.s32.totalorder %s29, 4
    %s39 = sphi 0, %s41
    %s42 = sphi 0, %s39
    %s43 = sphi 0, %s42
    %s59 = sphi 0, %s43
    %s65 = sphi 0, %s67
    %s68 = sphi 0, %s65
    %s69 = sphi 0, %s68
    %s85 = sphi 0, %s69
    %s89 = sphi 0, %s89
    %s91 = sphi 0, %s89
    %s92 = sphi 0, %s91
    %s106 = sphi 0, %s92
    %s110 = sphi 0, %s110
    %s112 = sphi 0, %s110
    %s113 = sphi 0, %s112
    %s127 = sphi 0, %s113
    %s131 = sphi 0, %s131
    %s133 = sphi 0, %s131
    %s134 = sphi 0, %s133
    %s148 = sphi 0, %s134
    %s152 = sphi 0, %s152
    %s154 = sphi 0, %s152
    %s155 = sphi 0, %s154
    %s169 = sphi 0, %s155
    %s173 = sphi 0, %s173
    %s175 = sphi 0, %s173
    %s176 = sphi 0, %s175
    %s190 = sphi 0, %s176
    %s194 = sphi 0, %s194
    %s196 = sphi 0, %s194
    %s197 = sphi 0, %s196
    %s211 = sphi 0, %s197
    %s215 = sphi 0, %s215
    %s217 = sphi 0, %s215
    %s218 = sphi 0, %s217
    %s232 = sphi 0, %s218
    %s236 = sphi 0, %s236
    %s238 = sphi 0, %s236
    %s239 = sphi 0, %s238
    %s253 = sphi 0, %s239
    %s257 = sphi 0, %s257
    %s259 = sphi 0, %s257
    %s260 = sphi 0, %s259
    %s274 = sphi 0, %s260
    %s278 = sphi 0, %s278
    %s280 = sphi 0, %s278
    %s281 = sphi 0, %s280
    %s295 = sphi 0, %s281
    %s299 = sphi 0, %s299
    %s301 = sphi 0, %s299
    %s302 = sphi 0, %s301
    %s316 = sphi 0, %s302
    %s320 = sphi 0, %s320
    %s322 = sphi 0, %s320
    %s323 = sphi 0, %s322
    %s337 = sphi 0, %s323
    %s343 = sphi 0, %s345
    %s346 = sphi 0, %s343
    %s347 = sphi 0, %s346
    %s363 = sphi 0, %s347
  $region4: #{paraformer_forward.4} parent=0 // loop_header_branch
    %32 = sbr.rel (%p30) target = $region8
  $region5: #{paraformer_forward.4} parent=0 // loop_body
    %s34 = ssub.s32 %s29, 1
    %s35 = ssub.s32 %s29, 2
    %s36 = sadd.s32 %s29, 1
    %s37 = ssub.s32 %s29, %s36
    %p38 = scmp.eq.s32.totalorder %s37, 0
    %s40 = sadd.s32 %s39, 1
    %s41 = scalar_select %p38, %s39, %s40
    %p44 = pneg %p38
    %p45 = scmp.eq.s32.totalorder %s29, 1
    %p46 = por %p44, %p45
    %p47 = scmp.ne.s32.totalorder %s39, %s42
    %p48 = scmp.eq.s32.totalorder %s29, 0
    %p49 = por %p47, %p48
    %p50 = scmp.ne.s32.totalorder %s39, %s42
    %p51 = scmp.eq.s32.totalorder %s34, 1
    %p52 = por %p50, %p51
    %p53 = scmp.ne.s32.totalorder %s42, %s43
    %p54 = scmp.eq.s32.totalorder %s34, 0
    %p55 = por %p53, %p54
    %p56 = scmp.ne.s32.totalorder %s42, %s43
    %p57 = scmp.eq.s32.totalorder %s35, 1
    %p58 = por %p56, %p57
    %p60 = scmp.ne.s32.totalorder %s43, %s59
    %p61 = scmp.eq.s32.totalorder %s35, 0
    %p62 = por %p60, %p61
    %s63 = ssub.s32 %s29, %s36
    %p64 = scmp.eq.s32.totalorder %s63, 0
    %s66 = sadd.s32 %s65, 1
    %s67 = scalar_select %p64, %s65, %s66
    %p70 = pneg %p64
    %p71 = scmp.eq.s32.totalorder %s29, 1
    %p72 = por %p70, %p71
    %p73 = scmp.ne.s32.totalorder %s65, %s68
    %p74 = scmp.eq.s32.totalorder %s29, 0
    %p75 = por %p73, %p74
    %p76 = scmp.ne.s32.totalorder %s65, %s68
    %p77 = scmp.eq.s32.totalorder %s34, 1
    %p78 = por %p76, %p77
    %p79 = scmp.ne.s32.totalorder %s68, %s69
    %p80 = scmp.eq.s32.totalorder %s34, 0
    %p81 = por %p79, %p80
    %p82 = scmp.ne.s32.totalorder %s68, %s69
    %p83 = scmp.eq.s32.totalorder %s35, 1
    %p84 = por %p82, %p83
    %p86 = scmp.ne.s32.totalorder %s69, %s85
    %p87 = scmp.eq.s32.totalorder %s35, 0
    %p88 = por %p86, %p87
    %s90 = sadd.s32 %s89, 1
    %p93 = scmp.eq.s32.totalorder %s29, 1
    %p94 = scmp.ne.s32.totalorder %s89, %s91
    %p95 = scmp.eq.s32.totalorder %s29, 0
    %p96 = por %p94, %p95
    %p97 = scmp.ne.s32.totalorder %s89, %s91
    %p98 = scmp.eq.s32.totalorder %s34, 1
    %p99 = por %p97, %p98
    %p100 = scmp.ne.s32.totalorder %s91, %s92
    %p101 = scmp.eq.s32.totalorder %s34, 0
    %p102 = por %p100, %p101
    %p103 = scmp.ne.s32.totalorder %s91, %s92
    %p104 = scmp.eq.s32.totalorder %s35, 1
    %p105 = por %p103, %p104
    %p107 = scmp.ne.s32.totalorder %s92, %s106
    %p108 = scmp.eq.s32.totalorder %s35, 0
    %p109 = por %p107, %p108
    %s111 = sadd.s32 %s110, 1
    %p114 = scmp.eq.s32.totalorder %s29, 1
    %p115 = scmp.ne.s32.totalorder %s110, %s112
    %p116 = scmp.eq.s32.totalorder %s29, 0
    %p117 = por %p115, %p116
    %p118 = scmp.ne.s32.totalorder %s110, %s112
    %p119 = scmp.eq.s32.totalorder %s34, 1
    %p120 = por %p118, %p119
    %p121 = scmp.ne.s32.totalorder %s112, %s113
    %p122 = scmp.eq.s32.totalorder %s34, 0
    %p123 = por %p121, %p122
    %p124 = scmp.ne.s32.totalorder %s112, %s113
    %p125 = scmp.eq.s32.totalorder %s35, 1
    %p126 = por %p124, %p125
    %p128 = scmp.ne.s32.totalorder %s113, %s127
    %p129 = scmp.eq.s32.totalorder %s35, 0
    %p130 = por %p128, %p129
    %s132 = sadd.s32 %s131, 1
    %p135 = scmp.eq.s32.totalorder %s29, 1
    %p136 = scmp.ne.s32.totalorder %s131, %s133
    %p137 = scmp.eq.s32.totalorder %s29, 0
    %p138 = por %p136, %p137
    %p139 = scmp.ne.s32.totalorder %s131, %s133
    %p140 = scmp.eq.s32.totalorder %s34, 1
    %p141 = por %p139, %p140
    %p142 = scmp.ne.s32.totalorder %s133, %s134
    %p143 = scmp.eq.s32.totalorder %s34, 0
    %p144 = por %p142, %p143
    %p145 = scmp.ne.s32.totalorder %s133, %s134
    %p146 = scmp.eq.s32.totalorder %s35, 1
    %p147 = por %p145, %p146
    %p149 = scmp.ne.s32.totalorder %s134, %s148
    %p150 = scmp.eq.s32.totalorder %s35, 0
    %p151 = por %p149, %p150
    %s153 = sadd.s32 %s152, 1
    %p156 = scmp.eq.s32.totalorder %s29, 1
    %p157 = scmp.ne.s32.totalorder %s152, %s154
    %p158 = scmp.eq.s32.totalorder %s29, 0
    %p159 = por %p157, %p158
    %p160 = scmp.ne.s32.totalorder %s152, %s154
    %p161 = scmp.eq.s32.totalorder %s34, 1
    %p162 = por %p160, %p161
    %p163 = scmp.ne.s32.totalorder %s154, %s155
    %p164 = scmp.eq.s32.totalorder %s34, 0
    %p165 = por %p163, %p164
    %p166 = scmp.ne.s32.totalorder %s154, %s155
    %p167 = scmp.eq.s32.totalorder %s35, 1
    %p168 = por %p166, %p167
    %p170 = scmp.ne.s32.totalorder %s155, %s169
    %p171 = scmp.eq.s32.totalorder %s35, 0
    %p172 = por %p170, %p171
    %s174 = sadd.s32 %s173, 1
    %p177 = scmp.eq.s32.totalorder %s29, 1
    %p178 = scmp.ne.s32.totalorder %s173, %s175
    %p179 = scmp.eq.s32.totalorder %s29, 0
    %p180 = por %p178, %p179
    %p181 = scmp.ne.s32.totalorder %s173, %s175
    %p182 = scmp.eq.s32.totalorder %s34, 1
    %p183 = por %p181, %p182
    %p184 = scmp.ne.s32.totalorder %s175, %s176
    %p185 = scmp.eq.s32.totalorder %s34, 0
    %p186 = por %p184, %p185
    %p187 = scmp.ne.s32.totalorder %s175, %s176
    %p188 = scmp.eq.s32.totalorder %s35, 1
    %p189 = por %p187, %p188
    %p191 = scmp.ne.s32.totalorder %s176, %s190
    %p192 = scmp.eq.s32.totalorder %s35, 0
    %p193 = por %p191, %p192
    %s195 = sadd.s32 %s194, 1
    %p198 = scmp.eq.s32.totalorder %s29, 1
    %p199 = scmp.ne.s32.totalorder %s194, %s196
    %p200 = scmp.eq.s32.totalorder %s29, 0
    %p201 = por %p199, %p200
    %p202 = scmp.ne.s32.totalorder %s194, %s196
    %p203 = scmp.eq.s32.totalorder %s34, 1
    %p204 = por %p202, %p203
    %p205 = scmp.ne.s32.totalorder %s196, %s197
    %p206 = scmp.eq.s32.totalorder %s34, 0
    %p207 = por %p205, %p206
    %p208 = scmp.ne.s32.totalorder %s196, %s197
    %p209 = scmp.eq.s32.totalorder %s35, 1
    %p210 = por %p208, %p209
    %p212 = scmp.ne.s32.totalorder %s197, %s211
    %p213 = scmp.eq.s32.totalorder %s35, 0
    %p214 = por %p212, %p213
    %s216 = sadd.s32 %s215, 1
    %p219 = scmp.eq.s32.totalorder %s29, 1
    %p220 = scmp.ne.s32.totalorder %s215, %s217
    %p221 = scmp.eq.s32.totalorder %s29, 0
    %p222 = por %p220, %p221
    %p223 = scmp.ne.s32.totalorder %s215, %s217
    %p224 = scmp.eq.s32.totalorder %s34, 1
    %p225 = por %p223, %p224
    %p226 = scmp.ne.s32.totalorder %s217, %s218
    %p227 = scmp.eq.s32.totalorder %s34, 0
    %p228 = por %p226, %p227
    %p229 = scmp.ne.s32.totalorder %s217, %s218
    %p230 = scmp.eq.s32.totalorder %s35, 1
    %p231 = por %p229, %p230
    %p233 = scmp.ne.s32.totalorder %s218, %s232
    %p234 = scmp.eq.s32.totalorder %s35, 0
    %p235 = por %p233, %p234
    %s237 = sadd.s32 %s236, 1
    %p240 = scmp.eq.s32.totalorder %s29, 1
    %p241 = scmp.ne.s32.totalorder %s236, %s238
    %p242 = scmp.eq.s32.totalorder %s29, 0
    %p243 = por %p241, %p242
    %p244 = scmp.ne.s32.totalorder %s236, %s238
    %p245 = scmp.eq.s32.totalorder %s34, 1
    %p246 = por %p244, %p245
    %p247 = scmp.ne.s32.totalorder %s238, %s239
    %p248 = scmp.eq.s32.totalorder %s34, 0
    %p249 = por %p247, %p248
    %p250 = scmp.ne.s32.totalorder %s238, %s239
    %p251 = scmp.eq.s32.totalorder %s35, 1
    %p252 = por %p250, %p251
    %p254 = scmp.ne.s32.totalorder %s239, %s253
    %p255 = scmp.eq.s32.totalorder %s35, 0
    %p256 = por %p254, %p255
    %s258 = sadd.s32 %s257, 1
    %p261 = scmp.eq.s32.totalorder %s29, 1
    %p262 = scmp.ne.s32.totalorder %s257, %s259
    %p263 = scmp.eq.s32.totalorder %s29, 0
    %p264 = por %p262, %p263
    %p265 = scmp.ne.s32.totalorder %s257, %s259
    %p266 = scmp.eq.s32.totalorder %s34, 1
    %p267 = por %p265, %p266
    %p268 = scmp.ne.s32.totalorder %s259, %s260
    %p269 = scmp.eq.s32.totalorder %s34, 0
    %p270 = por %p268, %p269
    %p271 = scmp.ne.s32.totalorder %s259, %s260
    %p272 = scmp.eq.s32.totalorder %s35, 1
    %p273 = por %p271, %p272
    %p275 = scmp.ne.s32.totalorder %s260, %s274
    %p276 = scmp.eq.s32.totalorder %s35, 0
    %p277 = por %p275, %p276
    %s279 = sadd.s32 %s278, 1
    %p282 = scmp.eq.s32.totalorder %s29, 1
    %p283 = scmp.ne.s32.totalorder %s278, %s280
    %p284 = scmp.eq.s32.totalorder %s29, 0
    %p285 = por %p283, %p284
    %p286 = scmp.ne.s32.totalorder %s278, %s280
    %p287 = scmp.eq.s32.totalorder %s34, 1
    %p288 = por %p286, %p287
    %p289 = scmp.ne.s32.totalorder %s280, %s281
    %p290 = scmp.eq.s32.totalorder %s34, 0
    %p291 = por %p289, %p290
    %p292 = scmp.ne.s32.totalorder %s280, %s281
    %p293 = scmp.eq.s32.totalorder %s35, 1
    %p294 = por %p292, %p293
    %p296 = scmp.ne.s32.totalorder %s281, %s295
    %p297 = scmp.eq.s32.totalorder %s35, 0
    %p298 = por %p296, %p297
    %s300 = sadd.s32 %s299, 1
    %p303 = scmp.eq.s32.totalorder %s29, 1
    %p304 = scmp.ne.s32.totalorder %s299, %s301
    %p305 = scmp.eq.s32.totalorder %s29, 0
    %p306 = por %p304, %p305
    %p307 = scmp.ne.s32.totalorder %s299, %s301
    %p308 = scmp.eq.s32.totalorder %s34, 1
    %p309 = por %p307, %p308
    %p310 = scmp.ne.s32.totalorder %s301, %s302
    %p311 = scmp.eq.s32.totalorder %s34, 0
    %p312 = por %p310, %p311
    %p313 = scmp.ne.s32.totalorder %s301, %s302
    %p314 = scmp.eq.s32.totalorder %s35, 1
    %p315 = por %p313, %p314
    %p317 = scmp.ne.s32.totalorder %s302, %s316
    %p318 = scmp.eq.s32.totalorder %s35, 0
    %p319 = por %p317, %p318
    %s321 = sadd.s32 %s320, 1
    %p324 = scmp.eq.s32.totalorder %s29, 1
    %p325 = scmp.ne.s32.totalorder %s320, %s322
    %p326 = scmp.eq.s32.totalorder %s29, 0
    %p327 = por %p325, %p326
    %p328 = scmp.ne.s32.totalorder %s320, %s322
    %p329 = scmp.eq.s32.totalorder %s34, 1
    %p330 = por %p328, %p329
    %p331 = scmp.ne.s32.totalorder %s322, %s323
    %p332 = scmp.eq.s32.totalorder %s34, 0
    %p333 = por %p331, %p332
    %p334 = scmp.ne.s32.totalorder %s322, %s323
    %p335 = scmp.eq.s32.totalorder %s35, 1
    %p336 = por %p334, %p335
    %p338 = scmp.ne.s32.totalorder %s323, %s337
    %p339 = scmp.eq.s32.totalorder %s35, 0
    %p340 = por %p338, %p339
    %s341 = ssub.s32 %s29, %s36
    %p342 = scmp.eq.s32.totalorder %s341, 0
    %s344 = sadd.s32 %s343, 1
    %s345 = scalar_select %p342, %s343, %s344
    %p348 = pneg %p342
    %p349 = scmp.eq.s32.totalorder %s29, 1
    %p350 = por %p348, %p349
    %p351 = scmp.ne.s32.totalorder %s343, %s346
    %p352 = scmp.eq.s32.totalorder %s29, 0
    %p353 = por %p351, %p352
    %p354 = scmp.ne.s32.totalorder %s343, %s346
    %p355 = scmp.eq.s32.totalorder %s34, 1
    %p356 = por %p354, %p355
    %p357 = scmp.ne.s32.totalorder %s346, %s347
    %p358 = scmp.eq.s32.totalorder %s34, 0
    %p359 = por %p357, %p358
    %p360 = scmp.ne.s32.totalorder %s346, %s347
    %p361 = scmp.eq.s32.totalorder %s35, 1
    %p362 = por %p360, %p361
    %p364 = scmp.ne.s32.totalorder %s347, %s363
    %p365 = scmp.eq.s32.totalorder %s35, 0
    %p366 = por %p364, %p365
    %p367 = scmp.le.s32.totalorder 1, %s29
    %p368 = scmp.lt.s32.totalorder %s29, 3
    %p369 = pnand %p367, %p368
    %p370 = pneg %p369
    // Predicated region
    $region9: #{paraformer_forward.4} parent=5 // pred_check
      _
    $region10: #{paraformer_forward.4} parent=5 // pred_check_branch
      %372 = sbr.rel (%p369) target = $region12
    $region11: #{paraformer_forward.4} parent=5 // pred_region
      %s373 = ssub.s32 %s29, 1
      // Predicated region
      $region13: #{paraformer_forward.4} parent=11 // pred_check
        %p374 = pneg %p102
      $region14: #{paraformer_forward.4} parent=11 // pred_check_branch
        %376 = sbr.rel (%p374) target = $region16
      $region15: #{paraformer_forward.4} parent=11 // pred_region
        _
      $region16: #{paraformer_forward.4} parent=11 // pred_fallthru
        _
      // Predicated region
      $region17: #{paraformer_forward.4} parent=11 // pred_check
        %p377 = pneg %p123
      $region18: #{paraformer_forward.4} parent=11 // pred_check_branch
        %379 = sbr.rel (%p377) target = $region20
      $region19: #{paraformer_forward.4} parent=11 // pred_region
        _
      $region20: #{paraformer_forward.4} parent=11 // pred_fallthru
        _
      // Predicated region
      $region21: #{paraformer_forward.4} parent=11 // pred_check
        %p380 = pneg %p144
      $region22: #{paraformer_forward.4} parent=11 // pred_check_branch
        %382 = sbr.rel (%p380) target = $region24
      $region23: #{paraformer_forward.4} parent=11 // pred_region
        _
      $region24: #{paraformer_forward.4} parent=11 // pred_fallthru
        _
      // Predicated region
      $region25: #{paraformer_forward.4} parent=11 // pred_check
        %p383 = pneg %p165
      $region26: #{paraformer_forward.4} parent=11 // pred_check_branch
        %385 = sbr.rel (%p383) target = $region28
      $region27: #{paraformer_forward.4} parent=11 // pred_region
        _
      $region28: #{paraformer_forward.4} parent=11 // pred_fallthru
        _
      // Predicated region
      $region29: #{paraformer_forward.4} parent=11 // pred_check
        %p386 = pneg %p186
      $region30: #{paraformer_forward.4} parent=11 // pred_check_branch
        %388 = sbr.rel (%p386) target = $region32
      $region31: #{paraformer_forward.4} parent=11 // pred_region
        _
      $region32: #{paraformer_forward.4} parent=11 // pred_fallthru
        _
      // Predicated region
      $region33: #{paraformer_forward.4} parent=11 // pred_check
        %p389 = pneg %p207
      $region34: #{paraformer_forward.4} parent=11 // pred_check_branch
        %391 = sbr.rel (%p389) target = $region36
      $region35: #{paraformer_forward.4} parent=11 // pred_region
        _
      $region36: #{paraformer_forward.4} parent=11 // pred_fallthru
        _
      // Predicated region
      $region37: #{paraformer_forward.4} parent=11 // pred_check
        %p392 = pneg %p228
      $region38: #{paraformer_forward.4} parent=11 // pred_check_branch
        %394 = sbr.rel (%p392) target = $region40
      $region39: #{paraformer_forward.4} parent=11 // pred_region
        _
      $region40: #{paraformer_forward.4} parent=11 // pred_fallthru
        _
      // Predicated region
      $region41: #{paraformer_forward.4} parent=11 // pred_check
        %p395 = pneg %p249
      $region42: #{paraformer_forward.4} parent=11 // pred_check_branch
        %397 = sbr.rel (%p395) target = $region44
      $region43: #{paraformer_forward.4} parent=11 // pred_region
        _
      $region44: #{paraformer_forward.4} parent=11 // pred_fallthru
        _
      // Predicated region
      $region45: #{paraformer_forward.4} parent=11 // pred_check
        %p398 = pneg %p270
      $region46: #{paraformer_forward.4} parent=11 // pred_check_branch
        %400 = sbr.rel (%p398) target = $region48
      $region47: #{paraformer_forward.4} parent=11 // pred_region
        _
      $region48: #{paraformer_forward.4} parent=11 // pred_fallthru
        _
      // Predicated region
      $region49: #{paraformer_forward.4} parent=11 // pred_check
        %p401 = pneg %p291
      $region50: #{paraformer_forward.4} parent=11 // pred_check_branch
        %403 = sbr.rel (%p401) target = $region52
      $region51: #{paraformer_forward.4} parent=11 // pred_region
        _
      $region52: #{paraformer_forward.4} parent=11 // pred_fallthru
        _
      // Predicated region
      $region53: #{paraformer_forward.4} parent=11 // pred_check
        %p404 = pneg %p312
      $region54: #{paraformer_forward.4} parent=11 // pred_check_branch
        %406 = sbr.rel (%p404) target = $region56
      $region55: #{paraformer_forward.4} parent=11 // pred_region
        _
      $region56: #{paraformer_forward.4} parent=11 // pred_fallthru
        _
      // Predicated region
      $region57: #{paraformer_forward.4} parent=11 // pred_check
        %p407 = pneg %p333
      $region58: #{paraformer_forward.4} parent=11 // pred_check_branch
        %409 = sbr.rel (%p407) target = $region60
      $region59: #{paraformer_forward.4} parent=11 // pred_region
        _
      $region60: #{paraformer_forward.4} parent=11 // pred_fallthru
        _
    $region12: #{paraformer_forward.4} parent=5 // pred_fallthru
      _
    %p410 = scmp.lt.s32.totalorder %s29, 2
    // Predicated region
    $region61: #{paraformer_forward.4} parent=5 // pred_check
      %p411 = pneg %p410
    $region62: #{paraformer_forward.4} parent=5 // pred_check_branch
      %413 = sbr.rel (%p411) target = $region64
    $region63: #{paraformer_forward.4} parent=5 // pred_region
      // Predicated region
      $region65: #{paraformer_forward.4} parent=63 // pred_check
        %p414 = pneg %p49
      $region66: #{paraformer_forward.4} parent=63 // pred_check_branch
        %416 = sbr.rel (%p414) target = $region68
      $region67: #{paraformer_forward.4} parent=63 // pred_region
        %p417 = scmp.lt.s32.totalorder %s29, 1
        %s418 = scalar_select %p417, %s29, 1
        %s419 = smul.addr %s418, 2
        %s420 = smul.addr %s419, 8
        %s421 = scalar_lea.vmem %s1, %s420
      $region68: #{paraformer_forward.4} parent=63 // pred_fallthru
        _
      // Predicated region
      $region69: #{paraformer_forward.4} parent=63 // pred_check
        %p422 = pneg %p75
      $region70: #{paraformer_forward.4} parent=63 // pred_check_branch
        %424 = sbr.rel (%p422) target = $region72
      $region71: #{paraformer_forward.4} parent=63 // pred_region
        %p425 = scmp.lt.s32.totalorder %s29, 1
        %s426 = scalar_select %p425, %s29, 1
        %s427 = smul.addr %s426, 16
        %s428 = smul.addr %s427, 4
        %s429 = scalar_lea.vmem %s2, %s428
      $region72: #{paraformer_forward.4} parent=63 // pred_fallthru
        _
    $region64: #{paraformer_forward.4} parent=5 // pred_fallthru
      _
    %p430 = scmp.le.s32.totalorder 1, %s29
    %p431 = scmp.lt.s32.totalorder %s29, 3
    %p432 = pnand %p430, %p431
    %p433 = pneg %p432
    // Predicated region
    $region73: #{paraformer_forward.4} parent=5 // pred_check
      _
    $region74: #{paraformer_forward.4} parent=5 // pred_check_branch
      %435 = sbr.rel (%p432) target = $region76
    $region75: #{paraformer_forward.4} parent=5 // pred_region
      %s436 = ssub.s32 %s29, 1
      %p437 = scmp.lt.s32.totalorder %s34, 1
      %s438 = scalar_select %p437, %s34, 1
      %s439 = smul.addr %s438, 2
      %s440 = smul.addr %s439, 8
      %s441 = scalar_lea.vmem %s1, %s440
      %p442 = pneg %p55
      %p443 = pneg %p52
      %p444 = scmp.lt.s32.totalorder %s34, 1
      %s445 = scalar_select %p444, %s34, 1
      %s446 = smul.addr %s445, 16
      %s447 = smul.addr %s446, 4
      %s448 = scalar_lea.vmem %s2, %s447
      %p449 = pneg %p81
      %p450 = pneg %p78
      %p451 = pneg %p102
      %p452 = pneg %p99
      %p453 = pneg %p123
      %p454 = pneg %p120
      %p455 = pneg %p144
      %p456 = pneg %p141
      %p457 = pneg %p165
      %p458 = pneg %p162
      %p459 = pneg %p186
      %p460 = pneg %p183
      %p461 = pneg %p207
      %p462 = pneg %p204
      %p463 = pneg %p228
      %p464 = pneg %p225
      %p465 = pneg %p249
      %p466 = pneg %p246
      %p467 = pneg %p270
      %p468 = pneg %p267
      %p469 = pneg %p291
      %p470 = pneg %p288
      %p471 = pneg %p312
      %p472 = pneg %p309
      %p473 = pneg %p333
      %p474 = pneg %p330
      %p475 = pneg %p359
      %p476 = pneg %p356
      %p477 = scmp.lt.s32.totalorder %s34, 1
      %s478 = scalar_select %p477, %s34, 1
      %s479 = smul.addr %s478, 2
      %s480 = smul.addr %s479, 4
      %s481 = scalar_lea.vmem %s15, %s480
      %p482 = scmp.lt.s32.totalorder %s34, 1
      %s483 = scalar_select %p482, %s34, 1
      %s484 = smul.addr %s483, 2
      %s485 = smul.addr %s484, 8
      %s486 = scalar_lea.vmem %s1, %s485
      %p487 = scmp.lt.s32.totalorder %s34, 1
      %s488 = scalar_select %p487, %s34, 1
      %s489 = smul.addr %s488, 16
      %s490 = smul.addr %s489, 4
      %s491 = scalar_lea.vmem %s2, %s490
      %p492 = scmp.lt.s32.totalorder %s34, 1
      %s493 = scalar_select %p492, %s34, 1
      %s494 = smul.addr %s493, 2
      %s495 = smul.addr %s494, 4
      %s496 = scalar_lea.vmem %s15, %s495
      %v497 = vld [vmem:[%s486] sm:$0xff]
      %v498 = vld [vmem:[%s486 + $0x8] sm:$0xff]
      %v499 = vld [vmem:[%s491] sm:$0xf]
      %v500 = vld [vmem:[%s491 + $0x4] sm:$0xf]
      %v501 = vld [vmem:[%s491 + $0x8] sm:$0xf]
      %v502 = vld [vmem:[%s491 + $0xc] sm:$0xf]
      %v503 = vld [vmem:[%s491 + $0x10] sm:$0xf]
      %v504 = vld [vmem:[%s491 + $0x14] sm:$0xf]
      %v505 = vld [vmem:[%s491 + $0x18] sm:$0xf]
      %v506 = vld [vmem:[%s491 + $0x1c] sm:$0xf]
      %v507 = vld [vmem:[%s491 + $0x20] sm:$0xf]
      %v508 = vld [vmem:[%s491 + $0x24] sm:$0xf]
      %v509 = vld [vmem:[%s491 + $0x28] sm:$0xf]
      %v510 = vld [vmem:[%s491 + $0x2c] sm:$0xf]
      %v511 = vld [vmem:[%s491 + $0x30] sm:$0xf]
      %v512 = vld [vmem:[%s491 + $0x34] sm:$0xf]
      %v513 = vld [vmem:[%s491 + $0x38] sm:$0xf]
      %v514 = vld [vmem:[%s491 + $0x3c] sm:$0xf]
      %v515 = vlaneseq
      %v516 = vand.u32 %v515, 127
      %s517 = sld [smem:[#allocation3 + %s34]]
      %v518 = vstv %s517
      %vm519 = vcmp.lt.s32.totalorder %v516, %v518
      %v520 = vsel %vm519, 1, 0
      %v521 = vcvt.s32.f32 %v520
      %v522 = vpack.c.bf16 %v498, %v497
      %v523 = vld [vmem:[%s3] sm:$0xf]
      %v524 = vld [vmem:[%s3 + $0x4] sm:$0xf]
      %v525 = vld [vmem:[%s3 + $0x8] sm:$0xf]
      %v526 = vld [vmem:[%s3 + $0xc] sm:$0xf]
      %v527 = vld [vmem:[%s3 + $0x10] sm:$0xf]
      %v528 = vld [vmem:[%s3 + $0x14] sm:$0xf]
      %v529 = vld [vmem:[%s3 + $0x18] sm:$0xf]
      %v530 = vld [vmem:[%s3 + $0x1c] sm:$0xf]
      %v531 = vld [vmem:[%s3 + $0x20] sm:$0xf]
      %v532 = vld [vmem:[%s3 + $0x24] sm:$0xf]
      %v533 = vld [vmem:[%s3 + $0x28] sm:$0xf]
      %v534 = vld [vmem:[%s3 + $0x2c] sm:$0xf]
      %v535 = vld [vmem:[%s3 + $0x30] sm:$0xf]
      %v536 = vld [vmem:[%s3 + $0x34] sm:$0xf]
      %v537 = vld [vmem:[%s3 + $0x38] sm:$0xf]
      %v538 = vld [vmem:[%s3 + $0x3c] sm:$0xf]
      %v555 = vunpack.c.l.b16 %v523
      %v556 = vunpack.c.l.b16 %v524
      %v557 = vunpack.c.l.b16 %v525
      %v558 = vunpack.c.l.b16 %v526
      %v559 = vunpack.c.l.b16 %v527
      %v560 = vunpack.c.l.b16 %v528
      %v561 = vunpack.c.l.b16 %v529
      %v562 = vunpack.c.l.b16 %v530
      %v563 = vunpack.c.l.b16 %v531
      %v564 = vunpack.c.l.b16 %v532
      %v565 = vunpack.c.l.b16 %v533
      %v566 = vunpack.c.l.b16 %v534
      %v567 = vunpack.c.l.b16 %v535
      %v568 = vunpack.c.l.b16 %v536
      %v569 = vunpack.c.l.b16 %v537
      %v570 = vunpack.c.l.b16 %v538
      %v571 = vpack.c.b16 %v556, %v555
      %v572 = vpack.c.b16 %v558, %v557
      %v573 = vpack.c.b16 %v560, %v559
      %v574 = vpack.c.b16 %v562, %v561
      %v575 = vpack.c.b16 %v564, %v563
      %v576 = vpack.c.b16 %v566, %v565
      %v577 = vpack.c.b16 %v568, %v567
      %v578 = vpack.c.b16 %v570, %v569
      %587 = vmatpush.bf16.msra.mxu0 %v578
      %588 = vmatpush.bf16.msra.mxu0 %v577
      %589 = vmatpush.bf16.msra.mxu0 %v576
      %590 = vmatpush.bf16.msra.mxu0 %v575
      %591 = vmatpush.bf16.msra.mxu0 %v574
      %592 = vmatpush.bf16.msra.mxu0 %v573
      %593 = vmatpush.bf16.msra.mxu0 %v572
      %594 = vmatpush.bf16.msra.mxu0 %v571
      %595 = vmatmul.bf16.gmra.mxu0 %v522
      %v596 = vpop.f32.mrf.mxu0
      %v597 = vadd.f32 0.0, %v596
      %v598 = vpop.f32.mrf.mxu0
      %v599 = vadd.f32 0.0, %v598
      %600 = vdwg.mxu0
      %v601 = vpack.c.bf16 %v599, %v597
      %v602 = vld [vmem:[%s4] sm:$0xf]
      %v603 = vld [vmem:[%s4 + $0x4] sm:$0xf]
      %v604 = vld [vmem:[%s4 + $0x8] sm:$0xf]
      %v605 = vld [vmem:[%s4 + $0xc] sm:$0xf]
      %v606 = vld [vmem:[%s4 + $0x10] sm:$0xf]
      %v607 = vld [vmem:[%s4 + $0x14] sm:$0xf]
      %v608 = vld [vmem:[%s4 + $0x18] sm:$0xf]
      %v609 = vld [vmem:[%s4 + $0x1c] sm:$0xf]
      %v610 = vld [vmem:[%s4 + $0x20] sm:$0xf]
      %v611 = vld [vmem:[%s4 + $0x24] sm:$0xf]
      %v612 = vld [vmem:[%s4 + $0x28] sm:$0xf]
      %v613 = vld [vmem:[%s4 + $0x2c] sm:$0xf]
      %v614 = vld [vmem:[%s4 + $0x30] sm:$0xf]
      %v615 = vld [vmem:[%s4 + $0x34] sm:$0xf]
      %v616 = vld [vmem:[%s4 + $0x38] sm:$0xf]
      %v617 = vld [vmem:[%s4 + $0x3c] sm:$0xf]
      %v634 = vunpack.c.l.b16 %v499
      %v635 = vunpack.c.l.b16 %v500
      %v636 = vunpack.c.l.b16 %v501
      %v637 = vunpack.c.l.b16 %v502
      %v638 = vunpack.c.l.b16 %v503
      %v639 = vunpack.c.l.b16 %v504
      %v640 = vunpack.c.l.b16 %v505
      %v641 = vunpack.c.l.b16 %v506
      %v642 = vunpack.c.l.b16 %v507
      %v643 = vunpack.c.l.b16 %v508
      %v644 = vunpack.c.l.b16 %v509
      %v645 = vunpack.c.l.b16 %v510
      %v646 = vunpack.c.l.b16 %v511
      %v647 = vunpack.c.l.b16 %v512
      %v648 = vunpack.c.l.b16 %v513
      %v649 = vunpack.c.l.b16 %v514
      %v650 = vpack.c.b16 %v635, %v634
      %v651 = vpack.c.b16 %v637, %v636
      %v652 = vpack.c.b16 %v639, %v638
      %v653 = vpack.c.b16 %v641, %v640
      %v654 = vpack.c.b16 %v643, %v642
      %v655 = vpack.c.b16 %v645, %v644
      %v656 = vpack.c.b16 %v647, %v646
      %v657 = vpack.c.b16 %v649, %v648
      %v682 = vunpack.c.l.b16 %v602
      %v683 = vunpack.c.l.b16 %v603
      %v684 = vunpack.c.l.b16 %v604
      %v685 = vunpack.c.l.b16 %v605
      %v686 = vunpack.c.l.b16 %v606
      %v687 = vunpack.c.l.b16 %v607
      %v688 = vunpack.c.l.b16 %v608
      %v689 = vunpack.c.l.b16 %v609
      %v690 = vunpack.c.l.b16 %v610
      %v691 = vunpack.c.l.b16 %v611
      %v692 = vunpack.c.l.b16 %v612
      %v693 = vunpack.c.l.b16 %v613
      %v694 = vunpack.c.l.b16 %v614
      %v695 = vunpack.c.l.b16 %v615
      %v696 = vunpack.c.l.b16 %v616
      %v697 = vunpack.c.l.b16 %v617
      %v698 = vpack.c.b16 %v683, %v682
      %v699 = vpack.c.b16 %v685, %v684
      %v700 = vpack.c.b16 %v687, %v686
      %v701 = vpack.c.b16 %v689, %v688
      %v702 = vpack.c.b16 %v691, %v690
      %v703 = vpack.c.b16 %v693, %v692
      %v704 = vpack.c.b16 %v695, %v694
      %v705 = vpack.c.b16 %v697, %v696
      %714 = vmatpush.bf16.msra.mxu0 %v705
      %715 = vmatpush.bf16.msra.mxu0 %v704
      %716 = vmatpush.bf16.msra.mxu0 %v703
      %717 = vmatpush.bf16.msra.mxu0 %v702
      %718 = vmatpush.bf16.msra.mxu0 %v701
      %719 = vmatpush.bf16.msra.mxu0 %v700
      %720 = vmatpush.bf16.msra.mxu0 %v699
      %721 = vmatpush.bf16.msra.mxu0 %v698
      %722 = vmatmul.bf16.gmra.mxu0 %v650
      %v723 = vpop.f32.mrf.mxu0
      %v724 = vadd.f32 0.0, %v723
      %v725 = vpop.f32.mrf.mxu0
      %v726 = vadd.f32 0.0, %v725
      %727 = vmatmul.bf16.gmra.mxu0 %v651
      %v728 = vpop.f32.mrf.mxu0
      %v729 = vadd.f32 0.0, %v728
      %v730 = vpop.f32.mrf.mxu0
      %v731 = vadd.f32 0.0, %v730
      %732 = vmatmul.bf16.gmra.mxu0 %v652
      %v733 = vpop.f32.mrf.mxu0
      %v734 = vadd.f32 0.0, %v733
      %v735 = vpop.f32.mrf.mxu0
      %v736 = vadd.f32 0.0, %v735
      %737 = vmatmul.bf16.gmra.mxu0 %v653
      %v738 = vpop.f32.mrf.mxu0
      %v739 = vadd.f32 0.0, %v738
      %v740 = vpop.f32.mrf.mxu0
      %v741 = vadd.f32 0.0, %v740
      %742 = vmatmul.bf16.gmra.mxu0 %v654
      %v743 = vpop.f32.mrf.mxu0
      %v744 = vadd.f32 0.0, %v743
      %v745 = vpop.f32.mrf.mxu0
      %v746 = vadd.f32 0.0, %v745
      %747 = vmatmul.bf16.gmra.mxu0 %v655
      %v748 = vpop.f32.mrf.mxu0
      %v749 = vadd.f32 0.0, %v748
      %v750 = vpop.f32.mrf.mxu0
      %v751 = vadd.f32 0.0, %v750
      %752 = vmatmul.bf16.gmra.mxu0 %v656
      %v753 = vpop.f32.mrf.mxu0
      %v754 = vadd.f32 0.0, %v753
      %v755 = vpop.f32.mrf.mxu0
      %v756 = vadd.f32 0.0, %v755
      %757 = vmatmul.bf16.gmra.mxu0 %v657
      %v758 = vpop.f32.mrf.mxu0
      %v759 = vadd.f32 0.0, %v758
      %v760 = vpop.f32.mrf.mxu0
      %v761 = vadd.f32 0.0, %v760
      %762 = vdwg.mxu0
      %v763 = vpack.c.bf16 %v726, %v724
      %v764 = vpack.c.bf16 %v731, %v729
      %v765 = vpack.c.bf16 %v736, %v734
      %v766 = vpack.c.bf16 %v741, %v739
      %v767 = vpack.c.bf16 %v746, %v744
      %v768 = vpack.c.bf16 %v751, %v749
      %v769 = vpack.c.bf16 %v756, %v754
      %v770 = vpack.c.bf16 %v761, %v759
      %v771 = vld [vmem:[%s5] sm:$0xf]
      %v772 = vld [vmem:[%s5 + $0x4] sm:$0xf]
      %v773 = vld [vmem:[%s5 + $0x8] sm:$0xf]
      %v774 = vld [vmem:[%s5 + $0xc] sm:$0xf]
      %v775 = vld [vmem:[%s5 + $0x10] sm:$0xf]
      %v776 = vld [vmem:[%s5 + $0x14] sm:$0xf]
      %v777 = vld [vmem:[%s5 + $0x18] sm:$0xf]
      %v778 = vld [vmem:[%s5 + $0x1c] sm:$0xf]
      %v779 = vld [vmem:[%s5 + $0x20] sm:$0xf]
      %v780 = vld [vmem:[%s5 + $0x24] sm:$0xf]
      %v781 = vld [vmem:[%s5 + $0x28] sm:$0xf]
      %v782 = vld [vmem:[%s5 + $0x2c] sm:$0xf]
      %v783 = vld [vmem:[%s5 + $0x30] sm:$0xf]
      %v784 = vld [vmem:[%s5 + $0x34] sm:$0xf]
      %v785 = vld [vmem:[%s5 + $0x38] sm:$0xf]
      %v786 = vld [vmem:[%s5 + $0x3c] sm:$0xf]
      %v803 = vunpack.c.l.b16 %v771
      %v804 = vunpack.c.l.b16 %v772
      %v805 = vunpack.c.l.b16 %v773
      %v806 = vunpack.c.l.b16 %v774
      %v807 = vunpack.c.l.b16 %v775
      %v808 = vunpack.c.l.b16 %v776
      %v809 = vunpack.c.l.b16 %v777
      %v810 = vunpack.c.l.b16 %v778
      %v811 = vunpack.c.l.b16 %v779
      %v812 = vunpack.c.l.b16 %v780
      %v813 = vunpack.c.l.b16 %v781
      %v814 = vunpack.c.l.b16 %v782
      %v815 = vunpack.c.l.b16 %v783
      %v816 = vunpack.c.l.b16 %v784
      %v817 = vunpack.c.l.b16 %v785
      %v818 = vunpack.c.l.b16 %v786
      %v819 = vpack.c.b16 %v804, %v803
      %v820 = vpack.c.b16 %v806, %v805
      %v821 = vpack.c.b16 %v808, %v807
      %v822 = vpack.c.b16 %v810, %v809
      %v823 = vpack.c.b16 %v812, %v811
      %v824 = vpack.c.b16 %v814, %v813
      %v825 = vpack.c.b16 %v816, %v815
      %v826 = vpack.c.b16 %v818, %v817
      %835 = vmatpush.bf16.msra.mxu0 %v826
      %836 = vmatpush.bf16.msra.mxu0 %v825
      %837 = vmatpush.bf16.msra.mxu0 %v824
      %838 = vmatpush.bf16.msra.mxu0 %v823
      %839 = vmatpush.bf16.msra.mxu0 %v822
      %840 = vmatpush.bf16.msra.mxu0 %v821
      %841 = vmatpush.bf16.msra.mxu0 %v820
      %842 = vmatpush.bf16.msra.mxu0 %v819
      %843 = vmatmul.bf16.gmra.mxu0 %v650
      %v844 = vpop.f32.mrf.mxu0
      %v845 = vadd.f32 0.0, %v844
      %v846 = vpop.f32.mrf.mxu0
      %v847 = vadd.f32 0.0, %v846
      %848 = vmatmul.bf16.gmra.mxu0 %v651
      %v849 = vpop.f32.mrf.mxu0
      %v850 = vadd.f32 0.0, %v849
      %v851 = vpop.f32.mrf.mxu0
      %v852 = vadd.f32 0.0, %v851
      %853 = vmatmul.bf16.gmra.mxu0 %v652
      %v854 = vpop.f32.mrf.mxu0
      %v855 = vadd.f32 0.0, %v854
      %v856 = vpop.f32.mrf.mxu0
      %v857 = vadd.f32 0.0, %v856
      %858 = vmatmul.bf16.gmra.mxu0 %v653
      %v859 = vpop.f32.mrf.mxu0
      %v860 = vadd.f32 0.0, %v859
      %v861 = vpop.f32.mrf.mxu0
      %v862 = vadd.f32 0.0, %v861
      %863 = vmatmul.bf16.gmra.mxu0 %v654
      %v864 = vpop.f32.mrf.mxu0
      %v865 = vadd.f32 0.0, %v864
      %v866 = vpop.f32.mrf.mxu0
      %v867 = vadd.f32 0.0, %v866
      %868 = vmatmul.bf16.gmra.mxu0 %v655
      %v869 = vpop.f32.mrf.mxu0
      %v870 = vadd.f32 0.0, %v869
      %v871 = vpop.f32.mrf.mxu0
      %v872 = vadd.f32 0.0, %v871
      %873 = vmatmul.bf16.gmra.mxu0 %v656
      %v874 = vpop.f32.mrf.mxu0
      %v875 = vadd.f32 0.0, %v874
      %v876 = vpop.f32.mrf.mxu0
      %v877 = vadd.f32 0.0, %v876
      %878 = vmatmul.bf16.gmra.mxu0 %v657
      %v879 = vpop.f32.mrf.mxu0
      %v880 = vadd.f32 0.0, %v879
      %v881 = vpop.f32.mrf.mxu0
      %v882 = vadd.f32 0.0, %v881
      %883 = vdwg.mxu0
      %v884 = vpack.c.bf16 %v847, %v845
      %v885 = vpack.c.bf16 %v852, %v850
      %v886 = vpack.c.bf16 %v857, %v855
      %v887 = vpack.c.bf16 %v862, %v860
      %v888 = vpack.c.bf16 %v867, %v865
      %v889 = vpack.c.bf16 %v872, %v870
      %v890 = vpack.c.bf16 %v877, %v875
      %v891 = vpack.c.bf16 %v882, %v880
      %892 = vmatpush.bf16.xpose.msra.mxu0 %v770
      %893 = vmatpush.bf16.xpose.msra.mxu0 %v769
      %894 = vmatpush.bf16.xpose.msra.mxu0 %v768
      %895 = vmatpush.bf16.xpose.msra.mxu0 %v767
      %896 = vmatpush.bf16.xpose.msra.mxu0 %v766
      %897 = vmatpush.bf16.xpose.msra.mxu0 %v765
      %898 = vmatpush.bf16.xpose.msra.mxu0 %v764
      %899 = vmatpush.bf16.xpose.msra.mxu0 %v763
      %900 = vmatmul.bf16.gmra.mxu0 %v601
      %v901 = vpop.f32.mrf.mxu0
      %v902 = vadd.f32 0.0, %v901
      %v903 = vpop.f32.mrf.mxu0
      %v904 = vadd.f32 0.0, %v903
      %905 = vdwg.mxu0
      %v906 = vmul.f32 %v902, 0.088388346
      %v907 = vmul.f32 %v904, 0.088388346
      %v908 = vsub.f32 %v521, 1.0
      %v909 = vmul.f32 %v908, 1e+30
      %v910 = vadd.f32 %v906, %v909
      %v911 = vadd.f32 %v907, %v909
      %912 = vmax.xlane.f32.xlu0 %v910
      %v913 = vpop.xlane.xlu0 %912
      %914 = vmax.xlane.f32.xlu0 %v911
      %v915 = vpop.xlane.xlu0 %914
      %v916 = vmax.f32 %v913, -1e+30
      %v917 = vmax.f32 %v915, -1e+30
      %v918 = vsub.f32 -1e+30, %v916
      %v919 = vsub.f32 -1e+30, %v917
      %v920 = vmul.f32 %v918, 1.442695
      %v921 = vpow.pop %v920
      %v922 = vmul.f32 %v919, 1.442695
      %v923 = vpow.pop %v922
      %v924 = vsub.f32 %v910, %v916
      %v925 = vsub.f32 %v911, %v917
      %v926 = vmul.f32 %v924, 1.442695
      %v927 = vpow.pop %v926
      %v928 = vmul.f32 %v925, 1.442695
      %v929 = vpow.pop %v928
      %v930 = vmul.f32 %v921, 0.0
      %v931 = vmul.f32 %v923, 0.0
      %932 = vadd.xlane.f32.xlu0 %v927
      %v933 = vpop.xlane.xlu0 %932
      %934 = vadd.xlane.f32.xlu0 %v929
      %v935 = vpop.xlane.xlu0 %934
      %v936 = vadd.f32 %v930, %v933
      %v937 = vadd.f32 %v931, %v935
      %v938 = vpack.c.bf16 %v929, %v927
      %939 = vmatpush.bf16.msra.mxu0 %v891
      %940 = vmatpush.bf16.msra.mxu0 %v890
      %941 = vmatpush.bf16.msra.mxu0 %v889
      %942 = vmatpush.bf16.msra.mxu0 %v888
      %943 = vmatpush.bf16.msra.mxu0 %v887
      %944 = vmatpush.bf16.msra.mxu0 %v886
      %945 = vmatpush.bf16.msra.mxu0 %v885
      %946 = vmatpush.bf16.msra.mxu0 %v884
      %947 = vmatmul.bf16.gmra.mxu0 %v938
      %v948 = vpop.f32.mrf.mxu0
      %v949 = vadd.f32 0.0, %v948
      %v950 = vpop.f32.mrf.mxu0
      %v951 = vadd.f32 0.0, %v950
      %952 = vdwg.mxu0
      %v953 = vadd.f32 %v930, %v949
      %v954 = vadd.f32 %v931, %v951
      %v955 = vrcp.pop %v936
      %v956 = vrcp.pop %v937
      %v957 = vmul.f32 %v953, %v955
      %v958 = vmul.f32 %v954, %v956
      %v959 = vpack.c.bf16 %v958, %v957
      %v960 = vld [vmem:[%s6] sm:$0xf]
      %v961 = vld [vmem:[%s6 + $0x4] sm:$0xf]
      %v962 = vld [vmem:[%s6 + $0x8] sm:$0xf]
      %v963 = vld [vmem:[%s6 + $0xc] sm:$0xf]
      %v964 = vld [vmem:[%s6 + $0x10] sm:$0xf]
      %v965 = vld [vmem:[%s6 + $0x14] sm:$0xf]
      %v966 = vld [vmem:[%s6 + $0x18] sm:$0xf]
      %v967 = vld [vmem:[%s6 + $0x1c] sm:$0xf]
      %v968 = vld [vmem:[%s6 + $0x20] sm:$0xf]
      %v969 = vld [vmem:[%s6 + $0x24] sm:$0xf]
      %v970 = vld [vmem:[%s6 + $0x28] sm:$0xf]
      %v971 = vld [vmem:[%s6 + $0x2c] sm:$0xf]
      %v972 = vld [vmem:[%s6 + $0x30] sm:$0xf]
      %v973 = vld [vmem:[%s6 + $0x34] sm:$0xf]
      %v974 = vld [vmem:[%s6 + $0x38] sm:$0xf]
      %v975 = vld [vmem:[%s6 + $0x3c] sm:$0xf]
      %v992 = vunpack.c.l.b16 %v960
      %v993 = vunpack.c.l.b16 %v961
      %v994 = vunpack.c.l.b16 %v962
      %v995 = vunpack.c.l.b16 %v963
      %v996 = vunpack.c.l.b16 %v964
      %v997 = vunpack.c.l.b16 %v965
      %v998 = vunpack.c.l.b16 %v966
      %v999 = vunpack.c.l.b16 %v967
      %v1000 = vunpack.c.l.b16 %v968
      %v1001 = vunpack.c.l.b16 %v969
      %v1002 = vunpack.c.l.b16 %v970
      %v1003 = vunpack.c.l.b16 %v971
      %v1004 = vunpack.c.l.b16 %v972
      %v1005 = vunpack.c.l.b16 %v973
      %v1006 = vunpack.c.l.b16 %v974
      %v1007 = vunpack.c.l.b16 %v975
      %v1008 = vpack.c.b16 %v993, %v992
      %v1009 = vpack.c.b16 %v995, %v994
      %v1010 = vpack.c.b16 %v997, %v996
      %v1011 = vpack.c.b16 %v999, %v998
      %v1012 = vpack.c.b16 %v1001, %v1000
      %v1013 = vpack.c.b16 %v1003, %v1002
      %v1014 = vpack.c.b16 %v1005, %v1004
      %v1015 = vpack.c.b16 %v1007, %v1006
      %1024 = vmatpush.bf16.msra.mxu0 %v1015
      %1025 = vmatpush.bf16.msra.mxu0 %v1014
      %1026 = vmatpush.bf16.msra.mxu0 %v1013
      %1027 = vmatpush.bf16.msra.mxu0 %v1012
      %1028 = vmatpush.bf16.msra.mxu0 %v1011
      %1029 = vmatpush.bf16.msra.mxu0 %v1010
      %1030 = vmatpush.bf16.msra.mxu0 %v1009
      %1031 = vmatpush.bf16.msra.mxu0 %v1008
      %1032 = vmatmul.bf16.gmra.mxu0 %v959
      %v1033 = vpop.f32.mrf.mxu0
      %v1034 = vadd.f32 0.0, %v1033
      %v1035 = vpop.f32.mrf.mxu0
      %v1036 = vadd.f32 0.0, %v1035
      %1037 = vdwg.mxu0
      %v1038 = vadd.f32 %v497, %v1034
      %v1039 = vadd.f32 %v498, %v1036
      %v1040 = vld [vmem:[%s11] sm:$0x1]
      %v1041 = vld [vmem:[%s12] sm:$0x1]
      %1042 = vadd.xlane.f32.xlu0 %v1038
      %v1043 = vpop.xlane.xlu0 %1042
      %1044 = vadd.xlane.f32.xlu0 %v1039
      %v1045 = vpop.xlane.xlu0 %1044
      %v1046 = vrcp.pop 128.0
      %v1047 = vmul.f32 128.0, %v1046
      %v1048 = vsub.f32 1.0, %v1047
      %v1049 = vmul.f32 %v1046, %v1048
      %v1050 = vadd.f32 %v1046, %v1049
      %vm1051 = vweird.f32 %v1046
      %v1052 = vsel %vm1051, %v1046, %v1050
      %v1053 = vmul.f32 %v1043, %v1052
      %v1054 = vmul.f32 %v1045, %v1052
      %v1055 = vsub.f32 %v1038, %v1053
      %v1056 = vsub.f32 %v1039, %v1054
      %v1057 = vmul.f32 %v1055, %v1055
      %v1058 = vmul.f32 %v1056, %v1056
      %1059 = vadd.xlane.f32.xlu0 %v1057
      %v1060 = vpop.xlane.xlu0 %1059
      %1061 = vadd.xlane.f32.xlu0 %v1058
      %v1062 = vpop.xlane.xlu0 %1061
      %v1063 = vmul.f32 %v1060, %v1052
      %v1064 = vmul.f32 %v1062, %v1052
      %v1065 = vadd.f32 %v1063, 1e-05
      %v1066 = vadd.f32 %v1064, 1e-05
      %v1067 = vrsqrt.pop %v1065
      %v1068 = vmul.f32 %v1067, %v1065
      %v1069 = vmul.f32 %v1068, %v1067
      %v1070 = vmul.f32 0.5, %v1069
      %v1071 = vsub.f32 1.5, %v1070
      %v1072 = vmul.f32 %v1067, %v1071
      %vm1073 = vweird.f32 %v1065
      %vm1074 = vweird.f32 %v1067
      %vm1075 = vmor %vm1073, %vm1074
      %v1076 = vsel %vm1075, %v1067, %v1072
      %v1077 = vrsqrt.pop %v1066
      %v1078 = vmul.f32 %v1077, %v1066
      %v1079 = vmul.f32 %v1078, %v1077
      %v1080 = vmul.f32 0.5, %v1079
      %v1081 = vsub.f32 1.5, %v1080
      %v1082 = vmul.f32 %v1077, %v1081
      %vm1083 = vweird.f32 %v1066
      %vm1084 = vweird.f32 %v1077
      %vm1085 = vmor %vm1083, %vm1084
      %v1086 = vsel %vm1085, %v1077, %v1082
      %v1087 = vmul.f32 %v1055, %v1076
      %v1088 = vmul.f32 %v1056, %v1086
      %v1090 = vperm.slane %v1040, 0
      %v1092 = vmul.f32 %v1087, %v1090
      %v1093 = vmul.f32 %v1088, %v1090
      %v1095 = vperm.slane %v1041, 0
      %v1097 = vadd.f32 %v1092, %v1095
      %v1098 = vadd.f32 %v1093, %v1095
      %v1099 = vpack.c.bf16 %v1098, %v1097
      %v1100 = vld [vmem:[%s7] sm:$0xff]
      %v1101 = vld [vmem:[%s7 + $0x8] sm:$0xff]
      %v1102 = vld [vmem:[%s7 + $0x10] sm:$0xff]
      %v1103 = vld [vmem:[%s7 + $0x18] sm:$0xff]
      %v1104 = vld [vmem:[%s7 + $0x20] sm:$0xff]
      %v1105 = vld [vmem:[%s7 + $0x28] sm:$0xff]
      %v1106 = vld [vmem:[%s7 + $0x30] sm:$0xff]
      %v1107 = vld [vmem:[%s7 + $0x38] sm:$0xff]
      %v1108 = vld [vmem:[%s7 + $0x40] sm:$0xff]
      %v1109 = vld [vmem:[%s7 + $0x48] sm:$0xff]
      %v1110 = vld [vmem:[%s7 + $0x50] sm:$0xff]
      %v1111 = vld [vmem:[%s7 + $0x58] sm:$0xff]
      %v1112 = vld [vmem:[%s7 + $0x60] sm:$0xff]
      %v1113 = vld [vmem:[%s7 + $0x68] sm:$0xff]
      %v1114 = vld [vmem:[%s7 + $0x70] sm:$0xff]
      %v1115 = vld [vmem:[%s7 + $0x78] sm:$0xff]
      %v1116 = vld [vmem:[%s8] sm:$0x3]
      %v1118 = vperm.slane %v1116, 0
      %v1119 = vperm.slane %v1116, 1
      %v1138 = vunpack.c.l.b16 %v1100
      %v1139 = vunpack.c.h.b16 %v1100
      %v1140 = vunpack.c.l.b16 %v1101
      %v1141 = vunpack.c.h.b16 %v1101
      %v1142 = vunpack.c.l.b16 %v1102
      %v1143 = vunpack.c.h.b16 %v1102
      %v1144 = vunpack.c.l.b16 %v1103
      %v1145 = vunpack.c.h.b16 %v1103
      %v1146 = vunpack.c.l.b16 %v1104
      %v1147 = vunpack.c.h.b16 %v1104
      %v1148 = vunpack.c.l.b16 %v1105
      %v1149 = vunpack.c.h.b16 %v1105
      %v1150 = vunpack.c.l.b16 %v1106
      %v1151 = vunpack.c.h.b16 %v1106
      %v1152 = vunpack.c.l.b16 %v1107
      %v1153 = vunpack.c.h.b16 %v1107
      %v1154 = vunpack.c.l.b16 %v1108
      %v1155 = vunpack.c.h.b16 %v1108
      %v1156 = vunpack.c.l.b16 %v1109
      %v1157 = vunpack.c.h.b16 %v1109
      %v1158 = vunpack.c.l.b16 %v1110
      %v1159 = vunpack.c.h.b16 %v1110
      %v1160 = vunpack.c.l.b16 %v1111
      %v1161 = vunpack.c.h.b16 %v1111
      %v1162 = vunpack.c.l.b16 %v1112
      %v1163 = vunpack.c.h.b16 %v1112
      %v1164 = vunpack.c.l.b16 %v1113
      %v1165 = vunpack.c.h.b16 %v1113
      %v1166 = vunpack.c.l.b16 %v1114
      %v1167 = vunpack.c.h.b16 %v1114
      %v1168 = vunpack.c.l.b16 %v1115
      %v1169 = vunpack.c.h.b16 %v1115
      %v1170 = vpack.c.b16 %v1140, %v1138
      %v1171 = vpack.c.b16 %v1141, %v1139
      %v1172 = vpack.c.b16 %v1144, %v1142
      %v1173 = vpack.c.b16 %v1145, %v1143
      %v1174 = vpack.c.b16 %v1148, %v1146
      %v1175 = vpack.c.b16 %v1149, %v1147
      %v1176 = vpack.c.b16 %v1152, %v1150
      %v1177 = vpack.c.b16 %v1153, %v1151
      %v1178 = vpack.c.b16 %v1156, %v1154
      %v1179 = vpack.c.b16 %v1157, %v1155
      %v1180 = vpack.c.b16 %v1160, %v1158
      %v1181 = vpack.c.b16 %v1161, %v1159
      %v1182 = vpack.c.b16 %v1164, %v1162
      %v1183 = vpack.c.b16 %v1165, %v1163
      %v1184 = vpack.c.b16 %v1168, %v1166
      %v1185 = vpack.c.b16 %v1169, %v1167
      %1202 = vmatpush.bf16.msra.mxu0 %v1184
      %1203 = vmatpush.bf16.msra.mxu0 %v1182
      %1204 = vmatpush.bf16.msra.mxu0 %v1180
      %1205 = vmatpush.bf16.msra.mxu0 %v1178
      %1206 = vmatpush.bf16.msra.mxu0 %v1176
      %1207 = vmatpush.bf16.msra.mxu0 %v1174
      %1208 = vmatpush.bf16.msra.mxu0 %v1172
      %1209 = vmatpush.bf16.msra.mxu0 %v1170
      %1210 = vmatmul.bf16.gmra.mxu0 %v1099
      %v1211 = vpop.f32.mrf.mxu0
      %v1212 = vadd.f32 %v1118, %v1211
      %v1213 = vpop.f32.mrf.mxu0
      %v1214 = vadd.f32 %v1118, %v1213
      %1215 = vdwg.mxu0
      %1216 = vmatpush.bf16.msra.mxu0 %v1185
      %1217 = vmatpush.bf16.msra.mxu0 %v1183
      %1218 = vmatpush.bf16.msra.mxu0 %v1181
      %1219 = vmatpush.bf16.msra.mxu0 %v1179
      %1220 = vmatpush.bf16.msra.mxu0 %v1177
      %1221 = vmatpush.bf16.msra.mxu0 %v1175
      %1222 = vmatpush.bf16.msra.mxu0 %v1173
      %1223 = vmatpush.bf16.msra.mxu0 %v1171
      %1224 = vmatmul.bf16.gmra.mxu0 %v1099
      %v1225 = vpop.f32.mrf.mxu0
      %v1226 = vadd.f32 %v1119, %v1225
      %v1227 = vpop.f32.mrf.mxu0
      %v1228 = vadd.f32 %v1119, %v1227
      %1229 = vdwg.mxu0
      %v1230 = vmax.f32 %v1212, 0.0
      %v1231 = vmax.f32 %v1226, 0.0
      %v1232 = vmax.f32 %v1214, 0.0
      %v1233 = vmax.f32 %v1228, 0.0
      %v1234 = vpack.c.bf16 %v1232, %v1230
      %v1235 = vpack.c.bf16 %v1233, %v1231
      %v1236 = vld [vmem:[%s9] sm:$0xf]
      %v1237 = vld [vmem:[%s9 + $0x4] sm:$0xf]
      %v1238 = vld [vmem:[%s9 + $0x8] sm:$0xf]
      %v1239 = vld [vmem:[%s9 + $0xc] sm:$0xf]
      %v1240 = vld [vmem:[%s9 + $0x10] sm:$0xf]
      %v1241 = vld [vmem:[%s9 + $0x14] sm:$0xf]
      %v1242 = vld [vmem:[%s9 + $0x18] sm:$0xf]
      %v1243 = vld [vmem:[%s9 + $0x1c] sm:$0xf]
      %v1244 = vld [vmem:[%s9 + $0x20] sm:$0xf]
      %v1245 = vld [vmem:[%s9 + $0x24] sm:$0xf]
      %v1246 = vld [vmem:[%s9 + $0x28] sm:$0xf]
      %v1247 = vld [vmem:[%s9 + $0x2c] sm:$0xf]
      %v1248 = vld [vmem:[%s9 + $0x30] sm:$0xf]
      %v1249 = vld [vmem:[%s9 + $0x34] sm:$0xf]
      %v1250 = vld [vmem:[%s9 + $0x38] sm:$0xf]
      %v1251 = vld [vmem:[%s9 + $0x3c] sm:$0xf]
      %v1252 = vld [vmem:[%s9 + $0x40] sm:$0xf]
      %v1253 = vld [vmem:[%s9 + $0x44] sm:$0xf]
      %v1254 = vld [vmem:[%s9 + $0x48] sm:$0xf]
      %v1255 = vld [vmem:[%s9 + $0x4c] sm:$0xf]
      %v1256 = vld [vmem:[%s9 + $0x50] sm:$0xf]
      %v1257 = vld [vmem:[%s9 + $0x54] sm:$0xf]
      %v1258 = vld [vmem:[%s9 + $0x58] sm:$0xf]
      %v1259 = vld [vmem:[%s9 + $0x5c] sm:$0xf]
      %v1260 = vld [vmem:[%s9 + $0x60] sm:$0xf]
      %v1261 = vld [vmem:[%s9 + $0x64] sm:$0xf]
      %v1262 = vld [vmem:[%s9 + $0x68] sm:$0xf]
      %v1263 = vld [vmem:[%s9 + $0x6c] sm:$0xf]
      %v1264 = vld [vmem:[%s9 + $0x70] sm:$0xf]
      %v1265 = vld [vmem:[%s9 + $0x74] sm:$0xf]
      %v1266 = vld [vmem:[%s9 + $0x78] sm:$0xf]
      %v1267 = vld [vmem:[%s9 + $0x7c] sm:$0xf]
      %v1268 = vld [vmem:[%s10] sm:$0x1]
      %v1270 = vperm.slane %v1268, 0
      %v1304 = vunpack.c.l.b16 %v1236
      %v1305 = vunpack.c.l.b16 %v1237
      %v1306 = vunpack.c.l.b16 %v1238
      %v1307 = vunpack.c.l.b16 %v1239
      %v1308 = vunpack.c.l.b16 %v1240
      %v1309 = vunpack.c.l.b16 %v1241
      %v1310 = vunpack.c.l.b16 %v1242
      %v1311 = vunpack.c.l.b16 %v1243
      %v1312 = vunpack.c.l.b16 %v1244
      %v1313 = vunpack.c.l.b16 %v1245
      %v1314 = vunpack.c.l.b16 %v1246
      %v1315 = vunpack.c.l.b16 %v1247
      %v1316 = vunpack.c.l.b16 %v1248
      %v1317 = vunpack.c.l.b16 %v1249
      %v1318 = vunpack.c.l.b16 %v1250
      %v1319 = vunpack.c.l.b16 %v1251
      %v1320 = vunpack.c.l.b16 %v1252
      %v1321 = vunpack.c.l.b16 %v1253
      %v1322 = vunpack.c.l.b16 %v1254
      %v1323 = vunpack.c.l.b16 %v1255
      %v1324 = vunpack.c.l.b16 %v1256
      %v1325 = vunpack.c.l.b16 %v1257
      %v1326 = vunpack.c.l.b16 %v1258
      %v1327 = vunpack.c.l.b16 %v1259
      %v1328 = vunpack.c.l.b16 %v1260
      %v1329 = vunpack.c.l.b16 %v1261
      %v1330 = vunpack.c.l.b16 %v1262
      %v1331 = vunpack.c.l.b16 %v1263
      %v1332 = vunpack.c.l.b16 %v1264
      %v1333 = vunpack.c.l.b16 %v1265
      %v1334 = vunpack.c.l.b16 %v1266
      %v1335 = vunpack.c.l.b16 %v1267
      %v1336 = vpack.c.b16 %v1305, %v1304
      %v1337 = vpack.c.b16 %v1307, %v1306
      %v1338 = vpack.c.b16 %v1309, %v1308
      %v1339 = vpack.c.b16 %v1311, %v1310
      %v1340 = vpack.c.b16 %v1313, %v1312
      %v1341 = vpack.c.b16 %v1315, %v1314
      %v1342 = vpack.c.b16 %v1317, %v1316
      %v1343 = vpack.c.b16 %v1319, %v1318
      %v1344 = vpack.c.b16 %v1321, %v1320
      %v1345 = vpack.c.b16 %v1323, %v1322
      %v1346 = vpack.c.b16 %v1325, %v1324
      %v1347 = vpack.c.b16 %v1327, %v1326
      %v1348 = vpack.c.b16 %v1329, %v1328
      %v1349 = vpack.c.b16 %v1331, %v1330
      %v1350 = vpack.c.b16 %v1333, %v1332
      %v1351 = vpack.c.b16 %v1335, %v1334
      %1368 = vmatpush.bf16.msra.mxu0 %v1343
      %1369 = vmatpush.bf16.msra.mxu0 %v1342
      %1370 = vmatpush.bf16.msra.mxu0 %v1341
      %1371 = vmatpush.bf16.msra.mxu0 %v1340
      %1372 = vmatpush.bf16.msra.mxu0 %v1339
      %1373 = vmatpush.bf16.msra.mxu0 %v1338
      %1374 = vmatpush.bf16.msra.mxu0 %v1337
      %1375 = vmatpush.bf16.msra.mxu0 %v1336
      %1376 = vmatmul.bf16.gmra.mxu0 %v1234
      %v1377 = vpop.f32.mrf.mxu0
      %v1378 = vadd.f32 %v1270, %v1377
      %v1379 = vpop.f32.mrf.mxu0
      %v1380 = vadd.f32 %v1270, %v1379
      %1381 = vdwg.mxu0
      %1382 = vmatpush.bf16.msra.mxu0 %v1351
      %1383 = vmatpush.bf16.msra.mxu0 %v1350
      %1384 = vmatpush.bf16.msra.mxu0 %v1349
      %1385 = vmatpush.bf16.msra.mxu0 %v1348
      %1386 = vmatpush.bf16.msra.mxu0 %v1347
      %1387 = vmatpush.bf16.msra.mxu0 %v1346
      %1388 = vmatpush.bf16.msra.mxu0 %v1345
      %1389 = vmatpush.bf16.msra.mxu0 %v1344
      %1390 = vmatmul.bf16.gmra.mxu0 %v1235
      %v1391 = vpop.f32.mrf.mxu0
      %v1392 = vadd.f32 %v1378, %v1391
      %v1393 = vpop.f32.mrf.mxu0
      %v1394 = vadd.f32 %v1380, %v1393
      %1395 = vdwg.mxu0
      %v1396 = vadd.f32 %v1097, %v1392
      %v1397 = vadd.f32 %v1098, %v1394
      %v1398 = vld [vmem:[%s13] sm:$0x1]
      %v1399 = vld [vmem:[%s14] sm:$0x1]
      %1400 = vadd.xlane.f32.xlu0 %v1396
      %v1401 = vpop.xlane.xlu0 %1400
      %1402 = vadd.xlane.f32.xlu0 %v1397
      %v1403 = vpop.xlane.xlu0 %1402
      %v1404 = vmul.f32 %v1401, %v1052
      %v1405 = vmul.f32 %v1403, %v1052
      %v1406 = vsub.f32 %v1396, %v1404
      %v1407 = vsub.f32 %v1397, %v1405
      %v1408 = vmul.f32 %v1406, %v1406
      %v1409 = vmul.f32 %v1407, %v1407
      %1410 = vadd.xlane.f32.xlu0 %v1408
      %v1411 = vpop.xlane.xlu0 %1410
      %1412 = vadd.xlane.f32.xlu0 %v1409
      %v1413 = vpop.xlane.xlu0 %1412
      %v1414 = vmul.f32 %v1411, %v1052
      %v1415 = vmul.f32 %v1413, %v1052
      %v1416 = vadd.f32 %v1414, 1e-05
      %v1417 = vadd.f32 %v1415, 1e-05
      %v1418 = vrsqrt.pop %v1416
      %v1419 = vmul.f32 %v1418, %v1416
      %v1420 = vmul.f32 %v1419, %v1418
      %v1421 = vmul.f32 0.5, %v1420
      %v1422 = vsub.f32 1.5, %v1421
      %v1423 = vmul.f32 %v1418, %v1422
      %vm1424 = vweird.f32 %v1416
      %vm1425 = vweird.f32 %v1418
      %vm1426 = vmor %vm1424, %vm1425
      %v1427 = vsel %vm1426, %v1418, %v1423
      %v1428 = vrsqrt.pop %v1417
      %v1429 = vmul.f32 %v1428, %v1417
      %v1430 = vmul.f32 %v1429, %v1428
      %v1431 = vmul.f32 0.5, %v1430
      %v1432 = vsub.f32 1.5, %v1431
      %v1433 = vmul.f32 %v1428, %v1432
      %vm1434 = vweird.f32 %v1417
      %vm1435 = vweird.f32 %v1428
      %vm1436 = vmor %vm1434, %vm1435
      %v1437 = vsel %vm1436, %v1428, %v1433
      %v1438 = vmul.f32 %v1406, %v1427
      %v1439 = vmul.f32 %v1407, %v1437
      %v1441 = vperm.slane %v1398, 0
      %v1443 = vmul.f32 %v1438, %v1441
      %v1444 = vmul.f32 %v1439, %v1441
      %v1446 = vperm.slane %v1399, 0
      %v1448 = vadd.f32 %v1443, %v1446
      %v1449 = vadd.f32 %v1444, %v1446
      %v1450 = vpack.c.bf16 %v1448, %v1448
      %v1451 = vpack.c.bf16 %v1449, %v1449
      %1452 = vst [vmem:[%s496] sm:$0xf] %v1450
      %1453 = vst [vmem:[%s496 + $0x4] sm:$0xf] %v1451
      %p1454 = scmp.lt.s32.totalorder %s34, 1
      %s1455 = scalar_select %p1454, %s34, 1
      %s1456 = smul.addr %s1455, 2
      %s1457 = smul.addr %s1456, 4
      %s1458 = scalar_lea.vmem %s15, %s1457
      // Predicated region
      $region77: #{paraformer_forward.4} parent=75 // pred_check
        %p1459 = pneg %p356
      $region78: #{paraformer_forward.4} parent=75 // pred_check_branch
        %1461 = sbr.rel (%p1459) target = $region80
      $region79: #{paraformer_forward.4} parent=75 // pred_region
        _
      $region80: #{paraformer_forward.4} parent=75 // pred_fallthru
        _
    $region76: #{paraformer_forward.4} parent=5 // pred_fallthru
      _
    %p1462 = scmp.le.s32.totalorder 2, %s29
    // Predicated region
    $region81: #{paraformer_forward.4} parent=5 // pred_check
      %p1463 = pneg %p1462
    $region82: #{paraformer_forward.4} parent=5 // pred_check_branch
      %1465 = sbr.rel (%p1463) target = $region84
    $region83: #{paraformer_forward.4} parent=5 // pred_region
      %s1466 = ssub.s32 %s29, 2
      // Predicated region
      $region85: #{paraformer_forward.4} parent=83 // pred_check
        %p1467 = pneg %p362
      $region86: #{paraformer_forward.4} parent=83 // pred_check_branch
        %1469 = sbr.rel (%p1467) target = $region88
      $region87: #{paraformer_forward.4} parent=83 // pred_region
        %p1470 = scmp.lt.s32.totalorder %s35, 1
        %s1471 = scalar_select %p1470, %s35, 1
        %s1472 = smul.addr %s1471, 2
        %s1473 = smul.addr %s1472, 4
        %s1474 = scalar_lea.vmem %s15, %s1473
      $region88: #{paraformer_forward.4} parent=83 // pred_fallthru
        _
    $region84: #{paraformer_forward.4} parent=5 // pred_fallthru
      _
  $region6: #{paraformer_forward.4} parent=0 // loop_footer
    %s33 = sadd.s32 1, %s29
  $region7: #{paraformer_forward.4} parent=0 // loop_footer_branch
    %28 = sbr.rel target = $region3
  $region8: #{paraformer_forward.4} parent=0 // loop_exit
    _

// kernel: paraformer_forward.3
$region0: #{paraformer_forward.3}
  #allocation0 [shape = 'u32[]', space=smem, size = 0x4, offset = 0x4, fixed_abs, tag = 'smem constant byte address 0x4 - core index']
  #allocation1 [shape = 'u32[72,128]{1,0:T(1,128)}', space=vmem, size = 0x9000, scoped, tag = 'internal scratch']
  #allocation2 [shape = 's32[1]{0}', space=sflag, size = 0x4, scoped, tag = 'scoped memory for paraformer_forward.3']
  #allocation3 [shape = 'u8[512]{0}', space=smem, size = 0x200, scoped, tag = 'prefetched SMEM operand 0']
  #allocation4 [shape = 'u8[512]{0}', space=smem, size = 0x200, scoped, tag = 'prefetched SMEM operand 1']
  #allocation5 [shape = 'f32[1,1]{1,0:T(1,128)S(1)}', space=vmem, size = 0x200, scoped, tag = 'scoped memory for paraformer_forward.3']
  %s0 = inlined_call_operand.vmem [shape: s32[2], index: 0, kind: input, shape index: {}]
  %s1 = inlined_call_operand.vmem [shape: s32[2], index: 1, kind: input, shape index: {}]
  %s2 = inlined_call_operand.vmem [shape: f32[2,128,80], index: 2, kind: input, shape index: {}]
  %s3 = inlined_call_operand.vmem [shape: bf16[80,128], index: 3, kind: input, shape index: {}]
  %s4 = inlined_call_operand.vmem [shape: f32[1,128], index: 4, kind: input, shape index: {}]
  %s5 = inlined_call_operand.vmem [shape: bf16[128,128], index: 5, kind: input, shape index: {}]
  %s6 = inlined_call_operand.vmem [shape: bf16[128,128], index: 6, kind: input, shape index: {}]
  %s7 = inlined_call_operand.vmem [shape: bf16[128,128], index: 7, kind: input, shape index: {}]
  %s8 = inlined_call_operand.vmem [shape: bf16[128,128], index: 8, kind: input, shape index: {}]
  %s9 = inlined_call_operand.vmem [shape: bf16[128,256], index: 9, kind: input, shape index: {}]
  %s10 = inlined_call_operand.vmem [shape: f32[1,256], index: 10, kind: input, shape index: {}]
  %s11 = inlined_call_operand.vmem [shape: bf16[256,128], index: 11, kind: input, shape index: {}]
  %s12 = inlined_call_operand.vmem [shape: f32[1,128], index: 12, kind: input, shape index: {}]
  %s13 = inlined_call_operand.vmem [shape: f32[1,128], index: 13, kind: input, shape index: {}]
  %s14 = inlined_call_operand.vmem [shape: f32[1,128], index: 14, kind: input, shape index: {}]
  %s15 = inlined_call_operand.vmem [shape: f32[1,128], index: 15, kind: input, shape index: {}]
  %s16 = inlined_call_operand.vmem [shape: f32[1,128], index: 16, kind: input, shape index: {}]
  %s17 = inlined_call_operand.vmem [shape: bf16[128,128], index: 17, kind: input, shape index: {}]
  %s18 = inlined_call_operand.vmem [shape: bf16[128,128], index: 18, kind: input, shape index: {}]
  %s19 = inlined_call_operand.vmem [shape: bf16[128,128], index: 19, kind: input, shape index: {}]
  %s20 = inlined_call_operand.vmem [shape: f32[1,128], index: 20, kind: input, shape index: {}]
  %s21 = inlined_call_operand.vmem [shape: f32[1,128], index: 21, kind: input, shape index: {}]
  %s22 = inlined_call_operand.<no memory space> [shape: f32[1,1], index: 22, kind: input, shape index: {}]
  %s23 = inlined_call_operand.vmem [shape: bf16[2,128,128], index: 23, kind: output, shape index: {0}]
  %s24 = inlined_call_operand.vmem [shape: f32[2,16,128], index: 24, kind: output, shape index: {1}]
  %s25 = inlined_call_operand.vmem [shape: f32[2,1,1], index: 25, kind: output, shape index: {2}]
  %26 = xla_tuple %s23, %s24, %s25
  %s27 = sld [smem:[#allocation0]]
  $region133: #{paraformer_forward.3} parent=0
    _
  %s29 = ssub.s32 1, %s27
  %s30 = scalar_select 0, %s29, %s27
  %s32 = sshll.u32 %s0, 4
  %s33 = int_to_ptr.vmem [resolvable:$true] %s32
  %35 = dma.vmem_to_smem %s33, 16, [#allocation3], [#allocation2]
  %s37 = sshll.u32 %s1, 4
  %s38 = int_to_ptr.vmem [resolvable:$true] %s37
  %40 = dma.vmem_to_smem %s38, 16, [#allocation4], [#allocation2]
  %v41 = vstv %s22
  %42 = vst [vmem:[#allocation5] sm:$0x1] %v41
  %44 = dma.done [#allocation2], 32
  %45 = sfence
  loop: start=0, step=1, limit=4
  $region2: #{paraformer_forward.3} parent=0 // loop_pre_header
    _
  $region3: #{paraformer_forward.3} parent=0 // loop_header
    %s47 = sphi 0, %s51
    %p48 = scmp.ge.s32.totalorder %s47, 4
    %s57 = sphi 0, %s59
    %s60 = sphi 0, %s57
    %s61 = sphi 0, %s60
    %s77 = sphi 0, %s61
    %s81 = sphi 0, %s81
    %s83 = sphi 0, %s81
    %s84 = sphi 0, %s83
    %s98 = sphi 0, %s84
    %s102 = sphi 0, %s102
    %s104 = sphi 0, %s102
    %s105 = sphi 0, %s104
    %s119 = sphi 0, %s105
    %s123 = sphi 0, %s123
    %s125 = sphi 0, %s123
    %s126 = sphi 0, %s125
    %s140 = sphi 0, %s126
    %s144 = sphi 0, %s144
    %s146 = sphi 0, %s144
    %s147 = sphi 0, %s146
    %s161 = sphi 0, %s147
    %s165 = sphi 0, %s165
    %s167 = sphi 0, %s165
    %s168 = sphi 0, %s167
    %s182 = sphi 0, %s168
    %s186 = sphi 0, %s186
    %s188 = sphi 0, %s186
    %s189 = sphi 0, %s188
    %s203 = sphi 0, %s189
    %s207 = sphi 0, %s207
    %s209 = sphi 0, %s207
    %s210 = sphi 0, %s209
    %s224 = sphi 0, %s210
    %s228 = sphi 0, %s228
    %s230 = sphi 0, %s228
    %s231 = sphi 0, %s230
    %s245 = sphi 0, %s231
    %s249 = sphi 0, %s249
    %s251 = sphi 0, %s249
    %s252 = sphi 0, %s251
    %s266 = sphi 0, %s252
    %s270 = sphi 0, %s270
    %s272 = sphi 0, %s270
    %s273 = sphi 0, %s272
    %s287 = sphi 0, %s273
    %s291 = sphi 0, %s291
    %s293 = sphi 0, %s291
    %s294 = sphi 0, %s293
    %s308 = sphi 0, %s294
    %s312 = sphi 0, %s312
    %s314 = sphi 0, %s312
    %s315 = sphi 0, %s314
    %s329 = sphi 0, %s315
    %s333 = sphi 0, %s333
    %s335 = sphi 0, %s333
    %s336 = sphi 0, %s335
    %s350 = sphi 0, %s336
    %s354 = sphi 0, %s354
    %s356 = sphi 0, %s354
    %s357 = sphi 0, %s356
    %s371 = sphi 0, %s357
    %s375 = sphi 0, %s375
    %s377 = sphi 0, %s375
    %s378 = sphi 0, %s377
    %s392 = sphi 0, %s378
    %s396 = sphi 0, %s396
    %s398 = sphi 0, %s396
    %s399 = sphi 0, %s398
    %s413 = sphi 0, %s399
    %s417 = sphi 0, %s417
    %s419 = sphi 0, %s417
    %s420 = sphi 0, %s419
    %s434 = sphi 0, %s420
    %s438 = sphi 0, %s438
    %s440 = sphi 0, %s438
    %s441 = sphi 0, %s440
    %s455 = sphi 0, %s441
    %s459 = sphi 0, %s459
    %s461 = sphi 0, %s459
    %s462 = sphi 0, %s461
    %s476 = sphi 0, %s462
    %s480 = sphi 0, %s480
    %s482 = sphi 0, %s480
    %s483 = sphi 0, %s482
    %s497 = sphi 0, %s483
    %s503 = sphi 0, %s505
    %s506 = sphi 0, %s503
    %s507 = sphi 0, %s506
    %s523 = sphi 0, %s507
    %s529 = sphi 0, %s531
    %s532 = sphi 0, %s529
    %s533 = sphi 0, %s532
    %s549 = sphi 0, %s533
    %s555 = sphi 0, %s557
    %s558 = sphi 0, %s555
    %s559 = sphi 0, %s558
    %s575 = sphi 0, %s559
  $region4: #{paraformer_forward.3} parent=0 // loop_header_branch
    %50 = sbr.rel (%p48) target = $region8
  $region5: #{paraformer_forward.3} parent=0 // loop_body
    %s52 = ssub.s32 %s47, 1
    %s53 = ssub.s32 %s47, 2
    %s54 = sadd.s32 %s47, 1
    %s55 = ssub.s32 %s47, %s54
    %p56 = scmp.eq.s32.totalorder %s55, 0
    %s58 = sadd.s32 %s57, 1
    %s59 = scalar_select %p56, %s57, %s58
    %p62 = pneg %p56
    %p63 = scmp.eq.s32.totalorder %s47, 1
    %p64 = por %p62, %p63
    %p65 = scmp.ne.s32.totalorder %s57, %s60
    %p66 = scmp.eq.s32.totalorder %s47, 0
    %p67 = por %p65, %p66
    %p68 = scmp.ne.s32.totalorder %s57, %s60
    %p69 = scmp.eq.s32.totalorder %s52, 1
    %p70 = por %p68, %p69
    %p71 = scmp.ne.s32.totalorder %s60, %s61
    %p72 = scmp.eq.s32.totalorder %s52, 0
    %p73 = por %p71, %p72
    %p74 = scmp.ne.s32.totalorder %s60, %s61
    %p75 = scmp.eq.s32.totalorder %s53, 1
    %p76 = por %p74, %p75
    %p78 = scmp.ne.s32.totalorder %s61, %s77
    %p79 = scmp.eq.s32.totalorder %s53, 0
    %p80 = por %p78, %p79
    %s82 = sadd.s32 %s81, 1
    %p85 = scmp.eq.s32.totalorder %s47, 1
    %p86 = scmp.ne.s32.totalorder %s81, %s83
    %p87 = scmp.eq.s32.totalorder %s47, 0
    %p88 = por %p86, %p87
    %p89 = scmp.ne.s32.totalorder %s81, %s83
    %p90 = scmp.eq.s32.totalorder %s52, 1
    %p91 = por %p89, %p90
    %p92 = scmp.ne.s32.totalorder %s83, %s84
    %p93 = scmp.eq.s32.totalorder %s52, 0
    %p94 = por %p92, %p93
    %p95 = scmp.ne.s32.totalorder %s83, %s84
    %p96 = scmp.eq.s32.totalorder %s53, 1
    %p97 = por %p95, %p96
    %p99 = scmp.ne.s32.totalorder %s84, %s98
    %p100 = scmp.eq.s32.totalorder %s53, 0
    %p101 = por %p99, %p100
    %s103 = sadd.s32 %s102, 1
    %p106 = scmp.eq.s32.totalorder %s47, 1
    %p107 = scmp.ne.s32.totalorder %s102, %s104
    %p108 = scmp.eq.s32.totalorder %s47, 0
    %p109 = por %p107, %p108
    %p110 = scmp.ne.s32.totalorder %s102, %s104
    %p111 = scmp.eq.s32.totalorder %s52, 1
    %p112 = por %p110, %p111
    %p113 = scmp.ne.s32.totalorder %s104, %s105
    %p114 = scmp.eq.s32.totalorder %s52, 0
    %p115 = por %p113, %p114
    %p116 = scmp.ne.s32.totalorder %s104, %s105
    %p117 = scmp.eq.s32.totalorder %s53, 1
    %p118 = por %p116, %p117
    %p120 = scmp.ne.s32.totalorder %s105, %s119
    %p121 = scmp.eq.s32.totalorder %s53, 0
    %p122 = por %p120, %p121
    %s124 = sadd.s32 %s123, 1
    %p127 = scmp.eq.s32.totalorder %s47, 1
    %p128 = scmp.ne.s32.totalorder %s123, %s125
    %p129 = scmp.eq.s32.totalorder %s47, 0
    %p130 = por %p128, %p129
    %p131 = scmp.ne.s32.totalorder %s123, %s125
    %p132 = scmp.eq.s32.totalorder %s52, 1
    %p133 = por %p131, %p132
    %p134 = scmp.ne.s32.totalorder %s125, %s126
    %p135 = scmp.eq.s32.totalorder %s52, 0
    %p136 = por %p134, %p135
    %p137 = scmp.ne.s32.totalorder %s125, %s126
    %p138 = scmp.eq.s32.totalorder %s53, 1
    %p139 = por %p137, %p138
    %p141 = scmp.ne.s32.totalorder %s126, %s140
    %p142 = scmp.eq.s32.totalorder %s53, 0
    %p143 = por %p141, %p142
    %s145 = sadd.s32 %s144, 1
    %p148 = scmp.eq.s32.totalorder %s47, 1
    %p149 = scmp.ne.s32.totalorder %s144, %s146
    %p150 = scmp.eq.s32.totalorder %s47, 0
    %p151 = por %p149, %p150
    %p152 = scmp.ne.s32.totalorder %s144, %s146
    %p153 = scmp.eq.s32.totalorder %s52, 1
    %p154 = por %p152, %p153
    %p155 = scmp.ne.s32.totalorder %s146, %s147
    %p156 = scmp.eq.s32.totalorder %s52, 0
    %p157 = por %p155, %p156
    %p158 = scmp.ne.s32.totalorder %s146, %s147
    %p159 = scmp.eq.s32.totalorder %s53, 1
    %p160 = por %p158, %p159
    %p162 = scmp.ne.s32.totalorder %s147, %s161
    %p163 = scmp.eq.s32.totalorder %s53, 0
    %p164 = por %p162, %p163
    %s166 = sadd.s32 %s165, 1
    %p169 = scmp.eq.s32.totalorder %s47, 1
    %p170 = scmp.ne.s32.totalorder %s165, %s167
    %p171 = scmp.eq.s32.totalorder %s47, 0
    %p172 = por %p170, %p171
    %p173 = scmp.ne.s32.totalorder %s165, %s167
    %p174 = scmp.eq.s32.totalorder %s52, 1
    %p175 = por %p173, %p174
    %p176 = scmp.ne.s32.totalorder %s167, %s168
    %p177 = scmp.eq.s32.totalorder %s52, 0
    %p178 = por %p176, %p177
    %p179 = scmp.ne.s32.totalorder %s167, %s168
    %p180 = scmp.eq.s32.totalorder %s53, 1
    %p181 = por %p179, %p180
    %p183 = scmp.ne.s32.totalorder %s168, %s182
    %p184 = scmp.eq.s32.totalorder %s53, 0
    %p185 = por %p183, %p184
    %s187 = sadd.s32 %s186, 1
    %p190 = scmp.eq.s32.totalorder %s47, 1
    %p191 = scmp.ne.s32.totalorder %s186, %s188
    %p192 = scmp.eq.s32.totalorder %s47, 0
    %p193 = por %p191, %p192
    %p194 = scmp.ne.s32.totalorder %s186, %s188
    %p195 = scmp.eq.s32.totalorder %s52, 1
    %p196 = por %p194, %p195
    %p197 = scmp.ne.s32.totalorder %s188, %s189
    %p198 = scmp.eq.s32.totalorder %s52, 0
    %p199 = por %p197, %p198
    %p200 = scmp.ne.s32.totalorder %s188, %s189
    %p201 = scmp.eq.s32.totalorder %s53, 1
    %p202 = por %p200, %p201
    %p204 = scmp.ne.s32.totalorder %s189, %s203
    %p205 = scmp.eq.s32.totalorder %s53, 0
    %p206 = por %p204, %p205
    %s208 = sadd.s32 %s207, 1
    %p211 = scmp.eq.s32.totalorder %s47, 1
    %p212 = scmp.ne.s32.totalorder %s207, %s209
    %p213 = scmp.eq.s32.totalorder %s47, 0
    %p214 = por %p212, %p213
    %p215 = scmp.ne.s32.totalorder %s207, %s209
    %p216 = scmp.eq.s32.totalorder %s52, 1
    %p217 = por %p215, %p216
    %p218 = scmp.ne.s32.totalorder %s209, %s210
    %p219 = scmp.eq.s32.totalorder %s52, 0
    %p220 = por %p218, %p219
    %p221 = scmp.ne.s32.totalorder %s209, %s210
    %p222 = scmp.eq.s32.totalorder %s53, 1
    %p223 = por %p221, %p222
    %p225 = scmp.ne.s32.totalorder %s210, %s224
    %p226 = scmp.eq.s32.totalorder %s53, 0
    %p227 = por %p225, %p226
    %s229 = sadd.s32 %s228, 1
    %p232 = scmp.eq.s32.totalorder %s47, 1
    %p233 = scmp.ne.s32.totalorder %s228, %s230
    %p234 = scmp.eq.s32.totalorder %s47, 0
    %p235 = por %p233, %p234
    %p236 = scmp.ne.s32.totalorder %s228, %s230
    %p237 = scmp.eq.s32.totalorder %s52, 1
    %p238 = por %p236, %p237
    %p239 = scmp.ne.s32.totalorder %s230, %s231
    %p240 = scmp.eq.s32.totalorder %s52, 0
    %p241 = por %p239, %p240
    %p242 = scmp.ne.s32.totalorder %s230, %s231
    %p243 = scmp.eq.s32.totalorder %s53, 1
    %p244 = por %p242, %p243
    %p246 = scmp.ne.s32.totalorder %s231, %s245
    %p247 = scmp.eq.s32.totalorder %s53, 0
    %p248 = por %p246, %p247
    %s250 = sadd.s32 %s249, 1
    %p253 = scmp.eq.s32.totalorder %s47, 1
    %p254 = scmp.ne.s32.totalorder %s249, %s251
    %p255 = scmp.eq.s32.totalorder %s47, 0
    %p256 = por %p254, %p255
    %p257 = scmp.ne.s32.totalorder %s249, %s251
    %p258 = scmp.eq.s32.totalorder %s52, 1
    %p259 = por %p257, %p258
    %p260 = scmp.ne.s32.totalorder %s251, %s252
    %p261 = scmp.eq.s32.totalorder %s52, 0
    %p262 = por %p260, %p261
    %p263 = scmp.ne.s32.totalorder %s251, %s252
    %p264 = scmp.eq.s32.totalorder %s53, 1
    %p265 = por %p263, %p264
    %p267 = scmp.ne.s32.totalorder %s252, %s266
    %p268 = scmp.eq.s32.totalorder %s53, 0
    %p269 = por %p267, %p268
    %s271 = sadd.s32 %s270, 1
    %p274 = scmp.eq.s32.totalorder %s47, 1
    %p275 = scmp.ne.s32.totalorder %s270, %s272
    %p276 = scmp.eq.s32.totalorder %s47, 0
    %p277 = por %p275, %p276
    %p278 = scmp.ne.s32.totalorder %s270, %s272
    %p279 = scmp.eq.s32.totalorder %s52, 1
    %p280 = por %p278, %p279
    %p281 = scmp.ne.s32.totalorder %s272, %s273
    %p282 = scmp.eq.s32.totalorder %s52, 0
    %p283 = por %p281, %p282
    %p284 = scmp.ne.s32.totalorder %s272, %s273
    %p285 = scmp.eq.s32.totalorder %s53, 1
    %p286 = por %p284, %p285
    %p288 = scmp.ne.s32.totalorder %s273, %s287
    %p289 = scmp.eq.s32.totalorder %s53, 0
    %p290 = por %p288, %p289
    %s292 = sadd.s32 %s291, 1
    %p295 = scmp.eq.s32.totalorder %s47, 1
    %p296 = scmp.ne.s32.totalorder %s291, %s293
    %p297 = scmp.eq.s32.totalorder %s47, 0
    %p298 = por %p296, %p297
    %p299 = scmp.ne.s32.totalorder %s291, %s293
    %p300 = scmp.eq.s32.totalorder %s52, 1
    %p301 = por %p299, %p300
    %p302 = scmp.ne.s32.totalorder %s293, %s294
    %p303 = scmp.eq.s32.totalorder %s52, 0
    %p304 = por %p302, %p303
    %p305 = scmp.ne.s32.totalorder %s293, %s294
    %p306 = scmp.eq.s32.totalorder %s53, 1
    %p307 = por %p305, %p306
    %p309 = scmp.ne.s32.totalorder %s294, %s308
    %p310 = scmp.eq.s32.totalorder %s53, 0
    %p311 = por %p309, %p310
    %s313 = sadd.s32 %s312, 1
    %p316 = scmp.eq.s32.totalorder %s47, 1
    %p317 = scmp.ne.s32.totalorder %s312, %s314
    %p318 = scmp.eq.s32.totalorder %s47, 0
    %p319 = por %p317, %p318
    %p320 = scmp.ne.s32.totalorder %s312, %s314
    %p321 = scmp.eq.s32.totalorder %s52, 1
    %p322 = por %p320, %p321
    %p323 = scmp.ne.s32.totalorder %s314, %s315
    %p324 = scmp.eq.s32.totalorder %s52, 0
    %p325 = por %p323, %p324
    %p326 = scmp.ne.s32.totalorder %s314, %s315
    %p327 = scmp.eq.s32.totalorder %s53, 1
    %p328 = por %p326, %p327
    %p330 = scmp.ne.s32.totalorder %s315, %s329
    %p331 = scmp.eq.s32.totalorder %s53, 0
    %p332 = por %p330, %p331
    %s334 = sadd.s32 %s333, 1
    %p337 = scmp.eq.s32.totalorder %s47, 1
    %p338 = scmp.ne.s32.totalorder %s333, %s335
    %p339 = scmp.eq.s32.totalorder %s47, 0
    %p340 = por %p338, %p339
    %p341 = scmp.ne.s32.totalorder %s333, %s335
    %p342 = scmp.eq.s32.totalorder %s52, 1
    %p343 = por %p341, %p342
    %p344 = scmp.ne.s32.totalorder %s335, %s336
    %p345 = scmp.eq.s32.totalorder %s52, 0
    %p346 = por %p344, %p345
    %p347 = scmp.ne.s32.totalorder %s335, %s336
    %p348 = scmp.eq.s32.totalorder %s53, 1
    %p349 = por %p347, %p348
    %p351 = scmp.ne.s32.totalorder %s336, %s350
    %p352 = scmp.eq.s32.totalorder %s53, 0
    %p353 = por %p351, %p352
    %s355 = sadd.s32 %s354, 1
    %p358 = scmp.eq.s32.totalorder %s47, 1
    %p359 = scmp.ne.s32.totalorder %s354, %s356
    %p360 = scmp.eq.s32.totalorder %s47, 0
    %p361 = por %p359, %p360
    %p362 = scmp.ne.s32.totalorder %s354, %s356
    %p363 = scmp.eq.s32.totalorder %s52, 1
    %p364 = por %p362, %p363
    %p365 = scmp.ne.s32.totalorder %s356, %s357
    %p366 = scmp.eq.s32.totalorder %s52, 0
    %p367 = por %p365, %p366
    %p368 = scmp.ne.s32.totalorder %s356, %s357
    %p369 = scmp.eq.s32.totalorder %s53, 1
    %p370 = por %p368, %p369
    %p372 = scmp.ne.s32.totalorder %s357, %s371
    %p373 = scmp.eq.s32.totalorder %s53, 0
    %p374 = por %p372, %p373
    %s376 = sadd.s32 %s375, 1
    %p379 = scmp.eq.s32.totalorder %s47, 1
    %p380 = scmp.ne.s32.totalorder %s375, %s377
    %p381 = scmp.eq.s32.totalorder %s47, 0
    %p382 = por %p380, %p381
    %p383 = scmp.ne.s32.totalorder %s375, %s377
    %p384 = scmp.eq.s32.totalorder %s52, 1
    %p385 = por %p383, %p384
    %p386 = scmp.ne.s32.totalorder %s377, %s378
    %p387 = scmp.eq.s32.totalorder %s52, 0
    %p388 = por %p386, %p387
    %p389 = scmp.ne.s32.totalorder %s377, %s378
    %p390 = scmp.eq.s32.totalorder %s53, 1
    %p391 = por %p389, %p390
    %p393 = scmp.ne.s32.totalorder %s378, %s392
    %p394 = scmp.eq.s32.totalorder %s53, 0
    %p395 = por %p393, %p394
    %s397 = sadd.s32 %s396, 1
    %p400 = scmp.eq.s32.totalorder %s47, 1
    %p401 = scmp.ne.s32.totalorder %s396, %s398
    %p402 = scmp.eq.s32.totalorder %s47, 0
    %p403 = por %p401, %p402
    %p404 = scmp.ne.s32.totalorder %s396, %s398
    %p405 = scmp.eq.s32.totalorder %s52, 1
    %p406 = por %p404, %p405
    %p407 = scmp.ne.s32.totalorder %s398, %s399
    %p408 = scmp.eq.s32.totalorder %s52, 0
    %p409 = por %p407, %p408
    %p410 = scmp.ne.s32.totalorder %s398, %s399
    %p411 = scmp.eq.s32.totalorder %s53, 1
    %p412 = por %p410, %p411
    %p414 = scmp.ne.s32.totalorder %s399, %s413
    %p415 = scmp.eq.s32.totalorder %s53, 0
    %p416 = por %p414, %p415
    %s418 = sadd.s32 %s417, 1
    %p421 = scmp.eq.s32.totalorder %s47, 1
    %p422 = scmp.ne.s32.totalorder %s417, %s419
    %p423 = scmp.eq.s32.totalorder %s47, 0
    %p424 = por %p422, %p423
    %p425 = scmp.ne.s32.totalorder %s417, %s419
    %p426 = scmp.eq.s32.totalorder %s52, 1
    %p427 = por %p425, %p426
    %p428 = scmp.ne.s32.totalorder %s419, %s420
    %p429 = scmp.eq.s32.totalorder %s52, 0
    %p430 = por %p428, %p429
    %p431 = scmp.ne.s32.totalorder %s419, %s420
    %p432 = scmp.eq.s32.totalorder %s53, 1
    %p433 = por %p431, %p432
    %p435 = scmp.ne.s32.totalorder %s420, %s434
    %p436 = scmp.eq.s32.totalorder %s53, 0
    %p437 = por %p435, %p436
    %s439 = sadd.s32 %s438, 1
    %p442 = scmp.eq.s32.totalorder %s47, 1
    %p443 = scmp.ne.s32.totalorder %s438, %s440
    %p444 = scmp.eq.s32.totalorder %s47, 0
    %p445 = por %p443, %p444
    %p446 = scmp.ne.s32.totalorder %s438, %s440
    %p447 = scmp.eq.s32.totalorder %s52, 1
    %p448 = por %p446, %p447
    %p449 = scmp.ne.s32.totalorder %s440, %s441
    %p450 = scmp.eq.s32.totalorder %s52, 0
    %p451 = por %p449, %p450
    %p452 = scmp.ne.s32.totalorder %s440, %s441
    %p453 = scmp.eq.s32.totalorder %s53, 1
    %p454 = por %p452, %p453
    %p456 = scmp.ne.s32.totalorder %s441, %s455
    %p457 = scmp.eq.s32.totalorder %s53, 0
    %p458 = por %p456, %p457
    %s460 = sadd.s32 %s459, 1
    %p463 = scmp.eq.s32.totalorder %s47, 1
    %p464 = scmp.ne.s32.totalorder %s459, %s461
    %p465 = scmp.eq.s32.totalorder %s47, 0
    %p466 = por %p464, %p465
    %p467 = scmp.ne.s32.totalorder %s459, %s461
    %p468 = scmp.eq.s32.totalorder %s52, 1
    %p469 = por %p467, %p468
    %p470 = scmp.ne.s32.totalorder %s461, %s462
    %p471 = scmp.eq.s32.totalorder %s52, 0
    %p472 = por %p470, %p471
    %p473 = scmp.ne.s32.totalorder %s461, %s462
    %p474 = scmp.eq.s32.totalorder %s53, 1
    %p475 = por %p473, %p474
    %p477 = scmp.ne.s32.totalorder %s462, %s476
    %p478 = scmp.eq.s32.totalorder %s53, 0
    %p479 = por %p477, %p478
    %s481 = sadd.s32 %s480, 1
    %p484 = scmp.eq.s32.totalorder %s47, 1
    %p485 = scmp.ne.s32.totalorder %s480, %s482
    %p486 = scmp.eq.s32.totalorder %s47, 0
    %p487 = por %p485, %p486
    %p488 = scmp.ne.s32.totalorder %s480, %s482
    %p489 = scmp.eq.s32.totalorder %s52, 1
    %p490 = por %p488, %p489
    %p491 = scmp.ne.s32.totalorder %s482, %s483
    %p492 = scmp.eq.s32.totalorder %s52, 0
    %p493 = por %p491, %p492
    %p494 = scmp.ne.s32.totalorder %s482, %s483
    %p495 = scmp.eq.s32.totalorder %s53, 1
    %p496 = por %p494, %p495
    %p498 = scmp.ne.s32.totalorder %s483, %s497
    %p499 = scmp.eq.s32.totalorder %s53, 0
    %p500 = por %p498, %p499
    %s501 = ssub.s32 %s47, %s54
    %p502 = scmp.eq.s32.totalorder %s501, 0
    %s504 = sadd.s32 %s503, 1
    %s505 = scalar_select %p502, %s503, %s504
    %p508 = pneg %p502
    %p509 = scmp.eq.s32.totalorder %s47, 1
    %p510 = por %p508, %p509
    %p511 = scmp.ne.s32.totalorder %s503, %s506
    %p512 = scmp.eq.s32.totalorder %s47, 0
    %p513 = por %p511, %p512
    %p514 = scmp.ne.s32.totalorder %s503, %s506
    %p515 = scmp.eq.s32.totalorder %s52, 1
    %p516 = por %p514, %p515
    %p517 = scmp.ne.s32.totalorder %s506, %s507
    %p518 = scmp.eq.s32.totalorder %s52, 0
    %p519 = por %p517, %p518
    %p520 = scmp.ne.s32.totalorder %s506, %s507
    %p521 = scmp.eq.s32.totalorder %s53, 1
    %p522 = por %p520, %p521
    %p524 = scmp.ne.s32.totalorder %s507, %s523
    %p525 = scmp.eq.s32.totalorder %s53, 0
    %p526 = por %p524, %p525
    %s527 = ssub.s32 %s47, %s54
    %p528 = scmp.eq.s32.totalorder %s527, 0
    %s530 = sadd.s32 %s529, 1
    %s531 = scalar_select %p528, %s529, %s530
    %p534 = pneg %p528
    %p535 = scmp.eq.s32.totalorder %s47, 1
    %p536 = por %p534, %p535
    %p537 = scmp.ne.s32.totalorder %s529, %s532
    %p538 = scmp.eq.s32.totalorder %s47, 0
    %p539 = por %p537, %p538
    %p540 = scmp.ne.s32.totalorder %s529, %s532
    %p541 = scmp.eq.s32.totalorder %s52, 1
    %p542 = por %p540, %p541
    %p543 = scmp.ne.s32.totalorder %s532, %s533
    %p544 = scmp.eq.s32.totalorder %s52, 0
    %p545 = por %p543, %p544
    %p546 = scmp.ne.s32.totalorder %s532, %s533
    %p547 = scmp.eq.s32.totalorder %s53, 1
    %p548 = por %p546, %p547
    %p550 = scmp.ne.s32.totalorder %s533, %s549
    %p551 = scmp.eq.s32.totalorder %s53, 0
    %p552 = por %p550, %p551
    %s553 = ssub.s32 %s47, %s54
    %p554 = scmp.eq.s32.totalorder %s553, 0
    %s556 = sadd.s32 %s555, 1
    %s557 = scalar_select %p554, %s555, %s556
    %p560 = pneg %p554
    %p561 = scmp.eq.s32.totalorder %s47, 1
    %p562 = por %p560, %p561
    %p563 = scmp.ne.s32.totalorder %s555, %s558
    %p564 = scmp.eq.s32.totalorder %s47, 0
    %p565 = por %p563, %p564
    %p566 = scmp.ne.s32.totalorder %s555, %s558
    %p567 = scmp.eq.s32.totalorder %s52, 1
    %p568 = por %p566, %p567
    %p569 = scmp.ne.s32.totalorder %s558, %s559
    %p570 = scmp.eq.s32.totalorder %s52, 0
    %p571 = por %p569, %p570
    %p572 = scmp.ne.s32.totalorder %s558, %s559
    %p573 = scmp.eq.s32.totalorder %s53, 1
    %p574 = por %p572, %p573
    %p576 = scmp.ne.s32.totalorder %s559, %s575
    %p577 = scmp.eq.s32.totalorder %s53, 0
    %p578 = por %p576, %p577
    %p579 = scmp.le.s32.totalorder 1, %s47
    %p580 = scmp.lt.s32.totalorder %s47, 3
    %p581 = pnand %p579, %p580
    %p582 = pneg %p581
    // Predicated region
    $region9: #{paraformer_forward.3} parent=5 // pred_check
      _
    $region10: #{paraformer_forward.3} parent=5 // pred_check_branch
      %584 = sbr.rel (%p581) target = $region12
    $region11: #{paraformer_forward.3} parent=5 // pred_region
      %s585 = ssub.s32 %s47, 1
      // Predicated region
      $region13: #{paraformer_forward.3} parent=11 // pred_check
        %p586 = pneg %p94
      $region14: #{paraformer_forward.3} parent=11 // pred_check_branch
        %588 = sbr.rel (%p586) target = $region16
      $region15: #{paraformer_forward.3} parent=11 // pred_region
        _
      $region16: #{paraformer_forward.3} parent=11 // pred_fallthru
        _
      // Predicated region
      $region17: #{paraformer_forward.3} parent=11 // pred_check
        %p589 = pneg %p115
      $region18: #{paraformer_forward.3} parent=11 // pred_check_branch
        %591 = sbr.rel (%p589) target = $region20
      $region19: #{paraformer_forward.3} parent=11 // pred_region
        _
      $region20: #{paraformer_forward.3} parent=11 // pred_fallthru
        _
      // Predicated region
      $region21: #{paraformer_forward.3} parent=11 // pred_check
        %p592 = pneg %p136
      $region22: #{paraformer_forward.3} parent=11 // pred_check_branch
        %594 = sbr.rel (%p592) target = $region24
      $region23: #{paraformer_forward.3} parent=11 // pred_region
        _
      $region24: #{paraformer_forward.3} parent=11 // pred_fallthru
        _
      // Predicated region
      $region25: #{paraformer_forward.3} parent=11 // pred_check
        %p595 = pneg %p157
      $region26: #{paraformer_forward.3} parent=11 // pred_check_branch
        %597 = sbr.rel (%p595) target = $region28
      $region27: #{paraformer_forward.3} parent=11 // pred_region
        _
      $region28: #{paraformer_forward.3} parent=11 // pred_fallthru
        _
      // Predicated region
      $region29: #{paraformer_forward.3} parent=11 // pred_check
        %p598 = pneg %p178
      $region30: #{paraformer_forward.3} parent=11 // pred_check_branch
        %600 = sbr.rel (%p598) target = $region32
      $region31: #{paraformer_forward.3} parent=11 // pred_region
        _
      $region32: #{paraformer_forward.3} parent=11 // pred_fallthru
        _
      // Predicated region
      $region33: #{paraformer_forward.3} parent=11 // pred_check
        %p601 = pneg %p199
      $region34: #{paraformer_forward.3} parent=11 // pred_check_branch
        %603 = sbr.rel (%p601) target = $region36
      $region35: #{paraformer_forward.3} parent=11 // pred_region
        _
      $region36: #{paraformer_forward.3} parent=11 // pred_fallthru
        _
      // Predicated region
      $region37: #{paraformer_forward.3} parent=11 // pred_check
        %p604 = pneg %p220
      $region38: #{paraformer_forward.3} parent=11 // pred_check_branch
        %606 = sbr.rel (%p604) target = $region40
      $region39: #{paraformer_forward.3} parent=11 // pred_region
        _
      $region40: #{paraformer_forward.3} parent=11 // pred_fallthru
        _
      // Predicated region
      $region41: #{paraformer_forward.3} parent=11 // pred_check
        %p607 = pneg %p241
      $region42: #{paraformer_forward.3} parent=11 // pred_check_branch
        %609 = sbr.rel (%p607) target = $region44
      $region43: #{paraformer_forward.3} parent=11 // pred_region
        _
      $region44: #{paraformer_forward.3} parent=11 // pred_fallthru
        _
      // Predicated region
      $region45: #{paraformer_forward.3} parent=11 // pred_check
        %p610 = pneg %p262
      $region46: #{paraformer_forward.3} parent=11 // pred_check_branch
        %612 = sbr.rel (%p610) target = $region48
      $region47: #{paraformer_forward.3} parent=11 // pred_region
        _
      $region48: #{paraformer_forward.3} parent=11 // pred_fallthru
        _
      // Predicated region
      $region49: #{paraformer_forward.3} parent=11 // pred_check
        %p613 = pneg %p283
      $region50: #{paraformer_forward.3} parent=11 // pred_check_branch
        %615 = sbr.rel (%p613) target = $region52
      $region51: #{paraformer_forward.3} parent=11 // pred_region
        _
      $region52: #{paraformer_forward.3} parent=11 // pred_fallthru
        _
      // Predicated region
      $region53: #{paraformer_forward.3} parent=11 // pred_check
        %p616 = pneg %p304
      $region54: #{paraformer_forward.3} parent=11 // pred_check_branch
        %618 = sbr.rel (%p616) target = $region56
      $region55: #{paraformer_forward.3} parent=11 // pred_region
        _
      $region56: #{paraformer_forward.3} parent=11 // pred_fallthru
        _
      // Predicated region
      $region57: #{paraformer_forward.3} parent=11 // pred_check
        %p619 = pneg %p325
      $region58: #{paraformer_forward.3} parent=11 // pred_check_branch
        %621 = sbr.rel (%p619) target = $region60
      $region59: #{paraformer_forward.3} parent=11 // pred_region
        _
      $region60: #{paraformer_forward.3} parent=11 // pred_fallthru
        _
      // Predicated region
      $region61: #{paraformer_forward.3} parent=11 // pred_check
        %p622 = pneg %p346
      $region62: #{paraformer_forward.3} parent=11 // pred_check_branch
        %624 = sbr.rel (%p622) target = $region64
      $region63: #{paraformer_forward.3} parent=11 // pred_region
        _
      $region64: #{paraformer_forward.3} parent=11 // pred_fallthru
        _
      // Predicated region
      $region65: #{paraformer_forward.3} parent=11 // pred_check
        %p625 = pneg %p367
      $region66: #{paraformer_forward.3} parent=11 // pred_check_branch
        %627 = sbr.rel (%p625) target = $region68
      $region67: #{paraformer_forward.3} parent=11 // pred_region
        _
      $region68: #{paraformer_forward.3} parent=11 // pred_fallthru
        _
      // Predicated region
      $region69: #{paraformer_forward.3} parent=11 // pred_check
        %p628 = pneg %p388
      $region70: #{paraformer_forward.3} parent=11 // pred_check_branch
        %630 = sbr.rel (%p628) target = $region72
      $region71: #{paraformer_forward.3} parent=11 // pred_region
        _
      $region72: #{paraformer_forward.3} parent=11 // pred_fallthru
        _
      // Predicated region
      $region73: #{paraformer_forward.3} parent=11 // pred_check
        %p631 = pneg %p409
      $region74: #{paraformer_forward.3} parent=11 // pred_check_branch
        %633 = sbr.rel (%p631) target = $region76
      $region75: #{paraformer_forward.3} parent=11 // pred_region
        _
      $region76: #{paraformer_forward.3} parent=11 // pred_fallthru
        _
      // Predicated region
      $region77: #{paraformer_forward.3} parent=11 // pred_check
        %p634 = pneg %p430
      $region78: #{paraformer_forward.3} parent=11 // pred_check_branch
        %636 = sbr.rel (%p634) target = $region80
      $region79: #{paraformer_forward.3} parent=11 // pred_region
        _
      $region80: #{paraformer_forward.3} parent=11 // pred_fallthru
        _
      // Predicated region
      $region81: #{paraformer_forward.3} parent=11 // pred_check
        %p637 = pneg %p451
      $region82: #{paraformer_forward.3} parent=11 // pred_check_branch
        %639 = sbr.rel (%p637) target = $region84
      $region83: #{paraformer_forward.3} parent=11 // pred_region
        _
      $region84: #{paraformer_forward.3} parent=11 // pred_fallthru
        _
      // Predicated region
      $region85: #{paraformer_forward.3} parent=11 // pred_check
        %p640 = pneg %p472
      $region86: #{paraformer_forward.3} parent=11 // pred_check_branch
        %642 = sbr.rel (%p640) target = $region88
      $region87: #{paraformer_forward.3} parent=11 // pred_region
        _
      $region88: #{paraformer_forward.3} parent=11 // pred_fallthru
        _
      // Predicated region
      $region89: #{paraformer_forward.3} parent=11 // pred_check
        %p643 = pneg %p493
      $region90: #{paraformer_forward.3} parent=11 // pred_check_branch
        %645 = sbr.rel (%p643) target = $region92
      $region91: #{paraformer_forward.3} parent=11 // pred_region
        _
      $region92: #{paraformer_forward.3} parent=11 // pred_fallthru
        _
    $region12: #{paraformer_forward.3} parent=5 // pred_fallthru
      _
    %p646 = scmp.lt.s32.totalorder %s47, 2
    // Predicated region
    $region93: #{paraformer_forward.3} parent=5 // pred_check
      %p647 = pneg %p646
    $region94: #{paraformer_forward.3} parent=5 // pred_check_branch
      %649 = sbr.rel (%p647) target = $region96
    $region95: #{paraformer_forward.3} parent=5 // pred_region
      // Predicated region
      $region97: #{paraformer_forward.3} parent=95 // pred_check
        %p650 = pneg %p67
      $region98: #{paraformer_forward.3} parent=95 // pred_check_branch
        %652 = sbr.rel (%p650) target = $region100
      $region99: #{paraformer_forward.3} parent=95 // pred_region
        %p653 = scmp.lt.s32.totalorder %s47, 1
        %s654 = scalar_select %p653, %s47, 1
        %s655 = smul.addr %s654, 16
        %s656 = smul.addr %s655, 8
        %s657 = scalar_lea.vmem %s2, %s656
      $region100: #{paraformer_forward.3} parent=95 // pred_fallthru
        _
    $region96: #{paraformer_forward.3} parent=5 // pred_fallthru
      _
    %p658 = scmp.le.s32.totalorder 1, %s47
    %p659 = scmp.lt.s32.totalorder %s47, 3
    %p660 = pnand %p658, %p659
    %p661 = pneg %p660
    // Predicated region
    $region101: #{paraformer_forward.3} parent=5 // pred_check
      _
    $region102: #{paraformer_forward.3} parent=5 // pred_check_branch
      %663 = sbr.rel (%p660) target = $region104
    $region103: #{paraformer_forward.3} parent=5 // pred_region
      %s664 = ssub.s32 %s47, 1
      %p665 = scmp.lt.s32.totalorder %s52, 1
      %s666 = scalar_select %p665, %s52, 1
      %s667 = smul.addr %s666, 16
      %s668 = smul.addr %s667, 8
      %s669 = scalar_lea.vmem %s2, %s668
      %p670 = pneg %p73
      %p671 = pneg %p70
      %p672 = pneg %p94
      %p673 = pneg %p91
      %p674 = pneg %p115
      %p675 = pneg %p112
      %p676 = pneg %p136
      %p677 = pneg %p133
      %p678 = pneg %p157
      %p679 = pneg %p154
      %p680 = pneg %p178
      %p681 = pneg %p175
      %p682 = pneg %p199
      %p683 = pneg %p196
      %p684 = pneg %p220
      %p685 = pneg %p217
      %p686 = pneg %p241
      %p687 = pneg %p238
      %p688 = pneg %p262
      %p689 = pneg %p259
      %p690 = pneg %p283
      %p691 = pneg %p280
      %p692 = pneg %p304
      %p693 = pneg %p301
      %p694 = pneg %p325
      %p695 = pneg %p322
      %p696 = pneg %p346
      %p697 = pneg %p343
      %p698 = pneg %p367
      %p699 = pneg %p364
      %p700 = pneg %p388
      %p701 = pneg %p385
      %p702 = pneg %p409
      %p703 = pneg %p406
      %p704 = pneg %p430
      %p705 = pneg %p427
      %p706 = pneg %p451
      %p707 = pneg %p448
      %p708 = pneg %p472
      %p709 = pneg %p469
      %p710 = pneg %p493
      %p711 = pneg %p490
      %p712 = pneg %p519
      %p713 = pneg %p516
      %p714 = scmp.lt.s32.totalorder %s52, 1
      %s715 = scalar_select %p714, %s52, 1
      %s716 = smul.addr %s715, 16
      %s717 = smul.addr %s716, 4
      %s718 = scalar_lea.vmem %s23, %s717
      %p719 = pneg %p545
      %p720 = pneg %p542
      %p721 = scmp.lt.s32.totalorder %s52, 1
      %s722 = scalar_select %p721, %s52, 1
      %s723 = smul.addr %s722, 2
      %s724 = smul.addr %s723, 8
      %s725 = scalar_lea.vmem %s24, %s724
      %p726 = pneg %p571
      %p727 = pneg %p568
      %p728 = scmp.lt.s32.totalorder %s52, 1
      %s729 = scalar_select %p728, %s52, 1
      %s730 = scalar_lea.vmem %s25, %s729
      %p731 = scmp.lt.s32.totalorder %s52, 1
      %s732 = scalar_select %p731, %s52, 1
      %s733 = smul.addr %s732, 16
      %s734 = smul.addr %s733, 8
      %s735 = scalar_lea.vmem %s2, %s734
      %p736 = scmp.lt.s32.totalorder %s52, 1
      %s737 = scalar_select %p736, %s52, 1
      %s738 = smul.addr %s737, 16
      %s739 = smul.addr %s738, 4
      %s740 = scalar_lea.vmem %s23, %s739
      %p741 = scmp.lt.s32.totalorder %s52, 1
      %s742 = scalar_select %p741, %s52, 1
      %s743 = smul.addr %s742, 2
      %s744 = smul.addr %s743, 8
      %s745 = scalar_lea.vmem %s24, %s744
      %p746 = scmp.lt.s32.totalorder %s52, 1
      %s747 = scalar_select %p746, %s52, 1
      %s748 = scalar_lea.vmem %s25, %s747
      %v750 = vld [vmem:[%s735] sm:$0xff]
      %v751 = vld [vmem:[%s735 + $0x8] sm:$0xff]
      %v752 = vld [vmem:[%s735 + $0x10] sm:$0xff]
      %v753 = vld [vmem:[%s735 + $0x18] sm:$0xff]
      %v754 = vld [vmem:[%s735 + $0x20] sm:$0xff]
      %v755 = vld [vmem:[%s735 + $0x28] sm:$0xff]
      %v756 = vld [vmem:[%s735 + $0x30] sm:$0xff]
      %v757 = vld [vmem:[%s735 + $0x38] sm:$0xff]
      %v758 = vld [vmem:[%s735 + $0x40] sm:$0xff]
      %v759 = vld [vmem:[%s735 + $0x48] sm:$0xff]
      %v760 = vld [vmem:[%s735 + $0x50] sm:$0xff]
      %v761 = vld [vmem:[%s735 + $0x58] sm:$0xff]
      %v762 = vld [vmem:[%s735 + $0x60] sm:$0xff]
      %v763 = vld [vmem:[%s735 + $0x68] sm:$0xff]
      %v764 = vld [vmem:[%s735 + $0x70] sm:$0xff]
      %v765 = vld [vmem:[%s735 + $0x78] sm:$0xff]
      %v766 = vlaneseq
      %v767 = vand.u32 %v766, 127
      %s768 = sld [smem:[#allocation3 + %s52]]
      %v769 = vstv %s768
      %vm770 = vcmp.lt.s32.totalorder %v767, %v769
      %v771 = vsel %vm770, 1, 0
      %v772 = vcvt.s32.f32 %v771
      %v773 = vpack.c.bf16 %v751, %v750
      %v774 = vpack.c.bf16 %v753, %v752
      %v775 = vpack.c.bf16 %v755, %v754
      %v776 = vpack.c.bf16 %v757, %v756
      %v777 = vpack.c.bf16 %v759, %v758
      %v778 = vpack.c.bf16 %v761, %v760
      %v779 = vpack.c.bf16 %v763, %v762
      %v780 = vpack.c.bf16 %v765, %v764
      %v781 = vld [vmem:[%s3] sm:$0xf]
      %v782 = vld [vmem:[%s3 + $0x4] sm:$0xf]
      %v783 = vld [vmem:[%s3 + $0x8] sm:$0xf]
      %v784 = vld [vmem:[%s3 + $0xc] sm:$0xf]
      %v785 = vld [vmem:[%s3 + $0x10] sm:$0xf]
      %v786 = vld [vmem:[%s3 + $0x14] sm:$0xf]
      %v787 = vld [vmem:[%s3 + $0x18] sm:$0xf]
      %v788 = vld [vmem:[%s3 + $0x1c] sm:$0xf]
      %v789 = vld [vmem:[%s3 + $0x20] sm:$0xf]
      %v790 = vld [vmem:[%s3 + $0x24] sm:$0xf]
      %v791 = vld [vmem:[%s4] sm:$0x1]
      %v793 = vperm.slane %v791, 0
      %v805 = vunpack.c.l.b16 %v781
      %v806 = vunpack.c.l.b16 %v782
      %v807 = vunpack.c.l.b16 %v783
      %v808 = vunpack.c.l.b16 %v784
      %v809 = vunpack.c.l.b16 %v785
      %v810 = vunpack.c.l.b16 %v786
      %v811 = vunpack.c.l.b16 %v787
      %v812 = vunpack.c.l.b16 %v788
      %v813 = vunpack.c.l.b16 %v789
      %v814 = vunpack.c.l.b16 %v790
      %v815 = vpack.c.b16 %v806, %v805
      %v816 = vpack.c.b16 %v808, %v807
      %v817 = vpack.c.b16 %v810, %v809
      %v818 = vpack.c.b16 %v812, %v811
      %v819 = vpack.c.b16 %v814, %v813
      %vm825 = vcmask 654336
      %v827 = vsel %vm825, %v773, 0
      %v830 = vsel %vm825, %v774, 0
      %v833 = vsel %vm825, %v775, 0
      %v836 = vsel %vm825, %v776, 0
      %v839 = vsel %vm825, %v777, 0
      %v842 = vsel %vm825, %v778, 0
      %v845 = vsel %vm825, %v779, 0
      %v848 = vsel %vm825, %v780, 0
      %850 = vmatpush.bf16.msra.mxu0 0
      %851 = vmatpush.bf16.msra.mxu0 0
      %852 = vmatpush.bf16.msra.mxu0 0
      %853 = vmatpush.bf16.msra.mxu0 %v819
      %854 = vmatpush.bf16.msra.mxu0 %v818
      %855 = vmatpush.bf16.msra.mxu0 %v817
      %856 = vmatpush.bf16.msra.mxu0 %v816
      %857 = vmatpush.bf16.msra.mxu0 %v815
      %858 = vmatmul.bf16.gmra.mxu0 %v827
      %v859 = vpop.f32.mrf.mxu0
      %v860 = vadd.f32 %v793, %v859
      %v861 = vpop.f32.mrf.mxu0
      %v862 = vadd.f32 %v793, %v861
      %863 = vmatmul.bf16.gmra.mxu0 %v830
      %v864 = vpop.f32.mrf.mxu0
      %v865 = vadd.f32 %v793, %v864
      %v866 = vpop.f32.mrf.mxu0
      %v867 = vadd.f32 %v793, %v866
      %868 = vmatmul.bf16.gmra.mxu0 %v833
      %v869 = vpop.f32.mrf.mxu0
      %v870 = vadd.f32 %v793, %v869
      %v871 = vpop.f32.mrf.mxu0
      %v872 = vadd.f32 %v793, %v871
      %873 = vmatmul.bf16.gmra.mxu0 %v836
      %v874 = vpop.f32.mrf.mxu0
      %v875 = vadd.f32 %v793, %v874
      %v876 = vpop.f32.mrf.mxu0
      %v877 = vadd.f32 %v793, %v876
      %878 = vmatmul.bf16.gmra.mxu0 %v839
      %v879 = vpop.f32.mrf.mxu0
      %v880 = vadd.f32 %v793, %v879
      %v881 = vpop.f32.mrf.mxu0
      %v882 = vadd.f32 %v793, %v881
      %883 = vmatmul.bf16.gmra.mxu0 %v842
      %v884 = vpop.f32.mrf.mxu0
      %v885 = vadd.f32 %v793, %v884
      %v886 = vpop.f32.mrf.mxu0
      %v887 = vadd.f32 %v793, %v886
      %888 = vmatmul.bf16.gmra.mxu0 %v845
      %v889 = vpop.f32.mrf.mxu0
      %v890 = vadd.f32 %v793, %v889
      %v891 = vpop.f32.mrf.mxu0
      %v892 = vadd.f32 %v793, %v891
      %893 = vmatmul.bf16.gmra.mxu0 %v848
      %v894 = vpop.f32.mrf.mxu0
      %v895 = vadd.f32 %v793, %v894
      %v896 = vpop.f32.mrf.mxu0
      %v897 = vadd.f32 %v793, %v896
      %898 = vdwg.mxu0
      %v899 = vpack.c.bf16 %v862, %v860
      %v900 = vpack.c.bf16 %v867, %v865
      %v901 = vpack.c.bf16 %v872, %v870
      %v902 = vpack.c.bf16 %v877, %v875
      %v903 = vpack.c.bf16 %v882, %v880
      %v904 = vpack.c.bf16 %v887, %v885
      %v905 = vpack.c.bf16 %v892, %v890
      %v906 = vpack.c.bf16 %v897, %v895
      %v907 = vld [vmem:[%s5] sm:$0xf]
      %v908 = vld [vmem:[%s5 + $0x4] sm:$0xf]
      %v909 = vld [vmem:[%s5 + $0x8] sm:$0xf]
      %v910 = vld [vmem:[%s5 + $0xc] sm:$0xf]
      %v911 = vld [vmem:[%s5 + $0x10] sm:$0xf]
      %v912 = vld [vmem:[%s5 + $0x14] sm:$0xf]
      %v913 = vld [vmem:[%s5 + $0x18] sm:$0xf]
      %v914 = vld [vmem:[%s5 + $0x1c] sm:$0xf]
      %v915 = vld [vmem:[%s5 + $0x20] sm:$0xf]
      %v916 = vld [vmem:[%s5 + $0x24] sm:$0xf]
      %v917 = vld [vmem:[%s5 + $0x28] sm:$0xf]
      %v918 = vld [vmem:[%s5 + $0x2c] sm:$0xf]
      %v919 = vld [vmem:[%s5 + $0x30] sm:$0xf]
      %v920 = vld [vmem:[%s5 + $0x34] sm:$0xf]
      %v921 = vld [vmem:[%s5 + $0x38] sm:$0xf]
      %v922 = vld [vmem:[%s5 + $0x3c] sm:$0xf]
      %v939 = vunpack.c.l.b16 %v907
      %v940 = vunpack.c.l.b16 %v908
      %v941 = vunpack.c.l.b16 %v909
      %v942 = vunpack.c.l.b16 %v910
      %v943 = vunpack.c.l.b16 %v911
      %v944 = vunpack.c.l.b16 %v912
      %v945 = vunpack.c.l.b16 %v913
      %v946 = vunpack.c.l.b16 %v914
      %v947 = vunpack.c.l.b16 %v915
      %v948 = vunpack.c.l.b16 %v916
      %v949 = vunpack.c.l.b16 %v917
      %v950 = vunpack.c.l.b16 %v918
      %v951 = vunpack.c.l.b16 %v919
      %v952 = vunpack.c.l.b16 %v920
      %v953 = vunpack.c.l.b16 %v921
      %v954 = vunpack.c.l.b16 %v922
      %v955 = vpack.c.b16 %v940, %v939
      %v956 = vpack.c.b16 %v942, %v941
      %v957 = vpack.c.b16 %v944, %v943
      %v958 = vpack.c.b16 %v946, %v945
      %v959 = vpack.c.b16 %v948, %v947
      %v960 = vpack.c.b16 %v950, %v949
      %v961 = vpack.c.b16 %v952, %v951
      %v962 = vpack.c.b16 %v954, %v953
      %971 = vmatpush.bf16.msra.mxu0 %v962
      %972 = vmatpush.bf16.msra.mxu0 %v961
      %973 = vmatpush.bf16.msra.mxu0 %v960
      %974 = vmatpush.bf16.msra.mxu0 %v959
      %975 = vmatpush.bf16.msra.mxu0 %v958
      %976 = vmatpush.bf16.msra.mxu0 %v957
      %977 = vmatpush.bf16.msra.mxu0 %v956
      %978 = vmatpush.bf16.msra.mxu0 %v955
      %979 = vmatmul.bf16.gmra.mxu0 %v899
      %v980 = vpop.f32.mrf.mxu0
      %v981 = vadd.f32 0.0, %v980
      %v982 = vpop.f32.mrf.mxu0
      %v983 = vadd.f32 0.0, %v982
      %984 = vmatmul.bf16.gmra.mxu0 %v900
      %v985 = vpop.f32.mrf.mxu0
      %v986 = vadd.f32 0.0, %v985
      %v987 = vpop.f32.mrf.mxu0
      %v988 = vadd.f32 0.0, %v987
      %989 = vmatmul.bf16.gmra.mxu0 %v901
      %v990 = vpop.f32.mrf.mxu0
      %v991 = vadd.f32 0.0, %v990
      %v992 = vpop.f32.mrf.mxu0
      %v993 = vadd.f32 0.0, %v992
      %994 = vmatmul.bf16.gmra.mxu0 %v902
      %v995 = vpop.f32.mrf.mxu0
      %v996 = vadd.f32 0.0, %v995
      %v997 = vpop.f32.mrf.mxu0
      %v998 = vadd.f32 0.0, %v997
      %999 = vmatmul.bf16.gmra.mxu0 %v903
      %v1000 = vpop.f32.mrf.mxu0
      %v1001 = vadd.f32 0.0, %v1000
      %v1002 = vpop.f32.mrf.mxu0
      %v1003 = vadd.f32 0.0, %v1002
      %1004 = vmatmul.bf16.gmra.mxu0 %v904
      %v1005 = vpop.f32.mrf.mxu0
      %v1006 = vadd.f32 0.0, %v1005
      %v1007 = vpop.f32.mrf.mxu0
      %v1008 = vadd.f32 0.0, %v1007
      %1009 = vmatmul.bf16.gmra.mxu0 %v905
      %v1010 = vpop.f32.mrf.mxu0
      %v1011 = vadd.f32 0.0, %v1010
      %v1012 = vpop.f32.mrf.mxu0
      %v1013 = vadd.f32 0.0, %v1012
      %1014 = vmatmul.bf16.gmra.mxu0 %v906
      %v1015 = vpop.f32.mrf.mxu0
      %v1016 = vadd.f32 0.0, %v1015
      %v1017 = vpop.f32.mrf.mxu0
      %v1018 = vadd.f32 0.0, %v1017
      %1019 = vdwg.mxu0
      %v1020 = vpack.c.bf16 %v983, %v981
      %v1021 = vpack.c.bf16 %v988, %v986
      %v1022 = vpack.c.bf16 %v993, %v991
      %v1023 = vpack.c.bf16 %v998, %v996
      %v1024 = vpack.c.bf16 %v1003, %v1001
      %v1025 = vpack.c.bf16 %v1008, %v1006
      %v1026 = vpack.c.bf16 %v1013, %v1011
      %v1027 = vpack.c.bf16 %v1018, %v1016
      %v1028 = vld [vmem:[%s6] sm:$0xf]
      %v1029 = vld [vmem:[%s6 + $0x4] sm:$0xf]
      %v1030 = vld [vmem:[%s6 + $0x8] sm:$0xf]
      %v1031 = vld [vmem:[%s6 + $0xc] sm:$0xf]
      %v1032 = vld [vmem:[%s6 + $0x10] sm:$0xf]
      %v1033 = vld [vmem:[%s6 + $0x14] sm:$0xf]
      %v1034 = vld [vmem:[%s6 + $0x18] sm:$0xf]
      %v1035 = vld [vmem:[%s6 + $0x1c] sm:$0xf]
      %v1036 = vld [vmem:[%s6 + $0x20] sm:$0xf]
      %v1037 = vld [vmem:[%s6 + $0x24] sm:$0xf]
      %v1038 = vld [vmem:[%s6 + $0x28] sm:$0xf]
      %v1039 = vld [vmem:[%s6 + $0x2c] sm:$0xf]
      %v1040 = vld [vmem:[%s6 + $0x30] sm:$0xf]
      %v1041 = vld [vmem:[%s6 + $0x34] sm:$0xf]
      %v1042 = vld [vmem:[%s6 + $0x38] sm:$0xf]
      %v1043 = vld [vmem:[%s6 + $0x3c] sm:$0xf]
      %v1060 = vunpack.c.l.b16 %v1028
      %v1061 = vunpack.c.l.b16 %v1029
      %v1062 = vunpack.c.l.b16 %v1030
      %v1063 = vunpack.c.l.b16 %v1031
      %v1064 = vunpack.c.l.b16 %v1032
      %v1065 = vunpack.c.l.b16 %v1033
      %v1066 = vunpack.c.l.b16 %v1034
      %v1067 = vunpack.c.l.b16 %v1035
      %v1068 = vunpack.c.l.b16 %v1036
      %v1069 = vunpack.c.l.b16 %v1037
      %v1070 = vunpack.c.l.b16 %v1038
      %v1071 = vunpack.c.l.b16 %v1039
      %v1072 = vunpack.c.l.b16 %v1040
      %v1073 = vunpack.c.l.b16 %v1041
      %v1074 = vunpack.c.l.b16 %v1042
      %v1075 = vunpack.c.l.b16 %v1043
      %v1076 = vpack.c.b16 %v1061, %v1060
      %v1077 = vpack.c.b16 %v1063, %v1062
      %v1078 = vpack.c.b16 %v1065, %v1064
      %v1079 = vpack.c.b16 %v1067, %v1066
      %v1080 = vpack.c.b16 %v1069, %v1068
      %v1081 = vpack.c.b16 %v1071, %v1070
      %v1082 = vpack.c.b16 %v1073, %v1072
      %v1083 = vpack.c.b16 %v1075, %v1074
      %1092 = vmatpush.bf16.msra.mxu0 %v1083
      %1093 = vmatpush.bf16.msra.mxu0 %v1082
      %1094 = vmatpush.bf16.msra.mxu0 %v1081
      %1095 = vmatpush.bf16.msra.mxu0 %v1080
      %1096 = vmatpush.bf16.msra.mxu0 %v1079
      %1097 = vmatpush.bf16.msra.mxu0 %v1078
      %1098 = vmatpush.bf16.msra.mxu0 %v1077
      %1099 = vmatpush.bf16.msra.mxu0 %v1076
      %1100 = vmatmul.bf16.gmra.mxu0 %v899
      %v1101 = vpop.f32.mrf.mxu0
      %v1102 = vadd.f32 0.0, %v1101
      %v1103 = vpop.f32.mrf.mxu0
      %v1104 = vadd.f32 0.0, %v1103
      %1105 = vmatmul.bf16.gmra.mxu0 %v900
      %v1106 = vpop.f32.mrf.mxu0
      %v1107 = vadd.f32 0.0, %v1106
      %v1108 = vpop.f32.mrf.mxu0
      %v1109 = vadd.f32 0.0, %v1108
      %1110 = vmatmul.bf16.gmra.mxu0 %v901
      %v1111 = vpop.f32.mrf.mxu0
      %v1112 = vadd.f32 0.0, %v1111
      %v1113 = vpop.f32.mrf.mxu0
      %v1114 = vadd.f32 0.0, %v1113
      %1115 = vmatmul.bf16.gmra.mxu0 %v902
      %v1116 = vpop.f32.mrf.mxu0
      %v1117 = vadd.f32 0.0, %v1116
      %v1118 = vpop.f32.mrf.mxu0
      %v1119 = vadd.f32 0.0, %v1118
      %1120 = vmatmul.bf16.gmra.mxu0 %v903
      %v1121 = vpop.f32.mrf.mxu0
      %v1122 = vadd.f32 0.0, %v1121
      %v1123 = vpop.f32.mrf.mxu0
      %v1124 = vadd.f32 0.0, %v1123
      %1125 = vmatmul.bf16.gmra.mxu0 %v904
      %v1126 = vpop.f32.mrf.mxu0
      %v1127 = vadd.f32 0.0, %v1126
      %v1128 = vpop.f32.mrf.mxu0
      %v1129 = vadd.f32 0.0, %v1128
      %1130 = vmatmul.bf16.gmra.mxu0 %v905
      %v1131 = vpop.f32.mrf.mxu0
      %v1132 = vadd.f32 0.0, %v1131
      %v1133 = vpop.f32.mrf.mxu0
      %v1134 = vadd.f32 0.0, %v1133
      %1135 = vmatmul.bf16.gmra.mxu0 %v906
      %v1136 = vpop.f32.mrf.mxu0
      %v1137 = vadd.f32 0.0, %v1136
      %v1138 = vpop.f32.mrf.mxu0
      %v1139 = vadd.f32 0.0, %v1138
      %1140 = vdwg.mxu0
      %v1141 = vpack.c.bf16 %v1104, %v1102
      %v1142 = vpack.c.bf16 %v1109, %v1107
      %v1143 = vpack.c.bf16 %v1114, %v1112
      %v1144 = vpack.c.bf16 %v1119, %v1117
      %v1145 = vpack.c.bf16 %v1124, %v1122
      %v1146 = vpack.c.bf16 %v1129, %v1127
      %v1147 = vpack.c.bf16 %v1134, %v1132
      %v1148 = vpack.c.bf16 %v1139, %v1137
      %v1149 = vld [vmem:[%s7] sm:$0xf]
      %v1150 = vld [vmem:[%s7 + $0x4] sm:$0xf]
      %v1151 = vld [vmem:[%s7 + $0x8] sm:$0xf]
      %v1152 = vld [vmem:[%s7 + $0xc] sm:$0xf]
      %v1153 = vld [vmem:[%s7 + $0x10] sm:$0xf]
      %v1154 = vld [vmem:[%s7 + $0x14] sm:$0xf]
      %v1155 = vld [vmem:[%s7 + $0x18] sm:$0xf]
      %v1156 = vld [vmem:[%s7 + $0x1c] sm:$0xf]
      %v1157 = vld [vmem:[%s7 + $0x20] sm:$0xf]
      %v1158 = vld [vmem:[%s7 + $0x24] sm:$0xf]
      %v1159 = vld [vmem:[%s7 + $0x28] sm:$0xf]
      %v1160 = vld [vmem:[%s7 + $0x2c] sm:$0xf]
      %v1161 = vld [vmem:[%s7 + $0x30] sm:$0xf]
      %v1162 = vld [vmem:[%s7 + $0x34] sm:$0xf]
      %v1163 = vld [vmem:[%s7 + $0x38] sm:$0xf]
      %v1164 = vld [vmem:[%s7 + $0x3c] sm:$0xf]
      %v1181 = vunpack.c.l.b16 %v1149
      %v1182 = vunpack.c.l.b16 %v1150
      %v1183 = vunpack.c.l.b16 %v1151
      %v1184 = vunpack.c.l.b16 %v1152
      %v1185 = vunpack.c.l.b16 %v1153
      %v1186 = vunpack.c.l.b16 %v1154
      %v1187 = vunpack.c.l.b16 %v1155
      %v1188 = vunpack.c.l.b16 %v1156
      %v1189 = vunpack.c.l.b16 %v1157
      %v1190 = vunpack.c.l.b16 %v1158
      %v1191 = vunpack.c.l.b16 %v1159
      %v1192 = vunpack.c.l.b16 %v1160
      %v1193 = vunpack.c.l.b16 %v1161
      %v1194 = vunpack.c.l.b16 %v1162
      %v1195 = vunpack.c.l.b16 %v1163
      %v1196 = vunpack.c.l.b16 %v1164
      %v1197 = vpack.c.b16 %v1182, %v1181
      %v1198 = vpack.c.b16 %v1184, %v1183
      %v1199 = vpack.c.b16 %v1186, %v1185
      %v1200 = vpack.c.b16 %v1188, %v1187
      %v1201 = vpack.c.b16 %v1190, %v1189
      %v1202 = vpack.c.b16 %v1192, %v1191
      %v1203 = vpack.c.b16 %v1194, %v1193
      %v1204 = vpack.c.b16 %v1196, %v1195
      %1213 = vmatpush.bf16.msra.mxu0 %v1204
      %1214 = vmatpush.bf16.msra.mxu0 %v1203
      %1215 = vmatpush.bf16.msra.mxu0 %v1202
      %1216 = vmatpush.bf16.msra.mxu0 %v1201
      %1217 = vmatpush.bf16.msra.mxu0 %v1200
      %1218 = vmatpush.bf16.msra.mxu0 %v1199
      %1219 = vmatpush.bf16.msra.mxu0 %v1198
      %1220 = vmatpush.bf16.msra.mxu0 %v1197
      %1221 = vmatmul.bf16.gmra.mxu0 %v899
      %v1222 = vpop.f32.mrf.mxu0
      %v1223 = vadd.f32 0.0, %v1222
      %v1224 = vpop.f32.mrf.mxu0
      %v1225 = vadd.f32 0.0, %v1224
      %1226 = vmatmul.bf16.gmra.mxu0 %v900
      %v1227 = vpop.f32.mrf.mxu0
      %v1228 = vadd.f32 0.0, %v1227
      %v1229 = vpop.f32.mrf.mxu0
      %v1230 = vadd.f32 0.0, %v1229
      %1231 = vmatmul.bf16.gmra.mxu0 %v901
      %v1232 = vpop.f32.mrf.mxu0
      %v1233 = vadd.f32 0.0, %v1232
      %v1234 = vpop.f32.mrf.mxu0
      %v1235 = vadd.f32 0.0, %v1234
      %1236 = vmatmul.bf16.gmra.mxu0 %v902
      %v1237 = vpop.f32.mrf.mxu0
      %v1238 = vadd.f32 0.0, %v1237
      %v1239 = vpop.f32.mrf.mxu0
      %v1240 = vadd.f32 0.0, %v1239
      %1241 = vmatmul.bf16.gmra.mxu0 %v903
      %v1242 = vpop.f32.mrf.mxu0
      %v1243 = vadd.f32 0.0, %v1242
      %v1244 = vpop.f32.mrf.mxu0
      %v1245 = vadd.f32 0.0, %v1244
      %1246 = vmatmul.bf16.gmra.mxu0 %v904
      %v1247 = vpop.f32.mrf.mxu0
      %v1248 = vadd.f32 0.0, %v1247
      %v1249 = vpop.f32.mrf.mxu0
      %v1250 = vadd.f32 0.0, %v1249
      %1251 = vmatmul.bf16.gmra.mxu0 %v905
      %v1252 = vpop.f32.mrf.mxu0
      %v1253 = vadd.f32 0.0, %v1252
      %v1254 = vpop.f32.mrf.mxu0
      %v1255 = vadd.f32 0.0, %v1254
      %1256 = vmatmul.bf16.gmra.mxu0 %v906
      %v1257 = vpop.f32.mrf.mxu0
      %v1258 = vadd.f32 0.0, %v1257
      %v1259 = vpop.f32.mrf.mxu0
      %v1260 = vadd.f32 0.0, %v1259
      %1261 = vdwg.mxu0
      %v1262 = vpack.c.bf16 %v1225, %v1223
      %v1263 = vpack.c.bf16 %v1230, %v1228
      %v1264 = vpack.c.bf16 %v1235, %v1233
      %v1265 = vpack.c.bf16 %v1240, %v1238
      %v1266 = vpack.c.bf16 %v1245, %v1243
      %v1267 = vpack.c.bf16 %v1250, %v1248
      %v1268 = vpack.c.bf16 %v1255, %v1253
      %v1269 = vpack.c.bf16 %v1260, %v1258
      %1270 = vmatpush.bf16.xpose.msra.mxu0 %v1148
      %1271 = vmatpush.bf16.xpose.msra.mxu0 %v1147
      %1272 = vmatpush.bf16.xpose.msra.mxu0 %v1146
      %1273 = vmatpush.bf16.xpose.msra.mxu0 %v1145
      %1274 = vmatpush.bf16.xpose.msra.mxu0 %v1144
      %1275 = vmatpush.bf16.xpose.msra.mxu0 %v1143
      %1276 = vmatpush.bf16.xpose.msra.mxu0 %v1142
      %1277 = vmatpush.bf16.xpose.msra.mxu0 %v1141
      %1278 = vmatmul.bf16.gmra.mxu0 %v1020
      %v1279 = vpop.f32.mrf.mxu0
      %v1280 = vadd.f32 0.0, %v1279
      %v1281 = vpop.f32.mrf.mxu0
      %v1282 = vadd.f32 0.0, %v1281
      %1283 = vmatmul.bf16.gmra.mxu0 %v1021
      %v1284 = vpop.f32.mrf.mxu0
      %v1285 = vadd.f32 0.0, %v1284
      %v1286 = vpop.f32.mrf.mxu0
      %v1287 = vadd.f32 0.0, %v1286
      %1288 = vmatmul.bf16.gmra.mxu0 %v1022
      %v1289 = vpop.f32.mrf.mxu0
      %v1290 = vadd.f32 0.0, %v1289
      %v1291 = vpop.f32.mrf.mxu0
      %v1292 = vadd.f32 0.0, %v1291
      %1293 = vmatmul.bf16.gmra.mxu0 %v1023
      %v1294 = vpop.f32.mrf.mxu0
      %v1295 = vadd.f32 0.0, %v1294
      %v1296 = vpop.f32.mrf.mxu0
      %v1297 = vadd.f32 0.0, %v1296
      %1298 = vmatmul.bf16.gmra.mxu0 %v1024
      %v1299 = vpop.f32.mrf.mxu0
      %v1300 = vadd.f32 0.0, %v1299
      %v1301 = vpop.f32.mrf.mxu0
      %v1302 = vadd.f32 0.0, %v1301
      %1303 = vmatmul.bf16.gmra.mxu0 %v1025
      %v1304 = vpop.f32.mrf.mxu0
      %v1305 = vadd.f32 0.0, %v1304
      %v1306 = vpop.f32.mrf.mxu0
      %v1307 = vadd.f32 0.0, %v1306
      %1308 = vmatmul.bf16.gmra.mxu0 %v1026
      %v1309 = vpop.f32.mrf.mxu0
      %v1310 = vadd.f32 0.0, %v1309
      %v1311 = vpop.f32.mrf.mxu0
      %v1312 = vadd.f32 0.0, %v1311
      %1313 = vmatmul.bf16.gmra.mxu0 %v1027
      %v1314 = vpop.f32.mrf.mxu0
      %v1315 = vadd.f32 0.0, %v1314
      %v1316 = vpop.f32.mrf.mxu0
      %v1317 = vadd.f32 0.0, %v1316
      %1318 = vdwg.mxu0
      %v1319 = vmul.f32 %v1280, 0.088388346
      %v1320 = vmul.f32 %v1282, 0.088388346
      %v1321 = vmul.f32 %v1285, 0.088388346
      %v1322 = vmul.f32 %v1287, 0.088388346
      %v1323 = vmul.f32 %v1290, 0.088388346
      %v1324 = vmul.f32 %v1292, 0.088388346
      %v1325 = vmul.f32 %v1295, 0.088388346
      %v1326 = vmul.f32 %v1297, 0.088388346
      %v1327 = vmul.f32 %v1300, 0.088388346
      %v1328 = vmul.f32 %v1302, 0.088388346
      %v1329 = vmul.f32 %v1305, 0.088388346
      %v1330 = vmul.f32 %v1307, 0.088388346
      %v1331 = vmul.f32 %v1310, 0.088388346
      %v1332 = vmul.f32 %v1312, 0.088388346
      %v1333 = vmul.f32 %v1315, 0.088388346
      %v1334 = vmul.f32 %v1317, 0.088388346
      %v1335 = vsub.f32 %v772, 1.0
      %v1336 = vmul.f32 %v1335, 1e+30
      %v1337 = vadd.f32 %v1319, %v1336
      %v1338 = vadd.f32 %v1320, %v1336
      %v1339 = vadd.f32 %v1321, %v1336
      %v1340 = vadd.f32 %v1322, %v1336
      %v1341 = vadd.f32 %v1323, %v1336
      %v1342 = vadd.f32 %v1324, %v1336
      %v1343 = vadd.f32 %v1325, %v1336
      %v1344 = vadd.f32 %v1326, %v1336
      %v1345 = vadd.f32 %v1327, %v1336
      %v1346 = vadd.f32 %v1328, %v1336
      %v1347 = vadd.f32 %v1329, %v1336
      %v1348 = vadd.f32 %v1330, %v1336
      %v1349 = vadd.f32 %v1331, %v1336
      %v1350 = vadd.f32 %v1332, %v1336
      %v1351 = vadd.f32 %v1333, %v1336
      %v1352 = vadd.f32 %v1334, %v1336
      %1353 = vmax.xlane.f32.xlu0 %v1337
      %v1354 = vpop.xlane.xlu0 %1353
      %1355 = vmax.xlane.f32.xlu0 %v1338
      %v1356 = vpop.xlane.xlu0 %1355
      %1357 = vmax.xlane.f32.xlu0 %v1339
      %v1358 = vpop.xlane.xlu0 %1357
      %1359 = vmax.xlane.f32.xlu0 %v1340
      %v1360 = vpop.xlane.xlu0 %1359
      %1361 = vmax.xlane.f32.xlu0 %v1341
      %v1362 = vpop.xlane.xlu0 %1361
      %1363 = vmax.xlane.f32.xlu0 %v1342
      %v1364 = vpop.xlane.xlu0 %1363
      %1365 = vmax.xlane.f32.xlu0 %v1343
      %v1366 = vpop.xlane.xlu0 %1365
      %1367 = vmax.xlane.f32.xlu0 %v1344
      %v1368 = vpop.xlane.xlu0 %1367
      %1369 = vmax.xlane.f32.xlu0 %v1345
      %v1370 = vpop.xlane.xlu0 %1369
      %1371 = vmax.xlane.f32.xlu0 %v1346
      %v1372 = vpop.xlane.xlu0 %1371
      %1373 = vmax.xlane.f32.xlu0 %v1347
      %v1374 = vpop.xlane.xlu0 %1373
      %1375 = vmax.xlane.f32.xlu0 %v1348
      %v1376 = vpop.xlane.xlu0 %1375
      %1377 = vmax.xlane.f32.xlu0 %v1349
      %v1378 = vpop.xlane.xlu0 %1377
      %1379 = vmax.xlane.f32.xlu0 %v1350
      %v1380 = vpop.xlane.xlu0 %1379
      %1381 = vmax.xlane.f32.xlu0 %v1351
      %v1382 = vpop.xlane.xlu0 %1381
      %1383 = vmax.xlane.f32.xlu0 %v1352
      %v1384 = vpop.xlane.xlu0 %1383
      %v1385 = vmax.f32 %v1354, -1e+30
      %v1386 = vmax.f32 %v1356, -1e+30
      %v1387 = vmax.f32 %v1358, -1e+30
      %v1388 = vmax.f32 %v1360, -1e+30
      %v1389 = vmax.f32 %v1362, -1e+30
      %v1390 = vmax.f32 %v1364, -1e+30
      %v1391 = vmax.f32 %v1366, -1e+30
      %v1392 = vmax.f32 %v1368, -1e+30
      %v1393 = vmax.f32 %v1370, -1e+30
      %v1394 = vmax.f32 %v1372, -1e+30
      %v1395 = vmax.f32 %v1374, -1e+30
      %v1396 = vmax.f32 %v1376, -1e+30
      %v1397 = vmax.f32 %v1378, -1e+30
      %v1398 = vmax.f32 %v1380, -1e+30
      %v1399 = vmax.f32 %v1382, -1e+30
      %v1400 = vmax.f32 %v1384, -1e+30
      %v1401 = vsub.f32 -1e+30, %v1385
      %v1402 = vsub.f32 -1e+30, %v1386
      %v1403 = vsub.f32 -1e+30, %v1387
      %v1404 = vsub.f32 -1e+30, %v1388
      %v1405 = vsub.f32 -1e+30, %v1389
      %v1406 = vsub.f32 -1e+30, %v1390
      %v1407 = vsub.f32 -1e+30, %v1391
      %v1408 = vsub.f32 -1e+30, %v1392
      %v1409 = vsub.f32 -1e+30, %v1393
      %v1410 = vsub.f32 -1e+30, %v1394
      %v1411 = vsub.f32 -1e+30, %v1395
      %v1412 = vsub.f32 -1e+30, %v1396
      %v1413 = vsub.f32 -1e+30, %v1397
      %v1414 = vsub.f32 -1e+30, %v1398
      %v1415 = vsub.f32 -1e+30, %v1399
      %v1416 = vsub.f32 -1e+30, %v1400
      %v1417 = vmul.f32 %v1401, 1.442695
      %v1418 = vpow.pop %v1417
      %v1419 = vmul.f32 %v1402, 1.442695
      %v1420 = vpow.pop %v1419
      %v1421 = vmul.f32 %v1403, 1.442695
      %v1422 = vpow.pop %v1421
      %v1423 = vmul.f32 %v1404, 1.442695
      %v1424 = vpow.pop %v1423
      %v1425 = vmul.f32 %v1405, 1.442695
      %v1426 = vpow.pop %v1425
      %v1427 = vmul.f32 %v1406, 1.442695
      %v1428 = vpow.pop %v1427
      %v1429 = vmul.f32 %v1407, 1.442695
      %v1430 = vpow.pop %v1429
      %v1431 = vmul.f32 %v1408, 1.442695
      %v1432 = vpow.pop %v1431
      %v1433 = vmul.f32 %v1409, 1.442695
      %v1434 = vpow.pop %v1433
      %v1435 = vmul.f32 %v1410, 1.442695
      %v1436 = vpow.pop %v1435
      %v1437 = vmul.f32 %v1411, 1.442695
      %v1438 = vpow.pop %v1437
      %v1439 = vmul.f32 %v1412, 1.442695
      %v1440 = vpow.pop %v1439
      %v1441 = vmul.f32 %v1413, 1.442695
      %v1442 = vpow.pop %v1441
      %v1443 = vmul.f32 %v1414, 1.442695
      %v1444 = vpow.pop %v1443
      %v1445 = vmul.f32 %v1415, 1.442695
      %v1446 = vpow.pop %v1445
      %v1447 = vmul.f32 %v1416, 1.442695
      %v1448 = vpow.pop %v1447
      %v1449 = vsub.f32 %v1337, %v1385
      %v1450 = vsub.f32 %v1338, %v1386
      %v1451 = vsub.f32 %v1339, %v1387
      %v1452 = vsub.f32 %v1340, %v1388
      %v1453 = vsub.f32 %v1341, %v1389
      %v1454 = vsub.f32 %v1342, %v1390
      %v1455 = vsub.f32 %v1343, %v1391
      %v1456 = vsub.f32 %v1344, %v1392
      %v1457 = vsub.f32 %v1345, %v1393
      %v1458 = vsub.f32 %v1346, %v1394
      %v1459 = vsub.f32 %v1347, %v1395
      %v1460 = vsub.f32 %v1348, %v1396
      %v1461 = vsub.f32 %v1349, %v1397
      %v1462 = vsub.f32 %v1350, %v1398
      %v1463 = vsub.f32 %v1351, %v1399
      %v1464 = vsub.f32 %v1352, %v1400
      %v1465 = vmul.f32 %v1449, 1.442695
      %v1466 = vpow.pop %v1465
      %v1467 = vmul.f32 %v1450, 1.442695
      %v1468 = vpow.pop %v1467
      %v1469 = vmul.f32 %v1451, 1.442695
      %v1470 = vpow.pop %v1469
      %v1471 = vmul.f32 %v1452, 1.442695
      %v1472 = vpow.pop %v1471
      %v1473 = vmul.f32 %v1453, 1.442695
      %v1474 = vpow.pop %v1473
      %v1475 = vmul.f32 %v1454, 1.442695
      %v1476 = vpow.pop %v1475
      %v1477 = vmul.f32 %v1455, 1.442695
      %v1478 = vpow.pop %v1477
      %v1479 = vmul.f32 %v1456, 1.442695
      %v1480 = vpow.pop %v1479
      %v1481 = vmul.f32 %v1457, 1.442695
      %v1482 = vpow.pop %v1481
      %v1483 = vmul.f32 %v1458, 1.442695
      %v1484 = vpow.pop %v1483
      %v1485 = vmul.f32 %v1459, 1.442695
      %v1486 = vpow.pop %v1485
      %v1487 = vmul.f32 %v1460, 1.442695
      %v1488 = vpow.pop %v1487
      %v1489 = vmul.f32 %v1461, 1.442695
      %v1490 = vpow.pop %v1489
      %v1491 = vmul.f32 %v1462, 1.442695
      %v1492 = vpow.pop %v1491
      %v1493 = vmul.f32 %v1463, 1.442695
      %v1494 = vpow.pop %v1493
      %v1495 = vmul.f32 %v1464, 1.442695
      %v1496 = vpow.pop %v1495
      %v1497 = vmul.f32 %v1418, 0.0
      %v1498 = vmul.f32 %v1420, 0.0
      %v1499 = vmul.f32 %v1422, 0.0
      %v1500 = vmul.f32 %v1424, 0.0
      %v1501 = vmul.f32 %v1426, 0.0
      %v1502 = vmul.f32 %v1428, 0.0
      %v1503 = vmul.f32 %v1430, 0.0
      %v1504 = vmul.f32 %v1432, 0.0
      %v1505 = vmul.f32 %v1434, 0.0
      %v1506 = vmul.f32 %v1436, 0.0
      %v1507 = vmul.f32 %v1438, 0.0
      %v1508 = vmul.f32 %v1440, 0.0
      %v1509 = vmul.f32 %v1442, 0.0
      %v1510 = vmul.f32 %v1444, 0.0
      %v1511 = vmul.f32 %v1446, 0.0
      %v1512 = vmul.f32 %v1448, 0.0
      %1513 = vadd.xlane.f32.xlu0 %v1466
      %v1514 = vpop.xlane.xlu0 %1513
      %1515 = vadd.xlane.f32.xlu0 %v1468
      %v1516 = vpop.xlane.xlu0 %1515
      %1517 = vadd.xlane.f32.xlu0 %v1470
      %v1518 = vpop.xlane.xlu0 %1517
      %1519 = vadd.xlane.f32.xlu0 %v1472
      %v1520 = vpop.xlane.xlu0 %1519
      %1521 = vadd.xlane.f32.xlu0 %v1474
      %v1522 = vpop.xlane.xlu0 %1521
      %1523 = vadd.xlane.f32.xlu0 %v1476
      %v1524 = vpop.xlane.xlu0 %1523
      %1525 = vadd.xlane.f32.xlu0 %v1478
      %v1526 = vpop.xlane.xlu0 %1525
      %1527 = vadd.xlane.f32.xlu0 %v1480
      %v1528 = vpop.xlane.xlu0 %1527
      %1529 = vadd.xlane.f32.xlu0 %v1482
      %v1530 = vpop.xlane.xlu0 %1529
      %1531 = vadd.xlane.f32.xlu0 %v1484
      %v1532 = vpop.xlane.xlu0 %1531
      %1533 = vadd.xlane.f32.xlu0 %v1486
      %v1534 = vpop.xlane.xlu0 %1533
      %1535 = vadd.xlane.f32.xlu0 %v1488
      %v1536 = vpop.xlane.xlu0 %1535
      %1537 = vadd.xlane.f32.xlu0 %v1490
      %v1538 = vpop.xlane.xlu0 %1537
      %1539 = vadd.xlane.f32.xlu0 %v1492
      %v1540 = vpop.xlane.xlu0 %1539
      %1541 = vadd.xlane.f32.xlu0 %v1494
      %v1542 = vpop.xlane.xlu0 %1541
      %1543 = vadd.xlane.f32.xlu0 %v1496
      %v1544 = vpop.xlane.xlu0 %1543
      %v1545 = vadd.f32 %v1497, %v1514
      %v1546 = vadd.f32 %v1498, %v1516
      %v1547 = vadd.f32 %v1499, %v1518
      %v1548 = vadd.f32 %v1500, %v1520
      %v1549 = vadd.f32 %v1501, %v1522
      %v1550 = vadd.f32 %v1502, %v1524
      %v1551 = vadd.f32 %v1503, %v1526
      %v1552 = vadd.f32 %v1504, %v1528
      %v1553 = vadd.f32 %v1505, %v1530
      %v1554 = vadd.f32 %v1506, %v1532
      %v1555 = vadd.f32 %v1507, %v1534
      %v1556 = vadd.f32 %v1508, %v1536
      %v1557 = vadd.f32 %v1509, %v1538
      %v1558 = vadd.f32 %v1510, %v1540
      %v1559 = vadd.f32 %v1511, %v1542
      %v1560 = vadd.f32 %v1512, %v1544
      %v1561 = vpack.c.bf16 %v1468, %v1466
      %v1562 = vpack.c.bf16 %v1472, %v1470
      %v1563 = vpack.c.bf16 %v1476, %v1474
      %v1564 = vpack.c.bf16 %v1480, %v1478
      %v1565 = vpack.c.bf16 %v1484, %v1482
      %v1566 = vpack.c.bf16 %v1488, %v1486
      %v1567 = vpack.c.bf16 %v1492, %v1490
      %v1568 = vpack.c.bf16 %v1496, %v1494
      %1569 = vmatpush.bf16.msra.mxu0 %v1269
      %1570 = vmatpush.bf16.msra.mxu0 %v1268
      %1571 = vmatpush.bf16.msra.mxu0 %v1267
      %1572 = vmatpush.bf16.msra.mxu0 %v1266
      %1573 = vmatpush.bf16.msra.mxu0 %v1265
      %1574 = vmatpush.bf16.msra.mxu0 %v1264
      %1575 = vmatpush.bf16.msra.mxu0 %v1263
      %1576 = vmatpush.bf16.msra.mxu0 %v1262
      %1577 = vmatmul.bf16.gmra.mxu0 %v1561
      %v1578 = vpop.f32.mrf.mxu0
      %v1579 = vadd.f32 0.0, %v1578
      %v1580 = vpop.f32.mrf.mxu0
      %v1581 = vadd.f32 0.0, %v1580
      %1582 = vmatmul.bf16.gmra.mxu0 %v1562
      %v1583 = vpop.f32.mrf.mxu0
      %v1584 = vadd.f32 0.0, %v1583
      %v1585 = vpop.f32.mrf.mxu0
      %v1586 = vadd.f32 0.0, %v1585
      %1587 = vmatmul.bf16.gmra.mxu0 %v1563
      %v1588 = vpop.f32.mrf.mxu0
      %v1589 = vadd.f32 0.0, %v1588
      %v1590 = vpop.f32.mrf.mxu0
      %v1591 = vadd.f32 0.0, %v1590
      %1592 = vmatmul.bf16.gmra.mxu0 %v1564
      %v1593 = vpop.f32.mrf.mxu0
      %v1594 = vadd.f32 0.0, %v1593
      %v1595 = vpop.f32.mrf.mxu0
      %v1596 = vadd.f32 0.0, %v1595
      %1597 = vmatmul.bf16.gmra.mxu0 %v1565
      %v1598 = vpop.f32.mrf.mxu0
      %v1599 = vadd.f32 0.0, %v1598
      %v1600 = vpop.f32.mrf.mxu0
      %v1601 = vadd.f32 0.0, %v1600
      %1602 = vmatmul.bf16.gmra.mxu0 %v1566
      %v1603 = vpop.f32.mrf.mxu0
      %v1604 = vadd.f32 0.0, %v1603
      %v1605 = vpop.f32.mrf.mxu0
      %v1606 = vadd.f32 0.0, %v1605
      %1607 = vmatmul.bf16.gmra.mxu0 %v1567
      %v1608 = vpop.f32.mrf.mxu0
      %v1609 = vadd.f32 0.0, %v1608
      %v1610 = vpop.f32.mrf.mxu0
      %v1611 = vadd.f32 0.0, %v1610
      %1612 = vmatmul.bf16.gmra.mxu0 %v1568
      %v1613 = vpop.f32.mrf.mxu0
      %v1614 = vadd.f32 0.0, %v1613
      %v1615 = vpop.f32.mrf.mxu0
      %v1616 = vadd.f32 0.0, %v1615
      %1617 = vdwg.mxu0
      %v1618 = vadd.f32 %v1497, %v1579
      %v1619 = vadd.f32 %v1498, %v1581
      %v1620 = vadd.f32 %v1499, %v1584
      %v1621 = vadd.f32 %v1500, %v1586
      %v1622 = vadd.f32 %v1501, %v1589
      %v1623 = vadd.f32 %v1502, %v1591
      %v1624 = vadd.f32 %v1503, %v1594
      %v1625 = vadd.f32 %v1504, %v1596
      %v1626 = vadd.f32 %v1505, %v1599
      %v1627 = vadd.f32 %v1506, %v1601
      %v1628 = vadd.f32 %v1507, %v1604
      %v1629 = vadd.f32 %v1508, %v1606
      %v1630 = vadd.f32 %v1509, %v1609
      %v1631 = vadd.f32 %v1510, %v1611
      %v1632 = vadd.f32 %v1511, %v1614
      %v1633 = vadd.f32 %v1512, %v1616
      %v1634 = vrcp.pop %v1545
      %v1635 = vrcp.pop %v1546
      %v1636 = vrcp.pop %v1547
      %v1637 = vrcp.pop %v1548
      %v1638 = vrcp.pop %v1549
      %v1639 = vrcp.pop %v1550
      %v1640 = vrcp.pop %v1551
      %v1641 = vrcp.pop %v1552
      %v1642 = vrcp.pop %v1553
      %v1643 = vrcp.pop %v1554
      %v1644 = vrcp.pop %v1555
      %v1645 = vrcp.pop %v1556
      %v1646 = vrcp.pop %v1557
      %v1647 = vrcp.pop %v1558
      %v1648 = vrcp.pop %v1559
      %v1649 = vrcp.pop %v1560
      %v1650 = vmul.f32 %v1618, %v1634
      %v1651 = vmul.f32 %v1619, %v1635
      %v1652 = vmul.f32 %v1620, %v1636
      %v1653 = vmul.f32 %v1621, %v1637
      %v1654 = vmul.f32 %v1622, %v1638
      %v1655 = vmul.f32 %v1623, %v1639
      %v1656 = vmul.f32 %v1624, %v1640
      %v1657 = vmul.f32 %v1625, %v1641
      %v1658 = vmul.f32 %v1626, %v1642
      %v1659 = vmul.f32 %v1627, %v1643
      %v1660 = vmul.f32 %v1628, %v1644
      %v1661 = vmul.f32 %v1629, %v1645
      %v1662 = vmul.f32 %v1630, %v1646
      %v1663 = vmul.f32 %v1631, %v1647
      %v1664 = vmul.f32 %v1632, %v1648
      %v1665 = vmul.f32 %v1633, %v1649
      %v1666 = vpack.c.bf16 %v1651, %v1650
      %v1667 = vpack.c.bf16 %v1653, %v1652
      %v1668 = vpack.c.bf16 %v1655, %v1654
      %v1669 = vpack.c.bf16 %v1657, %v1656
      %v1670 = vpack.c.bf16 %v1659, %v1658
      %v1671 = vpack.c.bf16 %v1661, %v1660
      %v1672 = vpack.c.bf16 %v1663, %v1662
      %v1673 = vpack.c.bf16 %v1665, %v1664
      %v1674 = vld [vmem:[%s8] sm:$0xf]
      %v1675 = vld [vmem:[%s8 + $0x4] sm:$0xf]
      %v1676 = vld [vmem:[%s8 + $0x8] sm:$0xf]
      %v1677 = vld [vmem:[%s8 + $0xc] sm:$0xf]
      %v1678 = vld [vmem:[%s8 + $0x10] sm:$0xf]
      %v1679 = vld [vmem:[%s8 + $0x14] sm:$0xf]
      %v1680 = vld [vmem:[%s8 + $0x18] sm:$0xf]
      %v1681 = vld [vmem:[%s8 + $0x1c] sm:$0xf]
      %v1682 = vld [vmem:[%s8 + $0x20] sm:$0xf]
      %v1683 = vld [vmem:[%s8 + $0x24] sm:$0xf]
      %v1684 = vld [vmem:[%s8 + $0x28] sm:$0xf]
      %v1685 = vld [vmem:[%s8 + $0x2c] sm:$0xf]
      %v1686 = vld [vmem:[%s8 + $0x30] sm:$0xf]
      %v1687 = vld [vmem:[%s8 + $0x34] sm:$0xf]
      %v1688 = vld [vmem:[%s8 + $0x38] sm:$0xf]
      %v1689 = vld [vmem:[%s8 + $0x3c] sm:$0xf]
      %v1706 = vunpack.c.l.b16 %v1674
      %v1707 = vunpack.c.l.b16 %v1675
      %v1708 = vunpack.c.l.b16 %v1676
      %v1709 = vunpack.c.l.b16 %v1677
      %v1710 = vunpack.c.l.b16 %v1678
      %v1711 = vunpack.c.l.b16 %v1679
      %v1712 = vunpack.c.l.b16 %v1680
      %v1713 = vunpack.c.l.b16 %v1681
      %v1714 = vunpack.c.l.b16 %v1682
      %v1715 = vunpack.c.l.b16 %v1683
      %v1716 = vunpack.c.l.b16 %v1684
      %v1717 = vunpack.c.l.b16 %v1685
      %v1718 = vunpack.c.l.b16 %v1686
      %v1719 = vunpack.c.l.b16 %v1687
      %v1720 = vunpack.c.l.b16 %v1688
      %v1721 = vunpack.c.l.b16 %v1689
      %v1722 = vpack.c.b16 %v1707, %v1706
      %v1723 = vpack.c.b16 %v1709, %v1708
      %v1724 = vpack.c.b16 %v1711, %v1710
      %v1725 = vpack.c.b16 %v1713, %v1712
      %v1726 = vpack.c.b16 %v1715, %v1714
      %v1727 = vpack.c.b16 %v1717, %v1716
      %v1728 = vpack.c.b16 %v1719, %v1718
      %v1729 = vpack.c.b16 %v1721, %v1720
      %1738 = vmatpush.bf16.msra.mxu0 %v1729
      %1739 = vmatpush.bf16.msra.mxu0 %v1728
      %1740 = vmatpush.bf16.msra.mxu0 %v1727
      %1741 = vmatpush.bf16.msra.mxu0 %v1726
      %1742 = vmatpush.bf16.msra.mxu0 %v1725
      %1743 = vmatpush.bf16.msra.mxu0 %v1724
      %1744 = vmatpush.bf16.msra.mxu0 %v1723
      %1745 = vmatpush.bf16.msra.mxu0 %v1722
      %1746 = vmatmul.bf16.gmra.mxu0 %v1666
      %v1747 = vpop.f32.mrf.mxu0
      %v1748 = vadd.f32 0.0, %v1747
      %v1749 = vpop.f32.mrf.mxu0
      %v1750 = vadd.f32 0.0, %v1749
      %1751 = vmatmul.bf16.gmra.mxu0 %v1667
      %v1752 = vpop.f32.mrf.mxu0
      %v1753 = vadd.f32 0.0, %v1752
      %v1754 = vpop.f32.mrf.mxu0
      %v1755 = vadd.f32 0.0, %v1754
      %1756 = vmatmul.bf16.gmra.mxu0 %v1668
      %v1757 = vpop.f32.mrf.mxu0
      %v1758 = vadd.f32 0.0, %v1757
      %v1759 = vpop.f32.mrf.mxu0
      %v1760 = vadd.f32 0.0, %v1759
      %1761 = vmatmul.bf16.gmra.mxu0 %v1669
      %v1762 = vpop.f32.mrf.mxu0
      %v1763 = vadd.f32 0.0, %v1762
      %v1764 = vpop.f32.mrf.mxu0
      %v1765 = vadd.f32 0.0, %v1764
      %1766 = vmatmul.bf16.gmra.mxu0 %v1670
      %v1767 = vpop.f32.mrf.mxu0
      %v1768 = vadd.f32 0.0, %v1767
      %v1769 = vpop.f32.mrf.mxu0
      %v1770 = vadd.f32 0.0, %v1769
      %1771 = vmatmul.bf16.gmra.mxu0 %v1671
      %v1772 = vpop.f32.mrf.mxu0
      %v1773 = vadd.f32 0.0, %v1772
      %v1774 = vpop.f32.mrf.mxu0
      %v1775 = vadd.f32 0.0, %v1774
      %1776 = vmatmul.bf16.gmra.mxu0 %v1672
      %v1777 = vpop.f32.mrf.mxu0
      %v1778 = vadd.f32 0.0, %v1777
      %v1779 = vpop.f32.mrf.mxu0
      %v1780 = vadd.f32 0.0, %v1779
      %1781 = vmatmul.bf16.gmra.mxu0 %v1673
      %v1782 = vpop.f32.mrf.mxu0
      %v1783 = vadd.f32 0.0, %v1782
      %v1784 = vpop.f32.mrf.mxu0
      %v1785 = vadd.f32 0.0, %v1784
      %1786 = vdwg.mxu0
      %v1787 = vadd.f32 %v860, %v1748
      %v1788 = vadd.f32 %v862, %v1750
      %v1789 = vadd.f32 %v865, %v1753
      %v1790 = vadd.f32 %v867, %v1755
      %v1791 = vadd.f32 %v870, %v1758
      %v1792 = vadd.f32 %v872, %v1760
      %v1793 = vadd.f32 %v875, %v1763
      %v1794 = vadd.f32 %v877, %v1765
      %v1795 = vadd.f32 %v880, %v1768
      %v1796 = vadd.f32 %v882, %v1770
      %v1797 = vadd.f32 %v885, %v1773
      %v1798 = vadd.f32 %v887, %v1775
      %v1799 = vadd.f32 %v890, %v1778
      %v1800 = vadd.f32 %v892, %v1780
      %v1801 = vadd.f32 %v895, %v1783
      %v1802 = vadd.f32 %v897, %v1785
      %v1803 = vld [vmem:[%s13] sm:$0x1]
      %v1804 = vld [vmem:[%s14] sm:$0x1]
      %1805 = vadd.xlane.f32.xlu0 %v1787
      %v1806 = vpop.xlane.xlu0 %1805
      %1807 = vadd.xlane.f32.xlu0 %v1788
      %v1808 = vpop.xlane.xlu0 %1807
      %1809 = vadd.xlane.f32.xlu0 %v1789
      %v1810 = vpop.xlane.xlu0 %1809
      %1811 = vadd.xlane.f32.xlu0 %v1790
      %v1812 = vpop.xlane.xlu0 %1811
      %1813 = vadd.xlane.f32.xlu0 %v1791
      %v1814 = vpop.xlane.xlu0 %1813
      %1815 = vadd.xlane.f32.xlu0 %v1792
      %v1816 = vpop.xlane.xlu0 %1815
      %1817 = vadd.xlane.f32.xlu0 %v1793
      %v1818 = vpop.xlane.xlu0 %1817
      %1819 = vadd.xlane.f32.xlu0 %v1794
      %v1820 = vpop.xlane.xlu0 %1819
      %1821 = vadd.xlane.f32.xlu0 %v1795
      %v1822 = vpop.xlane.xlu0 %1821
      %1823 = vadd.xlane.f32.xlu0 %v1796
      %v1824 = vpop.xlane.xlu0 %1823
      %1825 = vadd.xlane.f32.xlu0 %v1797
      %v1826 = vpop.xlane.xlu0 %1825
      %1827 = vadd.xlane.f32.xlu0 %v1798
      %v1828 = vpop.xlane.xlu0 %1827
      %1829 = vadd.xlane.f32.xlu0 %v1799
      %v1830 = vpop.xlane.xlu0 %1829
      %1831 = vadd.xlane.f32.xlu0 %v1800
      %v1832 = vpop.xlane.xlu0 %1831
      %1833 = vadd.xlane.f32.xlu0 %v1801
      %v1834 = vpop.xlane.xlu0 %1833
      %1835 = vadd.xlane.f32.xlu0 %v1802
      %v1836 = vpop.xlane.xlu0 %1835
      %v1837 = vrcp.pop 128.0
      %v1838 = vmul.f32 128.0, %v1837
      %v1839 = vsub.f32 1.0, %v1838
      %v1840 = vmul.f32 %v1837, %v1839
      %v1841 = vadd.f32 %v1837, %v1840
      %vm1842 = vweird.f32 %v1837
      %v1843 = vsel %vm1842, %v1837, %v1841
      %v1844 = vmul.f32 %v1806, %v1843
      %v1845 = vmul.f32 %v1808, %v1843
      %v1846 = vmul.f32 %v1810, %v1843
      %v1847 = vmul.f32 %v1812, %v1843
      %v1848 = vmul.f32 %v1814, %v1843
      %v1849 = vmul.f32 %v1816, %v1843
      %v1850 = vmul.f32 %v1818, %v1843
      %v1851 = vmul.f32 %v1820, %v1843
      %v1852 = vmul.f32 %v1822, %v1843
      %v1853 = vmul.f32 %v1824, %v1843
      %v1854 = vmul.f32 %v1826, %v1843
      %v1855 = vmul.f32 %v1828, %v1843
      %v1856 = vmul.f32 %v1830, %v1843
      %v1857 = vmul.f32 %v1832, %v1843
      %v1858 = vmul.f32 %v1834, %v1843
      %v1859 = vmul.f32 %v1836, %v1843
      %v1860 = vsub.f32 %v1787, %v1844
      %v1861 = vsub.f32 %v1788, %v1845
      %v1862 = vsub.f32 %v1789, %v1846
      %v1863 = vsub.f32 %v1790, %v1847
      %v1864 = vsub.f32 %v1791, %v1848
      %v1865 = vsub.f32 %v1792, %v1849
      %v1866 = vsub.f32 %v1793, %v1850
      %v1867 = vsub.f32 %v1794, %v1851
      %v1868 = vsub.f32 %v1795, %v1852
      %v1869 = vsub.f32 %v1796, %v1853
      %v1870 = vsub.f32 %v1797, %v1854
      %v1871 = vsub.f32 %v1798, %v1855
      %v1872 = vsub.f32 %v1799, %v1856
      %v1873 = vsub.f32 %v1800, %v1857
      %v1874 = vsub.f32 %v1801, %v1858
      %v1875 = vsub.f32 %v1802, %v1859
      %v1876 = vmul.f32 %v1860, %v1860
      %v1877 = vmul.f32 %v1861, %v1861
      %v1878 = vmul.f32 %v1862, %v1862
      %v1879 = vmul.f32 %v1863, %v1863
      %v1880 = vmul.f32 %v1864, %v1864
      %v1881 = vmul.f32 %v1865, %v1865
      %v1882 = vmul.f32 %v1866, %v1866
      %v1883 = vmul.f32 %v1867, %v1867
      %v1884 = vmul.f32 %v1868, %v1868
      %v1885 = vmul.f32 %v1869, %v1869
      %v1886 = vmul.f32 %v1870, %v1870
      %v1887 = vmul.f32 %v1871, %v1871
      %v1888 = vmul.f32 %v1872, %v1872
      %v1889 = vmul.f32 %v1873, %v1873
      %v1890 = vmul.f32 %v1874, %v1874
      %v1891 = vmul.f32 %v1875, %v1875
      %1892 = vadd.xlane.f32.xlu0 %v1876
      %v1893 = vpop.xlane.xlu0 %1892
      %1894 = vadd.xlane.f32.xlu0 %v1877
      %v1895 = vpop.xlane.xlu0 %1894
      %1896 = vadd.xlane.f32.xlu0 %v1878
      %v1897 = vpop.xlane.xlu0 %1896
      %1898 = vadd.xlane.f32.xlu0 %v1879
      %v1899 = vpop.xlane.xlu0 %1898
      %1900 = vadd.xlane.f32.xlu0 %v1880
      %v1901 = vpop.xlane.xlu0 %1900
      %1902 = vadd.xlane.f32.xlu0 %v1881
      %v1903 = vpop.xlane.xlu0 %1902
      %1904 = vadd.xlane.f32.xlu0 %v1882
      %v1905 = vpop.xlane.xlu0 %1904
      %1906 = vadd.xlane.f32.xlu0 %v1883
      %v1907 = vpop.xlane.xlu0 %1906
      %1908 = vadd.xlane.f32.xlu0 %v1884
      %v1909 = vpop.xlane.xlu0 %1908
      %1910 = vadd.xlane.f32.xlu0 %v1885
      %v1911 = vpop.xlane.xlu0 %1910
      %1912 = vadd.xlane.f32.xlu0 %v1886
      %v1913 = vpop.xlane.xlu0 %1912
      %1914 = vadd.xlane.f32.xlu0 %v1887
      %v1915 = vpop.xlane.xlu0 %1914
      %1916 = vadd.xlane.f32.xlu0 %v1888
      %v1917 = vpop.xlane.xlu0 %1916
      %1918 = vadd.xlane.f32.xlu0 %v1889
      %v1919 = vpop.xlane.xlu0 %1918
      %1920 = vadd.xlane.f32.xlu0 %v1890
      %v1921 = vpop.xlane.xlu0 %1920
      %1922 = vadd.xlane.f32.xlu0 %v1891
      %v1923 = vpop.xlane.xlu0 %1922
      %v1924 = vmul.f32 %v1893, %v1843
      %v1925 = vmul.f32 %v1895, %v1843
      %v1926 = vmul.f32 %v1897, %v1843
      %v1927 = vmul.f32 %v1899, %v1843
      %v1928 = vmul.f32 %v1901, %v1843
      %v1929 = vmul.f32 %v1903, %v1843
      %v1930 = vmul.f32 %v1905, %v1843
      %v1931 = vmul.f32 %v1907, %v1843
      %v1932 = vmul.f32 %v1909, %v1843
      %v1933 = vmul.f32 %v1911, %v1843
      %v1934 = vmul.f32 %v1913, %v1843
      %v1935 = vmul.f32 %v1915, %v1843
      %v1936 = vmul.f32 %v1917, %v1843
      %v1937 = vmul.f32 %v1919, %v1843
      %v1938 = vmul.f32 %v1921, %v1843
      %v1939 = vmul.f32 %v1923, %v1843
      %v1940 = vadd.f32 %v1924, 1e-05
      %v1941 = vadd.f32 %v1925, 1e-05
      %v1942 = vadd.f32 %v1926, 1e-05
      %v1943 = vadd.f32 %v1927, 1e-05
      %v1944 = vadd.f32 %v1928, 1e-05
      %v1945 = vadd.f32 %v1929, 1e-05
      %v1946 = vadd.f32 %v1930, 1e-05
      %v1947 = vadd.f32 %v1931, 1e-05
      %v1948 = vadd.f32 %v1932, 1e-05
      %v1949 = vadd.f32 %v1933, 1e-05
      %v1950 = vadd.f32 %v1934, 1e-05
      %v1951 = vadd.f32 %v1935, 1e-05
      %v1952 = vadd.f32 %v1936, 1e-05
      %v1953 = vadd.f32 %v1937, 1e-05
      %v1954 = vadd.f32 %v1938, 1e-05
      %v1955 = vadd.f32 %v1939, 1e-05
      %v1956 = vrsqrt.pop %v1940
      %v1957 = vmul.f32 %v1956, %v1940
      %v1958 = vmul.f32 %v1957, %v1956
      %v1959 = vmul.f32 0.5, %v1958
      %v1960 = vsub.f32 1.5, %v1959
      %v1961 = vmul.f32 %v1956, %v1960
      %vm1962 = vweird.f32 %v1940
      %vm1963 = vweird.f32 %v1956
      %vm1964 = vmor %vm1962, %vm1963
      %v1965 = vsel %vm1964, %v1956, %v1961
      %v1966 = vrsqrt.pop %v1941
      %v1967 = vmul.f32 %v1966, %v1941
      %v1968 = vmul.f32 %v1967, %v1966
      %v1969 = vmul.f32 0.5, %v1968
      %v1970 = vsub.f32 1.5, %v1969
      %v1971 = vmul.f32 %v1966, %v1970
      %vm1972 = vweird.f32 %v1941
      %vm1973 = vweird.f32 %v1966
      %vm1974 = vmor %vm1972, %vm1973
      %v1975 = vsel %vm1974, %v1966, %v1971
      %v1976 = vrsqrt.pop %v1942
      %v1977 = vmul.f32 %v1976, %v1942
      %v1978 = vmul.f32 %v1977, %v1976
      %v1979 = vmul.f32 0.5, %v1978
      %v1980 = vsub.f32 1.5, %v1979
      %v1981 = vmul.f32 %v1976, %v1980
      %vm1982 = vweird.f32 %v1942
      %vm1983 = vweird.f32 %v1976
      %vm1984 = vmor %vm1982, %vm1983
      %v1985 = vsel %vm1984, %v1976, %v1981
      %v1986 = vrsqrt.pop %v1943
      %v1987 = vmul.f32 %v1986, %v1943
      %v1988 = vmul.f32 %v1987, %v1986
      %v1989 = vmul.f32 0.5, %v1988
      %v1990 = vsub.f32 1.5, %v1989
      %v1991 = vmul.f32 %v1986, %v1990
      %vm1992 = vweird.f32 %v1943
      %vm1993 = vweird.f32 %v1986
      %vm1994 = vmor %vm1992, %vm1993
      %v1995 = vsel %vm1994, %v1986, %v1991
      %v1996 = vrsqrt.pop %v1944
      %v1997 = vmul.f32 %v1996, %v1944
      %v1998 = vmul.f32 %v1997, %v1996
      %v1999 = vmul.f32 0.5, %v1998
      %v2000 = vsub.f32 1.5, %v1999
      %v2001 = vmul.f32 %v1996, %v2000
      %vm2002 = vweird.f32 %v1944
      %vm2003 = vweird.f32 %v1996
      %vm2004 = vmor %vm2002, %vm2003
      %v2005 = vsel %vm2004, %v1996, %v2001
      %v2006 = vrsqrt.pop %v1945
      %v2007 = vmul.f32 %v2006, %v1945
      %v2008 = vmul.f32 %v2007, %v2006
      %v2009 = vmul.f32 0.5, %v2008
      %v2010 = vsub.f32 1.5, %v2009
      %v2011 = vmul.f32 %v2006, %v2010
      %vm2012 = vweird.f32 %v1945
      %vm2013 = vweird.f32 %v2006
      %vm2014 = vmor %vm2012, %vm2013
      %v2015 = vsel %vm2014, %v2006, %v2011
      %v2016 = vrsqrt.pop %v1946
      %v2017 = vmul.f32 %v2016, %v1946
      %v2018 = vmul.f32 %v2017, %v2016
      %v2019 = vmul.f32 0.5, %v2018
      %v2020 = vsub.f32 1.5, %v2019
      %v2021 = vmul.f32 %v2016, %v2020
      %vm2022 = vweird.f32 %v1946
      %vm2023 = vweird.f32 %v2016
      %vm2024 = vmor %vm2022, %vm2023
      %v2025 = vsel %vm2024, %v2016, %v2021
      %v2026 = vrsqrt.pop %v1947
      %v2027 = vmul.f32 %v2026, %v1947
      %v2028 = vmul.f32 %v2027, %v2026
      %v2029 = vmul.f32 0.5, %v2028
      %v2030 = vsub.f32 1.5, %v2029
      %v2031 = vmul.f32 %v2026, %v2030
      %vm2032 = vweird.f32 %v1947
      %vm2033 = vweird.f32 %v2026
      %vm2034 = vmor %vm2032, %vm2033
      %v2035 = vsel %vm2034, %v2026, %v2031
      %v2036 = vrsqrt.pop %v1948
      %v2037 = vmul.f32 %v2036, %v1948
      %v2038 = vmul.f32 %v2037, %v2036
      %v2039 = vmul.f32 0.5, %v2038
      %v2040 = vsub.f32 1.5, %v2039
      %v2041 = vmul.f32 %v2036, %v2040
      %vm2042 = vweird.f32 %v1948
      %vm2043 = vweird.f32 %v2036
      %vm2044 = vmor %vm2042, %vm2043
      %v2045 = vsel %vm2044, %v2036, %v2041
      %v2046 = vrsqrt.pop %v1949
      %v2047 = vmul.f32 %v2046, %v1949
      %v2048 = vmul.f32 %v2047, %v2046
      %v2049 = vmul.f32 0.5, %v2048
      %v2050 = vsub.f32 1.5, %v2049
      %v2051 = vmul.f32 %v2046, %v2050
      %vm2052 = vweird.f32 %v1949
      %vm2053 = vweird.f32 %v2046
      %vm2054 = vmor %vm2052, %vm2053
      %v2055 = vsel %vm2054, %v2046, %v2051
      %v2056 = vrsqrt.pop %v1950
      %v2057 = vmul.f32 %v2056, %v1950
      %v2058 = vmul.f32 %v2057, %v2056
      %v2059 = vmul.f32 0.5, %v2058
      %v2060 = vsub.f32 1.5, %v2059
      %v2061 = vmul.f32 %v2056, %v2060
      %vm2062 = vweird.f32 %v1950
      %vm2063 = vweird.f32 %v2056
      %vm2064 = vmor %vm2062, %vm2063
      %v2065 = vsel %vm2064, %v2056, %v2061
      %v2066 = vrsqrt.pop %v1951
      %v2067 = vmul.f32 %v2066, %v1951
      %v2068 = vmul.f32 %v2067, %v2066
      %v2069 = vmul.f32 0.5, %v2068
      %v2070 = vsub.f32 1.5, %v2069
      %v2071 = vmul.f32 %v2066, %v2070
      %vm2072 = vweird.f32 %v1951
      %vm2073 = vweird.f32 %v2066
      %vm2074 = vmor %vm2072, %vm2073
      %v2075 = vsel %vm2074, %v2066, %v2071
      %v2076 = vrsqrt.pop %v1952
      %v2077 = vmul.f32 %v2076, %v1952
      %v2078 = vmul.f32 %v2077, %v2076
      %v2079 = vmul.f32 0.5, %v2078
      %v2080 = vsub.f32 1.5, %v2079
      %v2081 = vmul.f32 %v2076, %v2080
      %vm2082 = vweird.f32 %v1952
      %vm2083 = vweird.f32 %v2076
      %vm2084 = vmor %vm2082, %vm2083
      %v2085 = vsel %vm2084, %v2076, %v2081
      %v2086 = vrsqrt.pop %v1953
      %v2087 = vmul.f32 %v2086, %v1953
      %v2088 = vmul.f32 %v2087, %v2086
      %v2089 = vmul.f32 0.5, %v2088
      %v2090 = vsub.f32 1.5, %v2089
      %v2091 = vmul.f32 %v2086, %v2090
      %vm2092 = vweird.f32 %v1953
      %vm2093 = vweird.f32 %v2086
      %vm2094 = vmor %vm2092, %vm2093
      %v2095 = vsel %vm2094, %v2086, %v2091
      %v2096 = vrsqrt.pop %v1954
      %v2097 = vmul.f32 %v2096, %v1954
      %v2098 = vmul.f32 %v2097, %v2096
      %v2099 = vmul.f32 0.5, %v2098
      %v2100 = vsub.f32 1.5, %v2099
      %v2101 = vmul.f32 %v2096, %v2100
      %vm2102 = vweird.f32 %v1954
      %vm2103 = vweird.f32 %v2096
      %vm2104 = vmor %vm2102, %vm2103
      %v2105 = vsel %vm2104, %v2096, %v2101
      %v2106 = vrsqrt.pop %v1955
      %v2107 = vmul.f32 %v2106, %v1955
      %v2108 = vmul.f32 %v2107, %v2106
      %v2109 = vmul.f32 0.5, %v2108
      %v2110 = vsub.f32 1.5, %v2109
      %v2111 = vmul.f32 %v2106, %v2110
      %vm2112 = vweird.f32 %v1955
      %vm2113 = vweird.f32 %v2106
      %vm2114 = vmor %vm2112, %vm2113
      %v2115 = vsel %vm2114, %v2106, %v2111
      %v2116 = vmul.f32 %v1860, %v1965
      %v2117 = vmul.f32 %v1861, %v1975
      %v2118 = vmul.f32 %v1862, %v1985
      %v2119 = vmul.f32 %v1863, %v1995
      %v2120 = vmul.f32 %v1864, %v2005
      %v2121 = vmul.f32 %v1865, %v2015
      %v2122 = vmul.f32 %v1866, %v2025
      %v2123 = vmul.f32 %v1867, %v2035
      %v2124 = vmul.f32 %v1868, %v2045
      %v2125 = vmul.f32 %v1869, %v2055
      %v2126 = vmul.f32 %v1870, %v2065
      %v2127 = vmul.f32 %v1871, %v2075
      %v2128 = vmul.f32 %v1872, %v2085
      %v2129 = vmul.f32 %v1873, %v2095
      %v2130 = vmul.f32 %v1874, %v2105
      %v2131 = vmul.f32 %v1875, %v2115
      %v2133 = vperm.slane %v1803, 0
      %v2135 = vmul.f32 %v2116, %v2133
      %v2136 = vmul.f32 %v2117, %v2133
      %v2137 = vmul.f32 %v2118, %v2133
      %v2138 = vmul.f32 %v2119, %v2133
      %v2139 = vmul.f32 %v2120, %v2133
      %v2140 = vmul.f32 %v2121, %v2133
      %v2141 = vmul.f32 %v2122, %v2133
      %v2142 = vmul.f32 %v2123, %v2133
      %v2143 = vmul.f32 %v2124, %v2133
      %v2144 = vmul.f32 %v2125, %v2133
      %v2145 = vmul.f32 %v2126, %v2133
      %v2146 = vmul.f32 %v2127, %v2133
      %v2147 = vmul.f32 %v2128, %v2133
      %v2148 = vmul.f32 %v2129, %v2133
      %v2149 = vmul.f32 %v2130, %v2133
      %v2150 = vmul.f32 %v2131, %v2133
      %v2152 = vperm.slane %v1804, 0
      %v2154 = vadd.f32 %v2135, %v2152
      %v2155 = vadd.f32 %v2136, %v2152
      %v2156 = vadd.f32 %v2137, %v2152
      %v2157 = vadd.f32 %v2138, %v2152
      %v2158 = vadd.f32 %v2139, %v2152
      %v2159 = vadd.f32 %v2140, %v2152
      %v2160 = vadd.f32 %v2141, %v2152
      %v2161 = vadd.f32 %v2142, %v2152
      %v2162 = vadd.f32 %v2143, %v2152
      %v2163 = vadd.f32 %v2144, %v2152
      %v2164 = vadd.f32 %v2145, %v2152
      %v2165 = vadd.f32 %v2146, %v2152
      %v2166 = vadd.f32 %v2147, %v2152
      %v2167 = vadd.f32 %v2148, %v2152
      %v2168 = vadd.f32 %v2149, %v2152
      %v2169 = vadd.f32 %v2150, %v2152
      %v2170 = vpack.c.bf16 %v2155, %v2154
      %v2171 = vpack.c.bf16 %v2157, %v2156
      %v2172 = vpack.c.bf16 %v2159, %v2158
      %v2173 = vpack.c.bf16 %v2161, %v2160
      %v2174 = vpack.c.bf16 %v2163, %v2162
      %v2175 = vpack.c.bf16 %v2165, %v2164
      %v2176 = vpack.c.bf16 %v2167, %v2166
      %v2177 = vpack.c.bf16 %v2169, %v2168
      %v2178 = vld [vmem:[%s9] sm:$0xff]
      %v2179 = vld [vmem:[%s9 + $0x8] sm:$0xff]
      %v2180 = vld [vmem:[%s9 + $0x10] sm:$0xff]
      %v2181 = vld [vmem:[%s9 + $0x18] sm:$0xff]
      %v2182 = vld [vmem:[%s9 + $0x20] sm:$0xff]
      %v2183 = vld [vmem:[%s9 + $0x28] sm:$0xff]
      %v2184 = vld [vmem:[%s9 + $0x30] sm:$0xff]
      %v2185 = vld [vmem:[%s9 + $0x38] sm:$0xff]
      %v2186 = vld [vmem:[%s9 + $0x40] sm:$0xff]
      %v2187 = vld [vmem:[%s9 + $0x48] sm:$0xff]
      %v2188 = vld [vmem:[%s9 + $0x50] sm:$0xff]
      %v2189 = vld [vmem:[%s9 + $0x58] sm:$0xff]
      %v2190 = vld [vmem:[%s9 + $0x60] sm:$0xff]
      %v2191 = vld [vmem:[%s9 + $0x68] sm:$0xff]
      %v2192 = vld [vmem:[%s9 + $0x70] sm:$0xff]
      %v2193 = vld [vmem:[%s9 + $0x78] sm:$0xff]
      %v2194 = vld [vmem:[%s10] sm:$0x3]
      %v2196 = vperm.slane %v2194, 0
      %v2197 = vperm.slane %v2194, 1
      %v2216 = vunpack.c.l.b16 %v2178
      %v2217 = vunpack.c.h.b16 %v2178
      %v2218 = vunpack.c.l.b16 %v2179
      %v2219 = vunpack.c.h.b16 %v2179
      %v2220 = vunpack.c.l.b16 %v2180
      %v2221 = vunpack.c.h.b16 %v2180
      %v2222 = vunpack.c.l.b16 %v2181
      %v2223 = vunpack.c.h.b16 %v2181
      %v2224 = vunpack.c.l.b16 %v2182
      %v2225 = vunpack.c.h.b16 %v2182
      %v2226 = vunpack.c.l.b16 %v2183
      %v2227 = vunpack.c.h.b16 %v2183
      %v2228 = vunpack.c.l.b16 %v2184
      %v2229 = vunpack.c.h.b16 %v2184
      %v2230 = vunpack.c.l.b16 %v2185
      %v2231 = vunpack.c.h.b16 %v2185
      %v2232 = vunpack.c.l.b16 %v2186
      %v2233 = vunpack.c.h.b16 %v2186
      %v2234 = vunpack.c.l.b16 %v2187
      %v2235 = vunpack.c.h.b16 %v2187
      %v2236 = vunpack.c.l.b16 %v2188
      %v2237 = vunpack.c.h.b16 %v2188
      %v2238 = vunpack.c.l.b16 %v2189
      %v2239 = vunpack.c.h.b16 %v2189
      %v2240 = vunpack.c.l.b16 %v2190
      %v2241 = vunpack.c.h.b16 %v2190
      %v2242 = vunpack.c.l.b16 %v2191
      %v2243 = vunpack.c.h.b16 %v2191
      %v2244 = vunpack.c.l.b16 %v2192
      %v2245 = vunpack.c.h.b16 %v2192
      %v2246 = vunpack.c.l.b16 %v2193
      %v2247 = vunpack.c.h.b16 %v2193
      %v2248 = vpack.c.b16 %v2218, %v2216
      %v2249 = vpack.c.b16 %v2219, %v2217
      %v2250 = vpack.c.b16 %v2222, %v2220
      %v2251 = vpack.c.b16 %v2223, %v2221
      %v2252 = vpack.c.b16 %v2226, %v2224
      %v2253 = vpack.c.b16 %v2227, %v2225
      %v2254 = vpack.c.b16 %v2230, %v2228
      %v2255 = vpack.c.b16 %v2231, %v2229
      %v2256 = vpack.c.b16 %v2234, %v2232
      %v2257 = vpack.c.b16 %v2235, %v2233
      %v2258 = vpack.c.b16 %v2238, %v2236
      %v2259 = vpack.c.b16 %v2239, %v2237
      %v2260 = vpack.c.b16 %v2242, %v2240
      %v2261 = vpack.c.b16 %v2243, %v2241
      %v2262 = vpack.c.b16 %v2246, %v2244
      %v2263 = vpack.c.b16 %v2247, %v2245
      %2280 = vmatpush.bf16.msra.mxu0 %v2262
      %2281 = vmatpush.bf16.msra.mxu0 %v2260
      %2282 = vmatpush.bf16.msra.mxu0 %v2258
      %2283 = vmatpush.bf16.msra.mxu0 %v2256
      %2284 = vmatpush.bf16.msra.mxu0 %v2254
      %2285 = vmatpush.bf16.msra.mxu0 %v2252
      %2286 = vmatpush.bf16.msra.mxu0 %v2250
      %2287 = vmatpush.bf16.msra.mxu0 %v2248
      %2288 = vmatmul.bf16.gmra.mxu0 %v2170
      %v2289 = vpop.f32.mrf.mxu0
      %v2290 = vadd.f32 %v2196, %v2289
      %v2291 = vpop.f32.mrf.mxu0
      %v2292 = vadd.f32 %v2196, %v2291
      %2293 = vmatmul.bf16.gmra.mxu0 %v2171
      %v2294 = vpop.f32.mrf.mxu0
      %v2295 = vadd.f32 %v2196, %v2294
      %v2296 = vpop.f32.mrf.mxu0
      %v2297 = vadd.f32 %v2196, %v2296
      %2298 = vmatmul.bf16.gmra.mxu0 %v2172
      %v2299 = vpop.f32.mrf.mxu0
      %v2300 = vadd.f32 %v2196, %v2299
      %v2301 = vpop.f32.mrf.mxu0
      %v2302 = vadd.f32 %v2196, %v2301
      %2303 = vmatmul.bf16.gmra.mxu0 %v2173
      %v2304 = vpop.f32.mrf.mxu0
      %v2305 = vadd.f32 %v2196, %v2304
      %v2306 = vpop.f32.mrf.mxu0
      %v2307 = vadd.f32 %v2196, %v2306
      %2308 = vmatmul.bf16.gmra.mxu0 %v2174
      %v2309 = vpop.f32.mrf.mxu0
      %v2310 = vadd.f32 %v2196, %v2309
      %v2311 = vpop.f32.mrf.mxu0
      %v2312 = vadd.f32 %v2196, %v2311
      %2313 = vmatmul.bf16.gmra.mxu0 %v2175
      %v2314 = vpop.f32.mrf.mxu0
      %v2315 = vadd.f32 %v2196, %v2314
      %v2316 = vpop.f32.mrf.mxu0
      %v2317 = vadd.f32 %v2196, %v2316
      %2318 = vmatmul.bf16.gmra.mxu0 %v2176
      %v2319 = vpop.f32.mrf.mxu0
      %v2320 = vadd.f32 %v2196, %v2319
      %v2321 = vpop.f32.mrf.mxu0
      %v2322 = vadd.f32 %v2196, %v2321
      %2323 = vmatmul.bf16.gmra.mxu0 %v2177
      %v2324 = vpop.f32.mrf.mxu0
      %v2325 = vadd.f32 %v2196, %v2324
      %v2326 = vpop.f32.mrf.mxu0
      %v2327 = vadd.f32 %v2196, %v2326
      %2328 = vdwg.mxu0
      %2329 = vmatpush.bf16.msra.mxu0 %v2263
      %2330 = vmatpush.bf16.msra.mxu0 %v2261
      %2331 = vmatpush.bf16.msra.mxu0 %v2259
      %2332 = vmatpush.bf16.msra.mxu0 %v2257
      %2333 = vmatpush.bf16.msra.mxu0 %v2255
      %2334 = vmatpush.bf16.msra.mxu0 %v2253
      %2335 = vmatpush.bf16.msra.mxu0 %v2251
      %2336 = vmatpush.bf16.msra.mxu0 %v2249
      %2337 = vmatmul.bf16.gmra.mxu0 %v2170
      %v2338 = vpop.f32.mrf.mxu0
      %v2339 = vadd.f32 %v2197, %v2338
      %v2340 = vpop.f32.mrf.mxu0
      %v2341 = vadd.f32 %v2197, %v2340
      %2342 = vmatmul.bf16.gmra.mxu0 %v2171
      %v2343 = vpop.f32.mrf.mxu0
      %v2344 = vadd.f32 %v2197, %v2343
      %v2345 = vpop.f32.mrf.mxu0
      %v2346 = vadd.f32 %v2197, %v2345
      %2347 = vmatmul.bf16.gmra.mxu0 %v2172
      %v2348 = vpop.f32.mrf.mxu0
      %v2349 = vadd.f32 %v2197, %v2348
      %v2350 = vpop.f32.mrf.mxu0
      %v2351 = vadd.f32 %v2197, %v2350
      %2352 = vmatmul.bf16.gmra.mxu0 %v2173
      %v2353 = vpop.f32.mrf.mxu0
      %v2354 = vadd.f32 %v2197, %v2353
      %v2355 = vpop.f32.mrf.mxu0
      %v2356 = vadd.f32 %v2197, %v2355
      %2357 = vmatmul.bf16.gmra.mxu0 %v2174
      %v2358 = vpop.f32.mrf.mxu0
      %v2359 = vadd.f32 %v2197, %v2358
      %v2360 = vpop.f32.mrf.mxu0
      %v2361 = vadd.f32 %v2197, %v2360
      %2362 = vmatmul.bf16.gmra.mxu0 %v2175
      %v2363 = vpop.f32.mrf.mxu0
      %v2364 = vadd.f32 %v2197, %v2363
      %v2365 = vpop.f32.mrf.mxu0
      %v2366 = vadd.f32 %v2197, %v2365
      %2367 = vmatmul.bf16.gmra.mxu0 %v2176
      %v2368 = vpop.f32.mrf.mxu0
      %v2369 = vadd.f32 %v2197, %v2368
      %v2370 = vpop.f32.mrf.mxu0
      %v2371 = vadd.f32 %v2197, %v2370
      %2372 = vmatmul.bf16.gmra.mxu0 %v2177
      %v2373 = vpop.f32.mrf.mxu0
      %v2374 = vadd.f32 %v2197, %v2373
      %v2375 = vpop.f32.mrf.mxu0
      %v2376 = vadd.f32 %v2197, %v2375
      %2377 = vdwg.mxu0
      %v2378 = vmax.f32 %v2290, 0.0
      %v2379 = vmax.f32 %v2339, 0.0
      %v2380 = vmax.f32 %v2292, 0.0
      %v2381 = vmax.f32 %v2341, 0.0
      %v2382 = vmax.f32 %v2295, 0.0
      %v2383 = vmax.f32 %v2344, 0.0
      %v2384 = vmax.f32 %v2297, 0.0
      %v2385 = vmax.f32 %v2346, 0.0
      %v2386 = vmax.f32 %v2300, 0.0
      %v2387 = vmax.f32 %v2349, 0.0
      %v2388 = vmax.f32 %v2302, 0.0
      %v2389 = vmax.f32 %v2351, 0.0
      %v2390 = vmax.f32 %v2305, 0.0
      %v2391 = vmax.f32 %v2354, 0.0
      %v2392 = vmax.f32 %v2307, 0.0
      %v2393 = vmax.f32 %v2356, 0.0
      %v2394 = vmax.f32 %v2310, 0.0
      %v2395 = vmax.f32 %v2359, 0.0
      %v2396 = vmax.f32 %v2312, 0.0
      %v2397 = vmax.f32 %v2361, 0.0
      %v2398 = vmax.f32 %v2315, 0.0
      %v2399 = vmax.f32 %v2364, 0.0
      %v2400 = vmax.f32 %v2317, 0.0
      %v2401 = vmax.f32 %v2366, 0.0
      %v2402 = vmax.f32 %v2320, 0.0
      %v2403 = vmax.f32 %v2369, 0.0
      %v2404 = vmax.f32 %v2322, 0.0
      %v2405 = vmax.f32 %v2371, 0.0
      %v2406 = vmax.f32 %v2325, 0.0
      %v2407 = vmax.f32 %v2374, 0.0
      %v2408 = vmax.f32 %v2327, 0.0
      %v2409 = vmax.f32 %v2376, 0.0
      %v2410 = vpack.c.bf16 %v2380, %v2378
      %v2411 = vpack.c.bf16 %v2381, %v2379
      %v2412 = vpack.c.bf16 %v2384, %v2382
      %v2413 = vpack.c.bf16 %v2385, %v2383
      %v2414 = vpack.c.bf16 %v2388, %v2386
      %v2415 = vpack.c.bf16 %v2389, %v2387
      %v2416 = vpack.c.bf16 %v2392, %v2390
      %v2417 = vpack.c.bf16 %v2393, %v2391
      %v2418 = vpack.c.bf16 %v2396, %v2394
      %v2419 = vpack.c.bf16 %v2397, %v2395
      %v2420 = vpack.c.bf16 %v2400, %v2398
      %v2421 = vpack.c.bf16 %v2401, %v2399
      %v2422 = vpack.c.bf16 %v2404, %v2402
      %v2423 = vpack.c.bf16 %v2405, %v2403
      %v2424 = vpack.c.bf16 %v2408, %v2406
      %v2425 = vpack.c.bf16 %v2409, %v2407
      %v2426 = vld [vmem:[%s11] sm:$0xf]
      %v2427 = vld [vmem:[%s11 + $0x4] sm:$0xf]
      %v2428 = vld [vmem:[%s11 + $0x8] sm:$0xf]
      %v2429 = vld [vmem:[%s11 + $0xc] sm:$0xf]
      %v2430 = vld [vmem:[%s11 + $0x10] sm:$0xf]
      %v2431 = vld [vmem:[%s11 + $0x14] sm:$0xf]
      %v2432 = vld [vmem:[%s11 + $0x18] sm:$0xf]
      %v2433 = vld [vmem:[%s11 + $0x1c] sm:$0xf]
      %v2434 = vld [vmem:[%s11 + $0x20] sm:$0xf]
      %v2435 = vld [vmem:[%s11 + $0x24] sm:$0xf]
      %v2436 = vld [vmem:[%s11 + $0x28] sm:$0xf]
      %v2437 = vld [vmem:[%s11 + $0x2c] sm:$0xf]
      %v2438 = vld [vmem:[%s11 + $0x30] sm:$0xf]
      %v2439 = vld [vmem:[%s11 + $0x34] sm:$0xf]
      %v2440 = vld [vmem:[%s11 + $0x38] sm:$0xf]
      %v2441 = vld [vmem:[%s11 + $0x3c] sm:$0xf]
      %v2442 = vld [vmem:[%s11 + $0x40] sm:$0xf]
      %v2443 = vld [vmem:[%s11 + $0x44] sm:$0xf]
      %v2444 = vld [vmem:[%s11 + $0x48] sm:$0xf]
      %v2445 = vld [vmem:[%s11 + $0x4c] sm:$0xf]
      %v2446 = vld [vmem:[%s11 + $0x50] sm:$0xf]
      %v2447 = vld [vmem:[%s11 + $0x54] sm:$0xf]
      %v2448 = vld [vmem:[%s11 + $0x58] sm:$0xf]
      %v2449 = vld [vmem:[%s11 + $0x5c] sm:$0xf]
      %v2450 = vld [vmem:[%s11 + $0x60] sm:$0xf]
      %v2451 = vld [vmem:[%s11 + $0x64] sm:$0xf]
      %v2452 = vld [vmem:[%s11 + $0x68] sm:$0xf]
      %v2453 = vld [vmem:[%s11 + $0x6c] sm:$0xf]
      %v2454 = vld [vmem:[%s11 + $0x70] sm:$0xf]
      %v2455 = vld [vmem:[%s11 + $0x74] sm:$0xf]
      %v2456 = vld [vmem:[%s11 + $0x78] sm:$0xf]
      %v2457 = vld [vmem:[%s11 + $0x7c] sm:$0xf]
      %v2458 = vld [vmem:[%s12] sm:$0x1]
      %v2460 = vperm.slane %v2458, 0
      %v2494 = vunpack.c.l.b16 %v2426
      %v2495 = vunpack.c.l.b16 %v2427
      %v2496 = vunpack.c.l.b16 %v2428
      %v2497 = vunpack.c.l.b16 %v2429
      %v2498 = vunpack.c.l.b16 %v2430
      %v2499 = vunpack.c.l.b16 %v2431
      %v2500 = vunpack.c.l.b16 %v2432
      %v2501 = vunpack.c.l.b16 %v2433
      %v2502 = vunpack.c.l.b16 %v2434
      %v2503 = vunpack.c.l.b16 %v2435
      %v2504 = vunpack.c.l.b16 %v2436
      %v2505 = vunpack.c.l.b16 %v2437
      %v2506 = vunpack.c.l.b16 %v2438
      %v2507 = vunpack.c.l.b16 %v2439
      %v2508 = vunpack.c.l.b16 %v2440
      %v2509 = vunpack.c.l.b16 %v2441
      %v2510 = vunpack.c.l.b16 %v2442
      %v2511 = vunpack.c.l.b16 %v2443
      %v2512 = vunpack.c.l.b16 %v2444
      %v2513 = vunpack.c.l.b16 %v2445
      %v2514 = vunpack.c.l.b16 %v2446
      %v2515 = vunpack.c.l.b16 %v2447
      %v2516 = vunpack.c.l.b16 %v2448
      %v2517 = vunpack.c.l.b16 %v2449
      %v2518 = vunpack.c.l.b16 %v2450
      %v2519 = vunpack.c.l.b16 %v2451
      %v2520 = vunpack.c.l.b16 %v2452
      %v2521 = vunpack.c.l.b16 %v2453
      %v2522 = vunpack.c.l.b16 %v2454
      %v2523 = vunpack.c.l.b16 %v2455
      %v2524 = vunpack.c.l.b16 %v2456
      %v2525 = vunpack.c.l.b16 %v2457
      %v2526 = vpack.c.b16 %v2495, %v2494
      %v2527 = vpack.c.b16 %v2497, %v2496
      %v2528 = vpack.c.b16 %v2499, %v2498
      %v2529 = vpack.c.b16 %v2501, %v2500
      %v2530 = vpack.c.b16 %v2503, %v2502
      %v2531 = vpack.c.b16 %v2505, %v2504
      %v2532 = vpack.c.b16 %v2507, %v2506
      %v2533 = vpack.c.b16 %v2509, %v2508
      %v2534 = vpack.c.b16 %v2511, %v2510
      %v2535 = vpack.c.b16 %v2513, %v2512
      %v2536 = vpack.c.b16 %v2515, %v2514
      %v2537 = vpack.c.b16 %v2517, %v2516
      %v2538 = vpack.c.b16 %v2519, %v2518
      %v2539 = vpack.c.b16 %v2521, %v2520
      %v2540 = vpack.c.b16 %v2523, %v2522
      %v2541 = vpack.c.b16 %v2525, %v2524
      %2558 = vmatpush.bf16.msra.mxu0 %v2533
      %2559 = vmatpush.bf16.msra.mxu0 %v2532
      %2560 = vmatpush.bf16.msra.mxu0 %v2531
      %2561 = vmatpush.bf16.msra.mxu0 %v2530
      %2562 = vmatpush.bf16.msra.mxu0 %v2529
      %2563 = vmatpush.bf16.msra.mxu0 %v2528
      %2564 = vmatpush.bf16.msra.mxu0 %v2527
      %2565 = vmatpush.bf16.msra.mxu0 %v2526
      %2566 = vmatmul.bf16.gmra.mxu0 %v2410
      %v2567 = vpop.f32.mrf.mxu0
      %v2568 = vadd.f32 %v2460, %v2567
      %v2569 = vpop.f32.mrf.mxu0
      %v2570 = vadd.f32 %v2460, %v2569
      %2571 = vmatmul.bf16.gmra.mxu0 %v2412
      %v2572 = vpop.f32.mrf.mxu0
      %v2573 = vadd.f32 %v2460, %v2572
      %v2574 = vpop.f32.mrf.mxu0
      %v2575 = vadd.f32 %v2460, %v2574
      %2576 = vmatmul.bf16.gmra.mxu0 %v2414
      %v2577 = vpop.f32.mrf.mxu0
      %v2578 = vadd.f32 %v2460, %v2577
      %v2579 = vpop.f32.mrf.mxu0
      %v2580 = vadd.f32 %v2460, %v2579
      %2581 = vmatmul.bf16.gmra.mxu0 %v2416
      %v2582 = vpop.f32.mrf.mxu0
      %v2583 = vadd.f32 %v2460, %v2582
      %v2584 = vpop.f32.mrf.mxu0
      %v2585 = vadd.f32 %v2460, %v2584
      %2586 = vmatmul.bf16.gmra.mxu0 %v2418
      %v2587 = vpop.f32.mrf.mxu0
      %v2588 = vadd.f32 %v2460, %v2587
      %v2589 = vpop.f32.mrf.mxu0
      %v2590 = vadd.f32 %v2460, %v2589
      %2591 = vmatmul.bf16.gmra.mxu0 %v2420
      %v2592 = vpop.f32.mrf.mxu0
      %v2593 = vadd.f32 %v2460, %v2592
      %v2594 = vpop.f32.mrf.mxu0
      %v2595 = vadd.f32 %v2460, %v2594
      %2596 = vmatmul.bf16.gmra.mxu0 %v2422
      %v2597 = vpop.f32.mrf.mxu0
      %v2598 = vadd.f32 %v2460, %v2597
      %v2599 = vpop.f32.mrf.mxu0
      %v2600 = vadd.f32 %v2460, %v2599
      %2601 = vmatmul.bf16.gmra.mxu0 %v2424
      %v2602 = vpop.f32.mrf.mxu0
      %v2603 = vadd.f32 %v2460, %v2602
      %v2604 = vpop.f32.mrf.mxu0
      %v2605 = vadd.f32 %v2460, %v2604
      %2606 = vdwg.mxu0
      %2607 = vmatpush.bf16.msra.mxu0 %v2541
      %2608 = vmatpush.bf16.msra.mxu0 %v2540
      %2609 = vmatpush.bf16.msra.mxu0 %v2539
      %2610 = vmatpush.bf16.msra.mxu0 %v2538
      %2611 = vmatpush.bf16.msra.mxu0 %v2537
      %2612 = vmatpush.bf16.msra.mxu0 %v2536
      %2613 = vmatpush.bf16.msra.mxu0 %v2535
      %2614 = vmatpush.bf16.msra.mxu0 %v2534
      %2615 = vmatmul.bf16.gmra.mxu0 %v2411
      %v2616 = vpop.f32.mrf.mxu0
      %v2617 = vadd.f32 %v2568, %v2616
      %v2618 = vpop.f32.mrf.mxu0
      %v2619 = vadd.f32 %v2570, %v2618
      %2620 = vmatmul.bf16.gmra.mxu0 %v2413
      %v2621 = vpop.f32.mrf.mxu0
      %v2622 = vadd.f32 %v2573, %v2621
      %v2623 = vpop.f32.mrf.mxu0
      %v2624 = vadd.f32 %v2575, %v2623
      %2625 = vmatmul.bf16.gmra.mxu0 %v2415
      %v2626 = vpop.f32.mrf.mxu0
      %v2627 = vadd.f32 %v2578, %v2626
      %v2628 = vpop.f32.mrf.mxu0
      %v2629 = vadd.f32 %v2580, %v2628
      %2630 = vmatmul.bf16.gmra.mxu0 %v2417
      %v2631 = vpop.f32.mrf.mxu0
      %v2632 = vadd.f32 %v2583, %v2631
      %v2633 = vpop.f32.mrf.mxu0
      %v2634 = vadd.f32 %v2585, %v2633
      %2635 = vmatmul.bf16.gmra.mxu0 %v2419
      %v2636 = vpop.f32.mrf.mxu0
      %v2637 = vadd.f32 %v2588, %v2636
      %v2638 = vpop.f32.mrf.mxu0
      %v2639 = vadd.f32 %v2590, %v2638
      %2640 = vmatmul.bf16.gmra.mxu0 %v2421
      %v2641 = vpop.f32.mrf.mxu0
      %v2642 = vadd.f32 %v2593, %v2641
      %v2643 = vpop.f32.mrf.mxu0
      %v2644 = vadd.f32 %v2595, %v2643
      %2645 = vmatmul.bf16.gmra.mxu0 %v2423
      %v2646 = vpop.f32.mrf.mxu0
      %v2647 = vadd.f32 %v2598, %v2646
      %v2648 = vpop.f32.mrf.mxu0
      %v2649 = vadd.f32 %v2600, %v2648
      %2650 = vmatmul.bf16.gmra.mxu0 %v2425
      %v2651 = vpop.f32.mrf.mxu0
      %v2652 = vadd.f32 %v2603, %v2651
      %v2653 = vpop.f32.mrf.mxu0
      %v2654 = vadd.f32 %v2605, %v2653
      %2655 = vdwg.mxu0
      %v2656 = vadd.f32 %v2154, %v2617
      %v2657 = vadd.f32 %v2155, %v2619
      %v2658 = vadd.f32 %v2156, %v2622
      %v2659 = vadd.f32 %v2157, %v2624
      %v2660 = vadd.f32 %v2158, %v2627
      %v2661 = vadd.f32 %v2159, %v2629
      %v2662 = vadd.f32 %v2160, %v2632
      %v2663 = vadd.f32 %v2161, %v2634
      %v2664 = vadd.f32 %v2162, %v2637
      %v2665 = vadd.f32 %v2163, %v2639
      %v2666 = vadd.f32 %v2164, %v2642
      %v2667 = vadd.f32 %v2165, %v2644
      %v2668 = vadd.f32 %v2166, %v2647
      %v2669 = vadd.f32 %v2167, %v2649
      %v2670 = vadd.f32 %v2168, %v2652
      %v2671 = vadd.f32 %v2169, %v2654
      %v2672 = vld [vmem:[%s15] sm:$0x1]
      %v2673 = vld [vmem:[%s16] sm:$0x1]
      %2674 = vadd.xlane.f32.xlu0 %v2656
      %v2675 = vpop.xlane.xlu0 %2674
      %2676 = vadd.xlane.f32.xlu0 %v2657
      %v2677 = vpop.xlane.xlu0 %2676
      %2678 = vadd.xlane.f32.xlu0 %v2658
      %v2679 = vpop.xlane.xlu0 %2678
      %2680 = vadd.xlane.f32.xlu0 %v2659
      %v2681 = vpop.xlane.xlu0 %2680
      %2682 = vadd.xlane.f32.xlu0 %v2660
      %v2683 = vpop.xlane.xlu0 %2682
      %2684 = vadd.xlane.f32.xlu0 %v2661
      %v2685 = vpop.xlane.xlu0 %2684
      %2686 = vadd.xlane.f32.xlu0 %v2662
      %v2687 = vpop.xlane.xlu0 %2686
      %2688 = vadd.xlane.f32.xlu0 %v2663
      %v2689 = vpop.xlane.xlu0 %2688
      %2690 = vadd.xlane.f32.xlu0 %v2664
      %v2691 = vpop.xlane.xlu0 %2690
      %2692 = vadd.xlane.f32.xlu0 %v2665
      %v2693 = vpop.xlane.xlu0 %2692
      %2694 = vadd.xlane.f32.xlu0 %v2666
      %v2695 = vpop.xlane.xlu0 %2694
      %2696 = vadd.xlane.f32.xlu0 %v2667
      %v2697 = vpop.xlane.xlu0 %2696
      %2698 = vadd.xlane.f32.xlu0 %v2668
      %v2699 = vpop.xlane.xlu0 %2698
      %2700 = vadd.xlane.f32.xlu0 %v2669
      %v2701 = vpop.xlane.xlu0 %2700
      %2702 = vadd.xlane.f32.xlu0 %v2670
      %v2703 = vpop.xlane.xlu0 %2702
      %2704 = vadd.xlane.f32.xlu0 %v2671
      %v2705 = vpop.xlane.xlu0 %2704
      %v2706 = vmul.f32 %v2675, %v1843
      %v2707 = vmul.f32 %v2677, %v1843
      %v2708 = vmul.f32 %v2679, %v1843
      %v2709 = vmul.f32 %v2681, %v1843
      %v2710 = vmul.f32 %v2683, %v1843
      %v2711 = vmul.f32 %v2685, %v1843
      %v2712 = vmul.f32 %v2687, %v1843
      %v2713 = vmul.f32 %v2689, %v1843
      %v2714 = vmul.f32 %v2691, %v1843
      %v2715 = vmul.f32 %v2693, %v1843
      %v2716 = vmul.f32 %v2695, %v1843
      %v2717 = vmul.f32 %v2697, %v1843
      %v2718 = vmul.f32 %v2699, %v1843
      %v2719 = vmul.f32 %v2701, %v1843
      %v2720 = vmul.f32 %v2703, %v1843
      %v2721 = vmul.f32 %v2705, %v1843
      %v2722 = vsub.f32 %v2656, %v2706
      %v2723 = vsub.f32 %v2657, %v2707
      %v2724 = vsub.f32 %v2658, %v2708
      %v2725 = vsub.f32 %v2659, %v2709
      %v2726 = vsub.f32 %v2660, %v2710
      %v2727 = vsub.f32 %v2661, %v2711
      %v2728 = vsub.f32 %v2662, %v2712
      %v2729 = vsub.f32 %v2663, %v2713
      %v2730 = vsub.f32 %v2664, %v2714
      %v2731 = vsub.f32 %v2665, %v2715
      %v2732 = vsub.f32 %v2666, %v2716
      %v2733 = vsub.f32 %v2667, %v2717
      %v2734 = vsub.f32 %v2668, %v2718
      %v2735 = vsub.f32 %v2669, %v2719
      %v2736 = vsub.f32 %v2670, %v2720
      %v2737 = vsub.f32 %v2671, %v2721
      %v2738 = vmul.f32 %v2722, %v2722
      %v2739 = vmul.f32 %v2723, %v2723
      %v2740 = vmul.f32 %v2724, %v2724
      %v2741 = vmul.f32 %v2725, %v2725
      %v2742 = vmul.f32 %v2726, %v2726
      %v2743 = vmul.f32 %v2727, %v2727
      %v2744 = vmul.f32 %v2728, %v2728
      %v2745 = vmul.f32 %v2729, %v2729
      %v2746 = vmul.f32 %v2730, %v2730
      %v2747 = vmul.f32 %v2731, %v2731
      %v2748 = vmul.f32 %v2732, %v2732
      %v2749 = vmul.f32 %v2733, %v2733
      %v2750 = vmul.f32 %v2734, %v2734
      %v2751 = vmul.f32 %v2735, %v2735
      %v2752 = vmul.f32 %v2736, %v2736
      %v2753 = vmul.f32 %v2737, %v2737
      %2754 = vadd.xlane.f32.xlu0 %v2738
      %v2755 = vpop.xlane.xlu0 %2754
      %2756 = vadd.xlane.f32.xlu0 %v2739
      %v2757 = vpop.xlane.xlu0 %2756
      %2758 = vadd.xlane.f32.xlu0 %v2740
      %v2759 = vpop.xlane.xlu0 %2758
      %2760 = vadd.xlane.f32.xlu0 %v2741
      %v2761 = vpop.xlane.xlu0 %2760
      %2762 = vadd.xlane.f32.xlu0 %v2742
      %v2763 = vpop.xlane.xlu0 %2762
      %2764 = vadd.xlane.f32.xlu0 %v2743
      %v2765 = vpop.xlane.xlu0 %2764
      %2766 = vadd.xlane.f32.xlu0 %v2744
      %v2767 = vpop.xlane.xlu0 %2766
      %2768 = vadd.xlane.f32.xlu0 %v2745
      %v2769 = vpop.xlane.xlu0 %2768
      %2770 = vadd.xlane.f32.xlu0 %v2746
      %v2771 = vpop.xlane.xlu0 %2770
      %2772 = vadd.xlane.f32.xlu0 %v2747
      %v2773 = vpop.xlane.xlu0 %2772
      %2774 = vadd.xlane.f32.xlu0 %v2748
      %v2775 = vpop.xlane.xlu0 %2774
      %2776 = vadd.xlane.f32.xlu0 %v2749
      %v2777 = vpop.xlane.xlu0 %2776
      %2778 = vadd.xlane.f32.xlu0 %v2750
      %v2779 = vpop.xlane.xlu0 %2778
      %2780 = vadd.xlane.f32.xlu0 %v2751
      %v2781 = vpop.xlane.xlu0 %2780
      %2782 = vadd.xlane.f32.xlu0 %v2752
      %v2783 = vpop.xlane.xlu0 %2782
      %2784 = vadd.xlane.f32.xlu0 %v2753
      %v2785 = vpop.xlane.xlu0 %2784
      %v2786 = vmul.f32 %v2755, %v1843
      %v2787 = vmul.f32 %v2757, %v1843
      %v2788 = vmul.f32 %v2759, %v1843
      %v2789 = vmul.f32 %v2761, %v1843
      %v2790 = vmul.f32 %v2763, %v1843
      %v2791 = vmul.f32 %v2765, %v1843
      %v2792 = vmul.f32 %v2767, %v1843
      %v2793 = vmul.f32 %v2769, %v1843
      %v2794 = vmul.f32 %v2771, %v1843
      %v2795 = vmul.f32 %v2773, %v1843
      %v2796 = vmul.f32 %v2775, %v1843
      %v2797 = vmul.f32 %v2777, %v1843
      %v2798 = vmul.f32 %v2779, %v1843
      %v2799 = vmul.f32 %v2781, %v1843
      %v2800 = vmul.f32 %v2783, %v1843
      %v2801 = vmul.f32 %v2785, %v1843
      %v2802 = vadd.f32 %v2786, 1e-05
      %v2803 = vadd.f32 %v2787, 1e-05
      %v2804 = vadd.f32 %v2788, 1e-05
      %v2805 = vadd.f32 %v2789, 1e-05
      %v2806 = vadd.f32 %v2790, 1e-05
      %v2807 = vadd.f32 %v2791, 1e-05
      %v2808 = vadd.f32 %v2792, 1e-05
      %v2809 = vadd.f32 %v2793, 1e-05
      %v2810 = vadd.f32 %v2794, 1e-05
      %v2811 = vadd.f32 %v2795, 1e-05
      %v2812 = vadd.f32 %v2796, 1e-05
      %v2813 = vadd.f32 %v2797, 1e-05
      %v2814 = vadd.f32 %v2798, 1e-05
      %v2815 = vadd.f32 %v2799, 1e-05
      %v2816 = vadd.f32 %v2800, 1e-05
      %v2817 = vadd.f32 %v2801, 1e-05
      %v2818 = vrsqrt.pop %v2802
      %v2819 = vmul.f32 %v2818, %v2802
      %v2820 = vmul.f32 %v2819, %v2818
      %v2821 = vmul.f32 0.5, %v2820
      %v2822 = vsub.f32 1.5, %v2821
      %v2823 = vmul.f32 %v2818, %v2822
      %vm2824 = vweird.f32 %v2802
      %vm2825 = vweird.f32 %v2818
      %vm2826 = vmor %vm2824, %vm2825
      %v2827 = vsel %vm2826, %v2818, %v2823
      %v2828 = vrsqrt.pop %v2803
      %v2829 = vmul.f32 %v2828, %v2803
      %v2830 = vmul.f32 %v2829, %v2828
      %v2831 = vmul.f32 0.5, %v2830
      %v2832 = vsub.f32 1.5, %v2831
      %v2833 = vmul.f32 %v2828, %v2832
      %vm2834 = vweird.f32 %v2803
      %vm2835 = vweird.f32 %v2828
      %vm2836 = vmor %vm2834, %vm2835
      %v2837 = vsel %vm2836, %v2828, %v2833
      %v2838 = vrsqrt.pop %v2804
      %v2839 = vmul.f32 %v2838, %v2804
      %v2840 = vmul.f32 %v2839, %v2838
      %v2841 = vmul.f32 0.5, %v2840
      %v2842 = vsub.f32 1.5, %v2841
      %v2843 = vmul.f32 %v2838, %v2842
      %vm2844 = vweird.f32 %v2804
      %vm2845 = vweird.f32 %v2838
      %vm2846 = vmor %vm2844, %vm2845
      %v2847 = vsel %vm2846, %v2838, %v2843
      %v2848 = vrsqrt.pop %v2805
      %v2849 = vmul.f32 %v2848, %v2805
      %v2850 = vmul.f32 %v2849, %v2848
      %v2851 = vmul.f32 0.5, %v2850
      %v2852 = vsub.f32 1.5, %v2851
      %v2853 = vmul.f32 %v2848, %v2852
      %vm2854 = vweird.f32 %v2805
      %vm2855 = vweird.f32 %v2848
      %vm2856 = vmor %vm2854, %vm2855
      %v2857 = vsel %vm2856, %v2848, %v2853
      %v2858 = vrsqrt.pop %v2806
      %v2859 = vmul.f32 %v2858, %v2806
      %v2860 = vmul.f32 %v2859, %v2858
      %v2861 = vmul.f32 0.5, %v2860
      %v2862 = vsub.f32 1.5, %v2861
      %v2863 = vmul.f32 %v2858, %v2862
      %vm2864 = vweird.f32 %v2806
      %vm2865 = vweird.f32 %v2858
      %vm2866 = vmor %vm2864, %vm2865
      %v2867 = vsel %vm2866, %v2858, %v2863
      %v2868 = vrsqrt.pop %v2807
      %v2869 = vmul.f32 %v2868, %v2807
      %v2870 = vmul.f32 %v2869, %v2868
      %v2871 = vmul.f32 0.5, %v2870
      %v2872 = vsub.f32 1.5, %v2871
      %v2873 = vmul.f32 %v2868, %v2872
      %vm2874 = vweird.f32 %v2807
      %vm2875 = vweird.f32 %v2868
      %vm2876 = vmor %vm2874, %vm2875
      %v2877 = vsel %vm2876, %v2868, %v2873
      %v2878 = vrsqrt.pop %v2808
      %v2879 = vmul.f32 %v2878, %v2808
      %v2880 = vmul.f32 %v2879, %v2878
      %v2881 = vmul.f32 0.5, %v2880
      %v2882 = vsub.f32 1.5, %v2881
      %v2883 = vmul.f32 %v2878, %v2882
      %vm2884 = vweird.f32 %v2808
      %vm2885 = vweird.f32 %v2878
      %vm2886 = vmor %vm2884, %vm2885
      %v2887 = vsel %vm2886, %v2878, %v2883
      %v2888 = vrsqrt.pop %v2809
      %v2889 = vmul.f32 %v2888, %v2809
      %v2890 = vmul.f32 %v2889, %v2888
      %v2891 = vmul.f32 0.5, %v2890
      %v2892 = vsub.f32 1.5, %v2891
      %v2893 = vmul.f32 %v2888, %v2892
      %vm2894 = vweird.f32 %v2809
      %vm2895 = vweird.f32 %v2888
      %vm2896 = vmor %vm2894, %vm2895
      %v2897 = vsel %vm2896, %v2888, %v2893
      %v2898 = vrsqrt.pop %v2810
      %v2899 = vmul.f32 %v2898, %v2810
      %v2900 = vmul.f32 %v2899, %v2898
      %v2901 = vmul.f32 0.5, %v2900
      %v2902 = vsub.f32 1.5, %v2901
      %v2903 = vmul.f32 %v2898, %v2902
      %vm2904 = vweird.f32 %v2810
      %vm2905 = vweird.f32 %v2898
      %vm2906 = vmor %vm2904, %vm2905
      %v2907 = vsel %vm2906, %v2898, %v2903
      %v2908 = vrsqrt.pop %v2811
      %v2909 = vmul.f32 %v2908, %v2811
      %v2910 = vmul.f32 %v2909, %v2908
      %v2911 = vmul.f32 0.5, %v2910
      %v2912 = vsub.f32 1.5, %v2911
      %v2913 = vmul.f32 %v2908, %v2912
      %vm2914 = vweird.f32 %v2811
      %vm2915 = vweird.f32 %v2908
      %vm2916 = vmor %vm2914, %vm2915
      %v2917 = vsel %vm2916, %v2908, %v2913
      %v2918 = vrsqrt.pop %v2812
      %v2919 = vmul.f32 %v2918, %v2812
      %v2920 = vmul.f32 %v2919, %v2918
      %v2921 = vmul.f32 0.5, %v2920
      %v2922 = vsub.f32 1.5, %v2921
      %v2923 = vmul.f32 %v2918, %v2922
      %vm2924 = vweird.f32 %v2812
      %vm2925 = vweird.f32 %v2918
      %vm2926 = vmor %vm2924, %vm2925
      %v2927 = vsel %vm2926, %v2918, %v2923
      %v2928 = vrsqrt.pop %v2813
      %v2929 = vmul.f32 %v2928, %v2813
      %v2930 = vmul.f32 %v2929, %v2928
      %v2931 = vmul.f32 0.5, %v2930
      %v2932 = vsub.f32 1.5, %v2931
      %v2933 = vmul.f32 %v2928, %v2932
      %vm2934 = vweird.f32 %v2813
      %vm2935 = vweird.f32 %v2928
      %vm2936 = vmor %vm2934, %vm2935
      %v2937 = vsel %vm2936, %v2928, %v2933
      %v2938 = vrsqrt.pop %v2814
      %v2939 = vmul.f32 %v2938, %v2814
      %v2940 = vmul.f32 %v2939, %v2938
      %v2941 = vmul.f32 0.5, %v2940
      %v2942 = vsub.f32 1.5, %v2941
      %v2943 = vmul.f32 %v2938, %v2942
      %vm2944 = vweird.f32 %v2814
      %vm2945 = vweird.f32 %v2938
      %vm2946 = vmor %vm2944, %vm2945
      %v2947 = vsel %vm2946, %v2938, %v2943
      %v2948 = vrsqrt.pop %v2815
      %v2949 = vmul.f32 %v2948, %v2815
      %v2950 = vmul.f32 %v2949, %v2948
      %v2951 = vmul.f32 0.5, %v2950
      %v2952 = vsub.f32 1.5, %v2951
      %v2953 = vmul.f32 %v2948, %v2952
      %vm2954 = vweird.f32 %v2815
      %vm2955 = vweird.f32 %v2948
      %vm2956 = vmor %vm2954, %vm2955
      %v2957 = vsel %vm2956, %v2948, %v2953
      %v2958 = vrsqrt.pop %v2816
      %v2959 = vmul.f32 %v2958, %v2816
      %v2960 = vmul.f32 %v2959, %v2958
      %v2961 = vmul.f32 0.5, %v2960
      %v2962 = vsub.f32 1.5, %v2961
      %v2963 = vmul.f32 %v2958, %v2962
      %vm2964 = vweird.f32 %v2816
      %vm2965 = vweird.f32 %v2958
      %vm2966 = vmor %vm2964, %vm2965
      %v2967 = vsel %vm2966, %v2958, %v2963
      %v2968 = vrsqrt.pop %v2817
      %v2969 = vmul.f32 %v2968, %v2817
      %v2970 = vmul.f32 %v2969, %v2968
      %v2971 = vmul.f32 0.5, %v2970
      %v2972 = vsub.f32 1.5, %v2971
      %v2973 = vmul.f32 %v2968, %v2972
      %vm2974 = vweird.f32 %v2817
      %vm2975 = vweird.f32 %v2968
      %vm2976 = vmor %vm2974, %vm2975
      %v2977 = vsel %vm2976, %v2968, %v2973
      %v2978 = vmul.f32 %v2722, %v2827
      %v2979 = vmul.f32 %v2723, %v2837
      %v2980 = vmul.f32 %v2724, %v2847
      %v2981 = vmul.f32 %v2725, %v2857
      %v2982 = vmul.f32 %v2726, %v2867
      %v2983 = vmul.f32 %v2727, %v2877
      %v2984 = vmul.f32 %v2728, %v2887
      %v2985 = vmul.f32 %v2729, %v2897
      %v2986 = vmul.f32 %v2730, %v2907
      %v2987 = vmul.f32 %v2731, %v2917
      %v2988 = vmul.f32 %v2732, %v2927
      %v2989 = vmul.f32 %v2733, %v2937
      %v2990 = vmul.f32 %v2734, %v2947
      %v2991 = vmul.f32 %v2735, %v2957
      %v2992 = vmul.f32 %v2736, %v2967
      %v2993 = vmul.f32 %v2737, %v2977
      %v2995 = vperm.slane %v2672, 0
      %v2997 = vmul.f32 %v2978, %v2995
      %v2998 = vmul.f32 %v2979, %v2995
      %v2999 = vmul.f32 %v2980, %v2995
      %v3000 = vmul.f32 %v2981, %v2995
      %v3001 = vmul.f32 %v2982, %v2995
      %v3002 = vmul.f32 %v2983, %v2995
      %v3003 = vmul.f32 %v2984, %v2995
      %v3004 = vmul.f32 %v2985, %v2995
      %v3005 = vmul.f32 %v2986, %v2995
      %v3006 = vmul.f32 %v2987, %v2995
      %v3007 = vmul.f32 %v2988, %v2995
      %v3008 = vmul.f32 %v2989, %v2995
      %v3009 = vmul.f32 %v2990, %v2995
      %v3010 = vmul.f32 %v2991, %v2995
      %v3011 = vmul.f32 %v2992, %v2995
      %v3012 = vmul.f32 %v2993, %v2995
      %v3014 = vperm.slane %v2673, 0
      %v3016 = vadd.f32 %v2997, %v3014
      %v3017 = vadd.f32 %v2998, %v3014
      %v3018 = vadd.f32 %v2999, %v3014
      %v3019 = vadd.f32 %v3000, %v3014
      %v3020 = vadd.f32 %v3001, %v3014
      %v3021 = vadd.f32 %v3002, %v3014
      %v3022 = vadd.f32 %v3003, %v3014
      %v3023 = vadd.f32 %v3004, %v3014
      %v3024 = vadd.f32 %v3005, %v3014
      %v3025 = vadd.f32 %v3006, %v3014
      %v3026 = vadd.f32 %v3007, %v3014
      %v3027 = vadd.f32 %v3008, %v3014
      %v3028 = vadd.f32 %v3009, %v3014
      %v3029 = vadd.f32 %v3010, %v3014
      %v3030 = vadd.f32 %v3011, %v3014
      %v3031 = vadd.f32 %v3012, %v3014
      %v3032 = vpack.c.bf16 %v3016, %v3016
      %v3033 = vpack.c.bf16 %v3017, %v3017
      %v3034 = vpack.c.bf16 %v3018, %v3018
      %v3035 = vpack.c.bf16 %v3019, %v3019
      %v3036 = vpack.c.bf16 %v3020, %v3020
      %v3037 = vpack.c.bf16 %v3021, %v3021
      %v3038 = vpack.c.bf16 %v3022, %v3022
      %v3039 = vpack.c.bf16 %v3023, %v3023
      %v3040 = vpack.c.bf16 %v3024, %v3024
      %v3041 = vpack.c.bf16 %v3025, %v3025
      %v3042 = vpack.c.bf16 %v3026, %v3026
      %v3043 = vpack.c.bf16 %v3027, %v3027
      %v3044 = vpack.c.bf16 %v3028, %v3028
      %v3045 = vpack.c.bf16 %v3029, %v3029
      %v3046 = vpack.c.bf16 %v3030, %v3030
      %v3047 = vpack.c.bf16 %v3031, %v3031
      %3048 = vst [vmem:[%s740] sm:$0xf] %v3032
      %3049 = vst [vmem:[%s740 + $0x4] sm:$0xf] %v3033
      %3050 = vst [vmem:[%s740 + $0x8] sm:$0xf] %v3034
      %3051 = vst [vmem:[%s740 + $0xc] sm:$0xf] %v3035
      %3052 = vst [vmem:[%s740 + $0x10] sm:$0xf] %v3036
      %3053 = vst [vmem:[%s740 + $0x14] sm:$0xf] %v3037
      %3054 = vst [vmem:[%s740 + $0x18] sm:$0xf] %v3038
      %3055 = vst [vmem:[%s740 + $0x1c] sm:$0xf] %v3039
      %3056 = vst [vmem:[%s740 + $0x20] sm:$0xf] %v3040
      %3057 = vst [vmem:[%s740 + $0x24] sm:$0xf] %v3041
      %3058 = vst [vmem:[%s740 + $0x28] sm:$0xf] %v3042
      %3059 = vst [vmem:[%s740 + $0x2c] sm:$0xf] %v3043
      %3060 = vst [vmem:[%s740 + $0x30] sm:$0xf] %v3044
      %3061 = vst [vmem:[%s740 + $0x34] sm:$0xf] %v3045
      %3062 = vst [vmem:[%s740 + $0x38] sm:$0xf] %v3046
      %3063 = vst [vmem:[%s740 + $0x3c] sm:$0xf] %v3047
      %v3064 = vlaneseq
      %v3065 = vshrl.u32 %v3064, 7
      %v3066 = vadd.s32 %v3065, 8
      %v3067 = vadd.s32 %v3065, 16
      %v3068 = vadd.s32 %v3065, 24
      %v3069 = vadd.s32 %v3065, 32
      %v3070 = vadd.s32 %v3065, 40
      %v3071 = vadd.s32 %v3065, 48
      %v3072 = vadd.s32 %v3065, 56
      %v3073 = vadd.s32 %v3065, 64
      %v3074 = vadd.s32 %v3065, 72
      %v3075 = vadd.s32 %v3065, 80
      %v3076 = vadd.s32 %v3065, 88
      %v3077 = vadd.s32 %v3065, 96
      %v3078 = vadd.s32 %v3065, 104
      %v3079 = vadd.s32 %v3065, 112
      %v3080 = vadd.s32 %v3065, 120
      %v3081 = vld [vmem:[%s17] sm:$0xf]
      %v3082 = vld [vmem:[%s17 + $0x4] sm:$0xf]
      %v3083 = vld [vmem:[%s17 + $0x8] sm:$0xf]
      %v3084 = vld [vmem:[%s17 + $0xc] sm:$0xf]
      %v3085 = vld [vmem:[%s17 + $0x10] sm:$0xf]
      %v3086 = vld [vmem:[%s17 + $0x14] sm:$0xf]
      %v3087 = vld [vmem:[%s17 + $0x18] sm:$0xf]
      %v3088 = vld [vmem:[%s17 + $0x1c] sm:$0xf]
      %v3089 = vld [vmem:[%s17 + $0x20] sm:$0xf]
      %v3090 = vld [vmem:[%s17 + $0x24] sm:$0xf]
      %v3091 = vld [vmem:[%s17 + $0x28] sm:$0xf]
      %v3092 = vld [vmem:[%s17 + $0x2c] sm:$0xf]
      %v3093 = vld [vmem:[%s17 + $0x30] sm:$0xf]
      %v3094 = vld [vmem:[%s17 + $0x34] sm:$0xf]
      %v3095 = vld [vmem:[%s17 + $0x38] sm:$0xf]
      %v3096 = vld [vmem:[%s17 + $0x3c] sm:$0xf]
      %v3113 = vunpack.c.l.b16 %v3032
      %v3114 = vunpack.c.l.b16 %v3033
      %v3115 = vunpack.c.l.b16 %v3034
      %v3116 = vunpack.c.l.b16 %v3035
      %v3117 = vunpack.c.l.b16 %v3036
      %v3118 = vunpack.c.l.b16 %v3037
      %v3119 = vunpack.c.l.b16 %v3038
      %v3120 = vunpack.c.l.b16 %v3039
      %v3121 = vunpack.c.l.b16 %v3040
      %v3122 = vunpack.c.l.b16 %v3041
      %v3123 = vunpack.c.l.b16 %v3042
      %v3124 = vunpack.c.l.b16 %v3043
      %v3125 = vunpack.c.l.b16 %v3044
      %v3126 = vunpack.c.l.b16 %v3045
      %v3127 = vunpack.c.l.b16 %v3046
      %v3128 = vunpack.c.l.b16 %v3047
      %v3129 = vpack.c.b16 %v3114, %v3113
      %v3130 = vpack.c.b16 %v3116, %v3115
      %v3131 = vpack.c.b16 %v3118, %v3117
      %v3132 = vpack.c.b16 %v3120, %v3119
      %v3133 = vpack.c.b16 %v3122, %v3121
      %v3134 = vpack.c.b16 %v3124, %v3123
      %v3135 = vpack.c.b16 %v3126, %v3125
      %v3136 = vpack.c.b16 %v3128, %v3127
      %v3161 = vunpack.c.l.b16 %v3081
      %v3162 = vunpack.c.l.b16 %v3082
      %v3163 = vunpack.c.l.b16 %v3083
      %v3164 = vunpack.c.l.b16 %v3084
      %v3165 = vunpack.c.l.b16 %v3085
      %v3166 = vunpack.c.l.b16 %v3086
      %v3167 = vunpack.c.l.b16 %v3087
      %v3168 = vunpack.c.l.b16 %v3088
      %v3169 = vunpack.c.l.b16 %v3089
      %v3170 = vunpack.c.l.b16 %v3090
      %v3171 = vunpack.c.l.b16 %v3091
      %v3172 = vunpack.c.l.b16 %v3092
      %v3173 = vunpack.c.l.b16 %v3093
      %v3174 = vunpack.c.l.b16 %v3094
      %v3175 = vunpack.c.l.b16 %v3095
      %v3176 = vunpack.c.l.b16 %v3096
      %v3177 = vpack.c.b16 %v3162, %v3161
      %v3178 = vpack.c.b16 %v3164, %v3163
      %v3179 = vpack.c.b16 %v3166, %v3165
      %v3180 = vpack.c.b16 %v3168, %v3167
      %v3181 = vpack.c.b16 %v3170, %v3169
      %v3182 = vpack.c.b16 %v3172, %v3171
      %v3183 = vpack.c.b16 %v3174, %v3173
      %v3184 = vpack.c.b16 %v3176, %v3175
      %3193 = vmatpush.bf16.msra.mxu0 %v3184
      %3194 = vmatpush.bf16.msra.mxu0 %v3183
      %3195 = vmatpush.bf16.msra.mxu0 %v3182
      %3196 = vmatpush.bf16.msra.mxu0 %v3181
      %3197 = vmatpush.bf16.msra.mxu0 %v3180
      %3198 = vmatpush.bf16.msra.mxu0 %v3179
      %3199 = vmatpush.bf16.msra.mxu0 %v3178
      %3200 = vmatpush.bf16.msra.mxu0 %v3177
      %3201 = vmatmul.bf16.gmra.mxu0 %v3129
      %v3202 = vpop.f32.mrf.mxu0
      %v3203 = vadd.f32 0.0, %v3202
      %v3204 = vpop.f32.mrf.mxu0
      %v3205 = vadd.f32 0.0, %v3204
      %3206 = vmatmul.bf16.gmra.mxu0 %v3130
      %v3207 = vpop.f32.mrf.mxu0
      %v3208 = vadd.f32 0.0, %v3207
      %v3209 = vpop.f32.mrf.mxu0
      %v3210 = vadd.f32 0.0, %v3209
      %3211 = vmatmul.bf16.gmra.mxu0 %v3131
      %v3212 = vpop.f32.mrf.mxu0
      %v3213 = vadd.f32 0.0, %v3212
      %v3214 = vpop.f32.mrf.mxu0
      %v3215 = vadd.f32 0.0, %v3214
      %3216 = vmatmul.bf16.gmra.mxu0 %v3132
      %v3217 = vpop.f32.mrf.mxu0
      %v3218 = vadd.f32 0.0, %v3217
      %v3219 = vpop.f32.mrf.mxu0
      %v3220 = vadd.f32 0.0, %v3219
      %3221 = vmatmul.bf16.gmra.mxu0 %v3133
      %v3222 = vpop.f32.mrf.mxu0
      %v3223 = vadd.f32 0.0, %v3222
      %v3224 = vpop.f32.mrf.mxu0
      %v3225 = vadd.f32 0.0, %v3224
      %3226 = vmatmul.bf16.gmra.mxu0 %v3134
      %v3227 = vpop.f32.mrf.mxu0
      %v3228 = vadd.f32 0.0, %v3227
      %v3229 = vpop.f32.mrf.mxu0
      %v3230 = vadd.f32 0.0, %v3229
      %3231 = vmatmul.bf16.gmra.mxu0 %v3135
      %v3232 = vpop.f32.mrf.mxu0
      %v3233 = vadd.f32 0.0, %v3232
      %v3234 = vpop.f32.mrf.mxu0
      %v3235 = vadd.f32 0.0, %v3234
      %3236 = vmatmul.bf16.gmra.mxu0 %v3136
      %v3237 = vpop.f32.mrf.mxu0
      %v3238 = vadd.f32 0.0, %v3237
      %v3239 = vpop.f32.mrf.mxu0
      %v3240 = vadd.f32 0.0, %v3239
      %3241 = vdwg.mxu0
      %v3242 = vld [vmem:[%s18] sm:$0xf]
      %v3243 = vld [vmem:[%s18 + $0x4] sm:$0xf]
      %v3244 = vld [vmem:[%s18 + $0x8] sm:$0xf]
      %v3245 = vld [vmem:[%s18 + $0xc] sm:$0xf]
      %v3246 = vld [vmem:[%s18 + $0x10] sm:$0xf]
      %v3247 = vld [vmem:[%s18 + $0x14] sm:$0xf]
      %v3248 = vld [vmem:[%s18 + $0x18] sm:$0xf]
      %v3249 = vld [vmem:[%s18 + $0x1c] sm:$0xf]
      %v3250 = vld [vmem:[%s18 + $0x20] sm:$0xf]
      %v3251 = vld [vmem:[%s18 + $0x24] sm:$0xf]
      %v3252 = vld [vmem:[%s18 + $0x28] sm:$0xf]
      %v3253 = vld [vmem:[%s18 + $0x2c] sm:$0xf]
      %v3254 = vld [vmem:[%s18 + $0x30] sm:$0xf]
      %v3255 = vld [vmem:[%s18 + $0x34] sm:$0xf]
      %v3256 = vld [vmem:[%s18 + $0x38] sm:$0xf]
      %v3257 = vld [vmem:[%s18 + $0x3c] sm:$0xf]
      %v3274 = vunpack.c.l.b16 %v3242
      %v3275 = vunpack.c.l.b16 %v3243
      %v3276 = vunpack.c.l.b16 %v3244
      %v3277 = vunpack.c.l.b16 %v3245
      %v3278 = vunpack.c.l.b16 %v3246
      %v3279 = vunpack.c.l.b16 %v3247
      %v3280 = vunpack.c.l.b16 %v3248
      %v3281 = vunpack.c.l.b16 %v3249
      %v3282 = vunpack.c.l.b16 %v3250
      %v3283 = vunpack.c.l.b16 %v3251
      %v3284 = vunpack.c.l.b16 %v3252
      %v3285 = vunpack.c.l.b16 %v3253
      %v3286 = vunpack.c.l.b16 %v3254
      %v3287 = vunpack.c.l.b16 %v3255
      %v3288 = vunpack.c.l.b16 %v3256
      %v3289 = vunpack.c.l.b16 %v3257
      %v3290 = vpack.c.b16 %v3275, %v3274
      %v3291 = vpack.c.b16 %v3277, %v3276
      %v3292 = vpack.c.b16 %v3279, %v3278
      %v3293 = vpack.c.b16 %v3281, %v3280
      %v3294 = vpack.c.b16 %v3283, %v3282
      %v3295 = vpack.c.b16 %v3285, %v3284
      %v3296 = vpack.c.b16 %v3287, %v3286
      %v3297 = vpack.c.b16 %v3289, %v3288
      %3306 = vmatpush.bf16.msra.mxu0 %v3297
      %3307 = vmatpush.bf16.msra.mxu0 %v3296
      %3308 = vmatpush.bf16.msra.mxu0 %v3295
      %3309 = vmatpush.bf16.msra.mxu0 %v3294
      %3310 = vmatpush.bf16.msra.mxu0 %v3293
      %3311 = vmatpush.bf16.msra.mxu0 %v3292
      %3312 = vmatpush.bf16.msra.mxu0 %v3291
      %3313 = vmatpush.bf16.msra.mxu0 %v3290
      %3314 = vmatmul.bf16.gmra.mxu0 %v3129
      %v3315 = vpop.f32.mrf.mxu0
      %v3316 = vadd.f32 0.0, %v3315
      %v3317 = vpop.f32.mrf.mxu0
      %v3318 = vadd.f32 0.0, %v3317
      %3319 = vmatmul.bf16.gmra.mxu0 %v3130
      %v3320 = vpop.f32.mrf.mxu0
      %v3321 = vadd.f32 0.0, %v3320
      %v3322 = vpop.f32.mrf.mxu0
      %v3323 = vadd.f32 0.0, %v3322
      %3324 = vmatmul.bf16.gmra.mxu0 %v3131
      %v3325 = vpop.f32.mrf.mxu0
      %v3326 = vadd.f32 0.0, %v3325
      %v3327 = vpop.f32.mrf.mxu0
      %v3328 = vadd.f32 0.0, %v3327
      %3329 = vmatmul.bf16.gmra.mxu0 %v3132
      %v3330 = vpop.f32.mrf.mxu0
      %v3331 = vadd.f32 0.0, %v3330
      %v3332 = vpop.f32.mrf.mxu0
      %v3333 = vadd.f32 0.0, %v3332
      %3334 = vmatmul.bf16.gmra.mxu0 %v3133
      %v3335 = vpop.f32.mrf.mxu0
      %v3336 = vadd.f32 0.0, %v3335
      %v3337 = vpop.f32.mrf.mxu0
      %v3338 = vadd.f32 0.0, %v3337
      %3339 = vmatmul.bf16.gmra.mxu0 %v3134
      %v3340 = vpop.f32.mrf.mxu0
      %v3341 = vadd.f32 0.0, %v3340
      %v3342 = vpop.f32.mrf.mxu0
      %v3343 = vadd.f32 0.0, %v3342
      %3344 = vmatmul.bf16.gmra.mxu0 %v3135
      %v3345 = vpop.f32.mrf.mxu0
      %v3346 = vadd.f32 0.0, %v3345
      %v3347 = vpop.f32.mrf.mxu0
      %v3348 = vadd.f32 0.0, %v3347
      %3349 = vmatmul.bf16.gmra.mxu0 %v3136
      %v3350 = vpop.f32.mrf.mxu0
      %v3351 = vadd.f32 0.0, %v3350
      %v3352 = vpop.f32.mrf.mxu0
      %v3353 = vadd.f32 0.0, %v3352
      %3354 = vdwg.mxu0
      %v3355 = vld [vmem:[%s19] sm:$0xf]
      %v3356 = vld [vmem:[%s19 + $0x4] sm:$0xf]
      %v3357 = vld [vmem:[%s19 + $0x8] sm:$0xf]
      %v3358 = vld [vmem:[%s19 + $0xc] sm:$0xf]
      %v3359 = vld [vmem:[%s19 + $0x10] sm:$0xf]
      %v3360 = vld [vmem:[%s19 + $0x14] sm:$0xf]
      %v3361 = vld [vmem:[%s19 + $0x18] sm:$0xf]
      %v3362 = vld [vmem:[%s19 + $0x1c] sm:$0xf]
      %v3363 = vld [vmem:[%s19 + $0x20] sm:$0xf]
      %v3364 = vld [vmem:[%s19 + $0x24] sm:$0xf]
      %v3365 = vld [vmem:[%s19 + $0x28] sm:$0xf]
      %v3366 = vld [vmem:[%s19 + $0x2c] sm:$0xf]
      %v3367 = vld [vmem:[%s19 + $0x30] sm:$0xf]
      %v3368 = vld [vmem:[%s19 + $0x34] sm:$0xf]
      %v3369 = vld [vmem:[%s19 + $0x38] sm:$0xf]
      %v3370 = vld [vmem:[%s19 + $0x3c] sm:$0xf]
      %v3387 = vunpack.c.l.b16 %v3355
      %v3388 = vunpack.c.l.b16 %v3356
      %v3389 = vunpack.c.l.b16 %v3357
      %v3390 = vunpack.c.l.b16 %v3358
      %v3391 = vunpack.c.l.b16 %v3359
      %v3392 = vunpack.c.l.b16 %v3360
      %v3393 = vunpack.c.l.b16 %v3361
      %v3394 = vunpack.c.l.b16 %v3362
      %v3395 = vunpack.c.l.b16 %v3363
      %v3396 = vunpack.c.l.b16 %v3364
      %v3397 = vunpack.c.l.b16 %v3365
      %v3398 = vunpack.c.l.b16 %v3366
      %v3399 = vunpack.c.l.b16 %v3367
      %v3400 = vunpack.c.l.b16 %v3368
      %v3401 = vunpack.c.l.b16 %v3369
      %v3402 = vunpack.c.l.b16 %v3370
      %v3403 = vpack.c.b16 %v3388, %v3387
      %v3404 = vpack.c.b16 %v3390, %v3389
      %v3405 = vpack.c.b16 %v3392, %v3391
      %v3406 = vpack.c.b16 %v3394, %v3393
      %v3407 = vpack.c.b16 %v3396, %v3395
      %v3408 = vpack.c.b16 %v3398, %v3397
      %v3409 = vpack.c.b16 %v3400, %v3399
      %v3410 = vpack.c.b16 %v3402, %v3401
      %3419 = vmatpush.bf16.msra.mxu0 %v3410
      %3420 = vmatpush.bf16.msra.mxu0 %v3409
      %3421 = vmatpush.bf16.msra.mxu0 %v3408
      %3422 = vmatpush.bf16.msra.mxu0 %v3407
      %3423 = vmatpush.bf16.msra.mxu0 %v3406
      %3424 = vmatpush.bf16.msra.mxu0 %v3405
      %3425 = vmatpush.bf16.msra.mxu0 %v3404
      %3426 = vmatpush.bf16.msra.mxu0 %v3403
      %3427 = vmatmul.bf16.gmra.mxu0 %v3129
      %v3428 = vpop.f32.mrf.mxu0
      %v3429 = vadd.f32 0.0, %v3428
      %v3430 = vpop.f32.mrf.mxu0
      %v3431 = vadd.f32 0.0, %v3430
      %3432 = vmatmul.bf16.gmra.mxu0 %v3130
      %v3433 = vpop.f32.mrf.mxu0
      %v3434 = vadd.f32 0.0, %v3433
      %v3435 = vpop.f32.mrf.mxu0
      %v3436 = vadd.f32 0.0, %v3435
      %3437 = vmatmul.bf16.gmra.mxu0 %v3131
      %v3438 = vpop.f32.mrf.mxu0
      %v3439 = vadd.f32 0.0, %v3438
      %v3440 = vpop.f32.mrf.mxu0
      %v3441 = vadd.f32 0.0, %v3440
      %3442 = vmatmul.bf16.gmra.mxu0 %v3132
      %v3443 = vpop.f32.mrf.mxu0
      %v3444 = vadd.f32 0.0, %v3443
      %v3445 = vpop.f32.mrf.mxu0
      %v3446 = vadd.f32 0.0, %v3445
      %3447 = vmatmul.bf16.gmra.mxu0 %v3133
      %v3448 = vpop.f32.mrf.mxu0
      %v3449 = vadd.f32 0.0, %v3448
      %v3450 = vpop.f32.mrf.mxu0
      %v3451 = vadd.f32 0.0, %v3450
      %3452 = vmatmul.bf16.gmra.mxu0 %v3134
      %v3453 = vpop.f32.mrf.mxu0
      %v3454 = vadd.f32 0.0, %v3453
      %v3455 = vpop.f32.mrf.mxu0
      %v3456 = vadd.f32 0.0, %v3455
      %3457 = vmatmul.bf16.gmra.mxu0 %v3135
      %v3458 = vpop.f32.mrf.mxu0
      %v3459 = vadd.f32 0.0, %v3458
      %v3460 = vpop.f32.mrf.mxu0
      %v3461 = vadd.f32 0.0, %v3460
      %3462 = vmatmul.bf16.gmra.mxu0 %v3136
      %v3463 = vpop.f32.mrf.mxu0
      %v3464 = vadd.f32 0.0, %v3463
      %v3465 = vpop.f32.mrf.mxu0
      %v3466 = vadd.f32 0.0, %v3465
      %3467 = vdwg.mxu0
      %vm3468 = vcmp.gt.s32.totalorder %v3065, 0
      %vm3469 = vcmp.gt.s32.totalorder %v3066, 0
      %vm3470 = vcmp.gt.s32.totalorder %v3067, 0
      %vm3471 = vcmp.gt.s32.totalorder %v3068, 0
      %vm3472 = vcmp.gt.s32.totalorder %v3069, 0
      %vm3473 = vcmp.gt.s32.totalorder %v3070, 0
      %vm3474 = vcmp.gt.s32.totalorder %v3071, 0
      %vm3475 = vcmp.gt.s32.totalorder %v3072, 0
      %vm3476 = vcmp.gt.s32.totalorder %v3073, 0
      %vm3477 = vcmp.gt.s32.totalorder %v3074, 0
      %vm3478 = vcmp.gt.s32.totalorder %v3075, 0
      %vm3479 = vcmp.gt.s32.totalorder %v3076, 0
      %vm3480 = vcmp.gt.s32.totalorder %v3077, 0
      %vm3481 = vcmp.gt.s32.totalorder %v3078, 0
      %vm3482 = vcmp.gt.s32.totalorder %v3079, 0
      %vm3483 = vcmp.gt.s32.totalorder %v3080, 0
      %v3484 = vrot.slane %v3203, 7
      %v3485 = vrot.slane %v3205, 7
      %v3486 = vrot.slane %v3208, 7
      %v3487 = vrot.slane %v3210, 7
      %v3488 = vrot.slane %v3213, 7
      %v3489 = vrot.slane %v3215, 7
      %v3490 = vrot.slane %v3218, 7
      %v3491 = vrot.slane %v3220, 7
      %v3492 = vrot.slane %v3223, 7
      %v3493 = vrot.slane %v3225, 7
      %v3494 = vrot.slane %v3228, 7
      %v3495 = vrot.slane %v3230, 7
      %v3496 = vrot.slane %v3233, 7
      %v3497 = vrot.slane %v3235, 7
      %v3498 = vrot.slane %v3238, 7
      %v3499 = vrot.slane %v3240, 7
      %vm3500 = vcmp.lt.s32.totalorder %v3065, 1
      %v3501 = vsel %vm3500, %v3498, %v3499
      %v3502 = vsel %vm3500, %v3497, %v3498
      %v3503 = vsel %vm3500, %v3496, %v3497
      %v3504 = vsel %vm3500, %v3495, %v3496
      %v3505 = vsel %vm3500, %v3494, %v3495
      %v3506 = vsel %vm3500, %v3493, %v3494
      %v3507 = vsel %vm3500, %v3492, %v3493
      %v3508 = vsel %vm3500, %v3491, %v3492
      %v3509 = vsel %vm3500, %v3490, %v3491
      %v3510 = vsel %vm3500, %v3489, %v3490
      %v3511 = vsel %vm3500, %v3488, %v3489
      %v3512 = vsel %vm3500, %v3487, %v3488
      %v3513 = vsel %vm3500, %v3486, %v3487
      %v3514 = vsel %vm3500, %v3485, %v3486
      %v3515 = vsel %vm3500, %v3484, %v3485
      %v3516 = vsel %vm3500, %v3499, %v3484
      %v3517 = vsel %vm3468, %v3516, 0.0
      %v3518 = vsel %vm3469, %v3515, 0.0
      %v3519 = vsel %vm3470, %v3514, 0.0
      %v3520 = vsel %vm3471, %v3513, 0.0
      %v3521 = vsel %vm3472, %v3512, 0.0
      %v3522 = vsel %vm3473, %v3511, 0.0
      %v3523 = vsel %vm3474, %v3510, 0.0
      %v3524 = vsel %vm3475, %v3509, 0.0
      %v3525 = vsel %vm3476, %v3508, 0.0
      %v3526 = vsel %vm3477, %v3507, 0.0
      %v3527 = vsel %vm3478, %v3506, 0.0
      %v3528 = vsel %vm3479, %v3505, 0.0
      %v3529 = vsel %vm3480, %v3504, 0.0
      %v3530 = vsel %vm3481, %v3503, 0.0
      %v3531 = vsel %vm3482, %v3502, 0.0
      %v3532 = vsel %vm3483, %v3501, 0.0
      %v3533 = vadd.f32 %v3517, %v3316
      %v3534 = vadd.f32 %v3518, %v3318
      %v3535 = vadd.f32 %v3519, %v3321
      %v3536 = vadd.f32 %v3520, %v3323
      %v3537 = vadd.f32 %v3521, %v3326
      %v3538 = vadd.f32 %v3522, %v3328
      %v3539 = vadd.f32 %v3523, %v3331
      %v3540 = vadd.f32 %v3524, %v3333
      %v3541 = vadd.f32 %v3525, %v3336
      %v3542 = vadd.f32 %v3526, %v3338
      %v3543 = vadd.f32 %v3527, %v3341
      %v3544 = vadd.f32 %v3528, %v3343
      %v3545 = vadd.f32 %v3529, %v3346
      %v3546 = vadd.f32 %v3530, %v3348
      %v3547 = vadd.f32 %v3531, %v3351
      %v3548 = vadd.f32 %v3532, %v3353
      %vm3549 = vcmp.lt.s32.totalorder %v3065, 127
      %vm3550 = vcmp.lt.s32.totalorder %v3066, 127
      %vm3551 = vcmp.lt.s32.totalorder %v3067, 127
      %vm3552 = vcmp.lt.s32.totalorder %v3068, 127
      %vm3553 = vcmp.lt.s32.totalorder %v3069, 127
      %vm3554 = vcmp.lt.s32.totalorder %v3070, 127
      %vm3555 = vcmp.lt.s32.totalorder %v3071, 127
      %vm3556 = vcmp.lt.s32.totalorder %v3072, 127
      %vm3557 = vcmp.lt.s32.totalorder %v3073, 127
      %vm3558 = vcmp.lt.s32.totalorder %v3074, 127
      %vm3559 = vcmp.lt.s32.totalorder %v3075, 127
      %vm3560 = vcmp.lt.s32.totalorder %v3076, 127
      %vm3561 = vcmp.lt.s32.totalorder %v3077, 127
      %vm3562 = vcmp.lt.s32.totalorder %v3078, 127
      %vm3563 = vcmp.lt.s32.totalorder %v3079, 127
      %vm3564 = vcmp.lt.s32.totalorder %v3080, 127
      %v3565 = vrot.slane %v3429, 1
      %v3566 = vrot.slane %v3431, 1
      %v3567 = vrot.slane %v3434, 1
      %v3568 = vrot.slane %v3436, 1
      %v3569 = vrot.slane %v3439, 1
      %v3570 = vrot.slane %v3441, 1
      %v3571 = vrot.slane %v3444, 1
      %v3572 = vrot.slane %v3446, 1
      %v3573 = vrot.slane %v3449, 1
      %v3574 = vrot.slane %v3451, 1
      %v3575 = vrot.slane %v3454, 1
      %v3576 = vrot.slane %v3456, 1
      %v3577 = vrot.slane %v3459, 1
      %v3578 = vrot.slane %v3461, 1
      %v3579 = vrot.slane %v3464, 1
      %v3580 = vrot.slane %v3466, 1
      %vm3581 = vcmp.lt.s32.totalorder %v3065, 7
      %v3582 = vsel %vm3581, %v3579, %v3580
      %v3583 = vsel %vm3581, %v3578, %v3579
      %v3584 = vsel %vm3581, %v3577, %v3578
      %v3585 = vsel %vm3581, %v3576, %v3577
      %v3586 = vsel %vm3581, %v3575, %v3576
      %v3587 = vsel %vm3581, %v3574, %v3575
      %v3588 = vsel %vm3581, %v3573, %v3574
      %v3589 = vsel %vm3581, %v3572, %v3573
      %v3590 = vsel %vm3581, %v3571, %v3572
      %v3591 = vsel %vm3581, %v3570, %v3571
      %v3592 = vsel %vm3581, %v3569, %v3570
      %v3593 = vsel %vm3581, %v3568, %v3569
      %v3594 = vsel %vm3581, %v3567, %v3568
      %v3595 = vsel %vm3581, %v3566, %v3567
      %v3596 = vsel %vm3581, %v3565, %v3566
      %v3597 = vsel %vm3581, %v3580, %v3565
      %v3598 = vsel %vm3549, %v3596, 0.0
      %v3599 = vsel %vm3550, %v3595, 0.0
      %v3600 = vsel %vm3551, %v3594, 0.0
      %v3601 = vsel %vm3552, %v3593, 0.0
      %v3602 = vsel %vm3553, %v3592, 0.0
      %v3603 = vsel %vm3554, %v3591, 0.0
      %v3604 = vsel %vm3555, %v3590, 0.0
      %v3605 = vsel %vm3556, %v3589, 0.0
      %v3606 = vsel %vm3557, %v3588, 0.0
      %v3607 = vsel %vm3558, %v3587, 0.0
      %v3608 = vsel %vm3559, %v3586, 0.0
      %v3609 = vsel %vm3560, %v3585, 0.0
      %v3610 = vsel %vm3561, %v3584, 0.0
      %v3611 = vsel %vm3562, %v3583, 0.0
      %v3612 = vsel %vm3563, %v3582, 0.0
      %v3613 = vsel %vm3564, %v3597, 0.0
      %v3614 = vadd.f32 %v3533, %v3598
      %v3615 = vadd.f32 %v3534, %v3599
      %v3616 = vadd.f32 %v3535, %v3600
      %v3617 = vadd.f32 %v3536, %v3601
      %v3618 = vadd.f32 %v3537, %v3602
      %v3619 = vadd.f32 %v3538, %v3603
      %v3620 = vadd.f32 %v3539, %v3604
      %v3621 = vadd.f32 %v3540, %v3605
      %v3622 = vadd.f32 %v3541, %v3606
      %v3623 = vadd.f32 %v3542, %v3607
      %v3624 = vadd.f32 %v3543, %v3608
      %v3625 = vadd.f32 %v3544, %v3609
      %v3626 = vadd.f32 %v3545, %v3610
      %v3627 = vadd.f32 %v3546, %v3611
      %v3628 = vadd.f32 %v3547, %v3612
      %v3629 = vadd.f32 %v3548, %v3613
      %v3630 = vld [vmem:[%s20] sm:$0x1]
      %v3632 = vperm.slane %v3630, 0
      %v3634 = vadd.f32 %v3614, %v3632
      %v3635 = vadd.f32 %v3615, %v3632
      %v3636 = vadd.f32 %v3616, %v3632
      %v3637 = vadd.f32 %v3617, %v3632
      %v3638 = vadd.f32 %v3618, %v3632
      %v3639 = vadd.f32 %v3619, %v3632
      %v3640 = vadd.f32 %v3620, %v3632
      %v3641 = vadd.f32 %v3621, %v3632
      %v3642 = vadd.f32 %v3622, %v3632
      %v3643 = vadd.f32 %v3623, %v3632
      %v3644 = vadd.f32 %v3624, %v3632
      %v3645 = vadd.f32 %v3625, %v3632
      %v3646 = vadd.f32 %v3626, %v3632
      %v3647 = vadd.f32 %v3627, %v3632
      %v3648 = vadd.f32 %v3628, %v3632
      %v3649 = vadd.f32 %v3629, %v3632
      %v3650 = vmax.f32 %v3634, 0.0
      %v3651 = vmax.f32 %v3635, 0.0
      %v3652 = vmax.f32 %v3636, 0.0
      %v3653 = vmax.f32 %v3637, 0.0
      %v3654 = vmax.f32 %v3638, 0.0
      %v3655 = vmax.f32 %v3639, 0.0
      %v3656 = vmax.f32 %v3640, 0.0
      %v3657 = vmax.f32 %v3641, 0.0
      %v3658 = vmax.f32 %v3642, 0.0
      %v3659 = vmax.f32 %v3643, 0.0
      %v3660 = vmax.f32 %v3644, 0.0
      %v3661 = vmax.f32 %v3645, 0.0
      %v3662 = vmax.f32 %v3646, 0.0
      %v3663 = vmax.f32 %v3647, 0.0
      %v3664 = vmax.f32 %v3648, 0.0
      %v3665 = vmax.f32 %v3649, 0.0
      %v3666 = vld [vmem:[%s21] sm:$0x1]
      %v3667 = vld [vmem:[#allocation5] sm:$0x1]
      %3669 = vset.pattern.permute.xlu0 0
      %3670 = vperm.xlu0 %3669, %v3667
      %v3671 = vpop.permute.xlu0 %3670
      %v3673 = vperm.slane %v3671, 0
      %3674 = vmatpush.xpose.msra.mxu0 %v3665
      %3675 = vmatpush.xpose.msra.mxu0 %v3664
      %3676 = vmatpush.xpose.msra.mxu0 %v3663
      %3677 = vmatpush.xpose.msra.mxu0 %v3662
      %3678 = vmatpush.xpose.msra.mxu0 %v3661
      %3679 = vmatpush.xpose.msra.mxu0 %v3660
      %3680 = vmatpush.xpose.msra.mxu0 %v3659
      %3681 = vmatpush.xpose.msra.mxu0 %v3658
      %3682 = vmatpush.xpose.msra.mxu0 %v3657
      %3683 = vmatpush.xpose.msra.mxu0 %v3656
      %3684 = vmatpush.xpose.msra.mxu0 %v3655
      %3685 = vmatpush.xpose.msra.mxu0 %v3654
      %3686 = vmatpush.xpose.msra.mxu0 %v3653
      %3687 = vmatpush.xpose.msra.mxu0 %v3652
      %3688 = vmatpush.xpose.msra.mxu0 %v3651
      %3689 = vmatpush.xpose.msra.mxu0 %v3650
      %3690 = vmatmul.f32.gmra.mxu0 %v3666
      %v3691 = vpop.f32.mrf.mxu0
      %v3692 = vadd.f32 %v3673, %v3691
      %3693 = vdwg.mxu0
      %v3694 = vxor.u32 %v3692, 2147483648
      %v3695 = vmul.f32 %v3694, 1.442695
      %v3696 = vpow.pop %v3695
      %v3697 = vadd.f32 %v3696, 1.0
      %v3698 = vrcp.pop %v3697
      %v3699 = vmul.f32 %v3697, %v3698
      %v3700 = vsub.f32 1.0, %v3699
      %v3701 = vmul.f32 %v3698, %v3700
      %v3702 = vadd.f32 %v3698, %v3701
      %vm3703 = vweird.f32 %v3697
      %vm3704 = vweird.f32 %v3698
      %vm3705 = vmor %vm3703, %vm3704
      %v3706 = vsel %vm3705, %v3698, %v3702
      %v3707 = vand.u32 2147483647, %v3697
      %vm3708 = vcmp.eq.f32.partialorder %v3707, 8.507059e+37
      %v3709 = vand.u32 %v3697, 2147483648
      %v3710 = vor.u32 1.1754944e-38, %v3709
      %v3711 = vsel %vm3708, %v3710, %v3706
      %v3712 = vmul.f32 1.0, %v3711
      %v3713 = vmul.f32 %v3712, %v772
      %vm3714 = vcmask 1040384
      %v3715 = vsel %vm3714, %v3713, 0.0
      %3716 = vadd.xlane.f32.xlu0 %v3715
      %v3717 = vpop.xlane.xlu0 %3716
      %vm3718 = vcmask 0
      %3719 = vst.msk [vmem:[%s748] sm:$0x1] %vm3718, %v3717
      %s3720 = sld [smem:[#allocation4 + %s52]]
      %s3721 = scvt.s32.f32 %s3720
      %v3722 = vmax.f32 %v3717, 1e-06
      %v3723 = vrcp.pop %v3722
      %v3724 = vstv %s3721
      %v3725 = vmul.f32 %v3724, %v3723
      %v3726 = vmul.f32 %v3713, %v3725
      %3727 = vrot.lane.b32.xlu0 %v3726, 1
      %v3728 = vpop.permute.xlu0 %3727
      %vm3729 = vcmp.ge.s32.totalorder %v767, 1
      %v3730 = vsel %vm3729, %v3728, 0.0
      %v3731 = vadd.f32 %v3726, %v3730
      %3732 = vrot.lane.b32.xlu0 %v3731, 2
      %v3733 = vpop.permute.xlu0 %3732
      %vm3734 = vcmp.ge.s32.totalorder %v767, 2
      %v3735 = vsel %vm3734, %v3733, 0.0
      %v3736 = vadd.f32 %v3731, %v3735
      %3737 = vrot.lane.b32.xlu0 %v3736, 4
      %v3738 = vpop.permute.xlu0 %3737
      %vm3739 = vcmp.ge.s32.totalorder %v767, 4
      %v3740 = vsel %vm3739, %v3738, 0.0
      %v3741 = vadd.f32 %v3736, %v3740
      %3742 = vrot.lane.b32.xlu0 %v3741, 8
      %v3743 = vpop.permute.xlu0 %3742
      %vm3744 = vcmp.ge.s32.totalorder %v767, 8
      %v3745 = vsel %vm3744, %v3743, 0.0
      %v3746 = vadd.f32 %v3741, %v3745
      %3747 = vrot.lane.b32.xlu0 %v3746, 16
      %v3748 = vpop.permute.xlu0 %3747
      %vm3749 = vcmp.ge.s32.totalorder %v767, 16
      %v3750 = vsel %vm3749, %v3748, 0.0
      %v3751 = vadd.f32 %v3746, %v3750
      %3752 = vrot.lane.b32.xlu0 %v3751, 32
      %v3753 = vpop.permute.xlu0 %3752
      %vm3754 = vcmp.ge.s32.totalorder %v767, 32
      %v3755 = vsel %vm3754, %v3753, 0.0
      %v3756 = vadd.f32 %v3751, %v3755
      %3757 = vrot.lane.b32.xlu0 %v3756, 64
      %v3758 = vpop.permute.xlu0 %3757
      %vm3759 = vcmp.ge.s32.totalorder %v767, 64
      %v3760 = vsel %vm3759, %v3758, 0.0
      %v3761 = vadd.f32 %v3756, %v3760
      %v3762 = vsub.f32 %v3761, %v3726
      %v3763 = vcvt.s32.f32 %v3065
      %v3764 = vcvt.s32.f32 %v3066
      %v3765 = vadd.f32 %v3763, 1.0
      %v3766 = vadd.f32 %v3764, 1.0
      %v3767 = vperm.slane %v3761, 0
      %v3768 = vmin.f32 %v3767, %v3765
      %v3769 = vmin.f32 %v3767, %v3766
      %v3770 = vperm.slane %v3762, 0
      %v3771 = vmax.f32 %v3770, %v3763
      %v3772 = vmax.f32 %v3770, %v3764
      %v3773 = vsub.f32 %v3768, %v3771
      %v3774 = vsub.f32 %v3769, %v3772
      %v3775 = vmax.f32 %v3773, 0.0
      %v3776 = vmax.f32 %v3774, 0.0
      %v3777 = vpack.c.bf16 %v3776, %v3775
      %3778 = vmatpush.bf16.msra.mxu0 %v3136
      %3779 = vmatpush.bf16.msra.mxu0 %v3135
      %3780 = vmatpush.bf16.msra.mxu0 %v3134
      %3781 = vmatpush.bf16.msra.mxu0 %v3133
      %3782 = vmatpush.bf16.msra.mxu0 %v3132
      %3783 = vmatpush.bf16.msra.mxu0 %v3131
      %3784 = vmatpush.bf16.msra.mxu0 %v3130
      %3785 = vmatpush.bf16.msra.mxu0 %v3129
      %3786 = vmatmul.bf16.gmra.mxu0 %v3777
      %v3787 = vpop.f32.mrf.mxu0
      %v3788 = vadd.f32 0.0, %v3787
      %v3789 = vpop.f32.mrf.mxu0
      %v3790 = vadd.f32 0.0, %v3789
      %3791 = vdwg.mxu0
      %3792 = vst [vmem:[%s745] sm:$0xff] %v3788
      %3793 = vst [vmem:[%s745 + $0x8] sm:$0xff] %v3790
      %p3794 = scmp.lt.s32.totalorder %s52, 1
      %s3795 = scalar_select %p3794, %s52, 1
      %s3796 = smul.addr %s3795, 16
      %s3797 = smul.addr %s3796, 4
      %s3798 = scalar_lea.vmem %s23, %s3797
      %p3799 = scmp.lt.s32.totalorder %s52, 1
      %s3800 = scalar_select %p3799, %s52, 1
      %s3801 = smul.addr %s3800, 2
      %s3802 = smul.addr %s3801, 8
      %s3803 = scalar_lea.vmem %s24, %s3802
      %p3804 = scmp.lt.s32.totalorder %s52, 1
      %s3805 = scalar_select %p3804, %s52, 1
      %s3806 = scalar_lea.vmem %s25, %s3805
      // Predicated region
      $region105: #{paraformer_forward.3} parent=103 // pred_check
        %p3807 = pneg %p516
      $region106: #{paraformer_forward.3} parent=103 // pred_check_branch
        %3809 = sbr.rel (%p3807) target = $region108
      $region107: #{paraformer_forward.3} parent=103 // pred_region
        _
      $region108: #{paraformer_forward.3} parent=103 // pred_fallthru
        _
      // Predicated region
      $region109: #{paraformer_forward.3} parent=103 // pred_check
        %p3810 = pneg %p542
      $region110: #{paraformer_forward.3} parent=103 // pred_check_branch
        %3812 = sbr.rel (%p3810) target = $region112
      $region111: #{paraformer_forward.3} parent=103 // pred_region
        _
      $region112: #{paraformer_forward.3} parent=103 // pred_fallthru
        _
      // Predicated region
      $region113: #{paraformer_forward.3} parent=103 // pred_check
        %p3813 = pneg %p568
      $region114: #{paraformer_forward.3} parent=103 // pred_check_branch
        %3815 = sbr.rel (%p3813) target = $region116
      $region115: #{paraformer_forward.3} parent=103 // pred_region
        _
      $region116: #{paraformer_forward.3} parent=103 // pred_fallthru
        _
    $region104: #{paraformer_forward.3} parent=5 // pred_fallthru
      _
    %p3816 = scmp.le.s32.totalorder 2, %s47
    // Predicated region
    $region117: #{paraformer_forward.3} parent=5 // pred_check
      %p3817 = pneg %p3816
    $region118: #{paraformer_forward.3} parent=5 // pred_check_branch
      %3819 = sbr.rel (%p3817) target = $region120
    $region119: #{paraformer_forward.3} parent=5 // pred_region
      %s3820 = ssub.s32 %s47, 2
      // Predicated region
      $region121: #{paraformer_forward.3} parent=119 // pred_check
        %p3821 = pneg %p522
      $region122: #{paraformer_forward.3} parent=119 // pred_check_branch
        %3823 = sbr.rel (%p3821) target = $region124
      $region123: #{paraformer_forward.3} parent=119 // pred_region
        %p3824 = scmp.lt.s32.totalorder %s53, 1
        %s3825 = scalar_select %p3824, %s53, 1
        %s3826 = smul.addr %s3825, 16
        %s3827 = smul.addr %s3826, 4
        %s3828 = scalar_lea.vmem %s23, %s3827
      $region124: #{paraformer_forward.3} parent=119 // pred_fallthru
        _
      // Predicated region
      $region125: #{paraformer_forward.3} parent=119 // pred_check
        %p3829 = pneg %p548
      $region126: #{paraformer_forward.3} parent=119 // pred_check_branch
        %3831 = sbr.rel (%p3829) target = $region128
      $region127: #{paraformer_forward.3} parent=119 // pred_region
        %p3832 = scmp.lt.s32.totalorder %s53, 1
        %s3833 = scalar_select %p3832, %s53, 1
        %s3834 = smul.addr %s3833, 2
        %s3835 = smul.addr %s3834, 8
        %s3836 = scalar_lea.vmem %s24, %s3835
      $region128: #{paraformer_forward.3} parent=119 // pred_fallthru
        _
      // Predicated region
      $region129: #{paraformer_forward.3} parent=119 // pred_check
        %p3837 = pneg %p574
      $region130: #{paraformer_forward.3} parent=119 // pred_check_branch
        %3839 = sbr.rel (%p3837) target = $region132
      $region131: #{paraformer_forward.3} parent=119 // pred_region
        %p3840 = scmp.lt.s32.totalorder %s53, 1
        %s3841 = scalar_select %p3840, %s53, 1
        %s3842 = scalar_lea.vmem %s25, %s3841
      $region132: #{paraformer_forward.3} parent=119 // pred_fallthru
        _
    $region120: #{paraformer_forward.3} parent=5 // pred_fallthru
      _
  $region6: #{paraformer_forward.3} parent=0 // loop_footer
    %s51 = sadd.s32 1, %s47
  $region7: #{paraformer_forward.3} parent=0 // loop_footer_branch
    %46 = sbr.rel target = $region3
  $region8: #{paraformer_forward.3} parent=0 // loop_exit
    _

</llo_original>
